<compile_context>
chip_gen: v6e
topology: v6e:2x2x1
jax: 0.10.0
libtpu: 0.0.40
codegen_flags: <defaults>
</compile_context>

<pallas_src>
import jax
import jax.numpy as jnp
from jax.experimental import pallas as pl
from jax.experimental.pallas import tpu as pltpu

# ----------------------------------------------------------------------------
# Scaled-down network configuration (same channel widths as the PyTorch module,
# smaller point counts so the demo runs fast).
# ----------------------------------------------------------------------------
IN_CHANNELS = 6
USE_XYZ = True
# (npoint, radius, nsample) per SA module (original: 1024/256/64/16, nsample 32)
SA_CONFIG = ((32, 0.1, 16), (16, 0.2, 16), (8, 0.4, 16), (4, 0.8, 16))

SA_MLPS = [
    [IN_CHANNELS + 3, 32, 32, 64],
    [64 + 3, 64, 64, 128],
    [128 + 3, 128, 128, 256],
    [256 + 3, 256, 256, 512],
]
FP_MLPS = [
    [128 + IN_CHANNELS, 128, 128, 128],
    [256 + 64, 256, 128],
    [256 + 128, 256, 256],
    [512 + 256, 256, 256],
]

CH_ALIGN = 16            # bf16 sublane tile: pad channel dims to 16, NOT 128
MAX_TILE_ROWS = 1024     # pointwise row-tile cap
MAX_GROUP_ROWS = 2048    # grouped path: cap on tile_g * nsample rows per step


def _round_up(n, m):
    return ((n + m - 1) // m) * m


def _pad_ch(c):
    return _round_up(c, CH_ALIGN)


# ----------------------------------------------------------------------------
# Fused MLP (+ optional per-group max-pool) Pallas kernel
# ----------------------------------------------------------------------------
def _make_fused_mlp_kernel(n_layers, pool_k=None):
    """Kernel: chain of matmul + bias + ReLU layers, optional max over groups.

    refs = (x_ref, w1, b1, ..., wn, bn, o_ref).  x / weights are bf16, biases
    f32; each matmul accumulates in f32, intermediates are re-cast to bf16.
    """

    def kernel(*refs):
        x_ref, o_ref = refs[0], refs[-1]
        wb = refs[1:-1]
        x = x_ref[...]                                   # (tile_m, cin_pad) bf16
        for li in range(n_layers):
            w = wb[2 * li][...]                          # (cin_i, cout_i) bf16
            b = wb[2 * li + 1][...]                      # (1, cout_i) f32
            y = jnp.dot(x, w, preferred_element_type=jnp.float32)
            y = jnp.maximum(y + b, 0.0)                  # folded-BN bias + ReLU
            x = y.astype(jnp.bfloat16) if li + 1 < n_layers else y
        if pool_k is not None:                           # fused group max-pool
            tile_m, cout = x.shape
            # pool_k is a multiple of 8 -> sublane-aligned split, no relayout.
            x = jnp.max(x.reshape(tile_m // pool_k, pool_k, cout), axis=1)
        o_ref[...] = x.astype(o_ref.dtype)
    return kernel


def _run_fused_mlp(x, layers, tile_rows, out_dtype, pool_k=None):
    """x: (Mp, cin_pad) bf16, Mp % tile_rows == 0.  Returns out_dtype
    (Mp, cout), or (Mp // pool_k, cout) if pool_k is given."""
    mp, cin_pad = x.shape
    cout = layers[-1][0].shape[1]
    kernel = _make_fused_mlp_kernel(len(layers), pool_k=pool_k)

    in_specs = [pl.BlockSpec((tile_rows, cin_pad), lambda i: (i, 0))]
    args = [x]
    for w, b in layers:
        # Whole weight / bias as one block, constant index -> stays resident in
        # VMEM across grid steps (no re-DMA).
        in_specs.append(pl.BlockSpec(w.shape, lambda i: (0, 0)))
        in_specs.append(pl.BlockSpec(b.shape, lambda i: (0, 0)))
        args += [w, b]

    if pool_k is None:
        out_rows, out_tile = mp, tile_rows
    else:
        out_rows, out_tile = mp // pool_k, tile_rows // pool_k

    return pl.pallas_call(
        kernel,
        out_shape=jax.ShapeDtypeStruct((out_rows, cout), out_dtype),
        grid=(mp // tile_rows,),
        in_specs=in_specs,
        out_specs=pl.BlockSpec((out_tile, cout), lambda i: (i, 0)),
        compiler_params=pltpu.CompilerParams(
            dimension_semantics=("parallel",),
            # Actual footprint is a few MB; 48 MiB keeps headroom on v7x's
            # 64 MiB VMEM while allowing large row tiles on v5e/v6e.
            vmem_limit_bytes=48 * 1024 * 1024,
        ),
    )(*args)


def _choose_tile_rows(m, max_rows=MAX_TILE_ROWS):
    # >=2 grid steps when possible (both v7x TensorCores get work), capped so
    # per-grid-step overhead (~0.35us) is amortized on big point counts.
    t = _round_up(max(1, (m + 1) // 2), 8)
    return max(8, min(max_rows, t))


def _choose_tile_groups(g, k, max_rows=MAX_GROUP_ROWS):
    max_g = max(8, (max_rows // k) // 8 * 8)
    t = _round_up(max(1, (g + 1) // 2), 8)
    return max(8, min(max_g, t))


def fused_pointwise_mlp(x, layers, out_dtype=jnp.bfloat16):
    """(M, cin_pad) bf16 -> (M, cout): whole conv1x1+BN+ReLU chain in one kernel."""
    m, cin_pad = x.shape
    assert cin_pad == layers[0][0].shape[0]
    tile_m = _choose_tile_rows(m)
    mp = _round_up(m, tile_m)
    if mp != m:
        x = jnp.pad(x, ((0, mp - m), (0, 0)))
    out = _run_fused_mlp(x, layers, tile_m, out_dtype)
    return out[:m] if mp != m else out


def fused_grouped_mlp_maxpool(grouped, layers, out_dtype=jnp.bfloat16):
    """(G, K, cin_pad) bf16 -> (G, cout): MLP chain + max over K in one kernel."""
    g, k, cin_pad = grouped.shape
    assert cin_pad == layers[0][0].shape[0]
    assert k % 8 == 0, "nsample must be sublane-aligned for the fused max-pool"
    tile_g = _choose_tile_groups(g, k)
    gp = _round_up(g, tile_g)
    x = grouped
    if gp != g:
        # Pad whole (all-zero) groups; their pooled rows are sliced off below.
        x = jnp.pad(x, ((0, gp - g), (0, 0), (0, 0)))
    x = x.reshape(gp * k, cin_pad)                    # row tiles hold whole groups
    out = _run_fused_mlp(x, layers, tile_g * k, out_dtype, pool_k=k)
    return out[:g] if gp != g else out


# ----------------------------------------------------------------------------
# Plain-JAX glue: sampling / grouping / interpolation (data-dependent gathers)
# TODO(synk): move the grouping gather into the MLP kernel via
# PrefetchScalarGridSpec (idx in SMEM) + per-group row DMAs instead of
# materializing the K-times-duplicated (B,S,K,C) tensor in HBM.
# ----------------------------------------------------------------------------
def _sqdist(a, b):
    # a: (B, n, 3), b: (B, m, 3) -> (B, n, m)
    return jnp.sum((a[:, :, None, :] - b[:, None, :, :]) ** 2, axis=-1)


def farthest_point_sample(xyz, npoint):
    # matches pointnet2_ops furthest_point_sampling (squared dists, start at 0)
    # TODO(synk): serial over npoint with a full (B,N) argmax each step; a
    # dedicated Pallas FPS kernel would help at N=4096/npoint=1024 scale.
    B, N, _ = xyz.shape

    def body(i, state):
        dists, idx, farthest = state
        idx = idx.at[:, i].set(farthest)
        centroid = jnp.take_along_axis(xyz, farthest[:, None, None], axis=1)
        d = jnp.sum((xyz - centroid) ** 2, axis=-1)
        dists = jnp.minimum(dists, d)
        farthest = jnp.argmax(dists, axis=-1).astype(jnp.int32)
        return dists, idx, farthest

    init = (
        jnp.full((B, N), 1e10, jnp.float32),
        jnp.zeros((B, npoint), jnp.int32),
        jnp.zeros((B,), jnp.int32),
    )
    _, idx, _ = jax.lax.fori_loop(0, npoint, body, init)
    return idx


def ball_query(radius, nsample, xyz, new_xyz):
    # matches pointnet2_ops ball_query: first nsample points (in index order)
    # with d2 < r^2, remaining slots filled with the first valid index.
    # Uses top_k over a keyed value instead of a full sort over N.
    B, N, _ = xyz.shape
    d2 = _sqdist(new_xyz, xyz)  # (B, S, N)
    arange = jnp.arange(N, dtype=jnp.int32)
    # hit -> -index (largest key == smallest index); miss -> -N (sorts last)
    keys = jnp.where(d2 < radius * radius, -arange[None, None, :],
                     jnp.int32(-N))
    if N < nsample:
        keys = jnp.pad(keys, ((0, 0), (0, 0), (0, nsample - N)),
                       constant_values=-N)
    topv, _ = jax.lax.top_k(keys, nsample)            # descending keys
    idx = -topv                                       # ascending hit indices; N = miss
    first = idx[:, :, :1]                             # centroid is always a hit
    idx = jnp.where(idx == N, first, idx)
    return idx.astype(jnp.int32)


def gather_groups(points, idx):
    # points: (B, N, C), idx: (B, S, K) -> (B, S, K, C)
    B, S, K = idx.shape
    C = points.shape[-1]
    flat = jnp.take_along_axis(points, idx.reshape(B, S * K, 1), axis=1)
    return flat.reshape(B, S, K, C)


def _concat_pad_bf16(parts, cin_pad):
    """Concat feature parts along channels, cast to bf16, and fold the channel
    padding up to the module's padded cin into the same single copy."""
    parts = [p.astype(jnp.bfloat16) for p in parts]
    c = sum(p.shape[-1] for p in parts)
    assert cin_pad >= c
    if cin_pad > c:
        pad_shape = parts[0].shape[:-1] + (cin_pad - c,)
        parts.append(jnp.zeros(pad_shape, jnp.bfloat16))
    return jnp.concatenate(parts, axis=-1) if len(parts) > 1 else parts[0]


# ----------------------------------------------------------------------------
# Modules
# ----------------------------------------------------------------------------
def sa_module(xyz, feats, npoint, radius, nsample, layers, use_xyz=True):
    """PointnetSAModule: FPS -> ball-query group -> fused shared-MLP + max-pool."""
    B = xyz.shape[0]
    fps_idx = farthest_point_sample(xyz, npoint)                       # (B, S)
    new_xyz = jnp.take_along_axis(xyz, fps_idx[..., None], axis=1)     # (B, S, 3)
    idx = ball_query(radius, nsample, xyz, new_xyz)                    # (B, S, K)
    grouped_xyz = gather_groups(xyz, idx) - new_xyz[:, :, None, :]     # (B, S, K, 3)

    if feats is not None:
        grouped_feats = gather_groups(feats, idx)                      # (B, S, K, C)
        parts = [grouped_xyz, grouped_feats] if use_xyz else [grouped_feats]
    else:
        parts = [grouped_xyz]

    cin_pad = layers[0][0].shape[0]
    grouped = _concat_pad_bf16(parts, cin_pad)                         # bf16, padded
    grouped = grouped.reshape(B * npoint, nsample, cin_pad)
    pooled = fused_grouped_mlp_maxpool(grouped, layers,
                                       out_dtype=jnp.bfloat16)         # (B*S, Cout)
    return new_xyz, pooled.reshape(B, npoint, -1)


def fp_module(unknown_xyz, known_xyz, unknown_feats, known_feats, layers,
              out_dtype=jnp.bfloat16):
    """PointnetFPModule: 3-NN inverse-distance interpolation -> concat -> fused MLP."""
    B, n, _ = unknown_xyz.shape
    d2 = _sqdist(unknown_xyz, known_xyz)                               # (B, n, m)
    neg_d2, idx = jax.lax.top_k(-d2, 3)                                # 3 nearest
    dist = jnp.sqrt(jnp.maximum(-neg_d2, 0.0))
    dist_recip = 1.0 / (dist + 1e-8)
    norm = jnp.sum(dist_recip, axis=-1, keepdims=True)
    weight = dist_recip / norm                                         # (B, n, 3)

    C2 = known_feats.shape[-1]
    gathered = jnp.take_along_axis(
        known_feats, idx.reshape(B, n * 3, 1), axis=1
    ).reshape(B, n, 3, C2)
    interp = jnp.sum(gathered.astype(jnp.float32) * weight[..., None], axis=2)

    parts = [interp] + ([unknown_feats] if unknown_feats is not None else [])
    cin_pad = layers[0][0].shape[0]
    x = _concat_pad_bf16(parts, cin_pad)                               # (B, n, cin_pad)
    x2 = x.reshape(B * n, cin_pad)
    out = fused_pointwise_mlp(x2, layers, out_dtype=out_dtype)         # fused Pallas MLP
    return out.reshape(B, n, -1)


# ----------------------------------------------------------------------------
# Parameters (deterministic synthetic init; BN folded into weights/bias).
# NOTE: params pytree contains ONLY arrays (no Python ints) so it can be traced
# under jit without TracerBoolConversionError; channel info comes from static
# array shapes.
# ----------------------------------------------------------------------------
def _init_mlp(key, channels):
    # Each 1x1 conv (bias=False) followed by eval-mode BatchNorm (gamma=1,
    # beta=0, running mean=0, var=1, eps=1e-5) folded into the conv weight.
    # TODO(synk): training-mode BatchNorm (batch statistics) is not modeled.
    layers = []
    for cin, cout in zip(channels[:-1], channels[1:]):
        key, k = jax.random.split(key)
        w = jax.random.normal(k, (cin, cout), jnp.float32) / jnp.sqrt(float(cin))
        w = w * (1.0 / jnp.sqrt(1.0 + 1e-5))          # folded BN scale
        bias = jnp.zeros((cout,), jnp.float32)        # folded BN bias
        cin_p = _pad_ch(cin)                          # pad to sublane tile only
        cout_p = _pad_ch(cout)
        wp = jnp.zeros((cin_p, cout_p), jnp.float32).at[:cin, :cout].set(w)
        bp = jnp.zeros((1, cout_p), jnp.float32).at[:, :cout].set(bias)
        layers.append((wp.astype(jnp.bfloat16), bp))  # bf16 weights, f32 bias
    # The module output flows (unsliced) into the next module's concat, so its
    # last-layer width must be the true channel count.
    assert _pad_ch(channels[-1]) == channels[-1]
    return key, layers


def init_params(key):
    params = {"sa": [], "fp": []}
    for ch in SA_MLPS:
        key, layers = _init_mlp(key, ch)
        params["sa"].append(layers)
    for ch in FP_MLPS:
        key, layers = _init_mlp(key, ch)
        params["fp"].append(layers)
    return params


# ----------------------------------------------------------------------------
# Full forward pass (as_backbone=True path of PointNet2SemSegSSG)
# ----------------------------------------------------------------------------
def pointnet2_forward(pointcloud, params):
    # pointcloud: (B, N, 3 + in_channels), channels-last like the torch input
    xyz = pointcloud[..., 0:3]
    feats = pointcloud[..., 3:] if pointcloud.shape[-1] > 3 else None  # (B, N, C)

    l_xyz, l_feats = [xyz], [feats]
    for i, (npoint, radius, nsample) in enumerate(SA_CONFIG):
        nx, nf = sa_module(
            l_xyz[i], l_feats[i], npoint, radius, nsample, params["sa"][i], USE_XYZ
        )
        l_xyz.append(nx)
        l_feats.append(nf)

    n_fp = len(FP_MLPS)
    for i in range(-1, -(n_fp + 1), -1):
        # Intermediate FP outputs stay bf16; only the final backbone features
        # (l_feats[0]) are emitted in f32.
        out_dtype = jnp.float32 if i == -n_fp else jnp.bfloat16
        l_feats[i - 1] = fp_module(
            l_xyz[i - 1], l_xyz[i], l_feats[i - 1], l_feats[i],
            params["fp"][i], out_dtype
        )

    out = l_feats[0]                       # (B, N, 128) channels-last, f32
    # TODO(synk): fc_layer (Conv1d+BN+ReLU+Dropout+Conv1d) only exists when
    # as_backbone=False; the default as_backbone=True path returns the backbone
    # features directly.
    return jnp.transpose(out, (0, 2, 1))   # (B, 128, N) to match PyTorch layout


# ----------------------------------------------------------------------------
# Demo
# ----------------------------------------------------------------------------
if __name__ == "__main__":
    key = jax.random.PRNGKey(0)
    k_pc, k_par = jax.random.split(key)

    B, N = 2, 64
    pointcloud = jax.random.uniform(
        k_pc, (B, N, 3 + IN_CHANNELS), dtype=jnp.float32
    )
    params = init_params(k_par)

    fwd = jax.jit(pointnet2_forward)
    out = fwd(pointcloud, params)
    out = jax.block_until_ready(out)

    assert out.shape == (B, 128, N), out.shape
    assert out.dtype == jnp.float32
    assert bool(jnp.all(jnp.isfinite(out)))
    print("KERNEL_OK")
</pallas_src>

<mosaic_0001>
module attributes {stable_mosaic.version = 11 : i64} {
  func.func @kernel(%arg0: i32, %arg1: memref<512x16xbf16, #tpu.memory_space<vmem>>, %arg2: memref<16x32xbf16, #tpu.memory_space<vmem>>, %arg3: memref<1x32xf32, #tpu.memory_space<vmem>>, %arg4: memref<32x32xbf16, #tpu.memory_space<vmem>>, %arg5: memref<1x32xf32, #tpu.memory_space<vmem>>, %arg6: memref<32x64xbf16, #tpu.memory_space<vmem>>, %arg7: memref<1x64xf32, #tpu.memory_space<vmem>>, %arg8: memref<32x64xbf16, #tpu.memory_space<vmem>>) attributes {dimension_semantics = [#tpu.dimension_semantics<parallel>], iteration_bounds = array<i64: 2>, scalar_prefetch = 0 : i64, scratch_operands = 0 : i64, tpu.core_type = #tpu.core_type<tc>, window_params = [{transform_indices = @transform_0, window_bounds = array<i64: 512, 16>}, {pipeline_mode = #tpu.pipeline_mode<synchronous>, transform_indices = @transform_1, window_bounds = array<i64: 16, 32>}, {pipeline_mode = #tpu.pipeline_mode<synchronous>, transform_indices = @transform_2, window_bounds = array<i64: 1, 32>}, {pipeline_mode = #tpu.pipeline_mode<synchronous>, transform_indices = @transform_3, window_bounds = array<i64: 32, 32>}, {pipeline_mode = #tpu.pipeline_mode<synchronous>, transform_indices = @transform_4, window_bounds = array<i64: 1, 32>}, {pipeline_mode = #tpu.pipeline_mode<synchronous>, transform_indices = @transform_5, window_bounds = array<i64: 32, 64>}, {pipeline_mode = #tpu.pipeline_mode<synchronous>, transform_indices = @transform_6, window_bounds = array<i64: 1, 64>}, {transform_indices = @transform_7, window_bounds = array<i64: 32, 64>}]} {
    %c0 = arith.constant 0 : index
    %c0_0 = arith.constant 0 : index
    %0 = vector.load %arg1[%c0, %c0_0] : memref<512x16xbf16, #tpu.memory_space<vmem>>, vector<512x16xbf16>
    %c0_1 = arith.constant 0 : index
    %c0_2 = arith.constant 0 : index
    %1 = vector.load %arg2[%c0_1, %c0_2] : memref<16x32xbf16, #tpu.memory_space<vmem>>, vector<16x32xbf16>
    %c0_3 = arith.constant 0 : index
    %c0_4 = arith.constant 0 : index
    %2 = vector.load %arg3[%c0_3, %c0_4] : memref<1x32xf32, #tpu.memory_space<vmem>>, vector<1x32xf32>
    %cst = arith.constant dense<0.000000e+00> : vector<512x32xf32>
    %3 = tpu.matmul %0, %1, %cst {dimension_numbers = #tpu.dot_dimension_numbers<[1], [0], [0], [1], [0, 0, 1, 1], [], []>} : vector<512x16xbf16>, vector<16x32xbf16>, vector<512x32xf32> -> vector<512x32xf32>
    %4 = vector.broadcast %2 : vector<1x32xf32> to vector<512x32xf32>
    %5 = arith.addf %3, %4 : vector<512x32xf32>
    %cst_5 = arith.constant 0.000000e+00 : f32
    %6 = vector.broadcast %cst_5 : f32 to vector<512x32xf32>
    %7 = arith.maximumf %5, %6 : vector<512x32xf32>
    %8 = arith.truncf %7 : vector<512x32xf32> to vector<512x32xbf16>
    %c0_6 = arith.constant 0 : index
    %c0_7 = arith.constant 0 : index
    %9 = vector.load %arg4[%c0_6, %c0_7] : memref<32x32xbf16, #tpu.memory_space<vmem>>, vector<32x32xbf16>
    %c0_8 = arith.constant 0 : index
    %c0_9 = arith.constant 0 : index
    %10 = vector.load %arg5[%c0_8, %c0_9] : memref<1x32xf32, #tpu.memory_space<vmem>>, vector<1x32xf32>
    %cst_10 = arith.constant dense<0.000000e+00> : vector<512x32xf32>
    %11 = tpu.matmul %8, %9, %cst_10 {dimension_numbers = #tpu.dot_dimension_numbers<[1], [0], [0], [1], [0, 0, 1, 1], [], []>} : vector<512x32xbf16>, vector<32x32xbf16>, vector<512x32xf32> -> vector<512x32xf32>
    %12 = vector.broadcast %10 : vector<1x32xf32> to vector<512x32xf32>
    %13 = arith.addf %11, %12 : vector<512x32xf32>
    %cst_11 = arith.constant 0.000000e+00 : f32
    %14 = vector.broadcast %cst_11 : f32 to vector<512x32xf32>
    %15 = arith.maximumf %13, %14 : vector<512x32xf32>
    %16 = arith.truncf %15 : vector<512x32xf32> to vector<512x32xbf16>
    %c0_12 = arith.constant 0 : index
    %c0_13 = arith.constant 0 : index
    %17 = vector.load %arg6[%c0_12, %c0_13] : memref<32x64xbf16, #tpu.memory_space<vmem>>, vector<32x64xbf16>
    %c0_14 = arith.constant 0 : index
    %c0_15 = arith.constant 0 : index
    %18 = vector.load %arg7[%c0_14, %c0_15] : memref<1x64xf32, #tpu.memory_space<vmem>>, vector<1x64xf32>
    %cst_16 = arith.constant dense<0.000000e+00> : vector<512x64xf32>
    %19 = tpu.matmul %16, %17, %cst_16 {dimension_numbers = #tpu.dot_dimension_numbers<[1], [0], [0], [1], [0, 0, 1, 1], [], []>} : vector<512x32xbf16>, vector<32x64xbf16>, vector<512x64xf32> -> vector<512x64xf32>
    %20 = vector.broadcast %18 : vector<1x64xf32> to vector<512x64xf32>
    %21 = arith.addf %19, %20 : vector<512x64xf32>
    %cst_17 = arith.constant 0.000000e+00 : f32
    %22 = vector.broadcast %cst_17 : f32 to vector<512x64xf32>
    %23 = arith.maximumf %21, %22 : vector<512x64xf32>
    %24 = vector.shape_cast %23 : vector<512x64xf32> to vector<32x16x64xf32>
    %cst_18 = arith.constant dense<0xFF800000> : vector<32x64xf32>
    %25 = vector.multi_reduction <maximumf>, %24, %cst_18 [1] : vector<32x16x64xf32> to vector<32x64xf32>
    %26 = arith.truncf %25 : vector<32x64xf32> to vector<32x64xbf16>
    %c0_19 = arith.constant 0 : index
    %c0_20 = arith.constant 0 : index
    %27 = vector.load %arg8[%c0_19, %c0_20] : memref<32x64xbf16, #tpu.memory_space<vmem>>, vector<32x64xbf16>
    tpu.vector_store %arg8[%c0_19, %c0_20], %26 {strides = array<i32>} : memref<32x64xbf16, #tpu.memory_space<vmem>>, vector<32x64xbf16>,
    return
  }
  func.func @transform_0(%arg0: i32) -> (i32, i32) {
    %c0_i32 = arith.constant 0 : i32
    %c0_i32_0 = arith.constant 0 : i32
    return %arg0, %c0_i32 : i32, i32
  }
  func.func @transform_1(%arg0: i32) -> (i32, i32) {
    %c0_i32 = arith.constant 0 : i32
    %c0_i32_0 = arith.constant 0 : i32
    %c0_i32_1 = arith.constant 0 : i32
    return %c0_i32, %c0_i32_0 : i32, i32
  }
  func.func @transform_2(%arg0: i32) -> (i32, i32) {
    %c0_i32 = arith.constant 0 : i32
    %c0_i32_0 = arith.constant 0 : i32
    %c0_i32_1 = arith.constant 0 : i32
    return %c0_i32, %c0_i32_0 : i32, i32
  }
  func.func @transform_3(%arg0: i32) -> (i32, i32) {
    %c0_i32 = arith.constant 0 : i32
    %c0_i32_0 = arith.constant 0 : i32
    %c0_i32_1 = arith.constant 0 : i32
    return %c0_i32, %c0_i32_0 : i32, i32
  }
  func.func @transform_4(%arg0: i32) -> (i32, i32) {
    %c0_i32 = arith.constant 0 : i32
    %c0_i32_0 = arith.constant 0 : i32
    %c0_i32_1 = arith.constant 0 : i32
    return %c0_i32, %c0_i32_0 : i32, i32
  }
  func.func @transform_5(%arg0: i32) -> (i32, i32) {
    %c0_i32 = arith.constant 0 : i32
    %c0_i32_0 = arith.constant 0 : i32
    %c0_i32_1 = arith.constant 0 : i32
    return %c0_i32, %c0_i32_0 : i32, i32
  }
  func.func @transform_6(%arg0: i32) -> (i32, i32) {
    %c0_i32 = arith.constant 0 : i32
    %c0_i32_0 = arith.constant 0 : i32
    %c0_i32_1 = arith.constant 0 : i32
    return %c0_i32, %c0_i32_0 : i32, i32
  }
  func.func @transform_7(%arg0: i32) -> (i32, i32) {
    %c0_i32 = arith.constant 0 : i32
    %c0_i32_0 = arith.constant 0 : i32
    return %arg0, %c0_i32 : i32, i32
  }
}

module attributes {stable_mosaic.version = 11 : i64} {
  func.func @kernel(%arg0: i32, %arg1: memref<256x80xbf16, #tpu.memory_space<vmem>>, %arg2: memref<80x64xbf16, #tpu.memory_space<vmem>>, %arg3: memref<1x64xf32, #tpu.memory_space<vmem>>, %arg4: memref<64x64xbf16, #tpu.memory_space<vmem>>, %arg5: memref<1x64xf32, #tpu.memory_space<vmem>>, %arg6: memref<64x128xbf16, #tpu.memory_space<vmem>>, %arg7: memref<1x128xf32, #tpu.memory_space<vmem>>, %arg8: memref<16x128xbf16, #tpu.memory_space<vmem>>) attributes {dimension_semantics = [#tpu.dimension_semantics<parallel>], iteration_bounds = array<i64: 2>, scalar_prefetch = 0 : i64, scratch_operands = 0 : i64, tpu.core_type = #tpu.core_type<tc>, window_params = [{transform_indices = @transform_0, window_bounds = array<i64: 256, 80>}, {pipeline_mode = #tpu.pipeline_mode<synchronous>, transform_indices = @transform_1, window_bounds = array<i64: 80, 64>}, {pipeline_mode = #tpu.pipeline_mode<synchronous>, transform_indices = @transform_2, window_bounds = array<i64: 1, 64>}, {pipeline_mode = #tpu.pipeline_mode<synchronous>, transform_indices = @transform_3, window_bounds = array<i64: 64, 64>}, {pipeline_mode = #tpu.pipeline_mode<synchronous>, transform_indices = @transform_4, window_bounds = array<i64: 1, 64>}, {pipeline_mode = #tpu.pipeline_mode<synchronous>, transform_indices = @transform_5, window_bounds = array<i64: 64, 128>}, {pipeline_mode = #tpu.pipeline_mode<synchronous>, transform_indices = @transform_6, window_bounds = array<i64: 1, 128>}, {transform_indices = @transform_7, window_bounds = array<i64: 16, 128>}]} {
    %c0 = arith.constant 0 : index
    %c0_0 = arith.constant 0 : index
    %0 = vector.load %arg1[%c0, %c0_0] : memref<256x80xbf16, #tpu.memory_space<vmem>>, vector<256x80xbf16>
    %c0_1 = arith.constant 0 : index
    %c0_2 = arith.constant 0 : index
    %1 = vector.load %arg2[%c0_1, %c0_2] : memref<80x64xbf16, #tpu.memory_space<vmem>>, vector<80x64xbf16>
    %c0_3 = arith.constant 0 : index
    %c0_4 = arith.constant 0 : index
    %2 = vector.load %arg3[%c0_3, %c0_4] : memref<1x64xf32, #tpu.memory_space<vmem>>, vector<1x64xf32>
    %cst = arith.constant dense<0.000000e+00> : vector<256x64xf32>
    %3 = tpu.matmul %0, %1, %cst {dimension_numbers = #tpu.dot_dimension_numbers<[1], [0], [0], [1], [0, 0, 1, 1], [], []>} : vector<256x80xbf16>, vector<80x64xbf16>, vector<256x64xf32> -> vector<256x64xf32>
    %4 = vector.broadcast %2 : vector<1x64xf32> to vector<256x64xf32>
    %5 = arith.addf %3, %4 : vector<256x64xf32>
    %cst_5 = arith.constant 0.000000e+00 : f32
    %6 = vector.broadcast %cst_5 : f32 to vector<256x64xf32>
    %7 = arith.maximumf %5, %6 : vector<256x64xf32>
    %8 = arith.truncf %7 : vector<256x64xf32> to vector<256x64xbf16>
    %c0_6 = arith.constant 0 : index
    %c0_7 = arith.constant 0 : index
    %9 = vector.load %arg4[%c0_6, %c0_7] : memref<64x64xbf16, #tpu.memory_space<vmem>>, vector<64x64xbf16>
    %c0_8 = arith.constant 0 : index
    %c0_9 = arith.constant 0 : index
    %10 = vector.load %arg5[%c0_8, %c0_9] : memref<1x64xf32, #tpu.memory_space<vmem>>, vector<1x64xf32>
    %cst_10 = arith.constant dense<0.000000e+00> : vector<256x64xf32>
    %11 = tpu.matmul %8, %9, %cst_10 {dimension_numbers = #tpu.dot_dimension_numbers<[1], [0], [0], [1], [0, 0, 1, 1], [], []>} : vector<256x64xbf16>, vector<64x64xbf16>, vector<256x64xf32> -> vector<256x64xf32>
    %12 = vector.broadcast %10 : vector<1x64xf32> to vector<256x64xf32>
    %13 = arith.addf %11, %12 : vector<256x64xf32>
    %cst_11 = arith.constant 0.000000e+00 : f32
    %14 = vector.broadcast %cst_11 : f32 to vector<256x64xf32>
    %15 = arith.maximumf %13, %14 : vector<256x64xf32>
    %16 = arith.truncf %15 : vector<256x64xf32> to vector<256x64xbf16>
    %c0_12 = arith.constant 0 : index
    %c0_13 = arith.constant 0 : index
    %17 = vector.load %arg6[%c0_12, %c0_13] : memref<64x128xbf16, #tpu.memory_space<vmem>>, vector<64x128xbf16>
    %c0_14 = arith.constant 0 : index
    %c0_15 = arith.constant 0 : index
    %18 = vector.load %arg7[%c0_14, %c0_15] : memref<1x128xf32, #tpu.memory_space<vmem>>, vector<1x128xf32>
    %cst_16 = arith.constant dense<0.000000e+00> : vector<256x128xf32>
    %19 = tpu.matmul %16, %17, %cst_16 {dimension_numbers = #tpu.dot_dimension_numbers<[1], [0], [0], [1], [0, 0, 1, 1], [], []>} : vector<256x64xbf16>, vector<64x128xbf16>, vector<256x128xf32> -> vector<256x128xf32>
    %20 = vector.broadcast %18 : vector<1x128xf32> to vector<256x128xf32>
    %21 = arith.addf %19, %20 : vector<256x128xf32>
    %cst_17 = arith.constant 0.000000e+00 : f32
    %22 = vector.broadcast %cst_17 : f32 to vector<256x128xf32>
    %23 = arith.maximumf %21, %22 : vector<256x128xf32>
    %24 = vector.shape_cast %23 : vector<256x128xf32> to vector<16x16x128xf32>
    %cst_18 = arith.constant dense<0xFF800000> : vector<16x128xf32>
    %25 = vector.multi_reduction <maximumf>, %24, %cst_18 [1] : vector<16x16x128xf32> to vector<16x128xf32>
    %26 = arith.truncf %25 : vector<16x128xf32> to vector<16x128xbf16>
    %c0_19 = arith.constant 0 : index
    %c0_20 = arith.constant 0 : index
    %27 = vector.load %arg8[%c0_19, %c0_20] : memref<16x128xbf16, #tpu.memory_space<vmem>>, vector<16x128xbf16>
    tpu.vector_store %arg8[%c0_19, %c0_20], %26 {strides = array<i32>} : memref<16x128xbf16, #tpu.memory_space<vmem>>, vector<16x128xbf16>,
    return
  }
  func.func @transform_0(%arg0: i32) -> (i32, i32) {
    %c0_i32 = arith.constant 0 : i32
    %c0_i32_0 = arith.constant 0 : i32
    return %arg0, %c0_i32 : i32, i32
  }
  func.func @transform_1(%arg0: i32) -> (i32, i32) {
    %c0_i32 = arith.constant 0 : i32
    %c0_i32_0 = arith.constant 0 : i32
    %c0_i32_1 = arith.constant 0 : i32
    return %c0_i32, %c0_i32_0 : i32, i32
  }
  func.func @transform_2(%arg0: i32) -> (i32, i32) {
    %c0_i32 = arith.constant 0 : i32
    %c0_i32_0 = arith.constant 0 : i32
    %c0_i32_1 = arith.constant 0 : i32
    return %c0_i32, %c0_i32_0 : i32, i32
  }
  func.func @transform_3(%arg0: i32) -> (i32, i32) {
    %c0_i32 = arith.constant 0 : i32
    %c0_i32_0 = arith.constant 0 : i32
    %c0_i32_1 = arith.constant 0 : i32
    return %c0_i32, %c0_i32_0 : i32, i32
  }
  func.func @transform_4(%arg0: i32) -> (i32, i32) {
    %c0_i32 = arith.constant 0 : i32
    %c0_i32_0 = arith.constant 0 : i32
    %c0_i32_1 = arith.constant 0 : i32
    return %c0_i32, %c0_i32_0 : i32, i32
  }
  func.func @transform_5(%arg0: i32) -> (i32, i32) {
    %c0_i32 = arith.constant 0 : i32
    %c0_i32_0 = arith.constant 0 : i32
    %c0_i32_1 = arith.constant 0 : i32
    return %c0_i32, %c0_i32_0 : i32, i32
  }
  func.func @transform_6(%arg0: i32) -> (i32, i32) {
    %c0_i32 = arith.constant 0 : i32
    %c0_i32_0 = arith.constant 0 : i32
    %c0_i32_1 = arith.constant 0 : i32
    return %c0_i32, %c0_i32_0 : i32, i32
  }
  func.func @transform_7(%arg0: i32) -> (i32, i32) {
    %c0_i32 = arith.constant 0 : i32
    %c0_i32_0 = arith.constant 0 : i32
    return %arg0, %c0_i32 : i32, i32
  }
}

module attributes {stable_mosaic.version = 11 : i64} {
  func.func @kernel(%arg0: i32, %arg1: memref<128x144xbf16, #tpu.memory_space<vmem>>, %arg2: memref<144x128xbf16, #tpu.memory_space<vmem>>, %arg3: memref<1x128xf32, #tpu.memory_space<vmem>>, %arg4: memref<128x128xbf16, #tpu.memory_space<vmem>>, %arg5: memref<1x128xf32, #tpu.memory_space<vmem>>, %arg6: memref<128x256xbf16, #tpu.memory_space<vmem>>, %arg7: memref<1x256xf32, #tpu.memory_space<vmem>>, %arg8: memref<8x256xbf16, #tpu.memory_space<vmem>>) attributes {dimension_semantics = [#tpu.dimension_semantics<parallel>], iteration_bounds = array<i64: 2>, scalar_prefetch = 0 : i64, scratch_operands = 0 : i64, tpu.core_type = #tpu.core_type<tc>, window_params = [{transform_indices = @transform_0, window_bounds = array<i64: 128, 144>}, {pipeline_mode = #tpu.pipeline_mode<synchronous>, transform_indices = @transform_1, window_bounds = array<i64: 144, 128>}, {pipeline_mode = #tpu.pipeline_mode<synchronous>, transform_indices = @transform_2, window_bounds = array<i64: 1, 128>}, {pipeline_mode = #tpu.pipeline_mode<synchronous>, transform_indices = @transform_3, window_bounds = array<i64: 128, 128>}, {pipeline_mode = #tpu.pipeline_mode<synchronous>, transform_indices = @transform_4, window_bounds = array<i64: 1, 128>}, {pipeline_mode = #tpu.pipeline_mode<synchronous>, transform_indices = @transform_5, window_bounds = array<i64: 128, 256>}, {pipeline_mode = #tpu.pipeline_mode<synchronous>, transform_indices = @transform_6, window_bounds = array<i64: 1, 256>}, {transform_indices = @transform_7, window_bounds = array<i64: 8, 256>}]} {
    %c0 = arith.constant 0 : index
    %c0_0 = arith.constant 0 : index
    %0 = vector.load %arg1[%c0, %c0_0] : memref<128x144xbf16, #tpu.memory_space<vmem>>, vector<128x144xbf16>
    %c0_1 = arith.constant 0 : index
    %c0_2 = arith.constant 0 : index
    %1 = vector.load %arg2[%c0_1, %c0_2] : memref<144x128xbf16, #tpu.memory_space<vmem>>, vector<144x128xbf16>
    %c0_3 = arith.constant 0 : index
    %c0_4 = arith.constant 0 : index
    %2 = vector.load %arg3[%c0_3, %c0_4] : memref<1x128xf32, #tpu.memory_space<vmem>>, vector<1x128xf32>
    %cst = arith.constant dense<0.000000e+00> : vector<128x128xf32>
    %3 = tpu.matmul %0, %1, %cst {dimension_numbers = #tpu.dot_dimension_numbers<[1], [0], [0], [1], [0, 0, 1, 1], [], []>} : vector<128x144xbf16>, vector<144x128xbf16>, vector<128x128xf32> -> vector<128x128xf32>
    %4 = vector.broadcast %2 : vector<1x128xf32> to vector<128x128xf32>
    %5 = arith.addf %3, %4 : vector<128x128xf32>
    %cst_5 = arith.constant 0.000000e+00 : f32
    %6 = vector.broadcast %cst_5 : f32 to vector<128x128xf32>
    %7 = arith.maximumf %5, %6 : vector<128x128xf32>
    %8 = arith.truncf %7 : vector<128x128xf32> to vector<128x128xbf16>
    %c0_6 = arith.constant 0 : index
    %c0_7 = arith.constant 0 : index
    %9 = vector.load %arg4[%c0_6, %c0_7] : memref<128x128xbf16, #tpu.memory_space<vmem>>, vector<128x128xbf16>
    %c0_8 = arith.constant 0 : index
    %c0_9 = arith.constant 0 : index
    %10 = vector.load %arg5[%c0_8, %c0_9] : memref<1x128xf32, #tpu.memory_space<vmem>>, vector<1x128xf32>
    %cst_10 = arith.constant dense<0.000000e+00> : vector<128x128xf32>
    %11 = tpu.matmul %8, %9, %cst_10 {dimension_numbers = #tpu.dot_dimension_numbers<[1], [0], [0], [1], [0, 0, 1, 1], [], []>} : vector<128x128xbf16>, vector<128x128xbf16>, vector<128x128xf32> -> vector<128x128xf32>
    %12 = vector.broadcast %10 : vector<1x128xf32> to vector<128x128xf32>
    %13 = arith.addf %11, %12 : vector<128x128xf32>
    %cst_11 = arith.constant 0.000000e+00 : f32
    %14 = vector.broadcast %cst_11 : f32 to vector<128x128xf32>
    %15 = arith.maximumf %13, %14 : vector<128x128xf32>
    %16 = arith.truncf %15 : vector<128x128xf32> to vector<128x128xbf16>
    %c0_12 = arith.constant 0 : index
    %c0_13 = arith.constant 0 : index
    %17 = vector.load %arg6[%c0_12, %c0_13] : memref<128x256xbf16, #tpu.memory_space<vmem>>, vector<128x256xbf16>
    %c0_14 = arith.constant 0 : index
    %c0_15 = arith.constant 0 : index
    %18 = vector.load %arg7[%c0_14, %c0_15] : memref<1x256xf32, #tpu.memory_space<vmem>>, vector<1x256xf32>
    %cst_16 = arith.constant dense<0.000000e+00> : vector<128x256xf32>
    %19 = tpu.matmul %16, %17, %cst_16 {dimension_numbers = #tpu.dot_dimension_numbers<[1], [0], [0], [1], [0, 0, 1, 1], [], []>} : vector<128x128xbf16>, vector<128x256xbf16>, vector<128x256xf32> -> vector<128x256xf32>
    %20 = vector.broadcast %18 : vector<1x256xf32> to vector<128x256xf32>
    %21 = arith.addf %19, %20 : vector<128x256xf32>
    %cst_17 = arith.constant 0.000000e+00 : f32
    %22 = vector.broadcast %cst_17 : f32 to vector<128x256xf32>
    %23 = arith.maximumf %21, %22 : vector<128x256xf32>
    %24 = vector.shape_cast %23 : vector<128x256xf32> to vector<8x16x256xf32>
    %cst_18 = arith.constant dense<0xFF800000> : vector<8x256xf32>
    %25 = vector.multi_reduction <maximumf>, %24, %cst_18 [1] : vector<8x16x256xf32> to vector<8x256xf32>
    %26 = arith.truncf %25 : vector<8x256xf32> to vector<8x256xbf16>
    %c0_19 = arith.constant 0 : index
    %c0_20 = arith.constant 0 : index
    %27 = vector.load %arg8[%c0_19, %c0_20] : memref<8x256xbf16, #tpu.memory_space<vmem>>, vector<8x256xbf16>
    tpu.vector_store %arg8[%c0_19, %c0_20], %26 {strides = array<i32>} : memref<8x256xbf16, #tpu.memory_space<vmem>>, vector<8x256xbf16>,
    return
  }
  func.func @transform_0(%arg0: i32) -> (i32, i32) {
    %c0_i32 = arith.constant 0 : i32
    %c0_i32_0 = arith.constant 0 : i32
    return %arg0, %c0_i32 : i32, i32
  }
  func.func @transform_1(%arg0: i32) -> (i32, i32) {
    %c0_i32 = arith.constant 0 : i32
    %c0_i32_0 = arith.constant 0 : i32
    %c0_i32_1 = arith.constant 0 : i32
    return %c0_i32, %c0_i32_0 : i32, i32
  }
  func.func @transform_2(%arg0: i32) -> (i32, i32) {
    %c0_i32 = arith.constant 0 : i32
    %c0_i32_0 = arith.constant 0 : i32
    %c0_i32_1 = arith.constant 0 : i32
    return %c0_i32, %c0_i32_0 : i32, i32
  }
  func.func @transform_3(%arg0: i32) -> (i32, i32) {
    %c0_i32 = arith.constant 0 : i32
    %c0_i32_0 = arith.constant 0 : i32
    %c0_i32_1 = arith.constant 0 : i32
    return %c0_i32, %c0_i32_0 : i32, i32
  }
  func.func @transform_4(%arg0: i32) -> (i32, i32) {
    %c0_i32 = arith.constant 0 : i32
    %c0_i32_0 = arith.constant 0 : i32
    %c0_i32_1 = arith.constant 0 : i32
    return %c0_i32, %c0_i32_0 : i32, i32
  }
  func.func @transform_5(%arg0: i32) -> (i32, i32) {
    %c0_i32 = arith.constant 0 : i32
    %c0_i32_0 = arith.constant 0 : i32
    %c0_i32_1 = arith.constant 0 : i32
    return %c0_i32, %c0_i32_0 : i32, i32
  }
  func.func @transform_6(%arg0: i32) -> (i32, i32) {
    %c0_i32 = arith.constant 0 : i32
    %c0_i32_0 = arith.constant 0 : i32
    %c0_i32_1 = arith.constant 0 : i32
    return %c0_i32, %c0_i32_0 : i32, i32
  }
  func.func @transform_7(%arg0: i32) -> (i32, i32) {
    %c0_i32 = arith.constant 0 : i32
    %c0_i32_0 = arith.constant 0 : i32
    return %arg0, %c0_i32 : i32, i32
  }
}

module attributes {stable_mosaic.version = 11 : i64} {
  func.func @kernel(%arg0: i32, %arg1: memref<128x272xbf16, #tpu.memory_space<vmem>>, %arg2: memref<272x256xbf16, #tpu.memory_space<vmem>>, %arg3: memref<1x256xf32, #tpu.memory_space<vmem>>, %arg4: memref<256x256xbf16, #tpu.memory_space<vmem>>, %arg5: memref<1x256xf32, #tpu.memory_space<vmem>>, %arg6: memref<256x512xbf16, #tpu.memory_space<vmem>>, %arg7: memref<1x512xf32, #tpu.memory_space<vmem>>, %arg8: memref<8x512xbf16, #tpu.memory_space<vmem>>) attributes {dimension_semantics = [#tpu.dimension_semantics<parallel>], iteration_bounds = array<i64: 1>, scalar_prefetch = 0 : i64, scratch_operands = 0 : i64, tpu.core_type = #tpu.core_type<tc>, window_params = [{transform_indices = @transform_0, window_bounds = array<i64: 128, 272>}, {pipeline_mode = #tpu.pipeline_mode<synchronous>, transform_indices = @transform_1, window_bounds = array<i64: 272, 256>}, {pipeline_mode = #tpu.pipeline_mode<synchronous>, transform_indices = @transform_2, window_bounds = array<i64: 1, 256>}, {pipeline_mode = #tpu.pipeline_mode<synchronous>, transform_indices = @transform_3, window_bounds = array<i64: 256, 256>}, {pipeline_mode = #tpu.pipeline_mode<synchronous>, transform_indices = @transform_4, window_bounds = array<i64: 1, 256>}, {pipeline_mode = #tpu.pipeline_mode<synchronous>, transform_indices = @transform_5, window_bounds = array<i64: 256, 512>}, {pipeline_mode = #tpu.pipeline_mode<synchronous>, transform_indices = @transform_6, window_bounds = array<i64: 1, 512>}, {transform_indices = @transform_7, window_bounds = array<i64: 8, 512>}]} {
    %c0 = arith.constant 0 : index
    %c0_0 = arith.constant 0 : index
    %0 = vector.load %arg1[%c0, %c0_0] : memref<128x272xbf16, #tpu.memory_space<vmem>>, vector<128x272xbf16>
    %c0_1 = arith.constant 0 : index
    %c0_2 = arith.constant 0 : index
    %1 = vector.load %arg2[%c0_1, %c0_2] : memref<272x256xbf16, #tpu.memory_space<vmem>>, vector<272x256xbf16>
    %c0_3 = arith.constant 0 : index
    %c0_4 = arith.constant 0 : index
    %2 = vector.load %arg3[%c0_3, %c0_4] : memref<1x256xf32, #tpu.memory_space<vmem>>, vector<1x256xf32>
    %cst = arith.constant dense<0.000000e+00> : vector<128x256xf32>
    %3 = tpu.matmul %0, %1, %cst {dimension_numbers = #tpu.dot_dimension_numbers<[1], [0], [0], [1], [0, 0, 1, 1], [], []>} : vector<128x272xbf16>, vector<272x256xbf16>, vector<128x256xf32> -> vector<128x256xf32>
    %4 = vector.broadcast %2 : vector<1x256xf32> to vector<128x256xf32>
    %5 = arith.addf %3, %4 : vector<128x256xf32>
    %cst_5 = arith.constant 0.000000e+00 : f32
    %6 = vector.broadcast %cst_5 : f32 to vector<128x256xf32>
    %7 = arith.maximumf %5, %6 : vector<128x256xf32>
    %8 = arith.truncf %7 : vector<128x256xf32> to vector<128x256xbf16>
    %c0_6 = arith.constant 0 : index
    %c0_7 = arith.constant 0 : index
    %9 = vector.load %arg4[%c0_6, %c0_7] : memref<256x256xbf16, #tpu.memory_space<vmem>>, vector<256x256xbf16>
    %c0_8 = arith.constant 0 : index
    %c0_9 = arith.constant 0 : index
    %10 = vector.load %arg5[%c0_8, %c0_9] : memref<1x256xf32, #tpu.memory_space<vmem>>, vector<1x256xf32>
    %cst_10 = arith.constant dense<0.000000e+00> : vector<128x256xf32>
    %11 = tpu.matmul %8, %9, %cst_10 {dimension_numbers = #tpu.dot_dimension_numbers<[1], [0], [0], [1], [0, 0, 1, 1], [], []>} : vector<128x256xbf16>, vector<256x256xbf16>, vector<128x256xf32> -> vector<128x256xf32>
    %12 = vector.broadcast %10 : vector<1x256xf32> to vector<128x256xf32>
    %13 = arith.addf %11, %12 : vector<128x256xf32>
    %cst_11 = arith.constant 0.000000e+00 : f32
    %14 = vector.broadcast %cst_11 : f32 to vector<128x256xf32>
    %15 = arith.maximumf %13, %14 : vector<128x256xf32>
    %16 = arith.truncf %15 : vector<128x256xf32> to vector<128x256xbf16>
    %c0_12 = arith.constant 0 : index
    %c0_13 = arith.constant 0 : index
    %17 = vector.load %arg6[%c0_12, %c0_13] : memref<256x512xbf16, #tpu.memory_space<vmem>>, vector<256x512xbf16>
    %c0_14 = arith.constant 0 : index
    %c0_15 = arith.constant 0 : index
    %18 = vector.load %arg7[%c0_14, %c0_15] : memref<1x512xf32, #tpu.memory_space<vmem>>, vector<1x512xf32>
    %cst_16 = arith.constant dense<0.000000e+00> : vector<128x512xf32>
    %19 = tpu.matmul %16, %17, %cst_16 {dimension_numbers = #tpu.dot_dimension_numbers<[1], [0], [0], [1], [0, 0, 1, 1], [], []>} : vector<128x256xbf16>, vector<256x512xbf16>, vector<128x512xf32> -> vector<128x512xf32>
    %20 = vector.broadcast %18 : vector<1x512xf32> to vector<128x512xf32>
    %21 = arith.addf %19, %20 : vector<128x512xf32>
    %cst_17 = arith.constant 0.000000e+00 : f32
    %22 = vector.broadcast %cst_17 : f32 to vector<128x512xf32>
    %23 = arith.maximumf %21, %22 : vector<128x512xf32>
    %24 = vector.shape_cast %23 : vector<128x512xf32> to vector<8x16x512xf32>
    %cst_18 = arith.constant dense<0xFF800000> : vector<8x512xf32>
    %25 = vector.multi_reduction <maximumf>, %24, %cst_18 [1] : vector<8x16x512xf32> to vector<8x512xf32>
    %26 = arith.truncf %25 : vector<8x512xf32> to vector<8x512xbf16>
    %c0_19 = arith.constant 0 : index
    %c0_20 = arith.constant 0 : index
    %27 = vector.load %arg8[%c0_19, %c0_20] : memref<8x512xbf16, #tpu.memory_space<vmem>>, vector<8x512xbf16>
    tpu.vector_store %arg8[%c0_19, %c0_20], %26 {strides = array<i32>} : memref<8x512xbf16, #tpu.memory_space<vmem>>, vector<8x512xbf16>,
    return
  }
  func.func @transform_0(%arg0: i32) -> (i32, i32) {
    %c0_i32 = arith.constant 0 : i32
    %c0_i32_0 = arith.constant 0 : i32
    return %arg0, %c0_i32 : i32, i32
  }
  func.func @transform_1(%arg0: i32) -> (i32, i32) {
    %c0_i32 = arith.constant 0 : i32
    %c0_i32_0 = arith.constant 0 : i32
    %c0_i32_1 = arith.constant 0 : i32
    return %c0_i32, %c0_i32_0 : i32, i32
  }
  func.func @transform_2(%arg0: i32) -> (i32, i32) {
    %c0_i32 = arith.constant 0 : i32
    %c0_i32_0 = arith.constant 0 : i32
    %c0_i32_1 = arith.constant 0 : i32
    return %c0_i32, %c0_i32_0 : i32, i32
  }
  func.func @transform_3(%arg0: i32) -> (i32, i32) {
    %c0_i32 = arith.constant 0 : i32
    %c0_i32_0 = arith.constant 0 : i32
    %c0_i32_1 = arith.constant 0 : i32
    return %c0_i32, %c0_i32_0 : i32, i32
  }
  func.func @transform_4(%arg0: i32) -> (i32, i32) {
    %c0_i32 = arith.constant 0 : i32
    %c0_i32_0 = arith.constant 0 : i32
    %c0_i32_1 = arith.constant 0 : i32
    return %c0_i32, %c0_i32_0 : i32, i32
  }
  func.func @transform_5(%arg0: i32) -> (i32, i32) {
    %c0_i32 = arith.constant 0 : i32
    %c0_i32_0 = arith.constant 0 : i32
    %c0_i32_1 = arith.constant 0 : i32
    return %c0_i32, %c0_i32_0 : i32, i32
  }
  func.func @transform_6(%arg0: i32) -> (i32, i32) {
    %c0_i32 = arith.constant 0 : i32
    %c0_i32_0 = arith.constant 0 : i32
    %c0_i32_1 = arith.constant 0 : i32
    return %c0_i32, %c0_i32_0 : i32, i32
  }
  func.func @transform_7(%arg0: i32) -> (i32, i32) {
    %c0_i32 = arith.constant 0 : i32
    %c0_i32_0 = arith.constant 0 : i32
    return %arg0, %c0_i32 : i32, i32
  }
}

module attributes {stable_mosaic.version = 11 : i64} {
  func.func @kernel(%arg0: i32, %arg1: memref<8x768xbf16, #tpu.memory_space<vmem>>, %arg2: memref<768x256xbf16, #tpu.memory_space<vmem>>, %arg3: memref<1x256xf32, #tpu.memory_space<vmem>>, %arg4: memref<256x256xbf16, #tpu.memory_space<vmem>>, %arg5: memref<1x256xf32, #tpu.memory_space<vmem>>, %arg6: memref<8x256xbf16, #tpu.memory_space<vmem>>) attributes {dimension_semantics = [#tpu.dimension_semantics<parallel>], iteration_bounds = array<i64: 2>, scalar_prefetch = 0 : i64, scratch_operands = 0 : i64, tpu.core_type = #tpu.core_type<tc>, window_params = [{transform_indices = @transform_0, window_bounds = array<i64: 8, 768>}, {pipeline_mode = #tpu.pipeline_mode<synchronous>, transform_indices = @transform_1, window_bounds = array<i64: 768, 256>}, {pipeline_mode = #tpu.pipeline_mode<synchronous>, transform_indices = @transform_2, window_bounds = array<i64: 1, 256>}, {pipeline_mode = #tpu.pipeline_mode<synchronous>, transform_indices = @transform_3, window_bounds = array<i64: 256, 256>}, {pipeline_mode = #tpu.pipeline_mode<synchronous>, transform_indices = @transform_4, window_bounds = array<i64: 1, 256>}, {transform_indices = @transform_5, window_bounds = array<i64: 8, 256>}]} {
    %c0 = arith.constant 0 : index
    %c0_0 = arith.constant 0 : index
    %0 = vector.load %arg1[%c0, %c0_0] : memref<8x768xbf16, #tpu.memory_space<vmem>>, vector<8x768xbf16>
    %c0_1 = arith.constant 0 : index
    %c0_2 = arith.constant 0 : index
    %1 = vector.load %arg2[%c0_1, %c0_2] : memref<768x256xbf16, #tpu.memory_space<vmem>>, vector<768x256xbf16>
    %c0_3 = arith.constant 0 : index
    %c0_4 = arith.constant 0 : index
    %2 = vector.load %arg3[%c0_3, %c0_4] : memref<1x256xf32, #tpu.memory_space<vmem>>, vector<1x256xf32>
    %cst = arith.constant dense<0.000000e+00> : vector<8x256xf32>
    %3 = tpu.matmul %0, %1, %cst {dimension_numbers = #tpu.dot_dimension_numbers<[1], [0], [0], [1], [0, 0, 1, 1], [], []>} : vector<8x768xbf16>, vector<768x256xbf16>, vector<8x256xf32> -> vector<8x256xf32>
    %4 = vector.broadcast %2 : vector<1x256xf32> to vector<8x256xf32>
    %5 = arith.addf %3, %4 : vector<8x256xf32>
    %cst_5 = arith.constant 0.000000e+00 : f32
    %6 = vector.broadcast %cst_5 : f32 to vector<8x256xf32>
    %7 = arith.maximumf %5, %6 : vector<8x256xf32>
    %8 = arith.truncf %7 : vector<8x256xf32> to vector<8x256xbf16>
    %c0_6 = arith.constant 0 : index
    %c0_7 = arith.constant 0 : index
    %9 = vector.load %arg4[%c0_6, %c0_7] : memref<256x256xbf16, #tpu.memory_space<vmem>>, vector<256x256xbf16>
    %c0_8 = arith.constant 0 : index
    %c0_9 = arith.constant 0 : index
    %10 = vector.load %arg5[%c0_8, %c0_9] : memref<1x256xf32, #tpu.memory_space<vmem>>, vector<1x256xf32>
    %cst_10 = arith.constant dense<0.000000e+00> : vector<8x256xf32>
    %11 = tpu.matmul %8, %9, %cst_10 {dimension_numbers = #tpu.dot_dimension_numbers<[1], [0], [0], [1], [0, 0, 1, 1], [], []>} : vector<8x256xbf16>, vector<256x256xbf16>, vector<8x256xf32> -> vector<8x256xf32>
    %12 = vector.broadcast %10 : vector<1x256xf32> to vector<8x256xf32>
    %13 = arith.addf %11, %12 : vector<8x256xf32>
    %cst_11 = arith.constant 0.000000e+00 : f32
    %14 = vector.broadcast %cst_11 : f32 to vector<8x256xf32>
    %15 = arith.maximumf %13, %14 : vector<8x256xf32>
    %16 = arith.truncf %15 : vector<8x256xf32> to vector<8x256xbf16>
    %c0_12 = arith.constant 0 : index
    %c0_13 = arith.constant 0 : index
    %17 = vector.load %arg6[%c0_12, %c0_13] : memref<8x256xbf16, #tpu.memory_space<vmem>>, vector<8x256xbf16>
    tpu.vector_store %arg6[%c0_12, %c0_13], %16 {strides = array<i32>} : memref<8x256xbf16, #tpu.memory_space<vmem>>, vector<8x256xbf16>,
    return
  }
  func.func @transform_0(%arg0: i32) -> (i32, i32) {
    %c0_i32 = arith.constant 0 : i32
    %c0_i32_0 = arith.constant 0 : i32
    return %arg0, %c0_i32 : i32, i32
  }
  func.func @transform_1(%arg0: i32) -> (i32, i32) {
    %c0_i32 = arith.constant 0 : i32
    %c0_i32_0 = arith.constant 0 : i32
    %c0_i32_1 = arith.constant 0 : i32
    return %c0_i32, %c0_i32_0 : i32, i32
  }
  func.func @transform_2(%arg0: i32) -> (i32, i32) {
    %c0_i32 = arith.constant 0 : i32
    %c0_i32_0 = arith.constant 0 : i32
    %c0_i32_1 = arith.constant 0 : i32
    return %c0_i32, %c0_i32_0 : i32, i32
  }
  func.func @transform_3(%arg0: i32) -> (i32, i32) {
    %c0_i32 = arith.constant 0 : i32
    %c0_i32_0 = arith.constant 0 : i32
    %c0_i32_1 = arith.constant 0 : i32
    return %c0_i32, %c0_i32_0 : i32, i32
  }
  func.func @transform_4(%arg0: i32) -> (i32, i32) {
    %c0_i32 = arith.constant 0 : i32
    %c0_i32_0 = arith.constant 0 : i32
    %c0_i32_1 = arith.constant 0 : i32
    return %c0_i32, %c0_i32_0 : i32, i32
  }
  func.func @transform_5(%arg0: i32) -> (i32, i32) {
    %c0_i32 = arith.constant 0 : i32
    %c0_i32_0 = arith.constant 0 : i32
    return %arg0, %c0_i32 : i32, i32
  }
}

module attributes {stable_mosaic.version = 11 : i64} {
  func.func @kernel(%arg0: i32, %arg1: memref<16x384xbf16, #tpu.memory_space<vmem>>, %arg2: memref<384x256xbf16, #tpu.memory_space<vmem>>, %arg3: memref<1x256xf32, #tpu.memory_space<vmem>>, %arg4: memref<256x256xbf16, #tpu.memory_space<vmem>>, %arg5: memref<1x256xf32, #tpu.memory_space<vmem>>, %arg6: memref<16x256xbf16, #tpu.memory_space<vmem>>) attributes {dimension_semantics = [#tpu.dimension_semantics<parallel>], iteration_bounds = array<i64: 2>, scalar_prefetch = 0 : i64, scratch_operands = 0 : i64, tpu.core_type = #tpu.core_type<tc>, window_params = [{transform_indices = @transform_0, window_bounds = array<i64: 16, 384>}, {pipeline_mode = #tpu.pipeline_mode<synchronous>, transform_indices = @transform_1, window_bounds = array<i64: 384, 256>}, {pipeline_mode = #tpu.pipeline_mode<synchronous>, transform_indices = @transform_2, window_bounds = array<i64: 1, 256>}, {pipeline_mode = #tpu.pipeline_mode<synchronous>, transform_indices = @transform_3, window_bounds = array<i64: 256, 256>}, {pipeline_mode = #tpu.pipeline_mode<synchronous>, transform_indices = @transform_4, window_bounds = array<i64: 1, 256>}, {transform_indices = @transform_5, window_bounds = array<i64: 16, 256>}]} {
    %c0 = arith.constant 0 : index
    %c0_0 = arith.constant 0 : index
    %0 = vector.load %arg1[%c0, %c0_0] : memref<16x384xbf16, #tpu.memory_space<vmem>>, vector<16x384xbf16>
    %c0_1 = arith.constant 0 : index
    %c0_2 = arith.constant 0 : index
    %1 = vector.load %arg2[%c0_1, %c0_2] : memref<384x256xbf16, #tpu.memory_space<vmem>>, vector<384x256xbf16>
    %c0_3 = arith.constant 0 : index
    %c0_4 = arith.constant 0 : index
    %2 = vector.load %arg3[%c0_3, %c0_4] : memref<1x256xf32, #tpu.memory_space<vmem>>, vector<1x256xf32>
    %cst = arith.constant dense<0.000000e+00> : vector<16x256xf32>
    %3 = tpu.matmul %0, %1, %cst {dimension_numbers = #tpu.dot_dimension_numbers<[1], [0], [0], [1], [0, 0, 1, 1], [], []>} : vector<16x384xbf16>, vector<384x256xbf16>, vector<16x256xf32> -> vector<16x256xf32>
    %4 = vector.broadcast %2 : vector<1x256xf32> to vector<16x256xf32>
    %5 = arith.addf %3, %4 : vector<16x256xf32>
    %cst_5 = arith.constant 0.000000e+00 : f32
    %6 = vector.broadcast %cst_5 : f32 to vector<16x256xf32>
    %7 = arith.maximumf %5, %6 : vector<16x256xf32>
    %8 = arith.truncf %7 : vector<16x256xf32> to vector<16x256xbf16>
    %c0_6 = arith.constant 0 : index
    %c0_7 = arith.constant 0 : index
    %9 = vector.load %arg4[%c0_6, %c0_7] : memref<256x256xbf16, #tpu.memory_space<vmem>>, vector<256x256xbf16>
    %c0_8 = arith.constant 0 : index
    %c0_9 = arith.constant 0 : index
    %10 = vector.load %arg5[%c0_8, %c0_9] : memref<1x256xf32, #tpu.memory_space<vmem>>, vector<1x256xf32>
    %cst_10 = arith.constant dense<0.000000e+00> : vector<16x256xf32>
    %11 = tpu.matmul %8, %9, %cst_10 {dimension_numbers = #tpu.dot_dimension_numbers<[1], [0], [0], [1], [0, 0, 1, 1], [], []>} : vector<16x256xbf16>, vector<256x256xbf16>, vector<16x256xf32> -> vector<16x256xf32>
    %12 = vector.broadcast %10 : vector<1x256xf32> to vector<16x256xf32>
    %13 = arith.addf %11, %12 : vector<16x256xf32>
    %cst_11 = arith.constant 0.000000e+00 : f32
    %14 = vector.broadcast %cst_11 : f32 to vector<16x256xf32>
    %15 = arith.maximumf %13, %14 : vector<16x256xf32>
    %16 = arith.truncf %15 : vector<16x256xf32> to vector<16x256xbf16>
    %c0_12 = arith.constant 0 : index
    %c0_13 = arith.constant 0 : index
    %17 = vector.load %arg6[%c0_12, %c0_13] : memref<16x256xbf16, #tpu.memory_space<vmem>>, vector<16x256xbf16>
    tpu.vector_store %arg6[%c0_12, %c0_13], %16 {strides = array<i32>} : memref<16x256xbf16, #tpu.memory_space<vmem>>, vector<16x256xbf16>,
    return
  }
  func.func @transform_0(%arg0: i32) -> (i32, i32) {
    %c0_i32 = arith.constant 0 : i32
    %c0_i32_0 = arith.constant 0 : i32
    return %arg0, %c0_i32 : i32, i32
  }
  func.func @transform_1(%arg0: i32) -> (i32, i32) {
    %c0_i32 = arith.constant 0 : i32
    %c0_i32_0 = arith.constant 0 : i32
    %c0_i32_1 = arith.constant 0 : i32
    return %c0_i32, %c0_i32_0 : i32, i32
  }
  func.func @transform_2(%arg0: i32) -> (i32, i32) {
    %c0_i32 = arith.constant 0 : i32
    %c0_i32_0 = arith.constant 0 : i32
    %c0_i32_1 = arith.constant 0 : i32
    return %c0_i32, %c0_i32_0 : i32, i32
  }
  func.func @transform_3(%arg0: i32) -> (i32, i32) {
    %c0_i32 = arith.constant 0 : i32
    %c0_i32_0 = arith.constant 0 : i32
    %c0_i32_1 = arith.constant 0 : i32
    return %c0_i32, %c0_i32_0 : i32, i32
  }
  func.func @transform_4(%arg0: i32) -> (i32, i32) {
    %c0_i32 = arith.constant 0 : i32
    %c0_i32_0 = arith.constant 0 : i32
    %c0_i32_1 = arith.constant 0 : i32
    return %c0_i32, %c0_i32_0 : i32, i32
  }
  func.func @transform_5(%arg0: i32) -> (i32, i32) {
    %c0_i32 = arith.constant 0 : i32
    %c0_i32_0 = arith.constant 0 : i32
    return %arg0, %c0_i32 : i32, i32
  }
}

module attributes {stable_mosaic.version = 11 : i64} {
  func.func @kernel(%arg0: i32, %arg1: memref<32x320xbf16, #tpu.memory_space<vmem>>, %arg2: memref<320x256xbf16, #tpu.memory_space<vmem>>, %arg3: memref<1x256xf32, #tpu.memory_space<vmem>>, %arg4: memref<256x128xbf16, #tpu.memory_space<vmem>>, %arg5: memref<1x128xf32, #tpu.memory_space<vmem>>, %arg6: memref<32x128xbf16, #tpu.memory_space<vmem>>) attributes {dimension_semantics = [#tpu.dimension_semantics<parallel>], iteration_bounds = array<i64: 2>, scalar_prefetch = 0 : i64, scratch_operands = 0 : i64, tpu.core_type = #tpu.core_type<tc>, window_params = [{transform_indices = @transform_0, window_bounds = array<i64: 32, 320>}, {pipeline_mode = #tpu.pipeline_mode<synchronous>, transform_indices = @transform_1, window_bounds = array<i64: 320, 256>}, {pipeline_mode = #tpu.pipeline_mode<synchronous>, transform_indices = @transform_2, window_bounds = array<i64: 1, 256>}, {pipeline_mode = #tpu.pipeline_mode<synchronous>, transform_indices = @transform_3, window_bounds = array<i64: 256, 128>}, {pipeline_mode = #tpu.pipeline_mode<synchronous>, transform_indices = @transform_4, window_bounds = array<i64: 1, 128>}, {transform_indices = @transform_5, window_bounds = array<i64: 32, 128>}]} {
    %c0 = arith.constant 0 : index
    %c0_0 = arith.constant 0 : index
    %0 = vector.load %arg1[%c0, %c0_0] : memref<32x320xbf16, #tpu.memory_space<vmem>>, vector<32x320xbf16>
    %c0_1 = arith.constant 0 : index
    %c0_2 = arith.constant 0 : index
    %1 = vector.load %arg2[%c0_1, %c0_2] : memref<320x256xbf16, #tpu.memory_space<vmem>>, vector<320x256xbf16>
    %c0_3 = arith.constant 0 : index
    %c0_4 = arith.constant 0 : index
    %2 = vector.load %arg3[%c0_3, %c0_4] : memref<1x256xf32, #tpu.memory_space<vmem>>, vector<1x256xf32>
    %cst = arith.constant dense<0.000000e+00> : vector<32x256xf32>
    %3 = tpu.matmul %0, %1, %cst {dimension_numbers = #tpu.dot_dimension_numbers<[1], [0], [0], [1], [0, 0, 1, 1], [], []>} : vector<32x320xbf16>, vector<320x256xbf16>, vector<32x256xf32> -> vector<32x256xf32>
    %4 = vector.broadcast %2 : vector<1x256xf32> to vector<32x256xf32>
    %5 = arith.addf %3, %4 : vector<32x256xf32>
    %cst_5 = arith.constant 0.000000e+00 : f32
    %6 = vector.broadcast %cst_5 : f32 to vector<32x256xf32>
    %7 = arith.maximumf %5, %6 : vector<32x256xf32>
    %8 = arith.truncf %7 : vector<32x256xf32> to vector<32x256xbf16>
    %c0_6 = arith.constant 0 : index
    %c0_7 = arith.constant 0 : index
    %9 = vector.load %arg4[%c0_6, %c0_7] : memref<256x128xbf16, #tpu.memory_space<vmem>>, vector<256x128xbf16>
    %c0_8 = arith.constant 0 : index
    %c0_9 = arith.constant 0 : index
    %10 = vector.load %arg5[%c0_8, %c0_9] : memref<1x128xf32, #tpu.memory_space<vmem>>, vector<1x128xf32>
    %cst_10 = arith.constant dense<0.000000e+00> : vector<32x128xf32>
    %11 = tpu.matmul %8, %9, %cst_10 {dimension_numbers = #tpu.dot_dimension_numbers<[1], [0], [0], [1], [0, 0, 1, 1], [], []>} : vector<32x256xbf16>, vector<256x128xbf16>, vector<32x128xf32> -> vector<32x128xf32>
    %12 = vector.broadcast %10 : vector<1x128xf32> to vector<32x128xf32>
    %13 = arith.addf %11, %12 : vector<32x128xf32>
    %cst_11 = arith.constant 0.000000e+00 : f32
    %14 = vector.broadcast %cst_11 : f32 to vector<32x128xf32>
    %15 = arith.maximumf %13, %14 : vector<32x128xf32>
    %16 = arith.truncf %15 : vector<32x128xf32> to vector<32x128xbf16>
    %c0_12 = arith.constant 0 : index
    %c0_13 = arith.constant 0 : index
    %17 = vector.load %arg6[%c0_12, %c0_13] : memref<32x128xbf16, #tpu.memory_space<vmem>>, vector<32x128xbf16>
    tpu.vector_store %arg6[%c0_12, %c0_13], %16 {strides = array<i32>} : memref<32x128xbf16, #tpu.memory_space<vmem>>, vector<32x128xbf16>,
    return
  }
  func.func @transform_0(%arg0: i32) -> (i32, i32) {
    %c0_i32 = arith.constant 0 : i32
    %c0_i32_0 = arith.constant 0 : i32
    return %arg0, %c0_i32 : i32, i32
  }
  func.func @transform_1(%arg0: i32) -> (i32, i32) {
    %c0_i32 = arith.constant 0 : i32
    %c0_i32_0 = arith.constant 0 : i32
    %c0_i32_1 = arith.constant 0 : i32
    return %c0_i32, %c0_i32_0 : i32, i32
  }
  func.func @transform_2(%arg0: i32) -> (i32, i32) {
    %c0_i32 = arith.constant 0 : i32
    %c0_i32_0 = arith.constant 0 : i32
    %c0_i32_1 = arith.constant 0 : i32
    return %c0_i32, %c0_i32_0 : i32, i32
  }
  func.func @transform_3(%arg0: i32) -> (i32, i32) {
    %c0_i32 = arith.constant 0 : i32
    %c0_i32_0 = arith.constant 0 : i32
    %c0_i32_1 = arith.constant 0 : i32
    return %c0_i32, %c0_i32_0 : i32, i32
  }
  func.func @transform_4(%arg0: i32) -> (i32, i32) {
    %c0_i32 = arith.constant 0 : i32
    %c0_i32_0 = arith.constant 0 : i32
    %c0_i32_1 = arith.constant 0 : i32
    return %c0_i32, %c0_i32_0 : i32, i32
  }
  func.func @transform_5(%arg0: i32) -> (i32, i32) {
    %c0_i32 = arith.constant 0 : i32
    %c0_i32_0 = arith.constant 0 : i32
    return %arg0, %c0_i32 : i32, i32
  }
}

module attributes {stable_mosaic.version = 11 : i64} {
  func.func @kernel(%arg0: i32, %arg1: memref<64x144xbf16, #tpu.memory_space<vmem>>, %arg2: memref<144x128xbf16, #tpu.memory_space<vmem>>, %arg3: memref<1x128xf32, #tpu.memory_space<vmem>>, %arg4: memref<128x128xbf16, #tpu.memory_space<vmem>>, %arg5: memref<1x128xf32, #tpu.memory_space<vmem>>, %arg6: memref<128x128xbf16, #tpu.memory_space<vmem>>, %arg7: memref<1x128xf32, #tpu.memory_space<vmem>>, %arg8: memref<64x128xf32, #tpu.memory_space<vmem>>) attributes {dimension_semantics = [#tpu.dimension_semantics<parallel>], iteration_bounds = array<i64: 2>, scalar_prefetch = 0 : i64, scratch_operands = 0 : i64, tpu.core_type = #tpu.core_type<tc>, window_params = [{transform_indices = @transform_0, window_bounds = array<i64: 64, 144>}, {pipeline_mode = #tpu.pipeline_mode<synchronous>, transform_indices = @transform_1, window_bounds = array<i64: 144, 128>}, {pipeline_mode = #tpu.pipeline_mode<synchronous>, transform_indices = @transform_2, window_bounds = array<i64: 1, 128>}, {pipeline_mode = #tpu.pipeline_mode<synchronous>, transform_indices = @transform_3, window_bounds = array<i64: 128, 128>}, {pipeline_mode = #tpu.pipeline_mode<synchronous>, transform_indices = @transform_4, window_bounds = array<i64: 1, 128>}, {pipeline_mode = #tpu.pipeline_mode<synchronous>, transform_indices = @transform_5, window_bounds = array<i64: 128, 128>}, {pipeline_mode = #tpu.pipeline_mode<synchronous>, transform_indices = @transform_6, window_bounds = array<i64: 1, 128>}, {transform_indices = @transform_7, window_bounds = array<i64: 64, 128>}]} {
    %c0 = arith.constant 0 : index
    %c0_0 = arith.constant 0 : index
    %0 = vector.load %arg1[%c0, %c0_0] : memref<64x144xbf16, #tpu.memory_space<vmem>>, vector<64x144xbf16>
    %c0_1 = arith.constant 0 : index
    %c0_2 = arith.constant 0 : index
    %1 = vector.load %arg2[%c0_1, %c0_2] : memref<144x128xbf16, #tpu.memory_space<vmem>>, vector<144x128xbf16>
    %c0_3 = arith.constant 0 : index
    %c0_4 = arith.constant 0 : index
    %2 = vector.load %arg3[%c0_3, %c0_4] : memref<1x128xf32, #tpu.memory_space<vmem>>, vector<1x128xf32>
    %cst = arith.constant dense<0.000000e+00> : vector<64x128xf32>
    %3 = tpu.matmul %0, %1, %cst {dimension_numbers = #tpu.dot_dimension_numbers<[1], [0], [0], [1], [0, 0, 1, 1], [], []>} : vector<64x144xbf16>, vector<144x128xbf16>, vector<64x128xf32> -> vector<64x128xf32>
    %4 = vector.broadcast %2 : vector<1x128xf32> to vector<64x128xf32>
    %5 = arith.addf %3, %4 : vector<64x128xf32>
    %cst_5 = arith.constant 0.000000e+00 : f32
    %6 = vector.broadcast %cst_5 : f32 to vector<64x128xf32>
    %7 = arith.maximumf %5, %6 : vector<64x128xf32>
    %8 = arith.truncf %7 : vector<64x128xf32> to vector<64x128xbf16>
    %c0_6 = arith.constant 0 : index
    %c0_7 = arith.constant 0 : index
    %9 = vector.load %arg4[%c0_6, %c0_7] : memref<128x128xbf16, #tpu.memory_space<vmem>>, vector<128x128xbf16>
    %c0_8 = arith.constant 0 : index
    %c0_9 = arith.constant 0 : index
    %10 = vector.load %arg5[%c0_8, %c0_9] : memref<1x128xf32, #tpu.memory_space<vmem>>, vector<1x128xf32>
    %cst_10 = arith.constant dense<0.000000e+00> : vector<64x128xf32>
    %11 = tpu.matmul %8, %9, %cst_10 {dimension_numbers = #tpu.dot_dimension_numbers<[1], [0], [0], [1], [0, 0, 1, 1], [], []>} : vector<64x128xbf16>, vector<128x128xbf16>, vector<64x128xf32> -> vector<64x128xf32>
    %12 = vector.broadcast %10 : vector<1x128xf32> to vector<64x128xf32>
    %13 = arith.addf %11, %12 : vector<64x128xf32>
    %cst_11 = arith.constant 0.000000e+00 : f32
    %14 = vector.broadcast %cst_11 : f32 to vector<64x128xf32>
    %15 = arith.maximumf %13, %14 : vector<64x128xf32>
    %16 = arith.truncf %15 : vector<64x128xf32> to vector<64x128xbf16>
    %c0_12 = arith.constant 0 : index
    %c0_13 = arith.constant 0 : index
    %17 = vector.load %arg6[%c0_12, %c0_13] : memref<128x128xbf16, #tpu.memory_space<vmem>>, vector<128x128xbf16>
    %c0_14 = arith.constant 0 : index
    %c0_15 = arith.constant 0 : index
    %18 = vector.load %arg7[%c0_14, %c0_15] : memref<1x128xf32, #tpu.memory_space<vmem>>, vector<1x128xf32>
    %cst_16 = arith.constant dense<0.000000e+00> : vector<64x128xf32>
    %19 = tpu.matmul %16, %17, %cst_16 {dimension_numbers = #tpu.dot_dimension_numbers<[1], [0], [0], [1], [0, 0, 1, 1], [], []>} : vector<64x128xbf16>, vector<128x128xbf16>, vector<64x128xf32> -> vector<64x128xf32>
    %20 = vector.broadcast %18 : vector<1x128xf32> to vector<64x128xf32>
    %21 = arith.addf %19, %20 : vector<64x128xf32>
    %cst_17 = arith.constant 0.000000e+00 : f32
    %22 = vector.broadcast %cst_17 : f32 to vector<64x128xf32>
    %23 = arith.maximumf %21, %22 : vector<64x128xf32>
    %c0_18 = arith.constant 0 : index
    %c0_19 = arith.constant 0 : index
    %24 = vector.load %arg8[%c0_18, %c0_19] : memref<64x128xf32, #tpu.memory_space<vmem>>, vector<64x128xf32>
    tpu.vector_store %arg8[%c0_18, %c0_19], %23 {strides = array<i32>} : memref<64x128xf32, #tpu.memory_space<vmem>>, vector<64x128xf32>,
    return
  }
  func.func @transform_0(%arg0: i32) -> (i32, i32) {
    %c0_i32 = arith.constant 0 : i32
    %c0_i32_0 = arith.constant 0 : i32
    return %arg0, %c0_i32 : i32, i32
  }
  func.func @transform_1(%arg0: i32) -> (i32, i32) {
    %c0_i32 = arith.constant 0 : i32
    %c0_i32_0 = arith.constant 0 : i32
    %c0_i32_1 = arith.constant 0 : i32
    return %c0_i32, %c0_i32_0 : i32, i32
  }
  func.func @transform_2(%arg0: i32) -> (i32, i32) {
    %c0_i32 = arith.constant 0 : i32
    %c0_i32_0 = arith.constant 0 : i32
    %c0_i32_1 = arith.constant 0 : i32
    return %c0_i32, %c0_i32_0 : i32, i32
  }
  func.func @transform_3(%arg0: i32) -> (i32, i32) {
    %c0_i32 = arith.constant 0 : i32
    %c0_i32_0 = arith.constant 0 : i32
    %c0_i32_1 = arith.constant 0 : i32
    return %c0_i32, %c0_i32_0 : i32, i32
  }
  func.func @transform_4(%arg0: i32) -> (i32, i32) {
    %c0_i32 = arith.constant 0 : i32
    %c0_i32_0 = arith.constant 0 : i32
    %c0_i32_1 = arith.constant 0 : i32
    return %c0_i32, %c0_i32_0 : i32, i32
  }
  func.func @transform_5(%arg0: i32) -> (i32, i32) {
    %c0_i32 = arith.constant 0 : i32
    %c0_i32_0 = arith.constant 0 : i32
    %c0_i32_1 = arith.constant 0 : i32
    return %c0_i32, %c0_i32_0 : i32, i32
  }
  func.func @transform_6(%arg0: i32) -> (i32, i32) {
    %c0_i32 = arith.constant 0 : i32
    %c0_i32_0 = arith.constant 0 : i32
    %c0_i32_1 = arith.constant 0 : i32
    return %c0_i32, %c0_i32_0 : i32, i32
  }
  func.func @transform_7(%arg0: i32) -> (i32, i32) {
    %c0_i32 = arith.constant 0 : i32
    %c0_i32_0 = arith.constant 0 : i32
    return %arg0, %c0_i32 : i32, i32
  }
}

</mosaic_0001>

<llo_original>
// kernel: custom-call.40
$region0: #{custom-call.40}
  %s0 = inlined_call_operand.vmem [shape: f32[2,64], index: 0, kind: output, shape index: {}]

// kernel: custom-call.41
$region0: #{custom-call.41}
  %s0 = inlined_call_operand.vmem [shape: f32[2,32], index: 0, kind: output, shape index: {}]

// kernel: custom-call.42
$region0: #{custom-call.42}
  %s0 = inlined_call_operand.vmem [shape: f32[2,16], index: 0, kind: output, shape index: {}]

// kernel: custom-call.43
$region0: #{custom-call.43}
  %s0 = inlined_call_operand.vmem [shape: f32[2,8], index: 0, kind: output, shape index: {}]

// kernel: neg.23
$region0: #{neg.23}
  #allocation0 [shape = 's32[1]{0}', space=sflag, size = 0x4, scoped, tag = 'scoped memory for neg.23']
  %s0 = inlined_call_operand.vmem [shape: s32[2,4,16], index: 0, kind: input, shape index: {}]
  %s1 = inlined_call_operand.vmem [shape: s32[2,4,16], index: 1, kind: output, shape index: {}]
  %v2 = vld [vmem:[%s0] sm:$0xff]
  %3 = xla_tuple %v2
  %4 = xla_tuple %3
  %v5 = vsub.s32 0, %v2
  %6 = xla_tuple %v5
  %7 = vst [vmem:[%s1] sm:$0xff] %v5
  %s8 = scalar_lea.vmem %s0, 16
  %v9 = vld [vmem:[%s8] sm:$0xff]
  %10 = xla_tuple %v9
  %11 = xla_tuple %10
  %v12 = vsub.s32 0, %v9
  %13 = xla_tuple %v12
  %s14 = scalar_lea.vmem %s1, 16
  %15 = vst [vmem:[%s14] sm:$0xff] %v12
  %s16 = scalar_lea.vmem %s0, 8
  %v17 = vld [vmem:[%s16] sm:$0xff]
  %18 = xla_tuple %v17
  %19 = xla_tuple %18
  %v20 = vsub.s32 0, %v17
  %21 = xla_tuple %v20
  %s22 = scalar_lea.vmem %s1, 8
  %23 = vst [vmem:[%s22] sm:$0xff] %v20
  %s24 = scalar_lea.vmem %s0, 24
  %v25 = vld [vmem:[%s24] sm:$0xff]
  %26 = xla_tuple %v25
  %27 = xla_tuple %26
  %v28 = vsub.s32 0, %v25
  %29 = xla_tuple %v28
  %s30 = scalar_lea.vmem %s1, 24
  %31 = vst [vmem:[%s30] sm:$0xff] %v28

// kernel: neg.21
$region0: #{neg.21}
  #allocation0 [shape = 's32[1]{0}', space=sflag, size = 0x4, scoped, tag = 'scoped memory for neg.21']
  %s0 = inlined_call_operand.vmem [shape: s32[2,8,16], index: 0, kind: input, shape index: {}]
  %s1 = inlined_call_operand.vmem [shape: s32[2,8,16], index: 1, kind: output, shape index: {}]
  %v2 = vld [vmem:[%s0] sm:$0xff]
  %3 = xla_tuple %v2
  %4 = xla_tuple %3
  %v5 = vsub.s32 0, %v2
  %6 = xla_tuple %v5
  %7 = vst [vmem:[%s1] sm:$0xff] %v5
  %s8 = scalar_lea.vmem %s0, 16
  %v9 = vld [vmem:[%s8] sm:$0xff]
  %10 = xla_tuple %v9
  %11 = xla_tuple %10
  %v12 = vsub.s32 0, %v9
  %13 = xla_tuple %v12
  %s14 = scalar_lea.vmem %s1, 16
  %15 = vst [vmem:[%s14] sm:$0xff] %v12
  %s16 = scalar_lea.vmem %s0, 8
  %v17 = vld [vmem:[%s16] sm:$0xff]
  %18 = xla_tuple %v17
  %19 = xla_tuple %18
  %v20 = vsub.s32 0, %v17
  %21 = xla_tuple %v20
  %s22 = scalar_lea.vmem %s1, 8
  %23 = vst [vmem:[%s22] sm:$0xff] %v20
  %s24 = scalar_lea.vmem %s0, 24
  %v25 = vld [vmem:[%s24] sm:$0xff]
  %26 = xla_tuple %v25
  %27 = xla_tuple %26
  %v28 = vsub.s32 0, %v25
  %29 = xla_tuple %v28
  %s30 = scalar_lea.vmem %s1, 24
  %31 = vst [vmem:[%s30] sm:$0xff] %v28

// kernel: sub.128
$region0: #{sub.128}
  #allocation0 [shape = 's32[1]{0}', space=sflag, size = 0x4, scoped, tag = 'scoped memory for sub.128']
  %s0 = inlined_call_operand.vmem [shape: f32[2,8,3], index: 0, kind: input, shape index: {}]
  %s1 = inlined_call_operand.vmem [shape: f32[2,8,16,3], index: 1, kind: output, shape index: {}]
  // Predicated region
  $region2: #{sub.128} parent=0 // pred_check
    _
  $region3: #{sub.128} parent=0 // pred_check_branch
    %3 = sbr.rel (0) target = $region5
  $region4: #{sub.128} parent=0 // pred_region
    _
  $region5: #{sub.128} parent=0 // pred_fallthru
    _
  %v4 = vld [vmem:[%s0] ss:$0 sm:$0xff]
  %5 = vst [vmem:[%s1] sm:$0xff] %v4
  %s6 = scalar_lea.vmem %s0, 8
  %v7 = vld [vmem:[%s6] ss:$0 sm:$0xff]
  %s8 = scalar_lea.vmem %s1, 128
  %9 = vst [vmem:[%s8] sm:$0xff] %v7
  %s10 = scalar_lea.vmem %s0, 1
  %v11 = vld [vmem:[%s10] ss:$0 sm:$0xff]
  %s12 = scalar_lea.vmem %s1, 16
  %13 = vst [vmem:[%s12] sm:$0xff] %v11
  %s14 = scalar_lea.vmem %s0, 8
  %s15 = scalar_lea.vmem %s14, 1
  %v16 = vld [vmem:[%s15] ss:$0 sm:$0xff]
  %s17 = scalar_lea.vmem %s1, 144
  %18 = vst [vmem:[%s17] sm:$0xff] %v16
  %s19 = scalar_lea.vmem %s0, 2
  %v20 = vld [vmem:[%s19] ss:$0 sm:$0xff]
  %s21 = scalar_lea.vmem %s1, 32
  %22 = vst [vmem:[%s21] sm:$0xff] %v20
  %s23 = scalar_lea.vmem %s0, 8
  %s24 = scalar_lea.vmem %s23, 2
  %v25 = vld [vmem:[%s24] ss:$0 sm:$0xff]
  %s26 = scalar_lea.vmem %s1, 160
  %27 = vst [vmem:[%s26] sm:$0xff] %v25
  %s28 = scalar_lea.vmem %s0, 3
  %v29 = vld [vmem:[%s28] ss:$0 sm:$0xff]
  %s30 = scalar_lea.vmem %s1, 48
  %31 = vst [vmem:[%s30] sm:$0xff] %v29
  %s32 = scalar_lea.vmem %s0, 8
  %s33 = scalar_lea.vmem %s32, 3
  %v34 = vld [vmem:[%s33] ss:$0 sm:$0xff]
  %s35 = scalar_lea.vmem %s1, 176
  %36 = vst [vmem:[%s35] sm:$0xff] %v34
  %s37 = scalar_lea.vmem %s0, 4
  %v38 = vld [vmem:[%s37] ss:$0 sm:$0xff]
  %s39 = scalar_lea.vmem %s1, 64
  %40 = vst [vmem:[%s39] sm:$0xff] %v38
  %s41 = scalar_lea.vmem %s0, 8
  %s42 = scalar_lea.vmem %s41, 4
  %v43 = vld [vmem:[%s42] ss:$0 sm:$0xff]
  %s44 = scalar_lea.vmem %s1, 192
  %45 = vst [vmem:[%s44] sm:$0xff] %v43
  %s46 = scalar_lea.vmem %s0, 5
  %v47 = vld [vmem:[%s46] ss:$0 sm:$0xff]
  %s48 = scalar_lea.vmem %s1, 80
  %49 = vst [vmem:[%s48] sm:$0xff] %v47
  %s50 = scalar_lea.vmem %s0, 8
  %s51 = scalar_lea.vmem %s50, 5
  %v52 = vld [vmem:[%s51] ss:$0 sm:$0xff]
  %s53 = scalar_lea.vmem %s1, 208
  %54 = vst [vmem:[%s53] sm:$0xff] %v52
  %s55 = scalar_lea.vmem %s0, 6
  %v56 = vld [vmem:[%s55] ss:$0 sm:$0xff]
  %s57 = scalar_lea.vmem %s1, 96
  %58 = vst [vmem:[%s57] sm:$0xff] %v56
  %s59 = scalar_lea.vmem %s0, 8
  %s60 = scalar_lea.vmem %s59, 6
  %v61 = vld [vmem:[%s60] ss:$0 sm:$0xff]
  %s62 = scalar_lea.vmem %s1, 224
  %63 = vst [vmem:[%s62] sm:$0xff] %v61
  %s64 = scalar_lea.vmem %s0, 7
  %v65 = vld [vmem:[%s64] ss:$0 sm:$0xff]
  %s66 = scalar_lea.vmem %s1, 112
  %67 = vst [vmem:[%s66] sm:$0xff] %v65
  %s68 = scalar_lea.vmem %s0, 8
  %s69 = scalar_lea.vmem %s68, 7
  %v70 = vld [vmem:[%s69] ss:$0 sm:$0xff]
  %s71 = scalar_lea.vmem %s1, 240
  %72 = vst [vmem:[%s71] sm:$0xff] %v70
  %s73 = scalar_lea.vmem %s1, 8
  %74 = vst [vmem:[%s73] sm:$0xff] %v4
  %s75 = scalar_lea.vmem %s1, 136
  %76 = vst [vmem:[%s75] sm:$0xff] %v7
  %s77 = scalar_lea.vmem %s1, 24
  %78 = vst [vmem:[%s77] sm:$0xff] %v11
  %s79 = scalar_lea.vmem %s1, 152
  %80 = vst [vmem:[%s79] sm:$0xff] %v16
  %s81 = scalar_lea.vmem %s1, 40
  %82 = vst [vmem:[%s81] sm:$0xff] %v20
  %s83 = scalar_lea.vmem %s1, 168
  %84 = vst [vmem:[%s83] sm:$0xff] %v25
  %s85 = scalar_lea.vmem %s1, 56
  %86 = vst [vmem:[%s85] sm:$0xff] %v29
  %s87 = scalar_lea.vmem %s1, 184
  %88 = vst [vmem:[%s87] sm:$0xff] %v34
  %s89 = scalar_lea.vmem %s1, 72
  %90 = vst [vmem:[%s89] sm:$0xff] %v38
  %s91 = scalar_lea.vmem %s1, 200
  %92 = vst [vmem:[%s91] sm:$0xff] %v43
  %s93 = scalar_lea.vmem %s1, 88
  %94 = vst [vmem:[%s93] sm:$0xff] %v47
  %s95 = scalar_lea.vmem %s1, 216
  %96 = vst [vmem:[%s95] sm:$0xff] %v52
  %s97 = scalar_lea.vmem %s1, 104
  %98 = vst [vmem:[%s97] sm:$0xff] %v56
  %s99 = scalar_lea.vmem %s1, 232
  %100 = vst [vmem:[%s99] sm:$0xff] %v61
  %s101 = scalar_lea.vmem %s1, 120
  %102 = vst [vmem:[%s101] sm:$0xff] %v65
  %s103 = scalar_lea.vmem %s1, 248
  %104 = vst [vmem:[%s103] sm:$0xff] %v70

// kernel: sub.164
$region0: #{sub.164}
  #allocation0 [shape = 's32[1]{0}', space=sflag, size = 0x4, scoped, tag = 'scoped memory for sub.164']
  %s0 = inlined_call_operand.vmem [shape: f32[2,32,3], index: 0, kind: input, shape index: {}]
  %s1 = inlined_call_operand.vmem [shape: f32[2,32,16,3], index: 1, kind: output, shape index: {}]
  // Predicated region
  $region2: #{sub.164} parent=0 // pred_check
    _
  $region3: #{sub.164} parent=0 // pred_check_branch
    %3 = sbr.rel (0) target = $region5
  $region4: #{sub.164} parent=0 // pred_region
    _
  $region5: #{sub.164} parent=0 // pred_fallthru
    _
  %v4 = vld [vmem:[%s0] ss:$0 sm:$0xff]
  %5 = vst [vmem:[%s1] sm:$0xff] %v4
  %s6 = scalar_lea.vmem %s0, 32
  %v7 = vld [vmem:[%s6] ss:$0 sm:$0xff]
  %s8 = scalar_lea.vmem %s1, 512
  %9 = vst [vmem:[%s8] sm:$0xff] %v7
  %s10 = scalar_lea.vmem %s0, 1
  %v11 = vld [vmem:[%s10] ss:$0 sm:$0xff]
  %s12 = scalar_lea.vmem %s1, 16
  %13 = vst [vmem:[%s12] sm:$0xff] %v11
  %s14 = scalar_lea.vmem %s0, 32
  %s15 = scalar_lea.vmem %s14, 1
  %v16 = vld [vmem:[%s15] ss:$0 sm:$0xff]
  %s17 = scalar_lea.vmem %s1, 528
  %18 = vst [vmem:[%s17] sm:$0xff] %v16
  %s19 = scalar_lea.vmem %s0, 2
  %v20 = vld [vmem:[%s19] ss:$0 sm:$0xff]
  %s21 = scalar_lea.vmem %s1, 32
  %22 = vst [vmem:[%s21] sm:$0xff] %v20
  %s23 = scalar_lea.vmem %s0, 32
  %s24 = scalar_lea.vmem %s23, 2
  %v25 = vld [vmem:[%s24] ss:$0 sm:$0xff]
  %s26 = scalar_lea.vmem %s1, 544
  %27 = vst [vmem:[%s26] sm:$0xff] %v25
  %s28 = scalar_lea.vmem %s0, 3
  %v29 = vld [vmem:[%s28] ss:$0 sm:$0xff]
  %s30 = scalar_lea.vmem %s1, 48
  %31 = vst [vmem:[%s30] sm:$0xff] %v29
  %s32 = scalar_lea.vmem %s0, 32
  %s33 = scalar_lea.vmem %s32, 3
  %v34 = vld [vmem:[%s33] ss:$0 sm:$0xff]
  %s35 = scalar_lea.vmem %s1, 560
  %36 = vst [vmem:[%s35] sm:$0xff] %v34
  %s37 = scalar_lea.vmem %s0, 4
  %v38 = vld [vmem:[%s37] ss:$0 sm:$0xff]
  %s39 = scalar_lea.vmem %s1, 64
  %40 = vst [vmem:[%s39] sm:$0xff] %v38
  %s41 = scalar_lea.vmem %s0, 32
  %s42 = scalar_lea.vmem %s41, 4
  %v43 = vld [vmem:[%s42] ss:$0 sm:$0xff]
  %s44 = scalar_lea.vmem %s1, 576
  %45 = vst [vmem:[%s44] sm:$0xff] %v43
  %s46 = scalar_lea.vmem %s0, 5
  %v47 = vld [vmem:[%s46] ss:$0 sm:$0xff]
  %s48 = scalar_lea.vmem %s1, 80
  %49 = vst [vmem:[%s48] sm:$0xff] %v47
  %s50 = scalar_lea.vmem %s0, 32
  %s51 = scalar_lea.vmem %s50, 5
  %v52 = vld [vmem:[%s51] ss:$0 sm:$0xff]
  %s53 = scalar_lea.vmem %s1, 592
  %54 = vst [vmem:[%s53] sm:$0xff] %v52
  %s55 = scalar_lea.vmem %s0, 6
  %v56 = vld [vmem:[%s55] ss:$0 sm:$0xff]
  %s57 = scalar_lea.vmem %s1, 96
  %58 = vst [vmem:[%s57] sm:$0xff] %v56
  %s59 = scalar_lea.vmem %s0, 32
  %s60 = scalar_lea.vmem %s59, 6
  %v61 = vld [vmem:[%s60] ss:$0 sm:$0xff]
  %s62 = scalar_lea.vmem %s1, 608
  %63 = vst [vmem:[%s62] sm:$0xff] %v61
  %s64 = scalar_lea.vmem %s0, 7
  %v65 = vld [vmem:[%s64] ss:$0 sm:$0xff]
  %s66 = scalar_lea.vmem %s1, 112
  %67 = vst [vmem:[%s66] sm:$0xff] %v65
  %s68 = scalar_lea.vmem %s0, 32
  %s69 = scalar_lea.vmem %s68, 7
  %v70 = vld [vmem:[%s69] ss:$0 sm:$0xff]
  %s71 = scalar_lea.vmem %s1, 624
  %72 = vst [vmem:[%s71] sm:$0xff] %v70
  %s73 = scalar_lea.vmem %s0, 8
  %v74 = vld [vmem:[%s73] ss:$0 sm:$0xff]
  %s75 = scalar_lea.vmem %s1, 128
  %76 = vst [vmem:[%s75] sm:$0xff] %v74
  %s77 = scalar_lea.vmem %s0, 40
  %v78 = vld [vmem:[%s77] ss:$0 sm:$0xff]
  %s79 = scalar_lea.vmem %s1, 640
  %80 = vst [vmem:[%s79] sm:$0xff] %v78
  %s81 = scalar_lea.vmem %s0, 8
  %s82 = scalar_lea.vmem %s81, 1
  %v83 = vld [vmem:[%s82] ss:$0 sm:$0xff]
  %s84 = scalar_lea.vmem %s1, 144
  %85 = vst [vmem:[%s84] sm:$0xff] %v83
  %s86 = scalar_lea.vmem %s0, 40
  %s87 = scalar_lea.vmem %s86, 1
  %v88 = vld [vmem:[%s87] ss:$0 sm:$0xff]
  %s89 = scalar_lea.vmem %s1, 656
  %90 = vst [vmem:[%s89] sm:$0xff] %v88
  %s91 = scalar_lea.vmem %s0, 8
  %s92 = scalar_lea.vmem %s91, 2
  %v93 = vld [vmem:[%s92] ss:$0 sm:$0xff]
  %s94 = scalar_lea.vmem %s1, 160
  %95 = vst [vmem:[%s94] sm:$0xff] %v93
  %s96 = scalar_lea.vmem %s0, 40
  %s97 = scalar_lea.vmem %s96, 2
  %v98 = vld [vmem:[%s97] ss:$0 sm:$0xff]
  %s99 = scalar_lea.vmem %s1, 672
  %100 = vst [vmem:[%s99] sm:$0xff] %v98
  %s101 = scalar_lea.vmem %s0, 8
  %s102 = scalar_lea.vmem %s101, 3
  %v103 = vld [vmem:[%s102] ss:$0 sm:$0xff]
  %s104 = scalar_lea.vmem %s1, 176
  %105 = vst [vmem:[%s104] sm:$0xff] %v103
  %s106 = scalar_lea.vmem %s0, 40
  %s107 = scalar_lea.vmem %s106, 3
  %v108 = vld [vmem:[%s107] ss:$0 sm:$0xff]
  %s109 = scalar_lea.vmem %s1, 688
  %110 = vst [vmem:[%s109] sm:$0xff] %v108
  %s111 = scalar_lea.vmem %s0, 8
  %s112 = scalar_lea.vmem %s111, 4
  %v113 = vld [vmem:[%s112] ss:$0 sm:$0xff]
  %s114 = scalar_lea.vmem %s1, 192
  %115 = vst [vmem:[%s114] sm:$0xff] %v113
  %s116 = scalar_lea.vmem %s0, 40
  %s117 = scalar_lea.vmem %s116, 4
  %v118 = vld [vmem:[%s117] ss:$0 sm:$0xff]
  %s119 = scalar_lea.vmem %s1, 704
  %120 = vst [vmem:[%s119] sm:$0xff] %v118
  %s121 = scalar_lea.vmem %s0, 8
  %s122 = scalar_lea.vmem %s121, 5
  %v123 = vld [vmem:[%s122] ss:$0 sm:$0xff]
  %s124 = scalar_lea.vmem %s1, 208
  %125 = vst [vmem:[%s124] sm:$0xff] %v123
  %s126 = scalar_lea.vmem %s0, 40
  %s127 = scalar_lea.vmem %s126, 5
  %v128 = vld [vmem:[%s127] ss:$0 sm:$0xff]
  %s129 = scalar_lea.vmem %s1, 720
  %130 = vst [vmem:[%s129] sm:$0xff] %v128
  %s131 = scalar_lea.vmem %s0, 8
  %s132 = scalar_lea.vmem %s131, 6
  %v133 = vld [vmem:[%s132] ss:$0 sm:$0xff]
  %s134 = scalar_lea.vmem %s1, 224
  %135 = vst [vmem:[%s134] sm:$0xff] %v133
  %s136 = scalar_lea.vmem %s0, 40
  %s137 = scalar_lea.vmem %s136, 6
  %v138 = vld [vmem:[%s137] ss:$0 sm:$0xff]
  %s139 = scalar_lea.vmem %s1, 736
  %140 = vst [vmem:[%s139] sm:$0xff] %v138
  %s141 = scalar_lea.vmem %s0, 8
  %s142 = scalar_lea.vmem %s141, 7
  %v143 = vld [vmem:[%s142] ss:$0 sm:$0xff]
  %s144 = scalar_lea.vmem %s1, 240
  %145 = vst [vmem:[%s144] sm:$0xff] %v143
  %s146 = scalar_lea.vmem %s0, 40
  %s147 = scalar_lea.vmem %s146, 7
  %v148 = vld [vmem:[%s147] ss:$0 sm:$0xff]
  %s149 = scalar_lea.vmem %s1, 752
  %150 = vst [vmem:[%s149] sm:$0xff] %v148
  %s151 = scalar_lea.vmem %s0, 16
  %v152 = vld [vmem:[%s151] ss:$0 sm:$0xff]
  %s153 = scalar_lea.vmem %s1, 256
  %154 = vst [vmem:[%s153] sm:$0xff] %v152
  %s155 = scalar_lea.vmem %s0, 48
  %v156 = vld [vmem:[%s155] ss:$0 sm:$0xff]
  %s157 = scalar_lea.vmem %s1, 768
  %158 = vst [vmem:[%s157] sm:$0xff] %v156
  %s159 = scalar_lea.vmem %s0, 16
  %s160 = scalar_lea.vmem %s159, 1
  %v161 = vld [vmem:[%s160] ss:$0 sm:$0xff]
  %s162 = scalar_lea.vmem %s1, 272
  %163 = vst [vmem:[%s162] sm:$0xff] %v161
  %s164 = scalar_lea.vmem %s0, 48
  %s165 = scalar_lea.vmem %s164, 1
  %v166 = vld [vmem:[%s165] ss:$0 sm:$0xff]
  %s167 = scalar_lea.vmem %s1, 784
  %168 = vst [vmem:[%s167] sm:$0xff] %v166
  %s169 = scalar_lea.vmem %s0, 16
  %s170 = scalar_lea.vmem %s169, 2
  %v171 = vld [vmem:[%s170] ss:$0 sm:$0xff]
  %s172 = scalar_lea.vmem %s1, 288
  %173 = vst [vmem:[%s172] sm:$0xff] %v171
  %s174 = scalar_lea.vmem %s0, 48
  %s175 = scalar_lea.vmem %s174, 2
  %v176 = vld [vmem:[%s175] ss:$0 sm:$0xff]
  %s177 = scalar_lea.vmem %s1, 800
  %178 = vst [vmem:[%s177] sm:$0xff] %v176
  %s179 = scalar_lea.vmem %s0, 16
  %s180 = scalar_lea.vmem %s179, 3
  %v181 = vld [vmem:[%s180] ss:$0 sm:$0xff]
  %s182 = scalar_lea.vmem %s1, 304
  %183 = vst [vmem:[%s182] sm:$0xff] %v181
  %s184 = scalar_lea.vmem %s0, 48
  %s185 = scalar_lea.vmem %s184, 3
  %v186 = vld [vmem:[%s185] ss:$0 sm:$0xff]
  %s187 = scalar_lea.vmem %s1, 816
  %188 = vst [vmem:[%s187] sm:$0xff] %v186
  %s189 = scalar_lea.vmem %s0, 16
  %s190 = scalar_lea.vmem %s189, 4
  %v191 = vld [vmem:[%s190] ss:$0 sm:$0xff]
  %s192 = scalar_lea.vmem %s1, 320
  %193 = vst [vmem:[%s192] sm:$0xff] %v191
  %s194 = scalar_lea.vmem %s0, 48
  %s195 = scalar_lea.vmem %s194, 4
  %v196 = vld [vmem:[%s195] ss:$0 sm:$0xff]
  %s197 = scalar_lea.vmem %s1, 832
  %198 = vst [vmem:[%s197] sm:$0xff] %v196
  %s199 = scalar_lea.vmem %s0, 16
  %s200 = scalar_lea.vmem %s199, 5
  %v201 = vld [vmem:[%s200] ss:$0 sm:$0xff]
  %s202 = scalar_lea.vmem %s1, 336
  %203 = vst [vmem:[%s202] sm:$0xff] %v201
  %s204 = scalar_lea.vmem %s0, 48
  %s205 = scalar_lea.vmem %s204, 5
  %v206 = vld [vmem:[%s205] ss:$0 sm:$0xff]
  %s207 = scalar_lea.vmem %s1, 848
  %208 = vst [vmem:[%s207] sm:$0xff] %v206
  %s209 = scalar_lea.vmem %s0, 16
  %s210 = scalar_lea.vmem %s209, 6
  %v211 = vld [vmem:[%s210] ss:$0 sm:$0xff]
  %s212 = scalar_lea.vmem %s1, 352
  %213 = vst [vmem:[%s212] sm:$0xff] %v211
  %s214 = scalar_lea.vmem %s0, 48
  %s215 = scalar_lea.vmem %s214, 6
  %v216 = vld [vmem:[%s215] ss:$0 sm:$0xff]
  %s217 = scalar_lea.vmem %s1, 864
  %218 = vst [vmem:[%s217] sm:$0xff] %v216
  %s219 = scalar_lea.vmem %s0, 16
  %s220 = scalar_lea.vmem %s219, 7
  %v221 = vld [vmem:[%s220] ss:$0 sm:$0xff]
  %s222 = scalar_lea.vmem %s1, 368
  %223 = vst [vmem:[%s222] sm:$0xff] %v221
  %s224 = scalar_lea.vmem %s0, 48
  %s225 = scalar_lea.vmem %s224, 7
  %v226 = vld [vmem:[%s225] ss:$0 sm:$0xff]
  %s227 = scalar_lea.vmem %s1, 880
  %228 = vst [vmem:[%s227] sm:$0xff] %v226
  %s229 = scalar_lea.vmem %s0, 24
  %v230 = vld [vmem:[%s229] ss:$0 sm:$0xff]
  %s231 = scalar_lea.vmem %s1, 384
  %232 = vst [vmem:[%s231] sm:$0xff] %v230
  %s233 = scalar_lea.vmem %s0, 56
  %v234 = vld [vmem:[%s233] ss:$0 sm:$0xff]
  %s235 = scalar_lea.vmem %s1, 896
  %236 = vst [vmem:[%s235] sm:$0xff] %v234
  %s237 = scalar_lea.vmem %s0, 24
  %s238 = scalar_lea.vmem %s237, 1
  %v239 = vld [vmem:[%s238] ss:$0 sm:$0xff]
  %s240 = scalar_lea.vmem %s1, 400
  %241 = vst [vmem:[%s240] sm:$0xff] %v239
  %s242 = scalar_lea.vmem %s0, 56
  %s243 = scalar_lea.vmem %s242, 1
  %v244 = vld [vmem:[%s243] ss:$0 sm:$0xff]
  %s245 = scalar_lea.vmem %s1, 912
  %246 = vst [vmem:[%s245] sm:$0xff] %v244
  %s247 = scalar_lea.vmem %s0, 24
  %s248 = scalar_lea.vmem %s247, 2
  %v249 = vld [vmem:[%s248] ss:$0 sm:$0xff]
  %s250 = scalar_lea.vmem %s1, 416
  %251 = vst [vmem:[%s250] sm:$0xff] %v249
  %s252 = scalar_lea.vmem %s0, 56
  %s253 = scalar_lea.vmem %s252, 2
  %v254 = vld [vmem:[%s253] ss:$0 sm:$0xff]
  %s255 = scalar_lea.vmem %s1, 928
  %256 = vst [vmem:[%s255] sm:$0xff] %v254
  %s257 = scalar_lea.vmem %s0, 24
  %s258 = scalar_lea.vmem %s257, 3
  %v259 = vld [vmem:[%s258] ss:$0 sm:$0xff]
  %s260 = scalar_lea.vmem %s1, 432
  %261 = vst [vmem:[%s260] sm:$0xff] %v259
  %s262 = scalar_lea.vmem %s0, 56
  %s263 = scalar_lea.vmem %s262, 3
  %v264 = vld [vmem:[%s263] ss:$0 sm:$0xff]
  %s265 = scalar_lea.vmem %s1, 944
  %266 = vst [vmem:[%s265] sm:$0xff] %v264
  %s267 = scalar_lea.vmem %s0, 24
  %s268 = scalar_lea.vmem %s267, 4
  %v269 = vld [vmem:[%s268] ss:$0 sm:$0xff]
  %s270 = scalar_lea.vmem %s1, 448
  %271 = vst [vmem:[%s270] sm:$0xff] %v269
  %s272 = scalar_lea.vmem %s0, 56
  %s273 = scalar_lea.vmem %s272, 4
  %v274 = vld [vmem:[%s273] ss:$0 sm:$0xff]
  %s275 = scalar_lea.vmem %s1, 960
  %276 = vst [vmem:[%s275] sm:$0xff] %v274
  %s277 = scalar_lea.vmem %s0, 24
  %s278 = scalar_lea.vmem %s277, 5
  %v279 = vld [vmem:[%s278] ss:$0 sm:$0xff]
  %s280 = scalar_lea.vmem %s1, 464
  %281 = vst [vmem:[%s280] sm:$0xff] %v279
  %s282 = scalar_lea.vmem %s0, 56
  %s283 = scalar_lea.vmem %s282, 5
  %v284 = vld [vmem:[%s283] ss:$0 sm:$0xff]
  %s285 = scalar_lea.vmem %s1, 976
  %286 = vst [vmem:[%s285] sm:$0xff] %v284
  %s287 = scalar_lea.vmem %s0, 24
  %s288 = scalar_lea.vmem %s287, 6
  %v289 = vld [vmem:[%s288] ss:$0 sm:$0xff]
  %s290 = scalar_lea.vmem %s1, 480
  %291 = vst [vmem:[%s290] sm:$0xff] %v289
  %s292 = scalar_lea.vmem %s0, 56
  %s293 = scalar_lea.vmem %s292, 6
  %v294 = vld [vmem:[%s293] ss:$0 sm:$0xff]
  %s295 = scalar_lea.vmem %s1, 992
  %296 = vst [vmem:[%s295] sm:$0xff] %v294
  %s297 = scalar_lea.vmem %s0, 24
  %s298 = scalar_lea.vmem %s297, 7
  %v299 = vld [vmem:[%s298] ss:$0 sm:$0xff]
  %s300 = scalar_lea.vmem %s1, 496
  %301 = vst [vmem:[%s300] sm:$0xff] %v299
  %s302 = scalar_lea.vmem %s0, 56
  %s303 = scalar_lea.vmem %s302, 7
  %v304 = vld [vmem:[%s303] ss:$0 sm:$0xff]
  %s305 = scalar_lea.vmem %s1, 1008
  %306 = vst [vmem:[%s305] sm:$0xff] %v304
  %s307 = scalar_lea.vmem %s1, 8
  %308 = vst [vmem:[%s307] sm:$0xff] %v4
  %s309 = scalar_lea.vmem %s1, 520
  %310 = vst [vmem:[%s309] sm:$0xff] %v7
  %s311 = scalar_lea.vmem %s1, 24
  %312 = vst [vmem:[%s311] sm:$0xff] %v11
  %s313 = scalar_lea.vmem %s1, 536
  %314 = vst [vmem:[%s313] sm:$0xff] %v16
  %s315 = scalar_lea.vmem %s1, 40
  %316 = vst [vmem:[%s315] sm:$0xff] %v20
  %s317 = scalar_lea.vmem %s1, 552
  %318 = vst [vmem:[%s317] sm:$0xff] %v25
  %s319 = scalar_lea.vmem %s1, 56
  %320 = vst [vmem:[%s319] sm:$0xff] %v29
  %s321 = scalar_lea.vmem %s1, 568
  %322 = vst [vmem:[%s321] sm:$0xff] %v34
  %s323 = scalar_lea.vmem %s1, 72
  %324 = vst [vmem:[%s323] sm:$0xff] %v38
  %s325 = scalar_lea.vmem %s1, 584
  %326 = vst [vmem:[%s325] sm:$0xff] %v43
  %s327 = scalar_lea.vmem %s1, 88
  %328 = vst [vmem:[%s327] sm:$0xff] %v47
  %s329 = scalar_lea.vmem %s1, 600
  %330 = vst [vmem:[%s329] sm:$0xff] %v52
  %s331 = scalar_lea.vmem %s1, 104
  %332 = vst [vmem:[%s331] sm:$0xff] %v56
  %s333 = scalar_lea.vmem %s1, 616
  %334 = vst [vmem:[%s333] sm:$0xff] %v61
  %s335 = scalar_lea.vmem %s1, 120
  %336 = vst [vmem:[%s335] sm:$0xff] %v65
  %s337 = scalar_lea.vmem %s1, 632
  %338 = vst [vmem:[%s337] sm:$0xff] %v70
  %s339 = scalar_lea.vmem %s1, 136
  %340 = vst [vmem:[%s339] sm:$0xff] %v74
  %s341 = scalar_lea.vmem %s1, 648
  %342 = vst [vmem:[%s341] sm:$0xff] %v78
  %s343 = scalar_lea.vmem %s1, 152
  %344 = vst [vmem:[%s343] sm:$0xff] %v83
  %s345 = scalar_lea.vmem %s1, 664
  %346 = vst [vmem:[%s345] sm:$0xff] %v88
  %s347 = scalar_lea.vmem %s1, 168
  %348 = vst [vmem:[%s347] sm:$0xff] %v93
  %s349 = scalar_lea.vmem %s1, 680
  %350 = vst [vmem:[%s349] sm:$0xff] %v98
  %s351 = scalar_lea.vmem %s1, 184
  %352 = vst [vmem:[%s351] sm:$0xff] %v103
  %s353 = scalar_lea.vmem %s1, 696
  %354 = vst [vmem:[%s353] sm:$0xff] %v108
  %s355 = scalar_lea.vmem %s1, 200
  %356 = vst [vmem:[%s355] sm:$0xff] %v113
  %s357 = scalar_lea.vmem %s1, 712
  %358 = vst [vmem:[%s357] sm:$0xff] %v118
  %s359 = scalar_lea.vmem %s1, 216
  %360 = vst [vmem:[%s359] sm:$0xff] %v123
  %s361 = scalar_lea.vmem %s1, 728
  %362 = vst [vmem:[%s361] sm:$0xff] %v128
  %s363 = scalar_lea.vmem %s1, 232
  %364 = vst [vmem:[%s363] sm:$0xff] %v133
  %s365 = scalar_lea.vmem %s1, 744
  %366 = vst [vmem:[%s365] sm:$0xff] %v138
  %s367 = scalar_lea.vmem %s1, 248
  %368 = vst [vmem:[%s367] sm:$0xff] %v143
  %s369 = scalar_lea.vmem %s1, 760
  %370 = vst [vmem:[%s369] sm:$0xff] %v148
  %s371 = scalar_lea.vmem %s1, 264
  %372 = vst [vmem:[%s371] sm:$0xff] %v152
  %s373 = scalar_lea.vmem %s1, 776
  %374 = vst [vmem:[%s373] sm:$0xff] %v156
  %s375 = scalar_lea.vmem %s1, 280
  %376 = vst [vmem:[%s375] sm:$0xff] %v161
  %s377 = scalar_lea.vmem %s1, 792
  %378 = vst [vmem:[%s377] sm:$0xff] %v166
  %s379 = scalar_lea.vmem %s1, 296
  %380 = vst [vmem:[%s379] sm:$0xff] %v171
  %s381 = scalar_lea.vmem %s1, 808
  %382 = vst [vmem:[%s381] sm:$0xff] %v176
  %s383 = scalar_lea.vmem %s1, 312
  %384 = vst [vmem:[%s383] sm:$0xff] %v181
  %s385 = scalar_lea.vmem %s1, 824
  %386 = vst [vmem:[%s385] sm:$0xff] %v186
  %s387 = scalar_lea.vmem %s1, 328
  %388 = vst [vmem:[%s387] sm:$0xff] %v191
  %s389 = scalar_lea.vmem %s1, 840
  %390 = vst [vmem:[%s389] sm:$0xff] %v196
  %s391 = scalar_lea.vmem %s1, 344
  %392 = vst [vmem:[%s391] sm:$0xff] %v201
  %s393 = scalar_lea.vmem %s1, 856
  %394 = vst [vmem:[%s393] sm:$0xff] %v206
  %s395 = scalar_lea.vmem %s1, 360
  %396 = vst [vmem:[%s395] sm:$0xff] %v211
  %s397 = scalar_lea.vmem %s1, 872
  %398 = vst [vmem:[%s397] sm:$0xff] %v216
  %s399 = scalar_lea.vmem %s1, 376
  %400 = vst [vmem:[%s399] sm:$0xff] %v221
  %s401 = scalar_lea.vmem %s1, 888
  %402 = vst [vmem:[%s401] sm:$0xff] %v226
  %s403 = scalar_lea.vmem %s1, 392
  %404 = vst [vmem:[%s403] sm:$0xff] %v230
  %s405 = scalar_lea.vmem %s1, 904
  %406 = vst [vmem:[%s405] sm:$0xff] %v234
  %s407 = scalar_lea.vmem %s1, 408
  %408 = vst [vmem:[%s407] sm:$0xff] %v239
  %s409 = scalar_lea.vmem %s1, 920
  %410 = vst [vmem:[%s409] sm:$0xff] %v244
  %s411 = scalar_lea.vmem %s1, 424
  %412 = vst [vmem:[%s411] sm:$0xff] %v249
  %s413 = scalar_lea.vmem %s1, 936
  %414 = vst [vmem:[%s413] sm:$0xff] %v254
  %s415 = scalar_lea.vmem %s1, 440
  %416 = vst [vmem:[%s415] sm:$0xff] %v259
  %s417 = scalar_lea.vmem %s1, 952
  %418 = vst [vmem:[%s417] sm:$0xff] %v264
  %s419 = scalar_lea.vmem %s1, 456
  %420 = vst [vmem:[%s419] sm:$0xff] %v269
  %s421 = scalar_lea.vmem %s1, 968
  %422 = vst [vmem:[%s421] sm:$0xff] %v274
  %s423 = scalar_lea.vmem %s1, 472
  %424 = vst [vmem:[%s423] sm:$0xff] %v279
  %s425 = scalar_lea.vmem %s1, 984
  %426 = vst [vmem:[%s425] sm:$0xff] %v284
  %s427 = scalar_lea.vmem %s1, 488
  %428 = vst [vmem:[%s427] sm:$0xff] %v289
  %s429 = scalar_lea.vmem %s1, 1000
  %430 = vst [vmem:[%s429] sm:$0xff] %v294
  %s431 = scalar_lea.vmem %s1, 504
  %432 = vst [vmem:[%s431] sm:$0xff] %v299
  %s433 = scalar_lea.vmem %s1, 1016
  %434 = vst [vmem:[%s433] sm:$0xff] %v304

// kernel: pointnet2_forward.8
$region0: #{pointnet2_forward.8}
  #allocation0 [shape = 'u32[]', space=smem, size = 0x4, offset = 0x4, fixed_abs, tag = 'smem constant byte address 0x4 - core index']
  #allocation1 [shape = 'u32[144,128]{1,0:T(1,128)}', space=vmem, size = 0x12000, scoped, tag = 'internal scratch']
  %s0 = inlined_call_operand.vmem [shape: bf16[1024,16], index: 0, kind: input, shape index: {}]
  %s1 = inlined_call_operand.vmem [shape: bf16[16,32], index: 1, kind: input, shape index: {}]
  %s2 = inlined_call_operand.vmem [shape: f32[1,32], index: 2, kind: input, shape index: {}]
  %s3 = inlined_call_operand.vmem [shape: bf16[32,32], index: 3, kind: input, shape index: {}]
  %s4 = inlined_call_operand.vmem [shape: f32[1,32], index: 4, kind: input, shape index: {}]
  %s5 = inlined_call_operand.vmem [shape: bf16[32,64], index: 5, kind: input, shape index: {}]
  %s6 = inlined_call_operand.vmem [shape: f32[1,64], index: 6, kind: input, shape index: {}]
  %s7 = inlined_call_operand.vmem [shape: bf16[64,64], index: 7, kind: output, shape index: {}]
  %s8 = sld [smem:[#allocation0]]
  $region61: #{pointnet2_forward.8} parent=0
    _
  %s10 = ssub.s32 1, %s8
  %s11 = scalar_select 0, %s10, %s8
  loop: start=0, step=1, limit=4
  $region2: #{pointnet2_forward.8} parent=0 // loop_pre_header
    _
  $region3: #{pointnet2_forward.8} parent=0 // loop_header
    %s13 = sphi 0, %s17
    %p14 = scmp.ge.s32.totalorder %s13, 4
    %s23 = sphi 0, %s25
    %s26 = sphi 0, %s23
    %s27 = sphi 0, %s26
    %s43 = sphi 0, %s27
    %s47 = sphi 0, %s47
    %s49 = sphi 0, %s47
    %s50 = sphi 0, %s49
    %s64 = sphi 0, %s50
    %s68 = sphi 0, %s68
    %s70 = sphi 0, %s68
    %s71 = sphi 0, %s70
    %s85 = sphi 0, %s71
    %s89 = sphi 0, %s89
    %s91 = sphi 0, %s89
    %s92 = sphi 0, %s91
    %s106 = sphi 0, %s92
    %s110 = sphi 0, %s110
    %s112 = sphi 0, %s110
    %s113 = sphi 0, %s112
    %s127 = sphi 0, %s113
    %s131 = sphi 0, %s131
    %s133 = sphi 0, %s131
    %s134 = sphi 0, %s133
    %s148 = sphi 0, %s134
    %s152 = sphi 0, %s152
    %s154 = sphi 0, %s152
    %s155 = sphi 0, %s154
    %s169 = sphi 0, %s155
    %s175 = sphi 0, %s177
    %s178 = sphi 0, %s175
    %s179 = sphi 0, %s178
    %s195 = sphi 0, %s179
  $region4: #{pointnet2_forward.8} parent=0 // loop_header_branch
    %16 = sbr.rel (%p14) target = $region8
  $region5: #{pointnet2_forward.8} parent=0 // loop_body
    %s18 = ssub.s32 %s13, 1
    %s19 = ssub.s32 %s13, 2
    %s20 = sadd.s32 %s13, 1
    %s21 = ssub.s32 %s13, %s20
    %p22 = scmp.eq.s32.totalorder %s21, 0
    %s24 = sadd.s32 %s23, 1
    %s25 = scalar_select %p22, %s23, %s24
    %p28 = pneg %p22
    %p29 = scmp.eq.s32.totalorder %s13, 1
    %p30 = por %p28, %p29
    %p31 = scmp.ne.s32.totalorder %s23, %s26
    %p32 = scmp.eq.s32.totalorder %s13, 0
    %p33 = por %p31, %p32
    %p34 = scmp.ne.s32.totalorder %s23, %s26
    %p35 = scmp.eq.s32.totalorder %s18, 1
    %p36 = por %p34, %p35
    %p37 = scmp.ne.s32.totalorder %s26, %s27
    %p38 = scmp.eq.s32.totalorder %s18, 0
    %p39 = por %p37, %p38
    %p40 = scmp.ne.s32.totalorder %s26, %s27
    %p41 = scmp.eq.s32.totalorder %s19, 1
    %p42 = por %p40, %p41
    %p44 = scmp.ne.s32.totalorder %s27, %s43
    %p45 = scmp.eq.s32.totalorder %s19, 0
    %p46 = por %p44, %p45
    %s48 = sadd.s32 %s47, 1
    %p51 = scmp.eq.s32.totalorder %s13, 1
    %p52 = scmp.ne.s32.totalorder %s47, %s49
    %p53 = scmp.eq.s32.totalorder %s13, 0
    %p54 = por %p52, %p53
    %p55 = scmp.ne.s32.totalorder %s47, %s49
    %p56 = scmp.eq.s32.totalorder %s18, 1
    %p57 = por %p55, %p56
    %p58 = scmp.ne.s32.totalorder %s49, %s50
    %p59 = scmp.eq.s32.totalorder %s18, 0
    %p60 = por %p58, %p59
    %p61 = scmp.ne.s32.totalorder %s49, %s50
    %p62 = scmp.eq.s32.totalorder %s19, 1
    %p63 = por %p61, %p62
    %p65 = scmp.ne.s32.totalorder %s50, %s64
    %p66 = scmp.eq.s32.totalorder %s19, 0
    %p67 = por %p65, %p66
    %s69 = sadd.s32 %s68, 1
    %p72 = scmp.eq.s32.totalorder %s13, 1
    %p73 = scmp.ne.s32.totalorder %s68, %s70
    %p74 = scmp.eq.s32.totalorder %s13, 0
    %p75 = por %p73, %p74
    %p76 = scmp.ne.s32.totalorder %s68, %s70
    %p77 = scmp.eq.s32.totalorder %s18, 1
    %p78 = por %p76, %p77
    %p79 = scmp.ne.s32.totalorder %s70, %s71
    %p80 = scmp.eq.s32.totalorder %s18, 0
    %p81 = por %p79, %p80
    %p82 = scmp.ne.s32.totalorder %s70, %s71
    %p83 = scmp.eq.s32.totalorder %s19, 1
    %p84 = por %p82, %p83
    %p86 = scmp.ne.s32.totalorder %s71, %s85
    %p87 = scmp.eq.s32.totalorder %s19, 0
    %p88 = por %p86, %p87
    %s90 = sadd.s32 %s89, 1
    %p93 = scmp.eq.s32.totalorder %s13, 1
    %p94 = scmp.ne.s32.totalorder %s89, %s91
    %p95 = scmp.eq.s32.totalorder %s13, 0
    %p96 = por %p94, %p95
    %p97 = scmp.ne.s32.totalorder %s89, %s91
    %p98 = scmp.eq.s32.totalorder %s18, 1
    %p99 = por %p97, %p98
    %p100 = scmp.ne.s32.totalorder %s91, %s92
    %p101 = scmp.eq.s32.totalorder %s18, 0
    %p102 = por %p100, %p101
    %p103 = scmp.ne.s32.totalorder %s91, %s92
    %p104 = scmp.eq.s32.totalorder %s19, 1
    %p105 = por %p103, %p104
    %p107 = scmp.ne.s32.totalorder %s92, %s106
    %p108 = scmp.eq.s32.totalorder %s19, 0
    %p109 = por %p107, %p108
    %s111 = sadd.s32 %s110, 1
    %p114 = scmp.eq.s32.totalorder %s13, 1
    %p115 = scmp.ne.s32.totalorder %s110, %s112
    %p116 = scmp.eq.s32.totalorder %s13, 0
    %p117 = por %p115, %p116
    %p118 = scmp.ne.s32.totalorder %s110, %s112
    %p119 = scmp.eq.s32.totalorder %s18, 1
    %p120 = por %p118, %p119
    %p121 = scmp.ne.s32.totalorder %s112, %s113
    %p122 = scmp.eq.s32.totalorder %s18, 0
    %p123 = por %p121, %p122
    %p124 = scmp.ne.s32.totalorder %s112, %s113
    %p125 = scmp.eq.s32.totalorder %s19, 1
    %p126 = por %p124, %p125
    %p128 = scmp.ne.s32.totalorder %s113, %s127
    %p129 = scmp.eq.s32.totalorder %s19, 0
    %p130 = por %p128, %p129
    %s132 = sadd.s32 %s131, 1
    %p135 = scmp.eq.s32.totalorder %s13, 1
    %p136 = scmp.ne.s32.totalorder %s131, %s133
    %p137 = scmp.eq.s32.totalorder %s13, 0
    %p138 = por %p136, %p137
    %p139 = scmp.ne.s32.totalorder %s131, %s133
    %p140 = scmp.eq.s32.totalorder %s18, 1
    %p141 = por %p139, %p140
    %p142 = scmp.ne.s32.totalorder %s133, %s134
    %p143 = scmp.eq.s32.totalorder %s18, 0
    %p144 = por %p142, %p143
    %p145 = scmp.ne.s32.totalorder %s133, %s134
    %p146 = scmp.eq.s32.totalorder %s19, 1
    %p147 = por %p145, %p146
    %p149 = scmp.ne.s32.totalorder %s134, %s148
    %p150 = scmp.eq.s32.totalorder %s19, 0
    %p151 = por %p149, %p150
    %s153 = sadd.s32 %s152, 1
    %p156 = scmp.eq.s32.totalorder %s13, 1
    %p157 = scmp.ne.s32.totalorder %s152, %s154
    %p158 = scmp.eq.s32.totalorder %s13, 0
    %p159 = por %p157, %p158
    %p160 = scmp.ne.s32.totalorder %s152, %s154
    %p161 = scmp.eq.s32.totalorder %s18, 1
    %p162 = por %p160, %p161
    %p163 = scmp.ne.s32.totalorder %s154, %s155
    %p164 = scmp.eq.s32.totalorder %s18, 0
    %p165 = por %p163, %p164
    %p166 = scmp.ne.s32.totalorder %s154, %s155
    %p167 = scmp.eq.s32.totalorder %s19, 1
    %p168 = por %p166, %p167
    %p170 = scmp.ne.s32.totalorder %s155, %s169
    %p171 = scmp.eq.s32.totalorder %s19, 0
    %p172 = por %p170, %p171
    %s173 = ssub.s32 %s13, %s20
    %p174 = scmp.eq.s32.totalorder %s173, 0
    %s176 = sadd.s32 %s175, 1
    %s177 = scalar_select %p174, %s175, %s176
    %p180 = pneg %p174
    %p181 = scmp.eq.s32.totalorder %s13, 1
    %p182 = por %p180, %p181
    %p183 = scmp.ne.s32.totalorder %s175, %s178
    %p184 = scmp.eq.s32.totalorder %s13, 0
    %p185 = por %p183, %p184
    %p186 = scmp.ne.s32.totalorder %s175, %s178
    %p187 = scmp.eq.s32.totalorder %s18, 1
    %p188 = por %p186, %p187
    %p189 = scmp.ne.s32.totalorder %s178, %s179
    %p190 = scmp.eq.s32.totalorder %s18, 0
    %p191 = por %p189, %p190
    %p192 = scmp.ne.s32.totalorder %s178, %s179
    %p193 = scmp.eq.s32.totalorder %s19, 1
    %p194 = por %p192, %p193
    %p196 = scmp.ne.s32.totalorder %s179, %s195
    %p197 = scmp.eq.s32.totalorder %s19, 0
    %p198 = por %p196, %p197
    %p199 = scmp.le.s32.totalorder 1, %s13
    %p200 = scmp.lt.s32.totalorder %s13, 3
    %p201 = pnand %p199, %p200
    %p202 = pneg %p201
    // Predicated region
    $region9: #{pointnet2_forward.8} parent=5 // pred_check
      _
    $region10: #{pointnet2_forward.8} parent=5 // pred_check_branch
      %204 = sbr.rel (%p201) target = $region12
    $region11: #{pointnet2_forward.8} parent=5 // pred_region
      %s205 = ssub.s32 %s13, 1
      // Predicated region
      $region13: #{pointnet2_forward.8} parent=11 // pred_check
        %p206 = pneg %p60
      $region14: #{pointnet2_forward.8} parent=11 // pred_check_branch
        %208 = sbr.rel (%p206) target = $region16
      $region15: #{pointnet2_forward.8} parent=11 // pred_region
        _
      $region16: #{pointnet2_forward.8} parent=11 // pred_fallthru
        _
      // Predicated region
      $region17: #{pointnet2_forward.8} parent=11 // pred_check
        %p209 = pneg %p81
      $region18: #{pointnet2_forward.8} parent=11 // pred_check_branch
        %211 = sbr.rel (%p209) target = $region20
      $region19: #{pointnet2_forward.8} parent=11 // pred_region
        _
      $region20: #{pointnet2_forward.8} parent=11 // pred_fallthru
        _
      // Predicated region
      $region21: #{pointnet2_forward.8} parent=11 // pred_check
        %p212 = pneg %p102
      $region22: #{pointnet2_forward.8} parent=11 // pred_check_branch
        %214 = sbr.rel (%p212) target = $region24
      $region23: #{pointnet2_forward.8} parent=11 // pred_region
        _
      $region24: #{pointnet2_forward.8} parent=11 // pred_fallthru
        _
      // Predicated region
      $region25: #{pointnet2_forward.8} parent=11 // pred_check
        %p215 = pneg %p123
      $region26: #{pointnet2_forward.8} parent=11 // pred_check_branch
        %217 = sbr.rel (%p215) target = $region28
      $region27: #{pointnet2_forward.8} parent=11 // pred_region
        _
      $region28: #{pointnet2_forward.8} parent=11 // pred_fallthru
        _
      // Predicated region
      $region29: #{pointnet2_forward.8} parent=11 // pred_check
        %p218 = pneg %p144
      $region30: #{pointnet2_forward.8} parent=11 // pred_check_branch
        %220 = sbr.rel (%p218) target = $region32
      $region31: #{pointnet2_forward.8} parent=11 // pred_region
        _
      $region32: #{pointnet2_forward.8} parent=11 // pred_fallthru
        _
      // Predicated region
      $region33: #{pointnet2_forward.8} parent=11 // pred_check
        %p221 = pneg %p165
      $region34: #{pointnet2_forward.8} parent=11 // pred_check_branch
        %223 = sbr.rel (%p221) target = $region36
      $region35: #{pointnet2_forward.8} parent=11 // pred_region
        _
      $region36: #{pointnet2_forward.8} parent=11 // pred_fallthru
        _
    $region12: #{pointnet2_forward.8} parent=5 // pred_fallthru
      _
    %p224 = scmp.lt.s32.totalorder %s13, 2
    // Predicated region
    $region37: #{pointnet2_forward.8} parent=5 // pred_check
      %p225 = pneg %p224
    $region38: #{pointnet2_forward.8} parent=5 // pred_check_branch
      %227 = sbr.rel (%p225) target = $region40
    $region39: #{pointnet2_forward.8} parent=5 // pred_region
      // Predicated region
      $region41: #{pointnet2_forward.8} parent=39 // pred_check
        %p228 = pneg %p33
      $region42: #{pointnet2_forward.8} parent=39 // pred_check_branch
        %230 = sbr.rel (%p228) target = $region44
      $region43: #{pointnet2_forward.8} parent=39 // pred_region
        %s231 = smul.u32 64, %s13
        %p232 = scmp.lt.s32.totalorder %s231, 127
        %s233 = scalar_select %p232, %s231, 127
        %s234 = smul.addr %s233, 4
        %s235 = scalar_lea.vmem %s0, %s234
        %s236 = smul.u32 64, %s13
      $region44: #{pointnet2_forward.8} parent=39 // pred_fallthru
        _
    $region40: #{pointnet2_forward.8} parent=5 // pred_fallthru
      _
    %p237 = scmp.le.s32.totalorder 1, %s13
    %p238 = scmp.lt.s32.totalorder %s13, 3
    %p239 = pnand %p237, %p238
    %p240 = pneg %p239
    // Predicated region
    $region45: #{pointnet2_forward.8} parent=5 // pred_check
      _
    $region46: #{pointnet2_forward.8} parent=5 // pred_check_branch
      %242 = sbr.rel (%p239) target = $region48
    $region47: #{pointnet2_forward.8} parent=5 // pred_region
      %s243 = ssub.s32 %s13, 1
      %s244 = smul.u32 64, %s18
      %p245 = scmp.lt.s32.totalorder %s244, 127
      %s246 = scalar_select %p245, %s244, 127
      %s247 = smul.addr %s246, 4
      %s248 = scalar_lea.vmem %s0, %s247
      %p249 = pneg %p39
      %p250 = pneg %p36
      %p251 = pneg %p60
      %p252 = pneg %p57
      %p253 = pneg %p81
      %p254 = pneg %p78
      %p255 = pneg %p102
      %p256 = pneg %p99
      %p257 = pneg %p123
      %p258 = pneg %p120
      %p259 = pneg %p144
      %p260 = pneg %p141
      %p261 = pneg %p165
      %p262 = pneg %p162
      %p263 = pneg %p191
      %p264 = pneg %p188
      %s265 = smul.u32 4, %s18
      %p266 = scmp.lt.s32.totalorder %s265, 7
      %s267 = scalar_select %p266, %s265, 7
      %s268 = smul.addr %s267, 4
      %s269 = scalar_lea.vmem %s7, %s268
      %s270 = smul.u32 64, %s18
      %p271 = scmp.lt.s32.totalorder %s270, 127
      %s272 = scalar_select %p271, %s270, 127
      %s273 = smul.addr %s272, 4
      %s274 = scalar_lea.vmem %s0, %s273
      %s275 = smul.u32 64, %s18
      %s276 = smul.u32 4, %s18
      %p277 = scmp.lt.s32.totalorder %s276, 7
      %s278 = scalar_select %p277, %s276, 7
      %s279 = smul.addr %s278, 4
      %s280 = scalar_lea.vmem %s7, %s279
      %s281 = smul.u32 4, %s18
      %v283 = vld [vmem:[%s274] sm:$0xf]
      %v284 = vld [vmem:[%s274 + $0x4] sm:$0xf]
      %v285 = vld [vmem:[%s274 + $0x8] sm:$0xf]
      %v286 = vld [vmem:[%s274 + $0xc] sm:$0xf]
      %v287 = vld [vmem:[%s274 + $0x10] sm:$0xf]
      %v288 = vld [vmem:[%s274 + $0x14] sm:$0xf]
      %v289 = vld [vmem:[%s274 + $0x18] sm:$0xf]
      %v290 = vld [vmem:[%s274 + $0x1c] sm:$0xf]
      %v291 = vld [vmem:[%s274 + $0x20] sm:$0xf]
      %v292 = vld [vmem:[%s274 + $0x24] sm:$0xf]
      %v293 = vld [vmem:[%s274 + $0x28] sm:$0xf]
      %v294 = vld [vmem:[%s274 + $0x2c] sm:$0xf]
      %v295 = vld [vmem:[%s274 + $0x30] sm:$0xf]
      %v296 = vld [vmem:[%s274 + $0x34] sm:$0xf]
      %v297 = vld [vmem:[%s274 + $0x38] sm:$0xf]
      %v298 = vld [vmem:[%s274 + $0x3c] sm:$0xf]
      %v299 = vld [vmem:[%s274 + $0x40] sm:$0xf]
      %v300 = vld [vmem:[%s274 + $0x44] sm:$0xf]
      %v301 = vld [vmem:[%s274 + $0x48] sm:$0xf]
      %v302 = vld [vmem:[%s274 + $0x4c] sm:$0xf]
      %v303 = vld [vmem:[%s274 + $0x50] sm:$0xf]
      %v304 = vld [vmem:[%s274 + $0x54] sm:$0xf]
      %v305 = vld [vmem:[%s274 + $0x58] sm:$0xf]
      %v306 = vld [vmem:[%s274 + $0x5c] sm:$0xf]
      %v307 = vld [vmem:[%s274 + $0x60] sm:$0xf]
      %v308 = vld [vmem:[%s274 + $0x64] sm:$0xf]
      %v309 = vld [vmem:[%s274 + $0x68] sm:$0xf]
      %v310 = vld [vmem:[%s274 + $0x6c] sm:$0xf]
      %v311 = vld [vmem:[%s274 + $0x70] sm:$0xf]
      %v312 = vld [vmem:[%s274 + $0x74] sm:$0xf]
      %v313 = vld [vmem:[%s274 + $0x78] sm:$0xf]
      %v314 = vld [vmem:[%s274 + $0x7c] sm:$0xf]
      %v315 = vld [vmem:[%s274 + $0x80] sm:$0xf]
      %v316 = vld [vmem:[%s274 + $0x84] sm:$0xf]
      %v317 = vld [vmem:[%s274 + $0x88] sm:$0xf]
      %v318 = vld [vmem:[%s274 + $0x8c] sm:$0xf]
      %v319 = vld [vmem:[%s274 + $0x90] sm:$0xf]
      %v320 = vld [vmem:[%s274 + $0x94] sm:$0xf]
      %v321 = vld [vmem:[%s274 + $0x98] sm:$0xf]
      %v322 = vld [vmem:[%s274 + $0x9c] sm:$0xf]
      %v323 = vld [vmem:[%s274 + $0xa0] sm:$0xf]
      %v324 = vld [vmem:[%s274 + $0xa4] sm:$0xf]
      %v325 = vld [vmem:[%s274 + $0xa8] sm:$0xf]
      %v326 = vld [vmem:[%s274 + $0xac] sm:$0xf]
      %v327 = vld [vmem:[%s274 + $0xb0] sm:$0xf]
      %v328 = vld [vmem:[%s274 + $0xb4] sm:$0xf]
      %v329 = vld [vmem:[%s274 + $0xb8] sm:$0xf]
      %v330 = vld [vmem:[%s274 + $0xbc] sm:$0xf]
      %v331 = vld [vmem:[%s274 + $0xc0] sm:$0xf]
      %v332 = vld [vmem:[%s274 + $0xc4] sm:$0xf]
      %v333 = vld [vmem:[%s274 + $0xc8] sm:$0xf]
      %v334 = vld [vmem:[%s274 + $0xcc] sm:$0xf]
      %v335 = vld [vmem:[%s274 + $0xd0] sm:$0xf]
      %v336 = vld [vmem:[%s274 + $0xd4] sm:$0xf]
      %v337 = vld [vmem:[%s274 + $0xd8] sm:$0xf]
      %v338 = vld [vmem:[%s274 + $0xdc] sm:$0xf]
      %v339 = vld [vmem:[%s274 + $0xe0] sm:$0xf]
      %v340 = vld [vmem:[%s274 + $0xe4] sm:$0xf]
      %v341 = vld [vmem:[%s274 + $0xe8] sm:$0xf]
      %v342 = vld [vmem:[%s274 + $0xec] sm:$0xf]
      %v343 = vld [vmem:[%s274 + $0xf0] sm:$0xf]
      %v344 = vld [vmem:[%s274 + $0xf4] sm:$0xf]
      %v345 = vld [vmem:[%s274 + $0xf8] sm:$0xf]
      %v346 = vld [vmem:[%s274 + $0xfc] sm:$0xf]
      %v347 = vld [vmem:[%s1] sm:$0xf]
      %v348 = vld [vmem:[%s1 + $0x4] sm:$0xf]
      %v349 = vld [vmem:[%s2] sm:$0x1]
      %v351 = vlaneseq
      %v352 = vshrl.u32 %v351, 7
      %v353 = vsub.s32 0, %v352
      %v354 = vrot.slane %v349, %v353
      %v420 = vunpack.c.l.b16 %v283
      %v421 = vunpack.c.l.b16 %v284
      %v422 = vunpack.c.l.b16 %v285
      %v423 = vunpack.c.l.b16 %v286
      %v424 = vunpack.c.l.b16 %v287
      %v425 = vunpack.c.l.b16 %v288
      %v426 = vunpack.c.l.b16 %v289
      %v427 = vunpack.c.l.b16 %v290
      %v428 = vunpack.c.l.b16 %v291
      %v429 = vunpack.c.l.b16 %v292
      %v430 = vunpack.c.l.b16 %v293
      %v431 = vunpack.c.l.b16 %v294
      %v432 = vunpack.c.l.b16 %v295
      %v433 = vunpack.c.l.b16 %v296
      %v434 = vunpack.c.l.b16 %v297
      %v435 = vunpack.c.l.b16 %v298
      %v436 = vunpack.c.l.b16 %v299
      %v437 = vunpack.c.l.b16 %v300
      %v438 = vunpack.c.l.b16 %v301
      %v439 = vunpack.c.l.b16 %v302
      %v440 = vunpack.c.l.b16 %v303
      %v441 = vunpack.c.l.b16 %v304
      %v442 = vunpack.c.l.b16 %v305
      %v443 = vunpack.c.l.b16 %v306
      %v444 = vunpack.c.l.b16 %v307
      %v445 = vunpack.c.l.b16 %v308
      %v446 = vunpack.c.l.b16 %v309
      %v447 = vunpack.c.l.b16 %v310
      %v448 = vunpack.c.l.b16 %v311
      %v449 = vunpack.c.l.b16 %v312
      %v450 = vunpack.c.l.b16 %v313
      %v451 = vunpack.c.l.b16 %v314
      %v452 = vunpack.c.l.b16 %v315
      %v453 = vunpack.c.l.b16 %v316
      %v454 = vunpack.c.l.b16 %v317
      %v455 = vunpack.c.l.b16 %v318
      %v456 = vunpack.c.l.b16 %v319
      %v457 = vunpack.c.l.b16 %v320
      %v458 = vunpack.c.l.b16 %v321
      %v459 = vunpack.c.l.b16 %v322
      %v460 = vunpack.c.l.b16 %v323
      %v461 = vunpack.c.l.b16 %v324
      %v462 = vunpack.c.l.b16 %v325
      %v463 = vunpack.c.l.b16 %v326
      %v464 = vunpack.c.l.b16 %v327
      %v465 = vunpack.c.l.b16 %v328
      %v466 = vunpack.c.l.b16 %v329
      %v467 = vunpack.c.l.b16 %v330
      %v468 = vunpack.c.l.b16 %v331
      %v469 = vunpack.c.l.b16 %v332
      %v470 = vunpack.c.l.b16 %v333
      %v471 = vunpack.c.l.b16 %v334
      %v472 = vunpack.c.l.b16 %v335
      %v473 = vunpack.c.l.b16 %v336
      %v474 = vunpack.c.l.b16 %v337
      %v475 = vunpack.c.l.b16 %v338
      %v476 = vunpack.c.l.b16 %v339
      %v477 = vunpack.c.l.b16 %v340
      %v478 = vunpack.c.l.b16 %v341
      %v479 = vunpack.c.l.b16 %v342
      %v480 = vunpack.c.l.b16 %v343
      %v481 = vunpack.c.l.b16 %v344
      %v482 = vunpack.c.l.b16 %v345
      %v483 = vunpack.c.l.b16 %v346
      %v484 = vpack.c.b16 %v421, %v420
      %v485 = vpack.c.b16 %v423, %v422
      %v486 = vpack.c.b16 %v425, %v424
      %v487 = vpack.c.b16 %v427, %v426
      %v488 = vpack.c.b16 %v429, %v428
      %v489 = vpack.c.b16 %v431, %v430
      %v490 = vpack.c.b16 %v433, %v432
      %v491 = vpack.c.b16 %v435, %v434
      %v492 = vpack.c.b16 %v437, %v436
      %v493 = vpack.c.b16 %v439, %v438
      %v494 = vpack.c.b16 %v441, %v440
      %v495 = vpack.c.b16 %v443, %v442
      %v496 = vpack.c.b16 %v445, %v444
      %v497 = vpack.c.b16 %v447, %v446
      %v498 = vpack.c.b16 %v449, %v448
      %v499 = vpack.c.b16 %v451, %v450
      %v500 = vpack.c.b16 %v453, %v452
      %v501 = vpack.c.b16 %v455, %v454
      %v502 = vpack.c.b16 %v457, %v456
      %v503 = vpack.c.b16 %v459, %v458
      %v504 = vpack.c.b16 %v461, %v460
      %v505 = vpack.c.b16 %v463, %v462
      %v506 = vpack.c.b16 %v465, %v464
      %v507 = vpack.c.b16 %v467, %v466
      %v508 = vpack.c.b16 %v469, %v468
      %v509 = vpack.c.b16 %v471, %v470
      %v510 = vpack.c.b16 %v473, %v472
      %v511 = vpack.c.b16 %v475, %v474
      %v512 = vpack.c.b16 %v477, %v476
      %v513 = vpack.c.b16 %v479, %v478
      %v514 = vpack.c.b16 %v481, %v480
      %v515 = vpack.c.b16 %v483, %v482
      %v518 = vunpack.c.l.b16 %v347
      %v519 = vunpack.c.l.b16 %v348
      %v520 = vpack.c.b16 %v519, %v518
      %vm522 = vcmask 130048
      %v524 = vsel %vm522, %v484, 0
      %v527 = vsel %vm522, %v485, 0
      %v530 = vsel %vm522, %v486, 0
      %v533 = vsel %vm522, %v487, 0
      %v536 = vsel %vm522, %v488, 0
      %v539 = vsel %vm522, %v489, 0
      %v542 = vsel %vm522, %v490, 0
      %v545 = vsel %vm522, %v491, 0
      %v548 = vsel %vm522, %v492, 0
      %v551 = vsel %vm522, %v493, 0
      %v554 = vsel %vm522, %v494, 0
      %v557 = vsel %vm522, %v495, 0
      %v560 = vsel %vm522, %v496, 0
      %v563 = vsel %vm522, %v497, 0
      %v566 = vsel %vm522, %v498, 0
      %v569 = vsel %vm522, %v499, 0
      %v572 = vsel %vm522, %v500, 0
      %v575 = vsel %vm522, %v501, 0
      %v578 = vsel %vm522, %v502, 0
      %v581 = vsel %vm522, %v503, 0
      %v584 = vsel %vm522, %v504, 0
      %v587 = vsel %vm522, %v505, 0
      %v590 = vsel %vm522, %v506, 0
      %v593 = vsel %vm522, %v507, 0
      %v596 = vsel %vm522, %v508, 0
      %v599 = vsel %vm522, %v509, 0
      %v602 = vsel %vm522, %v510, 0
      %v605 = vsel %vm522, %v511, 0
      %v608 = vsel %vm522, %v512, 0
      %v611 = vsel %vm522, %v513, 0
      %v614 = vsel %vm522, %v514, 0
      %v617 = vsel %vm522, %v515, 0
      %619 = vmatprep.subr.bf16.mxu0 0
      %620 = vmatpush1.bf16.msra.mxu0 0
      %621 = vmatprep.subr.bf16.mxu0 0
      %622 = vmatpush1.bf16.msra.mxu0 0
      %623 = vmatprep.subr.bf16.mxu0 0
      %624 = vmatpush1.bf16.msra.mxu0 0
      %625 = vmatprep.subr.bf16.mxu0 0
      %626 = vmatpush1.bf16.msra.mxu0 0
      %627 = vmatprep.subr.bf16.mxu0 0
      %628 = vmatpush1.bf16.msra.mxu0 0
      %629 = vmatprep.subr.bf16.mxu0 0
      %630 = vmatpush1.bf16.msra.mxu0 0
      %631 = vmatprep.subr.bf16.mxu0 0
      %632 = vmatpush1.bf16.msra.mxu0 0
      %633 = vmatprep.subr.bf16.mxu0 0
      %634 = vmatpush1.bf16.msra.mxu0 %v520
      %635 = vmatprep.subr.bf16.mxu0 0
      %636 = vmatpush2.bf16.msra.mxu0 0
      %637 = vmatprep.subr.bf16.mxu0 0
      %638 = vmatpush2.bf16.msra.mxu0 0
      %639 = vmatprep.subr.bf16.mxu0 0
      %640 = vmatpush2.bf16.msra.mxu0 0
      %641 = vmatprep.subr.bf16.mxu0 0
      %642 = vmatpush2.bf16.msra.mxu0 0
      %643 = vmatprep.subr.bf16.mxu0 0
      %644 = vmatpush2.bf16.msra.mxu0 0
      %645 = vmatprep.subr.bf16.mxu0 0
      %646 = vmatpush2.bf16.msra.mxu0 0
      %647 = vmatprep.subr.bf16.mxu0 0
      %648 = vmatpush2.bf16.msra.mxu0 0
      %649 = vmatprep.subr.bf16.mxu0 0
      %650 = vmatpush2.bf16.msra.mxu0 0
      %651 = vmatprep.mubr.bf16.mxu0 0
      %652 = vmatmul.mubr.bf16.gmra.mxu0 %v524
      %v653 = vpop.f32.mrf.mxu0
      %v654 = vadd.f32 %v354, %v653
      %v655 = vpop.f32.mrf.mxu0
      %v656 = vpop.f32.mrf.mxu0
      %v657 = vadd.f32 %v354, %v656
      %v658 = vpop.f32.mrf.mxu0
      %659 = vmatprep.mubr.bf16.mxu0 0
      %660 = vmatmul.mubr.bf16.gmra.mxu0 %v527
      %v661 = vpop.f32.mrf.mxu0
      %v662 = vadd.f32 %v354, %v661
      %v663 = vpop.f32.mrf.mxu0
      %v664 = vpop.f32.mrf.mxu0
      %v665 = vadd.f32 %v354, %v664
      %v666 = vpop.f32.mrf.mxu0
      %667 = vmatprep.mubr.bf16.mxu0 0
      %668 = vmatmul.mubr.bf16.gmra.mxu0 %v530
      %v669 = vpop.f32.mrf.mxu0
      %v670 = vadd.f32 %v354, %v669
      %v671 = vpop.f32.mrf.mxu0
      %v672 = vpop.f32.mrf.mxu0
      %v673 = vadd.f32 %v354, %v672
      %v674 = vpop.f32.mrf.mxu0
      %675 = vmatprep.mubr.bf16.mxu0 0
      %676 = vmatmul.mubr.bf16.gmra.mxu0 %v533
      %v677 = vpop.f32.mrf.mxu0
      %v678 = vadd.f32 %v354, %v677
      %v679 = vpop.f32.mrf.mxu0
      %v680 = vpop.f32.mrf.mxu0
      %v681 = vadd.f32 %v354, %v680
      %v682 = vpop.f32.mrf.mxu0
      %683 = vmatprep.mubr.bf16.mxu0 0
      %684 = vmatmul.mubr.bf16.gmra.mxu0 %v536
      %v685 = vpop.f32.mrf.mxu0
      %v686 = vadd.f32 %v354, %v685
      %v687 = vpop.f32.mrf.mxu0
      %v688 = vpop.f32.mrf.mxu0
      %v689 = vadd.f32 %v354, %v688
      %v690 = vpop.f32.mrf.mxu0
      %691 = vmatprep.mubr.bf16.mxu0 0
      %692 = vmatmul.mubr.bf16.gmra.mxu0 %v539
      %v693 = vpop.f32.mrf.mxu0
      %v694 = vadd.f32 %v354, %v693
      %v695 = vpop.f32.mrf.mxu0
      %v696 = vpop.f32.mrf.mxu0
      %v697 = vadd.f32 %v354, %v696
      %v698 = vpop.f32.mrf.mxu0
      %699 = vmatprep.mubr.bf16.mxu0 0
      %700 = vmatmul.mubr.bf16.gmra.mxu0 %v542
      %v701 = vpop.f32.mrf.mxu0
      %v702 = vadd.f32 %v354, %v701
      %v703 = vpop.f32.mrf.mxu0
      %v704 = vpop.f32.mrf.mxu0
      %v705 = vadd.f32 %v354, %v704
      %v706 = vpop.f32.mrf.mxu0
      %707 = vmatprep.mubr.bf16.mxu0 0
      %708 = vmatmul.mubr.bf16.gmra.mxu0 %v545
      %v709 = vpop.f32.mrf.mxu0
      %v710 = vadd.f32 %v354, %v709
      %v711 = vpop.f32.mrf.mxu0
      %v712 = vpop.f32.mrf.mxu0
      %v713 = vadd.f32 %v354, %v712
      %v714 = vpop.f32.mrf.mxu0
      %715 = vmatprep.mubr.bf16.mxu0 0
      %716 = vmatmul.mubr.bf16.gmra.mxu0 %v548
      %v717 = vpop.f32.mrf.mxu0
      %v718 = vadd.f32 %v354, %v717
      %v719 = vpop.f32.mrf.mxu0
      %v720 = vpop.f32.mrf.mxu0
      %v721 = vadd.f32 %v354, %v720
      %v722 = vpop.f32.mrf.mxu0
      %723 = vmatprep.mubr.bf16.mxu0 0
      %724 = vmatmul.mubr.bf16.gmra.mxu0 %v551
      %v725 = vpop.f32.mrf.mxu0
      %v726 = vadd.f32 %v354, %v725
      %v727 = vpop.f32.mrf.mxu0
      %v728 = vpop.f32.mrf.mxu0
      %v729 = vadd.f32 %v354, %v728
      %v730 = vpop.f32.mrf.mxu0
      %731 = vmatprep.mubr.bf16.mxu0 0
      %732 = vmatmul.mubr.bf16.gmra.mxu0 %v554
      %v733 = vpop.f32.mrf.mxu0
      %v734 = vadd.f32 %v354, %v733
      %v735 = vpop.f32.mrf.mxu0
      %v736 = vpop.f32.mrf.mxu0
      %v737 = vadd.f32 %v354, %v736
      %v738 = vpop.f32.mrf.mxu0
      %739 = vmatprep.mubr.bf16.mxu0 0
      %740 = vmatmul.mubr.bf16.gmra.mxu0 %v557
      %v741 = vpop.f32.mrf.mxu0
      %v742 = vadd.f32 %v354, %v741
      %v743 = vpop.f32.mrf.mxu0
      %v744 = vpop.f32.mrf.mxu0
      %v745 = vadd.f32 %v354, %v744
      %v746 = vpop.f32.mrf.mxu0
      %747 = vmatprep.mubr.bf16.mxu0 0
      %748 = vmatmul.mubr.bf16.gmra.mxu0 %v560
      %v749 = vpop.f32.mrf.mxu0
      %v750 = vadd.f32 %v354, %v749
      %v751 = vpop.f32.mrf.mxu0
      %v752 = vpop.f32.mrf.mxu0
      %v753 = vadd.f32 %v354, %v752
      %v754 = vpop.f32.mrf.mxu0
      %755 = vmatprep.mubr.bf16.mxu0 0
      %756 = vmatmul.mubr.bf16.gmra.mxu0 %v563
      %v757 = vpop.f32.mrf.mxu0
      %v758 = vadd.f32 %v354, %v757
      %v759 = vpop.f32.mrf.mxu0
      %v760 = vpop.f32.mrf.mxu0
      %v761 = vadd.f32 %v354, %v760
      %v762 = vpop.f32.mrf.mxu0
      %763 = vmatprep.mubr.bf16.mxu0 0
      %764 = vmatmul.mubr.bf16.gmra.mxu0 %v566
      %v765 = vpop.f32.mrf.mxu0
      %v766 = vadd.f32 %v354, %v765
      %v767 = vpop.f32.mrf.mxu0
      %v768 = vpop.f32.mrf.mxu0
      %v769 = vadd.f32 %v354, %v768
      %v770 = vpop.f32.mrf.mxu0
      %771 = vmatprep.mubr.bf16.mxu0 0
      %772 = vmatmul.mubr.bf16.gmra.mxu0 %v569
      %v773 = vpop.f32.mrf.mxu0
      %v774 = vadd.f32 %v354, %v773
      %v775 = vpop.f32.mrf.mxu0
      %v776 = vpop.f32.mrf.mxu0
      %v777 = vadd.f32 %v354, %v776
      %v778 = vpop.f32.mrf.mxu0
      %779 = vmatprep.mubr.bf16.mxu0 0
      %780 = vmatmul.mubr.bf16.gmra.mxu0 %v572
      %v781 = vpop.f32.mrf.mxu0
      %v782 = vadd.f32 %v354, %v781
      %v783 = vpop.f32.mrf.mxu0
      %v784 = vpop.f32.mrf.mxu0
      %v785 = vadd.f32 %v354, %v784
      %v786 = vpop.f32.mrf.mxu0
      %787 = vmatprep.mubr.bf16.mxu0 0
      %788 = vmatmul.mubr.bf16.gmra.mxu0 %v575
      %v789 = vpop.f32.mrf.mxu0
      %v790 = vadd.f32 %v354, %v789
      %v791 = vpop.f32.mrf.mxu0
      %v792 = vpop.f32.mrf.mxu0
      %v793 = vadd.f32 %v354, %v792
      %v794 = vpop.f32.mrf.mxu0
      %795 = vmatprep.mubr.bf16.mxu0 0
      %796 = vmatmul.mubr.bf16.gmra.mxu0 %v578
      %v797 = vpop.f32.mrf.mxu0
      %v798 = vadd.f32 %v354, %v797
      %v799 = vpop.f32.mrf.mxu0
      %v800 = vpop.f32.mrf.mxu0
      %v801 = vadd.f32 %v354, %v800
      %v802 = vpop.f32.mrf.mxu0
      %803 = vmatprep.mubr.bf16.mxu0 0
      %804 = vmatmul.mubr.bf16.gmra.mxu0 %v581
      %v805 = vpop.f32.mrf.mxu0
      %v806 = vadd.f32 %v354, %v805
      %v807 = vpop.f32.mrf.mxu0
      %v808 = vpop.f32.mrf.mxu0
      %v809 = vadd.f32 %v354, %v808
      %v810 = vpop.f32.mrf.mxu0
      %811 = vmatprep.mubr.bf16.mxu0 0
      %812 = vmatmul.mubr.bf16.gmra.mxu0 %v584
      %v813 = vpop.f32.mrf.mxu0
      %v814 = vadd.f32 %v354, %v813
      %v815 = vpop.f32.mrf.mxu0
      %v816 = vpop.f32.mrf.mxu0
      %v817 = vadd.f32 %v354, %v816
      %v818 = vpop.f32.mrf.mxu0
      %819 = vmatprep.mubr.bf16.mxu0 0
      %820 = vmatmul.mubr.bf16.gmra.mxu0 %v587
      %v821 = vpop.f32.mrf.mxu0
      %v822 = vadd.f32 %v354, %v821
      %v823 = vpop.f32.mrf.mxu0
      %v824 = vpop.f32.mrf.mxu0
      %v825 = vadd.f32 %v354, %v824
      %v826 = vpop.f32.mrf.mxu0
      %827 = vmatprep.mubr.bf16.mxu0 0
      %828 = vmatmul.mubr.bf16.gmra.mxu0 %v590
      %v829 = vpop.f32.mrf.mxu0
      %v830 = vadd.f32 %v354, %v829
      %v831 = vpop.f32.mrf.mxu0
      %v832 = vpop.f32.mrf.mxu0
      %v833 = vadd.f32 %v354, %v832
      %v834 = vpop.f32.mrf.mxu0
      %835 = vmatprep.mubr.bf16.mxu0 0
      %836 = vmatmul.mubr.bf16.gmra.mxu0 %v593
      %v837 = vpop.f32.mrf.mxu0
      %v838 = vadd.f32 %v354, %v837
      %v839 = vpop.f32.mrf.mxu0
      %v840 = vpop.f32.mrf.mxu0
      %v841 = vadd.f32 %v354, %v840
      %v842 = vpop.f32.mrf.mxu0
      %843 = vmatprep.mubr.bf16.mxu0 0
      %844 = vmatmul.mubr.bf16.gmra.mxu0 %v596
      %v845 = vpop.f32.mrf.mxu0
      %v846 = vadd.f32 %v354, %v845
      %v847 = vpop.f32.mrf.mxu0
      %v848 = vpop.f32.mrf.mxu0
      %v849 = vadd.f32 %v354, %v848
      %v850 = vpop.f32.mrf.mxu0
      %851 = vmatprep.mubr.bf16.mxu0 0
      %852 = vmatmul.mubr.bf16.gmra.mxu0 %v599
      %v853 = vpop.f32.mrf.mxu0
      %v854 = vadd.f32 %v354, %v853
      %v855 = vpop.f32.mrf.mxu0
      %v856 = vpop.f32.mrf.mxu0
      %v857 = vadd.f32 %v354, %v856
      %v858 = vpop.f32.mrf.mxu0
      %859 = vmatprep.mubr.bf16.mxu0 0
      %860 = vmatmul.mubr.bf16.gmra.mxu0 %v602
      %v861 = vpop.f32.mrf.mxu0
      %v862 = vadd.f32 %v354, %v861
      %v863 = vpop.f32.mrf.mxu0
      %v864 = vpop.f32.mrf.mxu0
      %v865 = vadd.f32 %v354, %v864
      %v866 = vpop.f32.mrf.mxu0
      %867 = vmatprep.mubr.bf16.mxu0 0
      %868 = vmatmul.mubr.bf16.gmra.mxu0 %v605
      %v869 = vpop.f32.mrf.mxu0
      %v870 = vadd.f32 %v354, %v869
      %v871 = vpop.f32.mrf.mxu0
      %v872 = vpop.f32.mrf.mxu0
      %v873 = vadd.f32 %v354, %v872
      %v874 = vpop.f32.mrf.mxu0
      %875 = vmatprep.mubr.bf16.mxu0 0
      %876 = vmatmul.mubr.bf16.gmra.mxu0 %v608
      %v877 = vpop.f32.mrf.mxu0
      %v878 = vadd.f32 %v354, %v877
      %v879 = vpop.f32.mrf.mxu0
      %v880 = vpop.f32.mrf.mxu0
      %v881 = vadd.f32 %v354, %v880
      %v882 = vpop.f32.mrf.mxu0
      %883 = vmatprep.mubr.bf16.mxu0 0
      %884 = vmatmul.mubr.bf16.gmra.mxu0 %v611
      %v885 = vpop.f32.mrf.mxu0
      %v886 = vadd.f32 %v354, %v885
      %v887 = vpop.f32.mrf.mxu0
      %v888 = vpop.f32.mrf.mxu0
      %v889 = vadd.f32 %v354, %v888
      %v890 = vpop.f32.mrf.mxu0
      %891 = vmatprep.mubr.bf16.mxu0 0
      %892 = vmatmul.mubr.bf16.gmra.mxu0 %v614
      %v893 = vpop.f32.mrf.mxu0
      %v894 = vadd.f32 %v354, %v893
      %v895 = vpop.f32.mrf.mxu0
      %v896 = vpop.f32.mrf.mxu0
      %v897 = vadd.f32 %v354, %v896
      %v898 = vpop.f32.mrf.mxu0
      %899 = vmatprep.mubr.bf16.mxu0 0
      %900 = vmatmul.mubr.bf16.gmra.mxu0 %v617
      %v901 = vpop.f32.mrf.mxu0
      %v902 = vadd.f32 %v354, %v901
      %v903 = vpop.f32.mrf.mxu0
      %v904 = vpop.f32.mrf.mxu0
      %v905 = vadd.f32 %v354, %v904
      %v906 = vpop.f32.mrf.mxu0
      %907 = vdwg.mxu0
      %v908 = vmax.f32 %v654, 0.0
      %v909 = vmax.f32 %v657, 0.0
      %v910 = vmax.f32 %v662, 0.0
      %v911 = vmax.f32 %v665, 0.0
      %v912 = vmax.f32 %v670, 0.0
      %v913 = vmax.f32 %v673, 0.0
      %v914 = vmax.f32 %v678, 0.0
      %v915 = vmax.f32 %v681, 0.0
      %v916 = vmax.f32 %v686, 0.0
      %v917 = vmax.f32 %v689, 0.0
      %v918 = vmax.f32 %v694, 0.0
      %v919 = vmax.f32 %v697, 0.0
      %v920 = vmax.f32 %v702, 0.0
      %v921 = vmax.f32 %v705, 0.0
      %v922 = vmax.f32 %v710, 0.0
      %v923 = vmax.f32 %v713, 0.0
      %v924 = vmax.f32 %v718, 0.0
      %v925 = vmax.f32 %v721, 0.0
      %v926 = vmax.f32 %v726, 0.0
      %v927 = vmax.f32 %v729, 0.0
      %v928 = vmax.f32 %v734, 0.0
      %v929 = vmax.f32 %v737, 0.0
      %v930 = vmax.f32 %v742, 0.0
      %v931 = vmax.f32 %v745, 0.0
      %v932 = vmax.f32 %v750, 0.0
      %v933 = vmax.f32 %v753, 0.0
      %v934 = vmax.f32 %v758, 0.0
      %v935 = vmax.f32 %v761, 0.0
      %v936 = vmax.f32 %v766, 0.0
      %v937 = vmax.f32 %v769, 0.0
      %v938 = vmax.f32 %v774, 0.0
      %v939 = vmax.f32 %v777, 0.0
      %v940 = vmax.f32 %v782, 0.0
      %v941 = vmax.f32 %v785, 0.0
      %v942 = vmax.f32 %v790, 0.0
      %v943 = vmax.f32 %v793, 0.0
      %v944 = vmax.f32 %v798, 0.0
      %v945 = vmax.f32 %v801, 0.0
      %v946 = vmax.f32 %v806, 0.0
      %v947 = vmax.f32 %v809, 0.0
      %v948 = vmax.f32 %v814, 0.0
      %v949 = vmax.f32 %v817, 0.0
      %v950 = vmax.f32 %v822, 0.0
      %v951 = vmax.f32 %v825, 0.0
      %v952 = vmax.f32 %v830, 0.0
      %v953 = vmax.f32 %v833, 0.0
      %v954 = vmax.f32 %v838, 0.0
      %v955 = vmax.f32 %v841, 0.0
      %v956 = vmax.f32 %v846, 0.0
      %v957 = vmax.f32 %v849, 0.0
      %v958 = vmax.f32 %v854, 0.0
      %v959 = vmax.f32 %v857, 0.0
      %v960 = vmax.f32 %v862, 0.0
      %v961 = vmax.f32 %v865, 0.0
      %v962 = vmax.f32 %v870, 0.0
      %v963 = vmax.f32 %v873, 0.0
      %v964 = vmax.f32 %v878, 0.0
      %v965 = vmax.f32 %v881, 0.0
      %v966 = vmax.f32 %v886, 0.0
      %v967 = vmax.f32 %v889, 0.0
      %v968 = vmax.f32 %v894, 0.0
      %v969 = vmax.f32 %v897, 0.0
      %v970 = vmax.f32 %v902, 0.0
      %v971 = vmax.f32 %v905, 0.0
      %v972 = vpack.c.bf16 %v909, %v908
      %v973 = vpack.c.bf16 %v911, %v910
      %v974 = vpack.c.bf16 %v913, %v912
      %v975 = vpack.c.bf16 %v915, %v914
      %v976 = vpack.c.bf16 %v917, %v916
      %v977 = vpack.c.bf16 %v919, %v918
      %v978 = vpack.c.bf16 %v921, %v920
      %v979 = vpack.c.bf16 %v923, %v922
      %v980 = vpack.c.bf16 %v925, %v924
      %v981 = vpack.c.bf16 %v927, %v926
      %v982 = vpack.c.bf16 %v929, %v928
      %v983 = vpack.c.bf16 %v931, %v930
      %v984 = vpack.c.bf16 %v933, %v932
      %v985 = vpack.c.bf16 %v935, %v934
      %v986 = vpack.c.bf16 %v937, %v936
      %v987 = vpack.c.bf16 %v939, %v938
      %v988 = vpack.c.bf16 %v941, %v940
      %v989 = vpack.c.bf16 %v943, %v942
      %v990 = vpack.c.bf16 %v945, %v944
      %v991 = vpack.c.bf16 %v947, %v946
      %v992 = vpack.c.bf16 %v949, %v948
      %v993 = vpack.c.bf16 %v951, %v950
      %v994 = vpack.c.bf16 %v953, %v952
      %v995 = vpack.c.bf16 %v955, %v954
      %v996 = vpack.c.bf16 %v957, %v956
      %v997 = vpack.c.bf16 %v959, %v958
      %v998 = vpack.c.bf16 %v961, %v960
      %v999 = vpack.c.bf16 %v963, %v962
      %v1000 = vpack.c.bf16 %v965, %v964
      %v1001 = vpack.c.bf16 %v967, %v966
      %v1002 = vpack.c.bf16 %v969, %v968
      %v1003 = vpack.c.bf16 %v971, %v970
      %v1004 = vld [vmem:[%s3] sm:$0xf]
      %v1005 = vld [vmem:[%s3 + $0x4] sm:$0xf]
      %v1006 = vld [vmem:[%s3 + $0x8] sm:$0xf]
      %v1007 = vld [vmem:[%s3 + $0xc] sm:$0xf]
      %v1008 = vld [vmem:[%s4] sm:$0x1]
      %v1010 = vlaneseq
      %v1011 = vshrl.u32 %v1010, 7
      %v1012 = vsub.s32 0, %v1011
      %v1013 = vrot.slane %v1008, %v1012
      %v1019 = vunpack.c.l.b16 %v1004
      %v1020 = vunpack.c.l.b16 %v1005
      %v1021 = vunpack.c.l.b16 %v1006
      %v1022 = vunpack.c.l.b16 %v1007
      %v1023 = vpack.c.b16 %v1020, %v1019
      %v1024 = vpack.c.b16 %v1022, %v1021
      %vm1027 = vcmask 261120
      %v1029 = vsel %vm1027, %v972, 0
      %v1032 = vsel %vm1027, %v973, 0
      %v1035 = vsel %vm1027, %v974, 0
      %v1038 = vsel %vm1027, %v975, 0
      %v1041 = vsel %vm1027, %v976, 0
      %v1044 = vsel %vm1027, %v977, 0
      %v1047 = vsel %vm1027, %v978, 0
      %v1050 = vsel %vm1027, %v979, 0
      %v1053 = vsel %vm1027, %v980, 0
      %v1056 = vsel %vm1027, %v981, 0
      %v1059 = vsel %vm1027, %v982, 0
      %v1062 = vsel %vm1027, %v983, 0
      %v1065 = vsel %vm1027, %v984, 0
      %v1068 = vsel %vm1027, %v985, 0
      %v1071 = vsel %vm1027, %v986, 0
      %v1074 = vsel %vm1027, %v987, 0
      %v1077 = vsel %vm1027, %v988, 0
      %v1080 = vsel %vm1027, %v989, 0
      %v1083 = vsel %vm1027, %v990, 0
      %v1086 = vsel %vm1027, %v991, 0
      %v1089 = vsel %vm1027, %v992, 0
      %v1092 = vsel %vm1027, %v993, 0
      %v1095 = vsel %vm1027, %v994, 0
      %v1098 = vsel %vm1027, %v995, 0
      %v1101 = vsel %vm1027, %v996, 0
      %v1104 = vsel %vm1027, %v997, 0
      %v1107 = vsel %vm1027, %v998, 0
      %v1110 = vsel %vm1027, %v999, 0
      %v1113 = vsel %vm1027, %v1000, 0
      %v1116 = vsel %vm1027, %v1001, 0
      %v1119 = vsel %vm1027, %v1002, 0
      %v1122 = vsel %vm1027, %v1003, 0
      %1124 = vmatprep.subr.bf16.mxu0 0
      %1125 = vmatpush1.bf16.msra.mxu0 0
      %1126 = vmatprep.subr.bf16.mxu0 0
      %1127 = vmatpush1.bf16.msra.mxu0 0
      %1128 = vmatprep.subr.bf16.mxu0 0
      %1129 = vmatpush1.bf16.msra.mxu0 0
      %1130 = vmatprep.subr.bf16.mxu0 0
      %1131 = vmatpush1.bf16.msra.mxu0 0
      %1132 = vmatprep.subr.bf16.mxu0 0
      %1133 = vmatpush1.bf16.msra.mxu0 0
      %1134 = vmatprep.subr.bf16.mxu0 0
      %1135 = vmatpush1.bf16.msra.mxu0 0
      %1136 = vmatprep.subr.bf16.mxu0 0
      %1137 = vmatpush1.bf16.msra.mxu0 %v1024
      %1138 = vmatprep.subr.bf16.mxu0 0
      %1139 = vmatpush1.bf16.msra.mxu0 %v1023
      %1140 = vmatprep.subr.bf16.mxu0 0
      %1141 = vmatpush2.bf16.msra.mxu0 0
      %1142 = vmatprep.subr.bf16.mxu0 0
      %1143 = vmatpush2.bf16.msra.mxu0 0
      %1144 = vmatprep.subr.bf16.mxu0 0
      %1145 = vmatpush2.bf16.msra.mxu0 0
      %1146 = vmatprep.subr.bf16.mxu0 0
      %1147 = vmatpush2.bf16.msra.mxu0 0
      %1148 = vmatprep.subr.bf16.mxu0 0
      %1149 = vmatpush2.bf16.msra.mxu0 0
      %1150 = vmatprep.subr.bf16.mxu0 0
      %1151 = vmatpush2.bf16.msra.mxu0 0
      %1152 = vmatprep.subr.bf16.mxu0 0
      %1153 = vmatpush2.bf16.msra.mxu0 0
      %1154 = vmatprep.subr.bf16.mxu0 0
      %1155 = vmatpush2.bf16.msra.mxu0 0
      %1156 = vmatprep.mubr.bf16.mxu0 0
      %1157 = vmatmul.mubr.bf16.gmra.mxu0 %v1029
      %v1158 = vpop.f32.mrf.mxu0
      %v1159 = vadd.f32 %v1013, %v1158
      %v1160 = vpop.f32.mrf.mxu0
      %v1161 = vpop.f32.mrf.mxu0
      %v1162 = vadd.f32 %v1013, %v1161
      %v1163 = vpop.f32.mrf.mxu0
      %1164 = vmatprep.mubr.bf16.mxu0 0
      %1165 = vmatmul.mubr.bf16.gmra.mxu0 %v1032
      %v1166 = vpop.f32.mrf.mxu0
      %v1167 = vadd.f32 %v1013, %v1166
      %v1168 = vpop.f32.mrf.mxu0
      %v1169 = vpop.f32.mrf.mxu0
      %v1170 = vadd.f32 %v1013, %v1169
      %v1171 = vpop.f32.mrf.mxu0
      %1172 = vmatprep.mubr.bf16.mxu0 0
      %1173 = vmatmul.mubr.bf16.gmra.mxu0 %v1035
      %v1174 = vpop.f32.mrf.mxu0
      %v1175 = vadd.f32 %v1013, %v1174
      %v1176 = vpop.f32.mrf.mxu0
      %v1177 = vpop.f32.mrf.mxu0
      %v1178 = vadd.f32 %v1013, %v1177
      %v1179 = vpop.f32.mrf.mxu0
      %1180 = vmatprep.mubr.bf16.mxu0 0
      %1181 = vmatmul.mubr.bf16.gmra.mxu0 %v1038
      %v1182 = vpop.f32.mrf.mxu0
      %v1183 = vadd.f32 %v1013, %v1182
      %v1184 = vpop.f32.mrf.mxu0
      %v1185 = vpop.f32.mrf.mxu0
      %v1186 = vadd.f32 %v1013, %v1185
      %v1187 = vpop.f32.mrf.mxu0
      %1188 = vmatprep.mubr.bf16.mxu0 0
      %1189 = vmatmul.mubr.bf16.gmra.mxu0 %v1041
      %v1190 = vpop.f32.mrf.mxu0
      %v1191 = vadd.f32 %v1013, %v1190
      %v1192 = vpop.f32.mrf.mxu0
      %v1193 = vpop.f32.mrf.mxu0
      %v1194 = vadd.f32 %v1013, %v1193
      %v1195 = vpop.f32.mrf.mxu0
      %1196 = vmatprep.mubr.bf16.mxu0 0
      %1197 = vmatmul.mubr.bf16.gmra.mxu0 %v1044
      %v1198 = vpop.f32.mrf.mxu0
      %v1199 = vadd.f32 %v1013, %v1198
      %v1200 = vpop.f32.mrf.mxu0
      %v1201 = vpop.f32.mrf.mxu0
      %v1202 = vadd.f32 %v1013, %v1201
      %v1203 = vpop.f32.mrf.mxu0
      %1204 = vmatprep.mubr.bf16.mxu0 0
      %1205 = vmatmul.mubr.bf16.gmra.mxu0 %v1047
      %v1206 = vpop.f32.mrf.mxu0
      %v1207 = vadd.f32 %v1013, %v1206
      %v1208 = vpop.f32.mrf.mxu0
      %v1209 = vpop.f32.mrf.mxu0
      %v1210 = vadd.f32 %v1013, %v1209
      %v1211 = vpop.f32.mrf.mxu0
      %1212 = vmatprep.mubr.bf16.mxu0 0
      %1213 = vmatmul.mubr.bf16.gmra.mxu0 %v1050
      %v1214 = vpop.f32.mrf.mxu0
      %v1215 = vadd.f32 %v1013, %v1214
      %v1216 = vpop.f32.mrf.mxu0
      %v1217 = vpop.f32.mrf.mxu0
      %v1218 = vadd.f32 %v1013, %v1217
      %v1219 = vpop.f32.mrf.mxu0
      %1220 = vmatprep.mubr.bf16.mxu0 0
      %1221 = vmatmul.mubr.bf16.gmra.mxu0 %v1053
      %v1222 = vpop.f32.mrf.mxu0
      %v1223 = vadd.f32 %v1013, %v1222
      %v1224 = vpop.f32.mrf.mxu0
      %v1225 = vpop.f32.mrf.mxu0
      %v1226 = vadd.f32 %v1013, %v1225
      %v1227 = vpop.f32.mrf.mxu0
      %1228 = vmatprep.mubr.bf16.mxu0 0
      %1229 = vmatmul.mubr.bf16.gmra.mxu0 %v1056
      %v1230 = vpop.f32.mrf.mxu0
      %v1231 = vadd.f32 %v1013, %v1230
      %v1232 = vpop.f32.mrf.mxu0
      %v1233 = vpop.f32.mrf.mxu0
      %v1234 = vadd.f32 %v1013, %v1233
      %v1235 = vpop.f32.mrf.mxu0
      %1236 = vmatprep.mubr.bf16.mxu0 0
      %1237 = vmatmul.mubr.bf16.gmra.mxu0 %v1059
      %v1238 = vpop.f32.mrf.mxu0
      %v1239 = vadd.f32 %v1013, %v1238
      %v1240 = vpop.f32.mrf.mxu0
      %v1241 = vpop.f32.mrf.mxu0
      %v1242 = vadd.f32 %v1013, %v1241
      %v1243 = vpop.f32.mrf.mxu0
      %1244 = vmatprep.mubr.bf16.mxu0 0
      %1245 = vmatmul.mubr.bf16.gmra.mxu0 %v1062
      %v1246 = vpop.f32.mrf.mxu0
      %v1247 = vadd.f32 %v1013, %v1246
      %v1248 = vpop.f32.mrf.mxu0
      %v1249 = vpop.f32.mrf.mxu0
      %v1250 = vadd.f32 %v1013, %v1249
      %v1251 = vpop.f32.mrf.mxu0
      %1252 = vmatprep.mubr.bf16.mxu0 0
      %1253 = vmatmul.mubr.bf16.gmra.mxu0 %v1065
      %v1254 = vpop.f32.mrf.mxu0
      %v1255 = vadd.f32 %v1013, %v1254
      %v1256 = vpop.f32.mrf.mxu0
      %v1257 = vpop.f32.mrf.mxu0
      %v1258 = vadd.f32 %v1013, %v1257
      %v1259 = vpop.f32.mrf.mxu0
      %1260 = vmatprep.mubr.bf16.mxu0 0
      %1261 = vmatmul.mubr.bf16.gmra.mxu0 %v1068
      %v1262 = vpop.f32.mrf.mxu0
      %v1263 = vadd.f32 %v1013, %v1262
      %v1264 = vpop.f32.mrf.mxu0
      %v1265 = vpop.f32.mrf.mxu0
      %v1266 = vadd.f32 %v1013, %v1265
      %v1267 = vpop.f32.mrf.mxu0
      %1268 = vmatprep.mubr.bf16.mxu0 0
      %1269 = vmatmul.mubr.bf16.gmra.mxu0 %v1071
      %v1270 = vpop.f32.mrf.mxu0
      %v1271 = vadd.f32 %v1013, %v1270
      %v1272 = vpop.f32.mrf.mxu0
      %v1273 = vpop.f32.mrf.mxu0
      %v1274 = vadd.f32 %v1013, %v1273
      %v1275 = vpop.f32.mrf.mxu0
      %1276 = vmatprep.mubr.bf16.mxu0 0
      %1277 = vmatmul.mubr.bf16.gmra.mxu0 %v1074
      %v1278 = vpop.f32.mrf.mxu0
      %v1279 = vadd.f32 %v1013, %v1278
      %v1280 = vpop.f32.mrf.mxu0
      %v1281 = vpop.f32.mrf.mxu0
      %v1282 = vadd.f32 %v1013, %v1281
      %v1283 = vpop.f32.mrf.mxu0
      %1284 = vmatprep.mubr.bf16.mxu0 0
      %1285 = vmatmul.mubr.bf16.gmra.mxu0 %v1077
      %v1286 = vpop.f32.mrf.mxu0
      %v1287 = vadd.f32 %v1013, %v1286
      %v1288 = vpop.f32.mrf.mxu0
      %v1289 = vpop.f32.mrf.mxu0
      %v1290 = vadd.f32 %v1013, %v1289
      %v1291 = vpop.f32.mrf.mxu0
      %1292 = vmatprep.mubr.bf16.mxu0 0
      %1293 = vmatmul.mubr.bf16.gmra.mxu0 %v1080
      %v1294 = vpop.f32.mrf.mxu0
      %v1295 = vadd.f32 %v1013, %v1294
      %v1296 = vpop.f32.mrf.mxu0
      %v1297 = vpop.f32.mrf.mxu0
      %v1298 = vadd.f32 %v1013, %v1297
      %v1299 = vpop.f32.mrf.mxu0
      %1300 = vmatprep.mubr.bf16.mxu0 0
      %1301 = vmatmul.mubr.bf16.gmra.mxu0 %v1083
      %v1302 = vpop.f32.mrf.mxu0
      %v1303 = vadd.f32 %v1013, %v1302
      %v1304 = vpop.f32.mrf.mxu0
      %v1305 = vpop.f32.mrf.mxu0
      %v1306 = vadd.f32 %v1013, %v1305
      %v1307 = vpop.f32.mrf.mxu0
      %1308 = vmatprep.mubr.bf16.mxu0 0
      %1309 = vmatmul.mubr.bf16.gmra.mxu0 %v1086
      %v1310 = vpop.f32.mrf.mxu0
      %v1311 = vadd.f32 %v1013, %v1310
      %v1312 = vpop.f32.mrf.mxu0
      %v1313 = vpop.f32.mrf.mxu0
      %v1314 = vadd.f32 %v1013, %v1313
      %v1315 = vpop.f32.mrf.mxu0
      %1316 = vmatprep.mubr.bf16.mxu0 0
      %1317 = vmatmul.mubr.bf16.gmra.mxu0 %v1089
      %v1318 = vpop.f32.mrf.mxu0
      %v1319 = vadd.f32 %v1013, %v1318
      %v1320 = vpop.f32.mrf.mxu0
      %v1321 = vpop.f32.mrf.mxu0
      %v1322 = vadd.f32 %v1013, %v1321
      %v1323 = vpop.f32.mrf.mxu0
      %1324 = vmatprep.mubr.bf16.mxu0 0
      %1325 = vmatmul.mubr.bf16.gmra.mxu0 %v1092
      %v1326 = vpop.f32.mrf.mxu0
      %v1327 = vadd.f32 %v1013, %v1326
      %v1328 = vpop.f32.mrf.mxu0
      %v1329 = vpop.f32.mrf.mxu0
      %v1330 = vadd.f32 %v1013, %v1329
      %v1331 = vpop.f32.mrf.mxu0
      %1332 = vmatprep.mubr.bf16.mxu0 0
      %1333 = vmatmul.mubr.bf16.gmra.mxu0 %v1095
      %v1334 = vpop.f32.mrf.mxu0
      %v1335 = vadd.f32 %v1013, %v1334
      %v1336 = vpop.f32.mrf.mxu0
      %v1337 = vpop.f32.mrf.mxu0
      %v1338 = vadd.f32 %v1013, %v1337
      %v1339 = vpop.f32.mrf.mxu0
      %1340 = vmatprep.mubr.bf16.mxu0 0
      %1341 = vmatmul.mubr.bf16.gmra.mxu0 %v1098
      %v1342 = vpop.f32.mrf.mxu0
      %v1343 = vadd.f32 %v1013, %v1342
      %v1344 = vpop.f32.mrf.mxu0
      %v1345 = vpop.f32.mrf.mxu0
      %v1346 = vadd.f32 %v1013, %v1345
      %v1347 = vpop.f32.mrf.mxu0
      %1348 = vmatprep.mubr.bf16.mxu0 0
      %1349 = vmatmul.mubr.bf16.gmra.mxu0 %v1101
      %v1350 = vpop.f32.mrf.mxu0
      %v1351 = vadd.f32 %v1013, %v1350
      %v1352 = vpop.f32.mrf.mxu0
      %v1353 = vpop.f32.mrf.mxu0
      %v1354 = vadd.f32 %v1013, %v1353
      %v1355 = vpop.f32.mrf.mxu0
      %1356 = vmatprep.mubr.bf16.mxu0 0
      %1357 = vmatmul.mubr.bf16.gmra.mxu0 %v1104
      %v1358 = vpop.f32.mrf.mxu0
      %v1359 = vadd.f32 %v1013, %v1358
      %v1360 = vpop.f32.mrf.mxu0
      %v1361 = vpop.f32.mrf.mxu0
      %v1362 = vadd.f32 %v1013, %v1361
      %v1363 = vpop.f32.mrf.mxu0
      %1364 = vmatprep.mubr.bf16.mxu0 0
      %1365 = vmatmul.mubr.bf16.gmra.mxu0 %v1107
      %v1366 = vpop.f32.mrf.mxu0
      %v1367 = vadd.f32 %v1013, %v1366
      %v1368 = vpop.f32.mrf.mxu0
      %v1369 = vpop.f32.mrf.mxu0
      %v1370 = vadd.f32 %v1013, %v1369
      %v1371 = vpop.f32.mrf.mxu0
      %1372 = vmatprep.mubr.bf16.mxu0 0
      %1373 = vmatmul.mubr.bf16.gmra.mxu0 %v1110
      %v1374 = vpop.f32.mrf.mxu0
      %v1375 = vadd.f32 %v1013, %v1374
      %v1376 = vpop.f32.mrf.mxu0
      %v1377 = vpop.f32.mrf.mxu0
      %v1378 = vadd.f32 %v1013, %v1377
      %v1379 = vpop.f32.mrf.mxu0
      %1380 = vmatprep.mubr.bf16.mxu0 0
      %1381 = vmatmul.mubr.bf16.gmra.mxu0 %v1113
      %v1382 = vpop.f32.mrf.mxu0
      %v1383 = vadd.f32 %v1013, %v1382
      %v1384 = vpop.f32.mrf.mxu0
      %v1385 = vpop.f32.mrf.mxu0
      %v1386 = vadd.f32 %v1013, %v1385
      %v1387 = vpop.f32.mrf.mxu0
      %1388 = vmatprep.mubr.bf16.mxu0 0
      %1389 = vmatmul.mubr.bf16.gmra.mxu0 %v1116
      %v1390 = vpop.f32.mrf.mxu0
      %v1391 = vadd.f32 %v1013, %v1390
      %v1392 = vpop.f32.mrf.mxu0
      %v1393 = vpop.f32.mrf.mxu0
      %v1394 = vadd.f32 %v1013, %v1393
      %v1395 = vpop.f32.mrf.mxu0
      %1396 = vmatprep.mubr.bf16.mxu0 0
      %1397 = vmatmul.mubr.bf16.gmra.mxu0 %v1119
      %v1398 = vpop.f32.mrf.mxu0
      %v1399 = vadd.f32 %v1013, %v1398
      %v1400 = vpop.f32.mrf.mxu0
      %v1401 = vpop.f32.mrf.mxu0
      %v1402 = vadd.f32 %v1013, %v1401
      %v1403 = vpop.f32.mrf.mxu0
      %1404 = vmatprep.mubr.bf16.mxu0 0
      %1405 = vmatmul.mubr.bf16.gmra.mxu0 %v1122
      %v1406 = vpop.f32.mrf.mxu0
      %v1407 = vadd.f32 %v1013, %v1406
      %v1408 = vpop.f32.mrf.mxu0
      %v1409 = vpop.f32.mrf.mxu0
      %v1410 = vadd.f32 %v1013, %v1409
      %v1411 = vpop.f32.mrf.mxu0
      %1412 = vdwg.mxu0
      %v1413 = vmax.f32 %v1159, 0.0
      %v1414 = vmax.f32 %v1162, 0.0
      %v1415 = vmax.f32 %v1167, 0.0
      %v1416 = vmax.f32 %v1170, 0.0
      %v1417 = vmax.f32 %v1175, 0.0
      %v1418 = vmax.f32 %v1178, 0.0
      %v1419 = vmax.f32 %v1183, 0.0
      %v1420 = vmax.f32 %v1186, 0.0
      %v1421 = vmax.f32 %v1191, 0.0
      %v1422 = vmax.f32 %v1194, 0.0
      %v1423 = vmax.f32 %v1199, 0.0
      %v1424 = vmax.f32 %v1202, 0.0
      %v1425 = vmax.f32 %v1207, 0.0
      %v1426 = vmax.f32 %v1210, 0.0
      %v1427 = vmax.f32 %v1215, 0.0
      %v1428 = vmax.f32 %v1218, 0.0
      %v1429 = vmax.f32 %v1223, 0.0
      %v1430 = vmax.f32 %v1226, 0.0
      %v1431 = vmax.f32 %v1231, 0.0
      %v1432 = vmax.f32 %v1234, 0.0
      %v1433 = vmax.f32 %v1239, 0.0
      %v1434 = vmax.f32 %v1242, 0.0
      %v1435 = vmax.f32 %v1247, 0.0
      %v1436 = vmax.f32 %v1250, 0.0
      %v1437 = vmax.f32 %v1255, 0.0
      %v1438 = vmax.f32 %v1258, 0.0
      %v1439 = vmax.f32 %v1263, 0.0
      %v1440 = vmax.f32 %v1266, 0.0
      %v1441 = vmax.f32 %v1271, 0.0
      %v1442 = vmax.f32 %v1274, 0.0
      %v1443 = vmax.f32 %v1279, 0.0
      %v1444 = vmax.f32 %v1282, 0.0
      %v1445 = vmax.f32 %v1287, 0.0
      %v1446 = vmax.f32 %v1290, 0.0
      %v1447 = vmax.f32 %v1295, 0.0
      %v1448 = vmax.f32 %v1298, 0.0
      %v1449 = vmax.f32 %v1303, 0.0
      %v1450 = vmax.f32 %v1306, 0.0
      %v1451 = vmax.f32 %v1311, 0.0
      %v1452 = vmax.f32 %v1314, 0.0
      %v1453 = vmax.f32 %v1319, 0.0
      %v1454 = vmax.f32 %v1322, 0.0
      %v1455 = vmax.f32 %v1327, 0.0
      %v1456 = vmax.f32 %v1330, 0.0
      %v1457 = vmax.f32 %v1335, 0.0
      %v1458 = vmax.f32 %v1338, 0.0
      %v1459 = vmax.f32 %v1343, 0.0
      %v1460 = vmax.f32 %v1346, 0.0
      %v1461 = vmax.f32 %v1351, 0.0
      %v1462 = vmax.f32 %v1354, 0.0
      %v1463 = vmax.f32 %v1359, 0.0
      %v1464 = vmax.f32 %v1362, 0.0
      %v1465 = vmax.f32 %v1367, 0.0
      %v1466 = vmax.f32 %v1370, 0.0
      %v1467 = vmax.f32 %v1375, 0.0
      %v1468 = vmax.f32 %v1378, 0.0
      %v1469 = vmax.f32 %v1383, 0.0
      %v1470 = vmax.f32 %v1386, 0.0
      %v1471 = vmax.f32 %v1391, 0.0
      %v1472 = vmax.f32 %v1394, 0.0
      %v1473 = vmax.f32 %v1399, 0.0
      %v1474 = vmax.f32 %v1402, 0.0
      %v1475 = vmax.f32 %v1407, 0.0
      %v1476 = vmax.f32 %v1410, 0.0
      %v1477 = vpack.c.bf16 %v1414, %v1413
      %v1478 = vpack.c.bf16 %v1416, %v1415
      %v1479 = vpack.c.bf16 %v1418, %v1417
      %v1480 = vpack.c.bf16 %v1420, %v1419
      %v1481 = vpack.c.bf16 %v1422, %v1421
      %v1482 = vpack.c.bf16 %v1424, %v1423
      %v1483 = vpack.c.bf16 %v1426, %v1425
      %v1484 = vpack.c.bf16 %v1428, %v1427
      %v1485 = vpack.c.bf16 %v1430, %v1429
      %v1486 = vpack.c.bf16 %v1432, %v1431
      %v1487 = vpack.c.bf16 %v1434, %v1433
      %v1488 = vpack.c.bf16 %v1436, %v1435
      %v1489 = vpack.c.bf16 %v1438, %v1437
      %v1490 = vpack.c.bf16 %v1440, %v1439
      %v1491 = vpack.c.bf16 %v1442, %v1441
      %v1492 = vpack.c.bf16 %v1444, %v1443
      %v1493 = vpack.c.bf16 %v1446, %v1445
      %v1494 = vpack.c.bf16 %v1448, %v1447
      %v1495 = vpack.c.bf16 %v1450, %v1449
      %v1496 = vpack.c.bf16 %v1452, %v1451
      %v1497 = vpack.c.bf16 %v1454, %v1453
      %v1498 = vpack.c.bf16 %v1456, %v1455
      %v1499 = vpack.c.bf16 %v1458, %v1457
      %v1500 = vpack.c.bf16 %v1460, %v1459
      %v1501 = vpack.c.bf16 %v1462, %v1461
      %v1502 = vpack.c.bf16 %v1464, %v1463
      %v1503 = vpack.c.bf16 %v1466, %v1465
      %v1504 = vpack.c.bf16 %v1468, %v1467
      %v1505 = vpack.c.bf16 %v1470, %v1469
      %v1506 = vpack.c.bf16 %v1472, %v1471
      %v1507 = vpack.c.bf16 %v1474, %v1473
      %v1508 = vpack.c.bf16 %v1476, %v1475
      %v1509 = vld [vmem:[%s5] sm:$0xf]
      %v1510 = vld [vmem:[%s5 + $0x4] sm:$0xf]
      %v1511 = vld [vmem:[%s5 + $0x8] sm:$0xf]
      %v1512 = vld [vmem:[%s5 + $0xc] sm:$0xf]
      %v1513 = vld [vmem:[%s6] sm:$0x1]
      %v1515 = vlaneseq
      %v1516 = vshrl.u32 %v1515, 7
      %v1517 = vsub.s32 0, %v1516
      %v1518 = vrot.slane %v1513, %v1517
      %v1524 = vunpack.c.l.b16 %v1509
      %v1525 = vunpack.c.l.b16 %v1510
      %v1526 = vunpack.c.l.b16 %v1511
      %v1527 = vunpack.c.l.b16 %v1512
      %v1528 = vpack.c.b16 %v1525, %v1524
      %v1529 = vpack.c.b16 %v1527, %v1526
      %v1533 = vsel %vm1027, %v1477, 0
      %v1536 = vsel %vm1027, %v1478, 0
      %v1539 = vsel %vm1027, %v1479, 0
      %v1542 = vsel %vm1027, %v1480, 0
      %v1545 = vsel %vm1027, %v1481, 0
      %v1548 = vsel %vm1027, %v1482, 0
      %v1551 = vsel %vm1027, %v1483, 0
      %v1554 = vsel %vm1027, %v1484, 0
      %v1557 = vsel %vm1027, %v1485, 0
      %v1560 = vsel %vm1027, %v1486, 0
      %v1563 = vsel %vm1027, %v1487, 0
      %v1566 = vsel %vm1027, %v1488, 0
      %v1569 = vsel %vm1027, %v1489, 0
      %v1572 = vsel %vm1027, %v1490, 0
      %v1575 = vsel %vm1027, %v1491, 0
      %v1578 = vsel %vm1027, %v1492, 0
      %v1581 = vsel %vm1027, %v1493, 0
      %v1584 = vsel %vm1027, %v1494, 0
      %v1587 = vsel %vm1027, %v1495, 0
      %v1590 = vsel %vm1027, %v1496, 0
      %v1593 = vsel %vm1027, %v1497, 0
      %v1596 = vsel %vm1027, %v1498, 0
      %v1599 = vsel %vm1027, %v1499, 0
      %v1602 = vsel %vm1027, %v1500, 0
      %v1605 = vsel %vm1027, %v1501, 0
      %v1608 = vsel %vm1027, %v1502, 0
      %v1611 = vsel %vm1027, %v1503, 0
      %v1614 = vsel %vm1027, %v1504, 0
      %v1617 = vsel %vm1027, %v1505, 0
      %v1620 = vsel %vm1027, %v1506, 0
      %v1623 = vsel %vm1027, %v1507, 0
      %v1626 = vsel %vm1027, %v1508, 0
      %1628 = vmatprep.subr.bf16.mxu0 0
      %1629 = vmatpush1.bf16.msra.mxu0 0
      %1630 = vmatprep.subr.bf16.mxu0 0
      %1631 = vmatpush1.bf16.msra.mxu0 0
      %1632 = vmatprep.subr.bf16.mxu0 0
      %1633 = vmatpush1.bf16.msra.mxu0 0
      %1634 = vmatprep.subr.bf16.mxu0 0
      %1635 = vmatpush1.bf16.msra.mxu0 0
      %1636 = vmatprep.subr.bf16.mxu0 0
      %1637 = vmatpush1.bf16.msra.mxu0 0
      %1638 = vmatprep.subr.bf16.mxu0 0
      %1639 = vmatpush1.bf16.msra.mxu0 0
      %1640 = vmatprep.subr.bf16.mxu0 0
      %1641 = vmatpush1.bf16.msra.mxu0 %v1529
      %1642 = vmatprep.subr.bf16.mxu0 0
      %1643 = vmatpush1.bf16.msra.mxu0 %v1528
      %1644 = vmatprep.subr.bf16.mxu0 0
      %1645 = vmatpush2.bf16.msra.mxu0 0
      %1646 = vmatprep.subr.bf16.mxu0 0
      %1647 = vmatpush2.bf16.msra.mxu0 0
      %1648 = vmatprep.subr.bf16.mxu0 0
      %1649 = vmatpush2.bf16.msra.mxu0 0
      %1650 = vmatprep.subr.bf16.mxu0 0
      %1651 = vmatpush2.bf16.msra.mxu0 0
      %1652 = vmatprep.subr.bf16.mxu0 0
      %1653 = vmatpush2.bf16.msra.mxu0 0
      %1654 = vmatprep.subr.bf16.mxu0 0
      %1655 = vmatpush2.bf16.msra.mxu0 0
      %1656 = vmatprep.subr.bf16.mxu0 0
      %1657 = vmatpush2.bf16.msra.mxu0 0
      %1658 = vmatprep.subr.bf16.mxu0 0
      %1659 = vmatpush2.bf16.msra.mxu0 0
      %1660 = vmatprep.mubr.bf16.mxu0 0
      %1661 = vmatmul.mubr.bf16.gmra.mxu0 %v1533
      %v1662 = vpop.f32.mrf.mxu0
      %v1663 = vadd.f32 %v1518, %v1662
      %v1664 = vpop.f32.mrf.mxu0
      %v1665 = vpop.f32.mrf.mxu0
      %v1666 = vadd.f32 %v1518, %v1665
      %v1667 = vpop.f32.mrf.mxu0
      %1668 = vmatprep.mubr.bf16.mxu0 0
      %1669 = vmatmul.mubr.bf16.gmra.mxu0 %v1536
      %v1670 = vpop.f32.mrf.mxu0
      %v1671 = vadd.f32 %v1518, %v1670
      %v1672 = vpop.f32.mrf.mxu0
      %v1673 = vpop.f32.mrf.mxu0
      %v1674 = vadd.f32 %v1518, %v1673
      %v1675 = vpop.f32.mrf.mxu0
      %1676 = vmatprep.mubr.bf16.mxu0 0
      %1677 = vmatmul.mubr.bf16.gmra.mxu0 %v1539
      %v1678 = vpop.f32.mrf.mxu0
      %v1679 = vadd.f32 %v1518, %v1678
      %v1680 = vpop.f32.mrf.mxu0
      %v1681 = vpop.f32.mrf.mxu0
      %v1682 = vadd.f32 %v1518, %v1681
      %v1683 = vpop.f32.mrf.mxu0
      %1684 = vmatprep.mubr.bf16.mxu0 0
      %1685 = vmatmul.mubr.bf16.gmra.mxu0 %v1542
      %v1686 = vpop.f32.mrf.mxu0
      %v1687 = vadd.f32 %v1518, %v1686
      %v1688 = vpop.f32.mrf.mxu0
      %v1689 = vpop.f32.mrf.mxu0
      %v1690 = vadd.f32 %v1518, %v1689
      %v1691 = vpop.f32.mrf.mxu0
      %1692 = vmatprep.mubr.bf16.mxu0 0
      %1693 = vmatmul.mubr.bf16.gmra.mxu0 %v1545
      %v1694 = vpop.f32.mrf.mxu0
      %v1695 = vadd.f32 %v1518, %v1694
      %v1696 = vpop.f32.mrf.mxu0
      %v1697 = vpop.f32.mrf.mxu0
      %v1698 = vadd.f32 %v1518, %v1697
      %v1699 = vpop.f32.mrf.mxu0
      %1700 = vmatprep.mubr.bf16.mxu0 0
      %1701 = vmatmul.mubr.bf16.gmra.mxu0 %v1548
      %v1702 = vpop.f32.mrf.mxu0
      %v1703 = vadd.f32 %v1518, %v1702
      %v1704 = vpop.f32.mrf.mxu0
      %v1705 = vpop.f32.mrf.mxu0
      %v1706 = vadd.f32 %v1518, %v1705
      %v1707 = vpop.f32.mrf.mxu0
      %1708 = vmatprep.mubr.bf16.mxu0 0
      %1709 = vmatmul.mubr.bf16.gmra.mxu0 %v1551
      %v1710 = vpop.f32.mrf.mxu0
      %v1711 = vadd.f32 %v1518, %v1710
      %v1712 = vpop.f32.mrf.mxu0
      %v1713 = vpop.f32.mrf.mxu0
      %v1714 = vadd.f32 %v1518, %v1713
      %v1715 = vpop.f32.mrf.mxu0
      %1716 = vmatprep.mubr.bf16.mxu0 0
      %1717 = vmatmul.mubr.bf16.gmra.mxu0 %v1554
      %v1718 = vpop.f32.mrf.mxu0
      %v1719 = vadd.f32 %v1518, %v1718
      %v1720 = vpop.f32.mrf.mxu0
      %v1721 = vpop.f32.mrf.mxu0
      %v1722 = vadd.f32 %v1518, %v1721
      %v1723 = vpop.f32.mrf.mxu0
      %1724 = vmatprep.mubr.bf16.mxu0 0
      %1725 = vmatmul.mubr.bf16.gmra.mxu0 %v1557
      %v1726 = vpop.f32.mrf.mxu0
      %v1727 = vadd.f32 %v1518, %v1726
      %v1728 = vpop.f32.mrf.mxu0
      %v1729 = vpop.f32.mrf.mxu0
      %v1730 = vadd.f32 %v1518, %v1729
      %v1731 = vpop.f32.mrf.mxu0
      %1732 = vmatprep.mubr.bf16.mxu0 0
      %1733 = vmatmul.mubr.bf16.gmra.mxu0 %v1560
      %v1734 = vpop.f32.mrf.mxu0
      %v1735 = vadd.f32 %v1518, %v1734
      %v1736 = vpop.f32.mrf.mxu0
      %v1737 = vpop.f32.mrf.mxu0
      %v1738 = vadd.f32 %v1518, %v1737
      %v1739 = vpop.f32.mrf.mxu0
      %1740 = vmatprep.mubr.bf16.mxu0 0
      %1741 = vmatmul.mubr.bf16.gmra.mxu0 %v1563
      %v1742 = vpop.f32.mrf.mxu0
      %v1743 = vadd.f32 %v1518, %v1742
      %v1744 = vpop.f32.mrf.mxu0
      %v1745 = vpop.f32.mrf.mxu0
      %v1746 = vadd.f32 %v1518, %v1745
      %v1747 = vpop.f32.mrf.mxu0
      %1748 = vmatprep.mubr.bf16.mxu0 0
      %1749 = vmatmul.mubr.bf16.gmra.mxu0 %v1566
      %v1750 = vpop.f32.mrf.mxu0
      %v1751 = vadd.f32 %v1518, %v1750
      %v1752 = vpop.f32.mrf.mxu0
      %v1753 = vpop.f32.mrf.mxu0
      %v1754 = vadd.f32 %v1518, %v1753
      %v1755 = vpop.f32.mrf.mxu0
      %1756 = vmatprep.mubr.bf16.mxu0 0
      %1757 = vmatmul.mubr.bf16.gmra.mxu0 %v1569
      %v1758 = vpop.f32.mrf.mxu0
      %v1759 = vadd.f32 %v1518, %v1758
      %v1760 = vpop.f32.mrf.mxu0
      %v1761 = vpop.f32.mrf.mxu0
      %v1762 = vadd.f32 %v1518, %v1761
      %v1763 = vpop.f32.mrf.mxu0
      %1764 = vmatprep.mubr.bf16.mxu0 0
      %1765 = vmatmul.mubr.bf16.gmra.mxu0 %v1572
      %v1766 = vpop.f32.mrf.mxu0
      %v1767 = vadd.f32 %v1518, %v1766
      %v1768 = vpop.f32.mrf.mxu0
      %v1769 = vpop.f32.mrf.mxu0
      %v1770 = vadd.f32 %v1518, %v1769
      %v1771 = vpop.f32.mrf.mxu0
      %1772 = vmatprep.mubr.bf16.mxu0 0
      %1773 = vmatmul.mubr.bf16.gmra.mxu0 %v1575
      %v1774 = vpop.f32.mrf.mxu0
      %v1775 = vadd.f32 %v1518, %v1774
      %v1776 = vpop.f32.mrf.mxu0
      %v1777 = vpop.f32.mrf.mxu0
      %v1778 = vadd.f32 %v1518, %v1777
      %v1779 = vpop.f32.mrf.mxu0
      %1780 = vmatprep.mubr.bf16.mxu0 0
      %1781 = vmatmul.mubr.bf16.gmra.mxu0 %v1578
      %v1782 = vpop.f32.mrf.mxu0
      %v1783 = vadd.f32 %v1518, %v1782
      %v1784 = vpop.f32.mrf.mxu0
      %v1785 = vpop.f32.mrf.mxu0
      %v1786 = vadd.f32 %v1518, %v1785
      %v1787 = vpop.f32.mrf.mxu0
      %1788 = vmatprep.mubr.bf16.mxu0 0
      %1789 = vmatmul.mubr.bf16.gmra.mxu0 %v1581
      %v1790 = vpop.f32.mrf.mxu0
      %v1791 = vadd.f32 %v1518, %v1790
      %v1792 = vpop.f32.mrf.mxu0
      %v1793 = vpop.f32.mrf.mxu0
      %v1794 = vadd.f32 %v1518, %v1793
      %v1795 = vpop.f32.mrf.mxu0
      %1796 = vmatprep.mubr.bf16.mxu0 0
      %1797 = vmatmul.mubr.bf16.gmra.mxu0 %v1584
      %v1798 = vpop.f32.mrf.mxu0
      %v1799 = vadd.f32 %v1518, %v1798
      %v1800 = vpop.f32.mrf.mxu0
      %v1801 = vpop.f32.mrf.mxu0
      %v1802 = vadd.f32 %v1518, %v1801
      %v1803 = vpop.f32.mrf.mxu0
      %1804 = vmatprep.mubr.bf16.mxu0 0
      %1805 = vmatmul.mubr.bf16.gmra.mxu0 %v1587
      %v1806 = vpop.f32.mrf.mxu0
      %v1807 = vadd.f32 %v1518, %v1806
      %v1808 = vpop.f32.mrf.mxu0
      %v1809 = vpop.f32.mrf.mxu0
      %v1810 = vadd.f32 %v1518, %v1809
      %v1811 = vpop.f32.mrf.mxu0
      %1812 = vmatprep.mubr.bf16.mxu0 0
      %1813 = vmatmul.mubr.bf16.gmra.mxu0 %v1590
      %v1814 = vpop.f32.mrf.mxu0
      %v1815 = vadd.f32 %v1518, %v1814
      %v1816 = vpop.f32.mrf.mxu0
      %v1817 = vpop.f32.mrf.mxu0
      %v1818 = vadd.f32 %v1518, %v1817
      %v1819 = vpop.f32.mrf.mxu0
      %1820 = vmatprep.mubr.bf16.mxu0 0
      %1821 = vmatmul.mubr.bf16.gmra.mxu0 %v1593
      %v1822 = vpop.f32.mrf.mxu0
      %v1823 = vadd.f32 %v1518, %v1822
      %v1824 = vpop.f32.mrf.mxu0
      %v1825 = vpop.f32.mrf.mxu0
      %v1826 = vadd.f32 %v1518, %v1825
      %v1827 = vpop.f32.mrf.mxu0
      %1828 = vmatprep.mubr.bf16.mxu0 0
      %1829 = vmatmul.mubr.bf16.gmra.mxu0 %v1596
      %v1830 = vpop.f32.mrf.mxu0
      %v1831 = vadd.f32 %v1518, %v1830
      %v1832 = vpop.f32.mrf.mxu0
      %v1833 = vpop.f32.mrf.mxu0
      %v1834 = vadd.f32 %v1518, %v1833
      %v1835 = vpop.f32.mrf.mxu0
      %1836 = vmatprep.mubr.bf16.mxu0 0
      %1837 = vmatmul.mubr.bf16.gmra.mxu0 %v1599
      %v1838 = vpop.f32.mrf.mxu0
      %v1839 = vadd.f32 %v1518, %v1838
      %v1840 = vpop.f32.mrf.mxu0
      %v1841 = vpop.f32.mrf.mxu0
      %v1842 = vadd.f32 %v1518, %v1841
      %v1843 = vpop.f32.mrf.mxu0
      %1844 = vmatprep.mubr.bf16.mxu0 0
      %1845 = vmatmul.mubr.bf16.gmra.mxu0 %v1602
      %v1846 = vpop.f32.mrf.mxu0
      %v1847 = vadd.f32 %v1518, %v1846
      %v1848 = vpop.f32.mrf.mxu0
      %v1849 = vpop.f32.mrf.mxu0
      %v1850 = vadd.f32 %v1518, %v1849
      %v1851 = vpop.f32.mrf.mxu0
      %1852 = vmatprep.mubr.bf16.mxu0 0
      %1853 = vmatmul.mubr.bf16.gmra.mxu0 %v1605
      %v1854 = vpop.f32.mrf.mxu0
      %v1855 = vadd.f32 %v1518, %v1854
      %v1856 = vpop.f32.mrf.mxu0
      %v1857 = vpop.f32.mrf.mxu0
      %v1858 = vadd.f32 %v1518, %v1857
      %v1859 = vpop.f32.mrf.mxu0
      %1860 = vmatprep.mubr.bf16.mxu0 0
      %1861 = vmatmul.mubr.bf16.gmra.mxu0 %v1608
      %v1862 = vpop.f32.mrf.mxu0
      %v1863 = vadd.f32 %v1518, %v1862
      %v1864 = vpop.f32.mrf.mxu0
      %v1865 = vpop.f32.mrf.mxu0
      %v1866 = vadd.f32 %v1518, %v1865
      %v1867 = vpop.f32.mrf.mxu0
      %1868 = vmatprep.mubr.bf16.mxu0 0
      %1869 = vmatmul.mubr.bf16.gmra.mxu0 %v1611
      %v1870 = vpop.f32.mrf.mxu0
      %v1871 = vadd.f32 %v1518, %v1870
      %v1872 = vpop.f32.mrf.mxu0
      %v1873 = vpop.f32.mrf.mxu0
      %v1874 = vadd.f32 %v1518, %v1873
      %v1875 = vpop.f32.mrf.mxu0
      %1876 = vmatprep.mubr.bf16.mxu0 0
      %1877 = vmatmul.mubr.bf16.gmra.mxu0 %v1614
      %v1878 = vpop.f32.mrf.mxu0
      %v1879 = vadd.f32 %v1518, %v1878
      %v1880 = vpop.f32.mrf.mxu0
      %v1881 = vpop.f32.mrf.mxu0
      %v1882 = vadd.f32 %v1518, %v1881
      %v1883 = vpop.f32.mrf.mxu0
      %1884 = vmatprep.mubr.bf16.mxu0 0
      %1885 = vmatmul.mubr.bf16.gmra.mxu0 %v1617
      %v1886 = vpop.f32.mrf.mxu0
      %v1887 = vadd.f32 %v1518, %v1886
      %v1888 = vpop.f32.mrf.mxu0
      %v1889 = vpop.f32.mrf.mxu0
      %v1890 = vadd.f32 %v1518, %v1889
      %v1891 = vpop.f32.mrf.mxu0
      %1892 = vmatprep.mubr.bf16.mxu0 0
      %1893 = vmatmul.mubr.bf16.gmra.mxu0 %v1620
      %v1894 = vpop.f32.mrf.mxu0
      %v1895 = vadd.f32 %v1518, %v1894
      %v1896 = vpop.f32.mrf.mxu0
      %v1897 = vpop.f32.mrf.mxu0
      %v1898 = vadd.f32 %v1518, %v1897
      %v1899 = vpop.f32.mrf.mxu0
      %1900 = vmatprep.mubr.bf16.mxu0 0
      %1901 = vmatmul.mubr.bf16.gmra.mxu0 %v1623
      %v1902 = vpop.f32.mrf.mxu0
      %v1903 = vadd.f32 %v1518, %v1902
      %v1904 = vpop.f32.mrf.mxu0
      %v1905 = vpop.f32.mrf.mxu0
      %v1906 = vadd.f32 %v1518, %v1905
      %v1907 = vpop.f32.mrf.mxu0
      %1908 = vmatprep.mubr.bf16.mxu0 0
      %1909 = vmatmul.mubr.bf16.gmra.mxu0 %v1626
      %v1910 = vpop.f32.mrf.mxu0
      %v1911 = vadd.f32 %v1518, %v1910
      %v1912 = vpop.f32.mrf.mxu0
      %v1913 = vpop.f32.mrf.mxu0
      %v1914 = vadd.f32 %v1518, %v1913
      %v1915 = vpop.f32.mrf.mxu0
      %1916 = vdwg.mxu0
      %v1917 = vmax.f32 %v1663, 0.0
      %v1918 = vmax.f32 %v1666, 0.0
      %v1919 = vmax.f32 %v1671, 0.0
      %v1920 = vmax.f32 %v1674, 0.0
      %v1921 = vmax.f32 %v1679, 0.0
      %v1922 = vmax.f32 %v1682, 0.0
      %v1923 = vmax.f32 %v1687, 0.0
      %v1924 = vmax.f32 %v1690, 0.0
      %v1925 = vmax.f32 %v1695, 0.0
      %v1926 = vmax.f32 %v1698, 0.0
      %v1927 = vmax.f32 %v1703, 0.0
      %v1928 = vmax.f32 %v1706, 0.0
      %v1929 = vmax.f32 %v1711, 0.0
      %v1930 = vmax.f32 %v1714, 0.0
      %v1931 = vmax.f32 %v1719, 0.0
      %v1932 = vmax.f32 %v1722, 0.0
      %v1933 = vmax.f32 %v1727, 0.0
      %v1934 = vmax.f32 %v1730, 0.0
      %v1935 = vmax.f32 %v1735, 0.0
      %v1936 = vmax.f32 %v1738, 0.0
      %v1937 = vmax.f32 %v1743, 0.0
      %v1938 = vmax.f32 %v1746, 0.0
      %v1939 = vmax.f32 %v1751, 0.0
      %v1940 = vmax.f32 %v1754, 0.0
      %v1941 = vmax.f32 %v1759, 0.0
      %v1942 = vmax.f32 %v1762, 0.0
      %v1943 = vmax.f32 %v1767, 0.0
      %v1944 = vmax.f32 %v1770, 0.0
      %v1945 = vmax.f32 %v1775, 0.0
      %v1946 = vmax.f32 %v1778, 0.0
      %v1947 = vmax.f32 %v1783, 0.0
      %v1948 = vmax.f32 %v1786, 0.0
      %v1949 = vmax.f32 %v1791, 0.0
      %v1950 = vmax.f32 %v1794, 0.0
      %v1951 = vmax.f32 %v1799, 0.0
      %v1952 = vmax.f32 %v1802, 0.0
      %v1953 = vmax.f32 %v1807, 0.0
      %v1954 = vmax.f32 %v1810, 0.0
      %v1955 = vmax.f32 %v1815, 0.0
      %v1956 = vmax.f32 %v1818, 0.0
      %v1957 = vmax.f32 %v1823, 0.0
      %v1958 = vmax.f32 %v1826, 0.0
      %v1959 = vmax.f32 %v1831, 0.0
      %v1960 = vmax.f32 %v1834, 0.0
      %v1961 = vmax.f32 %v1839, 0.0
      %v1962 = vmax.f32 %v1842, 0.0
      %v1963 = vmax.f32 %v1847, 0.0
      %v1964 = vmax.f32 %v1850, 0.0
      %v1965 = vmax.f32 %v1855, 0.0
      %v1966 = vmax.f32 %v1858, 0.0
      %v1967 = vmax.f32 %v1863, 0.0
      %v1968 = vmax.f32 %v1866, 0.0
      %v1969 = vmax.f32 %v1871, 0.0
      %v1970 = vmax.f32 %v1874, 0.0
      %v1971 = vmax.f32 %v1879, 0.0
      %v1972 = vmax.f32 %v1882, 0.0
      %v1973 = vmax.f32 %v1887, 0.0
      %v1974 = vmax.f32 %v1890, 0.0
      %v1975 = vmax.f32 %v1895, 0.0
      %v1976 = vmax.f32 %v1898, 0.0
      %v1977 = vmax.f32 %v1903, 0.0
      %v1978 = vmax.f32 %v1906, 0.0
      %v1979 = vmax.f32 %v1911, 0.0
      %v1980 = vmax.f32 %v1914, 0.0
      %vm1981 = vcmask 523264
      %v1982 = vsel %vm1981, %v1917, -inf
      %v1983 = vsel %vm1981, %v1918, -inf
      %v1984 = vmax.f32 %v1982, %v1983
      %v1985 = vrot.slane %v1984, 4
      %v1986 = vmax.f32 %v1984, %v1985
      %v1987 = vrot.slane %v1986, 2
      %v1988 = vmax.f32 %v1986, %v1987
      %v1989 = vrot.slane %v1988, 1
      %v1990 = vmax.f32 %v1988, %v1989
      %v1991 = vsel %vm1981, %v1919, -inf
      %v1992 = vsel %vm1981, %v1920, -inf
      %v1993 = vmax.f32 %v1991, %v1992
      %v1994 = vrot.slane %v1993, 4
      %v1995 = vmax.f32 %v1993, %v1994
      %v1996 = vrot.slane %v1995, 2
      %v1997 = vmax.f32 %v1995, %v1996
      %v1998 = vrot.slane %v1997, 1
      %v1999 = vmax.f32 %v1997, %v1998
      %v2000 = vsel %vm1981, %v1921, -inf
      %v2001 = vsel %vm1981, %v1922, -inf
      %v2002 = vmax.f32 %v2000, %v2001
      %v2003 = vrot.slane %v2002, 4
      %v2004 = vmax.f32 %v2002, %v2003
      %v2005 = vrot.slane %v2004, 2
      %v2006 = vmax.f32 %v2004, %v2005
      %v2007 = vrot.slane %v2006, 1
      %v2008 = vmax.f32 %v2006, %v2007
      %v2009 = vsel %vm1981, %v1923, -inf
      %v2010 = vsel %vm1981, %v1924, -inf
      %v2011 = vmax.f32 %v2009, %v2010
      %v2012 = vrot.slane %v2011, 4
      %v2013 = vmax.f32 %v2011, %v2012
      %v2014 = vrot.slane %v2013, 2
      %v2015 = vmax.f32 %v2013, %v2014
      %v2016 = vrot.slane %v2015, 1
      %v2017 = vmax.f32 %v2015, %v2016
      %v2018 = vsel %vm1981, %v1925, -inf
      %v2019 = vsel %vm1981, %v1926, -inf
      %v2020 = vmax.f32 %v2018, %v2019
      %v2021 = vrot.slane %v2020, 4
      %v2022 = vmax.f32 %v2020, %v2021
      %v2023 = vrot.slane %v2022, 2
      %v2024 = vmax.f32 %v2022, %v2023
      %v2025 = vrot.slane %v2024, 1
      %v2026 = vmax.f32 %v2024, %v2025
      %v2027 = vsel %vm1981, %v1927, -inf
      %v2028 = vsel %vm1981, %v1928, -inf
      %v2029 = vmax.f32 %v2027, %v2028
      %v2030 = vrot.slane %v2029, 4
      %v2031 = vmax.f32 %v2029, %v2030
      %v2032 = vrot.slane %v2031, 2
      %v2033 = vmax.f32 %v2031, %v2032
      %v2034 = vrot.slane %v2033, 1
      %v2035 = vmax.f32 %v2033, %v2034
      %v2036 = vsel %vm1981, %v1929, -inf
      %v2037 = vsel %vm1981, %v1930, -inf
      %v2038 = vmax.f32 %v2036, %v2037
      %v2039 = vrot.slane %v2038, 4
      %v2040 = vmax.f32 %v2038, %v2039
      %v2041 = vrot.slane %v2040, 2
      %v2042 = vmax.f32 %v2040, %v2041
      %v2043 = vrot.slane %v2042, 1
      %v2044 = vmax.f32 %v2042, %v2043
      %v2045 = vsel %vm1981, %v1931, -inf
      %v2046 = vsel %vm1981, %v1932, -inf
      %v2047 = vmax.f32 %v2045, %v2046
      %v2048 = vrot.slane %v2047, 4
      %v2049 = vmax.f32 %v2047, %v2048
      %v2050 = vrot.slane %v2049, 2
      %v2051 = vmax.f32 %v2049, %v2050
      %v2052 = vrot.slane %v2051, 1
      %v2053 = vmax.f32 %v2051, %v2052
      %v2054 = vsel %vm1981, %v1933, -inf
      %v2055 = vsel %vm1981, %v1934, -inf
      %v2056 = vmax.f32 %v2054, %v2055
      %v2057 = vrot.slane %v2056, 4
      %v2058 = vmax.f32 %v2056, %v2057
      %v2059 = vrot.slane %v2058, 2
      %v2060 = vmax.f32 %v2058, %v2059
      %v2061 = vrot.slane %v2060, 1
      %v2062 = vmax.f32 %v2060, %v2061
      %v2063 = vsel %vm1981, %v1935, -inf
      %v2064 = vsel %vm1981, %v1936, -inf
      %v2065 = vmax.f32 %v2063, %v2064
      %v2066 = vrot.slane %v2065, 4
      %v2067 = vmax.f32 %v2065, %v2066
      %v2068 = vrot.slane %v2067, 2
      %v2069 = vmax.f32 %v2067, %v2068
      %v2070 = vrot.slane %v2069, 1
      %v2071 = vmax.f32 %v2069, %v2070
      %v2072 = vsel %vm1981, %v1937, -inf
      %v2073 = vsel %vm1981, %v1938, -inf
      %v2074 = vmax.f32 %v2072, %v2073
      %v2075 = vrot.slane %v2074, 4
      %v2076 = vmax.f32 %v2074, %v2075
      %v2077 = vrot.slane %v2076, 2
      %v2078 = vmax.f32 %v2076, %v2077
      %v2079 = vrot.slane %v2078, 1
      %v2080 = vmax.f32 %v2078, %v2079
      %v2081 = vsel %vm1981, %v1939, -inf
      %v2082 = vsel %vm1981, %v1940, -inf
      %v2083 = vmax.f32 %v2081, %v2082
      %v2084 = vrot.slane %v2083, 4
      %v2085 = vmax.f32 %v2083, %v2084
      %v2086 = vrot.slane %v2085, 2
      %v2087 = vmax.f32 %v2085, %v2086
      %v2088 = vrot.slane %v2087, 1
      %v2089 = vmax.f32 %v2087, %v2088
      %v2090 = vsel %vm1981, %v1941, -inf
      %v2091 = vsel %vm1981, %v1942, -inf
      %v2092 = vmax.f32 %v2090, %v2091
      %v2093 = vrot.slane %v2092, 4
      %v2094 = vmax.f32 %v2092, %v2093
      %v2095 = vrot.slane %v2094, 2
      %v2096 = vmax.f32 %v2094, %v2095
      %v2097 = vrot.slane %v2096, 1
      %v2098 = vmax.f32 %v2096, %v2097
      %v2099 = vsel %vm1981, %v1943, -inf
      %v2100 = vsel %vm1981, %v1944, -inf
      %v2101 = vmax.f32 %v2099, %v2100
      %v2102 = vrot.slane %v2101, 4
      %v2103 = vmax.f32 %v2101, %v2102
      %v2104 = vrot.slane %v2103, 2
      %v2105 = vmax.f32 %v2103, %v2104
      %v2106 = vrot.slane %v2105, 1
      %v2107 = vmax.f32 %v2105, %v2106
      %v2108 = vsel %vm1981, %v1945, -inf
      %v2109 = vsel %vm1981, %v1946, -inf
      %v2110 = vmax.f32 %v2108, %v2109
      %v2111 = vrot.slane %v2110, 4
      %v2112 = vmax.f32 %v2110, %v2111
      %v2113 = vrot.slane %v2112, 2
      %v2114 = vmax.f32 %v2112, %v2113
      %v2115 = vrot.slane %v2114, 1
      %v2116 = vmax.f32 %v2114, %v2115
      %v2117 = vsel %vm1981, %v1947, -inf
      %v2118 = vsel %vm1981, %v1948, -inf
      %v2119 = vmax.f32 %v2117, %v2118
      %v2120 = vrot.slane %v2119, 4
      %v2121 = vmax.f32 %v2119, %v2120
      %v2122 = vrot.slane %v2121, 2
      %v2123 = vmax.f32 %v2121, %v2122
      %v2124 = vrot.slane %v2123, 1
      %v2125 = vmax.f32 %v2123, %v2124
      %v2126 = vsel %vm1981, %v1949, -inf
      %v2127 = vsel %vm1981, %v1950, -inf
      %v2128 = vmax.f32 %v2126, %v2127
      %v2129 = vrot.slane %v2128, 4
      %v2130 = vmax.f32 %v2128, %v2129
      %v2131 = vrot.slane %v2130, 2
      %v2132 = vmax.f32 %v2130, %v2131
      %v2133 = vrot.slane %v2132, 1
      %v2134 = vmax.f32 %v2132, %v2133
      %v2135 = vsel %vm1981, %v1951, -inf
      %v2136 = vsel %vm1981, %v1952, -inf
      %v2137 = vmax.f32 %v2135, %v2136
      %v2138 = vrot.slane %v2137, 4
      %v2139 = vmax.f32 %v2137, %v2138
      %v2140 = vrot.slane %v2139, 2
      %v2141 = vmax.f32 %v2139, %v2140
      %v2142 = vrot.slane %v2141, 1
      %v2143 = vmax.f32 %v2141, %v2142
      %v2144 = vsel %vm1981, %v1953, -inf
      %v2145 = vsel %vm1981, %v1954, -inf
      %v2146 = vmax.f32 %v2144, %v2145
      %v2147 = vrot.slane %v2146, 4
      %v2148 = vmax.f32 %v2146, %v2147
      %v2149 = vrot.slane %v2148, 2
      %v2150 = vmax.f32 %v2148, %v2149
      %v2151 = vrot.slane %v2150, 1
      %v2152 = vmax.f32 %v2150, %v2151
      %v2153 = vsel %vm1981, %v1955, -inf
      %v2154 = vsel %vm1981, %v1956, -inf
      %v2155 = vmax.f32 %v2153, %v2154
      %v2156 = vrot.slane %v2155, 4
      %v2157 = vmax.f32 %v2155, %v2156
      %v2158 = vrot.slane %v2157, 2
      %v2159 = vmax.f32 %v2157, %v2158
      %v2160 = vrot.slane %v2159, 1
      %v2161 = vmax.f32 %v2159, %v2160
      %v2162 = vsel %vm1981, %v1957, -inf
      %v2163 = vsel %vm1981, %v1958, -inf
      %v2164 = vmax.f32 %v2162, %v2163
      %v2165 = vrot.slane %v2164, 4
      %v2166 = vmax.f32 %v2164, %v2165
      %v2167 = vrot.slane %v2166, 2
      %v2168 = vmax.f32 %v2166, %v2167
      %v2169 = vrot.slane %v2168, 1
      %v2170 = vmax.f32 %v2168, %v2169
      %v2171 = vsel %vm1981, %v1959, -inf
      %v2172 = vsel %vm1981, %v1960, -inf
      %v2173 = vmax.f32 %v2171, %v2172
      %v2174 = vrot.slane %v2173, 4
      %v2175 = vmax.f32 %v2173, %v2174
      %v2176 = vrot.slane %v2175, 2
      %v2177 = vmax.f32 %v2175, %v2176
      %v2178 = vrot.slane %v2177, 1
      %v2179 = vmax.f32 %v2177, %v2178
      %v2180 = vsel %vm1981, %v1961, -inf
      %v2181 = vsel %vm1981, %v1962, -inf
      %v2182 = vmax.f32 %v2180, %v2181
      %v2183 = vrot.slane %v2182, 4
      %v2184 = vmax.f32 %v2182, %v2183
      %v2185 = vrot.slane %v2184, 2
      %v2186 = vmax.f32 %v2184, %v2185
      %v2187 = vrot.slane %v2186, 1
      %v2188 = vmax.f32 %v2186, %v2187
      %v2189 = vsel %vm1981, %v1963, -inf
      %v2190 = vsel %vm1981, %v1964, -inf
      %v2191 = vmax.f32 %v2189, %v2190
      %v2192 = vrot.slane %v2191, 4
      %v2193 = vmax.f32 %v2191, %v2192
      %v2194 = vrot.slane %v2193, 2
      %v2195 = vmax.f32 %v2193, %v2194
      %v2196 = vrot.slane %v2195, 1
      %v2197 = vmax.f32 %v2195, %v2196
      %v2198 = vsel %vm1981, %v1965, -inf
      %v2199 = vsel %vm1981, %v1966, -inf
      %v2200 = vmax.f32 %v2198, %v2199
      %v2201 = vrot.slane %v2200, 4
      %v2202 = vmax.f32 %v2200, %v2201
      %v2203 = vrot.slane %v2202, 2
      %v2204 = vmax.f32 %v2202, %v2203
      %v2205 = vrot.slane %v2204, 1
      %v2206 = vmax.f32 %v2204, %v2205
      %v2207 = vsel %vm1981, %v1967, -inf
      %v2208 = vsel %vm1981, %v1968, -inf
      %v2209 = vmax.f32 %v2207, %v2208
      %v2210 = vrot.slane %v2209, 4
      %v2211 = vmax.f32 %v2209, %v2210
      %v2212 = vrot.slane %v2211, 2
      %v2213 = vmax.f32 %v2211, %v2212
      %v2214 = vrot.slane %v2213, 1
      %v2215 = vmax.f32 %v2213, %v2214
      %v2216 = vsel %vm1981, %v1969, -inf
      %v2217 = vsel %vm1981, %v1970, -inf
      %v2218 = vmax.f32 %v2216, %v2217
      %v2219 = vrot.slane %v2218, 4
      %v2220 = vmax.f32 %v2218, %v2219
      %v2221 = vrot.slane %v2220, 2
      %v2222 = vmax.f32 %v2220, %v2221
      %v2223 = vrot.slane %v2222, 1
      %v2224 = vmax.f32 %v2222, %v2223
      %v2225 = vsel %vm1981, %v1971, -inf
      %v2226 = vsel %vm1981, %v1972, -inf
      %v2227 = vmax.f32 %v2225, %v2226
      %v2228 = vrot.slane %v2227, 4
      %v2229 = vmax.f32 %v2227, %v2228
      %v2230 = vrot.slane %v2229, 2
      %v2231 = vmax.f32 %v2229, %v2230
      %v2232 = vrot.slane %v2231, 1
      %v2233 = vmax.f32 %v2231, %v2232
      %v2234 = vsel %vm1981, %v1973, -inf
      %v2235 = vsel %vm1981, %v1974, -inf
      %v2236 = vmax.f32 %v2234, %v2235
      %v2237 = vrot.slane %v2236, 4
      %v2238 = vmax.f32 %v2236, %v2237
      %v2239 = vrot.slane %v2238, 2
      %v2240 = vmax.f32 %v2238, %v2239
      %v2241 = vrot.slane %v2240, 1
      %v2242 = vmax.f32 %v2240, %v2241
      %v2243 = vsel %vm1981, %v1975, -inf
      %v2244 = vsel %vm1981, %v1976, -inf
      %v2245 = vmax.f32 %v2243, %v2244
      %v2246 = vrot.slane %v2245, 4
      %v2247 = vmax.f32 %v2245, %v2246
      %v2248 = vrot.slane %v2247, 2
      %v2249 = vmax.f32 %v2247, %v2248
      %v2250 = vrot.slane %v2249, 1
      %v2251 = vmax.f32 %v2249, %v2250
      %v2252 = vsel %vm1981, %v1977, -inf
      %v2253 = vsel %vm1981, %v1978, -inf
      %v2254 = vmax.f32 %v2252, %v2253
      %v2255 = vrot.slane %v2254, 4
      %v2256 = vmax.f32 %v2254, %v2255
      %v2257 = vrot.slane %v2256, 2
      %v2258 = vmax.f32 %v2256, %v2257
      %v2259 = vrot.slane %v2258, 1
      %v2260 = vmax.f32 %v2258, %v2259
      %v2261 = vsel %vm1981, %v1979, -inf
      %v2262 = vsel %vm1981, %v1980, -inf
      %v2263 = vmax.f32 %v2261, %v2262
      %v2264 = vrot.slane %v2263, 4
      %v2265 = vmax.f32 %v2263, %v2264
      %v2266 = vrot.slane %v2265, 2
      %v2267 = vmax.f32 %v2265, %v2266
      %v2268 = vrot.slane %v2267, 1
      %v2269 = vmax.f32 %v2267, %v2268
      %v2270 = vpack.c.bf16 %v1990, %v1990
      %v2271 = vpack.c.bf16 %v1999, %v1999
      %v2272 = vpack.c.bf16 %v2008, %v2008
      %v2273 = vpack.c.bf16 %v2017, %v2017
      %v2274 = vpack.c.bf16 %v2026, %v2026
      %v2275 = vpack.c.bf16 %v2035, %v2035
      %v2276 = vpack.c.bf16 %v2044, %v2044
      %v2277 = vpack.c.bf16 %v2053, %v2053
      %v2278 = vpack.c.bf16 %v2062, %v2062
      %v2279 = vpack.c.bf16 %v2071, %v2071
      %v2280 = vpack.c.bf16 %v2080, %v2080
      %v2281 = vpack.c.bf16 %v2089, %v2089
      %v2282 = vpack.c.bf16 %v2098, %v2098
      %v2283 = vpack.c.bf16 %v2107, %v2107
      %v2284 = vpack.c.bf16 %v2116, %v2116
      %v2285 = vpack.c.bf16 %v2125, %v2125
      %v2286 = vpack.c.bf16 %v2134, %v2134
      %v2287 = vpack.c.bf16 %v2143, %v2143
      %v2288 = vpack.c.bf16 %v2152, %v2152
      %v2289 = vpack.c.bf16 %v2161, %v2161
      %v2290 = vpack.c.bf16 %v2170, %v2170
      %v2291 = vpack.c.bf16 %v2179, %v2179
      %v2292 = vpack.c.bf16 %v2188, %v2188
      %v2293 = vpack.c.bf16 %v2197, %v2197
      %v2294 = vpack.c.bf16 %v2206, %v2206
      %v2295 = vpack.c.bf16 %v2215, %v2215
      %v2296 = vpack.c.bf16 %v2224, %v2224
      %v2297 = vpack.c.bf16 %v2233, %v2233
      %v2298 = vpack.c.bf16 %v2242, %v2242
      %v2299 = vpack.c.bf16 %v2251, %v2251
      %v2300 = vpack.c.bf16 %v2260, %v2260
      %v2301 = vpack.c.bf16 %v2269, %v2269
      %v2334 = vunpack.c.l.b16 %v2270
      %v2335 = vunpack.c.l.b16 %v2271
      %v2336 = vunpack.c.l.b16 %v2272
      %v2337 = vunpack.c.l.b16 %v2273
      %v2338 = vunpack.c.l.b16 %v2274
      %v2339 = vunpack.c.l.b16 %v2275
      %v2340 = vunpack.c.l.b16 %v2276
      %v2341 = vunpack.c.l.b16 %v2277
      %v2342 = vunpack.c.l.b16 %v2278
      %v2343 = vunpack.c.l.b16 %v2279
      %v2344 = vunpack.c.l.b16 %v2280
      %v2345 = vunpack.c.l.b16 %v2281
      %v2346 = vunpack.c.l.b16 %v2282
      %v2347 = vunpack.c.l.b16 %v2283
      %v2348 = vunpack.c.l.b16 %v2284
      %v2349 = vunpack.c.l.b16 %v2285
      %v2350 = vunpack.c.l.b16 %v2286
      %v2351 = vunpack.c.l.b16 %v2287
      %v2352 = vunpack.c.l.b16 %v2288
      %v2353 = vunpack.c.l.b16 %v2289
      %v2354 = vunpack.c.l.b16 %v2290
      %v2355 = vunpack.c.l.b16 %v2291
      %v2356 = vunpack.c.l.b16 %v2292
      %v2357 = vunpack.c.l.b16 %v2293
      %v2358 = vunpack.c.l.b16 %v2294
      %v2359 = vunpack.c.l.b16 %v2295
      %v2360 = vunpack.c.l.b16 %v2296
      %v2361 = vunpack.c.l.b16 %v2297
      %v2362 = vunpack.c.l.b16 %v2298
      %v2363 = vunpack.c.l.b16 %v2299
      %v2364 = vunpack.c.l.b16 %v2300
      %v2365 = vunpack.c.l.b16 %v2301
      %v2366 = vpack.c.b16 %v2334, %v2334
      %v2367 = vpack.c.b16 %v2335, %v2335
      %v2368 = vpack.c.b16 %v2336, %v2336
      %v2369 = vpack.c.b16 %v2337, %v2337
      %v2370 = vpack.c.b16 %v2338, %v2338
      %v2371 = vpack.c.b16 %v2339, %v2339
      %v2372 = vpack.c.b16 %v2340, %v2340
      %v2373 = vpack.c.b16 %v2341, %v2341
      %v2374 = vpack.c.b16 %v2342, %v2342
      %v2375 = vpack.c.b16 %v2343, %v2343
      %v2376 = vpack.c.b16 %v2344, %v2344
      %v2377 = vpack.c.b16 %v2345, %v2345
      %v2378 = vpack.c.b16 %v2346, %v2346
      %v2379 = vpack.c.b16 %v2347, %v2347
      %v2380 = vpack.c.b16 %v2348, %v2348
      %v2381 = vpack.c.b16 %v2349, %v2349
      %v2382 = vpack.c.b16 %v2350, %v2350
      %v2383 = vpack.c.b16 %v2351, %v2351
      %v2384 = vpack.c.b16 %v2352, %v2352
      %v2385 = vpack.c.b16 %v2353, %v2353
      %v2386 = vpack.c.b16 %v2354, %v2354
      %v2387 = vpack.c.b16 %v2355, %v2355
      %v2388 = vpack.c.b16 %v2356, %v2356
      %v2389 = vpack.c.b16 %v2357, %v2357
      %v2390 = vpack.c.b16 %v2358, %v2358
      %v2391 = vpack.c.b16 %v2359, %v2359
      %v2392 = vpack.c.b16 %v2360, %v2360
      %v2393 = vpack.c.b16 %v2361, %v2361
      %v2394 = vpack.c.b16 %v2362, %v2362
      %v2395 = vpack.c.b16 %v2363, %v2363
      %v2396 = vpack.c.b16 %v2364, %v2364
      %v2397 = vpack.c.b16 %v2365, %v2365
      %v2398 = vunpack.c.l.b16 %v2366
      %v2399 = vunpack.c.l.b16 %v2367
      %v2400 = vunpack.c.l.b16 %v2368
      %v2401 = vunpack.c.l.b16 %v2369
      %v2402 = vunpack.c.l.b16 %v2370
      %v2403 = vunpack.c.l.b16 %v2371
      %v2404 = vunpack.c.l.b16 %v2372
      %v2405 = vunpack.c.l.b16 %v2373
      %v2406 = vunpack.c.l.b16 %v2374
      %v2407 = vunpack.c.l.b16 %v2375
      %v2408 = vunpack.c.l.b16 %v2376
      %v2409 = vunpack.c.l.b16 %v2377
      %v2410 = vunpack.c.l.b16 %v2378
      %v2411 = vunpack.c.l.b16 %v2379
      %v2412 = vunpack.c.l.b16 %v2380
      %v2413 = vunpack.c.l.b16 %v2381
      %v2414 = vunpack.c.l.b16 %v2382
      %v2415 = vunpack.c.l.b16 %v2383
      %v2416 = vunpack.c.l.b16 %v2384
      %v2417 = vunpack.c.l.b16 %v2385
      %v2418 = vunpack.c.l.b16 %v2386
      %v2419 = vunpack.c.l.b16 %v2387
      %v2420 = vunpack.c.l.b16 %v2388
      %v2421 = vunpack.c.l.b16 %v2389
      %v2422 = vunpack.c.l.b16 %v2390
      %v2423 = vunpack.c.l.b16 %v2391
      %v2424 = vunpack.c.l.b16 %v2392
      %v2425 = vunpack.c.l.b16 %v2393
      %v2426 = vunpack.c.l.b16 %v2394
      %v2427 = vunpack.c.l.b16 %v2395
      %v2428 = vunpack.c.l.b16 %v2396
      %v2429 = vunpack.c.l.b16 %v2397
      %vm2430 = vcmask 1041409
      %v2431 = vsel %vm2430, %v2399, %v2398
      %vm2432 = vcmask 1042434
      %v2433 = vsel %vm2432, %v2400, %v2431
      %vm2434 = vcmask 1043459
      %v2435 = vsel %vm2434, %v2401, %v2433
      %vm2436 = vcmask 1044484
      %v2437 = vsel %vm2436, %v2402, %v2435
      %vm2438 = vcmask 1045509
      %v2439 = vsel %vm2438, %v2403, %v2437
      %vm2440 = vcmask 1046534
      %v2441 = vsel %vm2440, %v2404, %v2439
      %vm2442 = vcmask 1047559
      %v2443 = vsel %vm2442, %v2405, %v2441
      %v2444 = vsel %vm2430, %v2407, %v2406
      %v2445 = vsel %vm2432, %v2408, %v2444
      %v2446 = vsel %vm2434, %v2409, %v2445
      %v2447 = vsel %vm2436, %v2410, %v2446
      %v2448 = vsel %vm2438, %v2411, %v2447
      %v2449 = vsel %vm2440, %v2412, %v2448
      %v2450 = vsel %vm2442, %v2413, %v2449
      %v2451 = vsel %vm2430, %v2415, %v2414
      %v2452 = vsel %vm2432, %v2416, %v2451
      %v2453 = vsel %vm2434, %v2417, %v2452
      %v2454 = vsel %vm2436, %v2418, %v2453
      %v2455 = vsel %vm2438, %v2419, %v2454
      %v2456 = vsel %vm2440, %v2420, %v2455
      %v2457 = vsel %vm2442, %v2421, %v2456
      %v2458 = vsel %vm2430, %v2423, %v2422
      %v2459 = vsel %vm2432, %v2424, %v2458
      %v2460 = vsel %vm2434, %v2425, %v2459
      %v2461 = vsel %vm2436, %v2426, %v2460
      %v2462 = vsel %vm2438, %v2427, %v2461
      %v2463 = vsel %vm2440, %v2428, %v2462
      %v2464 = vsel %vm2442, %v2429, %v2463
      %v2465 = vpack.c.b16 %v2443, %v2443
      %v2466 = vpack.c.b16 %v2450, %v2450
      %v2467 = vpack.c.b16 %v2457, %v2457
      %v2468 = vpack.c.b16 %v2464, %v2464
      %vm2473 = vcmask 519168
      %2474 = vst.msk [vmem:[%s280] sm:$0xf] %vm2473, %v2465
      %2475 = vst.msk [vmem:[%s280 + $0x4] sm:$0xf] %vm2473, %v2466
      %2476 = vst.msk [vmem:[%s280 + $0x8] sm:$0xf] %vm2473, %v2467
      %2477 = vst.msk [vmem:[%s280 + $0xc] sm:$0xf] %vm2473, %v2468
      %s2478 = smul.u32 4, %s18
      %p2479 = scmp.lt.s32.totalorder %s2478, 7
      %s2480 = scalar_select %p2479, %s2478, 7
      %s2481 = smul.addr %s2480, 4
      %s2482 = scalar_lea.vmem %s7, %s2481
      // Predicated region
      $region49: #{pointnet2_forward.8} parent=47 // pred_check
        %p2483 = pneg %p188
      $region50: #{pointnet2_forward.8} parent=47 // pred_check_branch
        %2485 = sbr.rel (%p2483) target = $region52
      $region51: #{pointnet2_forward.8} parent=47 // pred_region
        %s2486 = smul.u32 4, %s18
      $region52: #{pointnet2_forward.8} parent=47 // pred_fallthru
        _
    $region48: #{pointnet2_forward.8} parent=5 // pred_fallthru
      _
    %p2487 = scmp.le.s32.totalorder 2, %s13
    // Predicated region
    $region53: #{pointnet2_forward.8} parent=5 // pred_check
      %p2488 = pneg %p2487
    $region54: #{pointnet2_forward.8} parent=5 // pred_check_branch
      %2490 = sbr.rel (%p2488) target = $region56
    $region55: #{pointnet2_forward.8} parent=5 // pred_region
      %s2491 = ssub.s32 %s13, 2
      // Predicated region
      $region57: #{pointnet2_forward.8} parent=55 // pred_check
        %p2492 = pneg %p194
      $region58: #{pointnet2_forward.8} parent=55 // pred_check_branch
        %2494 = sbr.rel (%p2492) target = $region60
      $region59: #{pointnet2_forward.8} parent=55 // pred_region
        %s2495 = smul.u32 4, %s19
        %p2496 = scmp.lt.s32.totalorder %s2495, 7
        %s2497 = scalar_select %p2496, %s2495, 7
        %s2498 = smul.addr %s2497, 4
        %s2499 = scalar_lea.vmem %s7, %s2498
      $region60: #{pointnet2_forward.8} parent=55 // pred_fallthru
        _
    $region56: #{pointnet2_forward.8} parent=5 // pred_fallthru
      _
  $region6: #{pointnet2_forward.8} parent=0 // loop_footer
    %s17 = sadd.s32 1, %s13
  $region7: #{pointnet2_forward.8} parent=0 // loop_footer_branch
    %12 = sbr.rel target = $region3
  $region8: #{pointnet2_forward.8} parent=0 // loop_exit
    _

// kernel: pointnet2_forward.9
$region0: #{pointnet2_forward.9}
  #allocation0 [shape = 'u32[]', space=smem, size = 0x4, offset = 0x4, fixed_abs, tag = 'smem constant byte address 0x4 - core index']
  #allocation1 [shape = 'u32[144,128]{1,0:T(1,128)}', space=vmem, size = 0x12000, scoped, tag = 'internal scratch']
  %s0 = inlined_call_operand.vmem [shape: bf16[512,80], index: 0, kind: input, shape index: {}]
  %s1 = inlined_call_operand.vmem [shape: bf16[80,64], index: 1, kind: input, shape index: {}]
  %s2 = inlined_call_operand.vmem [shape: f32[1,64], index: 2, kind: input, shape index: {}]
  %s3 = inlined_call_operand.vmem [shape: bf16[64,64], index: 3, kind: input, shape index: {}]
  %s4 = inlined_call_operand.vmem [shape: f32[1,64], index: 4, kind: input, shape index: {}]
  %s5 = inlined_call_operand.vmem [shape: bf16[64,128], index: 5, kind: input, shape index: {}]
  %s6 = inlined_call_operand.vmem [shape: f32[1,128], index: 6, kind: input, shape index: {}]
  %s7 = inlined_call_operand.vmem [shape: bf16[32,128], index: 7, kind: output, shape index: {}]
  %s8 = sld [smem:[#allocation0]]
  $region61: #{pointnet2_forward.9} parent=0
    _
  %s10 = ssub.s32 1, %s8
  %s11 = scalar_select 0, %s10, %s8
  loop: start=0, step=1, limit=4
  $region2: #{pointnet2_forward.9} parent=0 // loop_pre_header
    _
  $region3: #{pointnet2_forward.9} parent=0 // loop_header
    %s13 = sphi 0, %s17
    %p14 = scmp.ge.s32.totalorder %s13, 4
    %s23 = sphi 0, %s25
    %s26 = sphi 0, %s23
    %s27 = sphi 0, %s26
    %s43 = sphi 0, %s27
    %s47 = sphi 0, %s47
    %s49 = sphi 0, %s47
    %s50 = sphi 0, %s49
    %s64 = sphi 0, %s50
    %s68 = sphi 0, %s68
    %s70 = sphi 0, %s68
    %s71 = sphi 0, %s70
    %s85 = sphi 0, %s71
    %s89 = sphi 0, %s89
    %s91 = sphi 0, %s89
    %s92 = sphi 0, %s91
    %s106 = sphi 0, %s92
    %s110 = sphi 0, %s110
    %s112 = sphi 0, %s110
    %s113 = sphi 0, %s112
    %s127 = sphi 0, %s113
    %s131 = sphi 0, %s131
    %s133 = sphi 0, %s131
    %s134 = sphi 0, %s133
    %s148 = sphi 0, %s134
    %s152 = sphi 0, %s152
    %s154 = sphi 0, %s152
    %s155 = sphi 0, %s154
    %s169 = sphi 0, %s155
    %s175 = sphi 0, %s177
    %s178 = sphi 0, %s175
    %s179 = sphi 0, %s178
    %s195 = sphi 0, %s179
  $region4: #{pointnet2_forward.9} parent=0 // loop_header_branch
    %16 = sbr.rel (%p14) target = $region8
  $region5: #{pointnet2_forward.9} parent=0 // loop_body
    %s18 = ssub.s32 %s13, 1
    %s19 = ssub.s32 %s13, 2
    %s20 = sadd.s32 %s13, 1
    %s21 = ssub.s32 %s13, %s20
    %p22 = scmp.eq.s32.totalorder %s21, 0
    %s24 = sadd.s32 %s23, 1
    %s25 = scalar_select %p22, %s23, %s24
    %p28 = pneg %p22
    %p29 = scmp.eq.s32.totalorder %s13, 1
    %p30 = por %p28, %p29
    %p31 = scmp.ne.s32.totalorder %s23, %s26
    %p32 = scmp.eq.s32.totalorder %s13, 0
    %p33 = por %p31, %p32
    %p34 = scmp.ne.s32.totalorder %s23, %s26
    %p35 = scmp.eq.s32.totalorder %s18, 1
    %p36 = por %p34, %p35
    %p37 = scmp.ne.s32.totalorder %s26, %s27
    %p38 = scmp.eq.s32.totalorder %s18, 0
    %p39 = por %p37, %p38
    %p40 = scmp.ne.s32.totalorder %s26, %s27
    %p41 = scmp.eq.s32.totalorder %s19, 1
    %p42 = por %p40, %p41
    %p44 = scmp.ne.s32.totalorder %s27, %s43
    %p45 = scmp.eq.s32.totalorder %s19, 0
    %p46 = por %p44, %p45
    %s48 = sadd.s32 %s47, 1
    %p51 = scmp.eq.s32.totalorder %s13, 1
    %p52 = scmp.ne.s32.totalorder %s47, %s49
    %p53 = scmp.eq.s32.totalorder %s13, 0
    %p54 = por %p52, %p53
    %p55 = scmp.ne.s32.totalorder %s47, %s49
    %p56 = scmp.eq.s32.totalorder %s18, 1
    %p57 = por %p55, %p56
    %p58 = scmp.ne.s32.totalorder %s49, %s50
    %p59 = scmp.eq.s32.totalorder %s18, 0
    %p60 = por %p58, %p59
    %p61 = scmp.ne.s32.totalorder %s49, %s50
    %p62 = scmp.eq.s32.totalorder %s19, 1
    %p63 = por %p61, %p62
    %p65 = scmp.ne.s32.totalorder %s50, %s64
    %p66 = scmp.eq.s32.totalorder %s19, 0
    %p67 = por %p65, %p66
    %s69 = sadd.s32 %s68, 1
    %p72 = scmp.eq.s32.totalorder %s13, 1
    %p73 = scmp.ne.s32.totalorder %s68, %s70
    %p74 = scmp.eq.s32.totalorder %s13, 0
    %p75 = por %p73, %p74
    %p76 = scmp.ne.s32.totalorder %s68, %s70
    %p77 = scmp.eq.s32.totalorder %s18, 1
    %p78 = por %p76, %p77
    %p79 = scmp.ne.s32.totalorder %s70, %s71
    %p80 = scmp.eq.s32.totalorder %s18, 0
    %p81 = por %p79, %p80
    %p82 = scmp.ne.s32.totalorder %s70, %s71
    %p83 = scmp.eq.s32.totalorder %s19, 1
    %p84 = por %p82, %p83
    %p86 = scmp.ne.s32.totalorder %s71, %s85
    %p87 = scmp.eq.s32.totalorder %s19, 0
    %p88 = por %p86, %p87
    %s90 = sadd.s32 %s89, 1
    %p93 = scmp.eq.s32.totalorder %s13, 1
    %p94 = scmp.ne.s32.totalorder %s89, %s91
    %p95 = scmp.eq.s32.totalorder %s13, 0
    %p96 = por %p94, %p95
    %p97 = scmp.ne.s32.totalorder %s89, %s91
    %p98 = scmp.eq.s32.totalorder %s18, 1
    %p99 = por %p97, %p98
    %p100 = scmp.ne.s32.totalorder %s91, %s92
    %p101 = scmp.eq.s32.totalorder %s18, 0
    %p102 = por %p100, %p101
    %p103 = scmp.ne.s32.totalorder %s91, %s92
    %p104 = scmp.eq.s32.totalorder %s19, 1
    %p105 = por %p103, %p104
    %p107 = scmp.ne.s32.totalorder %s92, %s106
    %p108 = scmp.eq.s32.totalorder %s19, 0
    %p109 = por %p107, %p108
    %s111 = sadd.s32 %s110, 1
    %p114 = scmp.eq.s32.totalorder %s13, 1
    %p115 = scmp.ne.s32.totalorder %s110, %s112
    %p116 = scmp.eq.s32.totalorder %s13, 0
    %p117 = por %p115, %p116
    %p118 = scmp.ne.s32.totalorder %s110, %s112
    %p119 = scmp.eq.s32.totalorder %s18, 1
    %p120 = por %p118, %p119
    %p121 = scmp.ne.s32.totalorder %s112, %s113
    %p122 = scmp.eq.s32.totalorder %s18, 0
    %p123 = por %p121, %p122
    %p124 = scmp.ne.s32.totalorder %s112, %s113
    %p125 = scmp.eq.s32.totalorder %s19, 1
    %p126 = por %p124, %p125
    %p128 = scmp.ne.s32.totalorder %s113, %s127
    %p129 = scmp.eq.s32.totalorder %s19, 0
    %p130 = por %p128, %p129
    %s132 = sadd.s32 %s131, 1
    %p135 = scmp.eq.s32.totalorder %s13, 1
    %p136 = scmp.ne.s32.totalorder %s131, %s133
    %p137 = scmp.eq.s32.totalorder %s13, 0
    %p138 = por %p136, %p137
    %p139 = scmp.ne.s32.totalorder %s131, %s133
    %p140 = scmp.eq.s32.totalorder %s18, 1
    %p141 = por %p139, %p140
    %p142 = scmp.ne.s32.totalorder %s133, %s134
    %p143 = scmp.eq.s32.totalorder %s18, 0
    %p144 = por %p142, %p143
    %p145 = scmp.ne.s32.totalorder %s133, %s134
    %p146 = scmp.eq.s32.totalorder %s19, 1
    %p147 = por %p145, %p146
    %p149 = scmp.ne.s32.totalorder %s134, %s148
    %p150 = scmp.eq.s32.totalorder %s19, 0
    %p151 = por %p149, %p150
    %s153 = sadd.s32 %s152, 1
    %p156 = scmp.eq.s32.totalorder %s13, 1
    %p157 = scmp.ne.s32.totalorder %s152, %s154
    %p158 = scmp.eq.s32.totalorder %s13, 0
    %p159 = por %p157, %p158
    %p160 = scmp.ne.s32.totalorder %s152, %s154
    %p161 = scmp.eq.s32.totalorder %s18, 1
    %p162 = por %p160, %p161
    %p163 = scmp.ne.s32.totalorder %s154, %s155
    %p164 = scmp.eq.s32.totalorder %s18, 0
    %p165 = por %p163, %p164
    %p166 = scmp.ne.s32.totalorder %s154, %s155
    %p167 = scmp.eq.s32.totalorder %s19, 1
    %p168 = por %p166, %p167
    %p170 = scmp.ne.s32.totalorder %s155, %s169
    %p171 = scmp.eq.s32.totalorder %s19, 0
    %p172 = por %p170, %p171
    %s173 = ssub.s32 %s13, %s20
    %p174 = scmp.eq.s32.totalorder %s173, 0
    %s176 = sadd.s32 %s175, 1
    %s177 = scalar_select %p174, %s175, %s176
    %p180 = pneg %p174
    %p181 = scmp.eq.s32.totalorder %s13, 1
    %p182 = por %p180, %p181
    %p183 = scmp.ne.s32.totalorder %s175, %s178
    %p184 = scmp.eq.s32.totalorder %s13, 0
    %p185 = por %p183, %p184
    %p186 = scmp.ne.s32.totalorder %s175, %s178
    %p187 = scmp.eq.s32.totalorder %s18, 1
    %p188 = por %p186, %p187
    %p189 = scmp.ne.s32.totalorder %s178, %s179
    %p190 = scmp.eq.s32.totalorder %s18, 0
    %p191 = por %p189, %p190
    %p192 = scmp.ne.s32.totalorder %s178, %s179
    %p193 = scmp.eq.s32.totalorder %s19, 1
    %p194 = por %p192, %p193
    %p196 = scmp.ne.s32.totalorder %s179, %s195
    %p197 = scmp.eq.s32.totalorder %s19, 0
    %p198 = por %p196, %p197
    %p199 = scmp.le.s32.totalorder 1, %s13
    %p200 = scmp.lt.s32.totalorder %s13, 3
    %p201 = pnand %p199, %p200
    %p202 = pneg %p201
    // Predicated region
    $region9: #{pointnet2_forward.9} parent=5 // pred_check
      _
    $region10: #{pointnet2_forward.9} parent=5 // pred_check_branch
      %204 = sbr.rel (%p201) target = $region12
    $region11: #{pointnet2_forward.9} parent=5 // pred_region
      %s205 = ssub.s32 %s13, 1
      // Predicated region
      $region13: #{pointnet2_forward.9} parent=11 // pred_check
        %p206 = pneg %p60
      $region14: #{pointnet2_forward.9} parent=11 // pred_check_branch
        %208 = sbr.rel (%p206) target = $region16
      $region15: #{pointnet2_forward.9} parent=11 // pred_region
        _
      $region16: #{pointnet2_forward.9} parent=11 // pred_fallthru
        _
      // Predicated region
      $region17: #{pointnet2_forward.9} parent=11 // pred_check
        %p209 = pneg %p81
      $region18: #{pointnet2_forward.9} parent=11 // pred_check_branch
        %211 = sbr.rel (%p209) target = $region20
      $region19: #{pointnet2_forward.9} parent=11 // pred_region
        _
      $region20: #{pointnet2_forward.9} parent=11 // pred_fallthru
        _
      // Predicated region
      $region21: #{pointnet2_forward.9} parent=11 // pred_check
        %p212 = pneg %p102
      $region22: #{pointnet2_forward.9} parent=11 // pred_check_branch
        %214 = sbr.rel (%p212) target = $region24
      $region23: #{pointnet2_forward.9} parent=11 // pred_region
        _
      $region24: #{pointnet2_forward.9} parent=11 // pred_fallthru
        _
      // Predicated region
      $region25: #{pointnet2_forward.9} parent=11 // pred_check
        %p215 = pneg %p123
      $region26: #{pointnet2_forward.9} parent=11 // pred_check_branch
        %217 = sbr.rel (%p215) target = $region28
      $region27: #{pointnet2_forward.9} parent=11 // pred_region
        _
      $region28: #{pointnet2_forward.9} parent=11 // pred_fallthru
        _
      // Predicated region
      $region29: #{pointnet2_forward.9} parent=11 // pred_check
        %p218 = pneg %p144
      $region30: #{pointnet2_forward.9} parent=11 // pred_check_branch
        %220 = sbr.rel (%p218) target = $region32
      $region31: #{pointnet2_forward.9} parent=11 // pred_region
        _
      $region32: #{pointnet2_forward.9} parent=11 // pred_fallthru
        _
      // Predicated region
      $region33: #{pointnet2_forward.9} parent=11 // pred_check
        %p221 = pneg %p165
      $region34: #{pointnet2_forward.9} parent=11 // pred_check_branch
        %223 = sbr.rel (%p221) target = $region36
      $region35: #{pointnet2_forward.9} parent=11 // pred_region
        _
      $region36: #{pointnet2_forward.9} parent=11 // pred_fallthru
        _
    $region12: #{pointnet2_forward.9} parent=5 // pred_fallthru
      _
    %p224 = scmp.lt.s32.totalorder %s13, 2
    // Predicated region
    $region37: #{pointnet2_forward.9} parent=5 // pred_check
      %p225 = pneg %p224
    $region38: #{pointnet2_forward.9} parent=5 // pred_check_branch
      %227 = sbr.rel (%p225) target = $region40
    $region39: #{pointnet2_forward.9} parent=5 // pred_region
      // Predicated region
      $region41: #{pointnet2_forward.9} parent=39 // pred_check
        %p228 = pneg %p33
      $region42: #{pointnet2_forward.9} parent=39 // pred_check_branch
        %230 = sbr.rel (%p228) target = $region44
      $region43: #{pointnet2_forward.9} parent=39 // pred_region
        %s231 = smul.u32 32, %s13
        %p232 = scmp.lt.s32.totalorder %s231, 63
        %s233 = scalar_select %p232, %s231, 63
        %s234 = smul.addr %s233, 4
        %s235 = scalar_lea.vmem %s0, %s234
        %s236 = smul.u32 32, %s13
      $region44: #{pointnet2_forward.9} parent=39 // pred_fallthru
        _
    $region40: #{pointnet2_forward.9} parent=5 // pred_fallthru
      _
    %p237 = scmp.le.s32.totalorder 1, %s13
    %p238 = scmp.lt.s32.totalorder %s13, 3
    %p239 = pnand %p237, %p238
    %p240 = pneg %p239
    // Predicated region
    $region45: #{pointnet2_forward.9} parent=5 // pred_check
      _
    $region46: #{pointnet2_forward.9} parent=5 // pred_check_branch
      %242 = sbr.rel (%p239) target = $region48
    $region47: #{pointnet2_forward.9} parent=5 // pred_region
      %s243 = ssub.s32 %s13, 1
      %s244 = smul.u32 32, %s18
      %p245 = scmp.lt.s32.totalorder %s244, 63
      %s246 = scalar_select %p245, %s244, 63
      %s247 = smul.addr %s246, 4
      %s248 = scalar_lea.vmem %s0, %s247
      %p249 = pneg %p39
      %p250 = pneg %p36
      %p251 = pneg %p60
      %p252 = pneg %p57
      %p253 = pneg %p81
      %p254 = pneg %p78
      %p255 = pneg %p102
      %p256 = pneg %p99
      %p257 = pneg %p123
      %p258 = pneg %p120
      %p259 = pneg %p144
      %p260 = pneg %p141
      %p261 = pneg %p165
      %p262 = pneg %p162
      %p263 = pneg %p191
      %p264 = pneg %p188
      %s265 = smul.u32 2, %s18
      %p266 = scmp.lt.s32.totalorder %s265, 3
      %s267 = scalar_select %p266, %s265, 3
      %s268 = smul.addr %s267, 4
      %s269 = scalar_lea.vmem %s7, %s268
      %s270 = smul.u32 32, %s18
      %p271 = scmp.lt.s32.totalorder %s270, 63
      %s272 = scalar_select %p271, %s270, 63
      %s273 = smul.addr %s272, 4
      %s274 = scalar_lea.vmem %s0, %s273
      %s275 = smul.u32 32, %s18
      %s276 = smul.u32 2, %s18
      %p277 = scmp.lt.s32.totalorder %s276, 3
      %s278 = scalar_select %p277, %s276, 3
      %s279 = smul.addr %s278, 4
      %s280 = scalar_lea.vmem %s7, %s279
      %s281 = smul.u32 2, %s18
      %v283 = vld [vmem:[%s274] sm:$0xf]
      %v284 = vld [vmem:[%s274 + $0x4] sm:$0xf]
      %v285 = vld [vmem:[%s274 + $0x8] sm:$0xf]
      %v286 = vld [vmem:[%s274 + $0xc] sm:$0xf]
      %v287 = vld [vmem:[%s274 + $0x10] sm:$0xf]
      %v288 = vld [vmem:[%s274 + $0x14] sm:$0xf]
      %v289 = vld [vmem:[%s274 + $0x18] sm:$0xf]
      %v290 = vld [vmem:[%s274 + $0x1c] sm:$0xf]
      %v291 = vld [vmem:[%s274 + $0x20] sm:$0xf]
      %v292 = vld [vmem:[%s274 + $0x24] sm:$0xf]
      %v293 = vld [vmem:[%s274 + $0x28] sm:$0xf]
      %v294 = vld [vmem:[%s274 + $0x2c] sm:$0xf]
      %v295 = vld [vmem:[%s274 + $0x30] sm:$0xf]
      %v296 = vld [vmem:[%s274 + $0x34] sm:$0xf]
      %v297 = vld [vmem:[%s274 + $0x38] sm:$0xf]
      %v298 = vld [vmem:[%s274 + $0x3c] sm:$0xf]
      %v299 = vld [vmem:[%s274 + $0x40] sm:$0xf]
      %v300 = vld [vmem:[%s274 + $0x44] sm:$0xf]
      %v301 = vld [vmem:[%s274 + $0x48] sm:$0xf]
      %v302 = vld [vmem:[%s274 + $0x4c] sm:$0xf]
      %v303 = vld [vmem:[%s274 + $0x50] sm:$0xf]
      %v304 = vld [vmem:[%s274 + $0x54] sm:$0xf]
      %v305 = vld [vmem:[%s274 + $0x58] sm:$0xf]
      %v306 = vld [vmem:[%s274 + $0x5c] sm:$0xf]
      %v307 = vld [vmem:[%s274 + $0x60] sm:$0xf]
      %v308 = vld [vmem:[%s274 + $0x64] sm:$0xf]
      %v309 = vld [vmem:[%s274 + $0x68] sm:$0xf]
      %v310 = vld [vmem:[%s274 + $0x6c] sm:$0xf]
      %v311 = vld [vmem:[%s274 + $0x70] sm:$0xf]
      %v312 = vld [vmem:[%s274 + $0x74] sm:$0xf]
      %v313 = vld [vmem:[%s274 + $0x78] sm:$0xf]
      %v314 = vld [vmem:[%s274 + $0x7c] sm:$0xf]
      %v315 = vld [vmem:[%s1] sm:$0xf]
      %v316 = vld [vmem:[%s1 + $0x4] sm:$0xf]
      %v317 = vld [vmem:[%s1 + $0x8] sm:$0xf]
      %v318 = vld [vmem:[%s1 + $0xc] sm:$0xf]
      %v319 = vld [vmem:[%s1 + $0x10] sm:$0xf]
      %v320 = vld [vmem:[%s1 + $0x14] sm:$0xf]
      %v321 = vld [vmem:[%s1 + $0x18] sm:$0xf]
      %v322 = vld [vmem:[%s1 + $0x1c] sm:$0xf]
      %v323 = vld [vmem:[%s1 + $0x20] sm:$0xf]
      %v324 = vld [vmem:[%s1 + $0x24] sm:$0xf]
      %v325 = vld [vmem:[%s2] sm:$0x1]
      %v327 = vlaneseq
      %v328 = vshrl.u32 %v327, 7
      %v329 = vsub.s32 0, %v328
      %v330 = vrot.slane %v325, %v329
      %v364 = vunpack.c.l.b16 %v283
      %v365 = vunpack.c.l.b16 %v284
      %v366 = vunpack.c.l.b16 %v285
      %v367 = vunpack.c.l.b16 %v286
      %v368 = vunpack.c.l.b16 %v287
      %v369 = vunpack.c.l.b16 %v288
      %v370 = vunpack.c.l.b16 %v289
      %v371 = vunpack.c.l.b16 %v290
      %v372 = vunpack.c.l.b16 %v291
      %v373 = vunpack.c.l.b16 %v292
      %v374 = vunpack.c.l.b16 %v293
      %v375 = vunpack.c.l.b16 %v294
      %v376 = vunpack.c.l.b16 %v295
      %v377 = vunpack.c.l.b16 %v296
      %v378 = vunpack.c.l.b16 %v297
      %v379 = vunpack.c.l.b16 %v298
      %v380 = vunpack.c.l.b16 %v299
      %v381 = vunpack.c.l.b16 %v300
      %v382 = vunpack.c.l.b16 %v301
      %v383 = vunpack.c.l.b16 %v302
      %v384 = vunpack.c.l.b16 %v303
      %v385 = vunpack.c.l.b16 %v304
      %v386 = vunpack.c.l.b16 %v305
      %v387 = vunpack.c.l.b16 %v306
      %v388 = vunpack.c.l.b16 %v307
      %v389 = vunpack.c.l.b16 %v308
      %v390 = vunpack.c.l.b16 %v309
      %v391 = vunpack.c.l.b16 %v310
      %v392 = vunpack.c.l.b16 %v311
      %v393 = vunpack.c.l.b16 %v312
      %v394 = vunpack.c.l.b16 %v313
      %v395 = vunpack.c.l.b16 %v314
      %v396 = vpack.c.b16 %v365, %v364
      %v397 = vpack.c.b16 %v367, %v366
      %v398 = vpack.c.b16 %v369, %v368
      %v399 = vpack.c.b16 %v371, %v370
      %v400 = vpack.c.b16 %v373, %v372
      %v401 = vpack.c.b16 %v375, %v374
      %v402 = vpack.c.b16 %v377, %v376
      %v403 = vpack.c.b16 %v379, %v378
      %v404 = vpack.c.b16 %v381, %v380
      %v405 = vpack.c.b16 %v383, %v382
      %v406 = vpack.c.b16 %v385, %v384
      %v407 = vpack.c.b16 %v387, %v386
      %v408 = vpack.c.b16 %v389, %v388
      %v409 = vpack.c.b16 %v391, %v390
      %v410 = vpack.c.b16 %v393, %v392
      %v411 = vpack.c.b16 %v395, %v394
      %v422 = vunpack.c.l.b16 %v315
      %v423 = vunpack.c.l.b16 %v316
      %v424 = vunpack.c.l.b16 %v317
      %v425 = vunpack.c.l.b16 %v318
      %v426 = vunpack.c.l.b16 %v319
      %v427 = vunpack.c.l.b16 %v320
      %v428 = vunpack.c.l.b16 %v321
      %v429 = vunpack.c.l.b16 %v322
      %v430 = vunpack.c.l.b16 %v323
      %v431 = vunpack.c.l.b16 %v324
      %v432 = vpack.c.b16 %v423, %v422
      %v433 = vpack.c.b16 %v425, %v424
      %v434 = vpack.c.b16 %v427, %v426
      %v435 = vpack.c.b16 %v429, %v428
      %v436 = vpack.c.b16 %v431, %v430
      %vm442 = vcmask 654336
      %v444 = vsel %vm442, %v396, 0
      %v447 = vsel %vm442, %v397, 0
      %v450 = vsel %vm442, %v398, 0
      %v453 = vsel %vm442, %v399, 0
      %v456 = vsel %vm442, %v400, 0
      %v459 = vsel %vm442, %v401, 0
      %v462 = vsel %vm442, %v402, 0
      %v465 = vsel %vm442, %v403, 0
      %v468 = vsel %vm442, %v404, 0
      %v471 = vsel %vm442, %v405, 0
      %v474 = vsel %vm442, %v406, 0
      %v477 = vsel %vm442, %v407, 0
      %v480 = vsel %vm442, %v408, 0
      %v483 = vsel %vm442, %v409, 0
      %v486 = vsel %vm442, %v410, 0
      %v489 = vsel %vm442, %v411, 0
      %491 = vmatprep.subr.bf16.mxu0 0
      %492 = vmatpush1.bf16.msra.mxu0 0
      %493 = vmatprep.subr.bf16.mxu0 0
      %494 = vmatpush1.bf16.msra.mxu0 0
      %495 = vmatprep.subr.bf16.mxu0 0
      %496 = vmatpush1.bf16.msra.mxu0 0
      %497 = vmatprep.subr.bf16.mxu0 0
      %498 = vmatpush1.bf16.msra.mxu0 %v436
      %499 = vmatprep.subr.bf16.mxu0 0
      %500 = vmatpush1.bf16.msra.mxu0 %v435
      %501 = vmatprep.subr.bf16.mxu0 0
      %502 = vmatpush1.bf16.msra.mxu0 %v434
      %503 = vmatprep.subr.bf16.mxu0 0
      %504 = vmatpush1.bf16.msra.mxu0 %v433
      %505 = vmatprep.subr.bf16.mxu0 0
      %506 = vmatpush1.bf16.msra.mxu0 %v432
      %507 = vmatprep.subr.bf16.mxu0 0
      %508 = vmatpush2.bf16.msra.mxu0 0
      %509 = vmatprep.subr.bf16.mxu0 0
      %510 = vmatpush2.bf16.msra.mxu0 0
      %511 = vmatprep.subr.bf16.mxu0 0
      %512 = vmatpush2.bf16.msra.mxu0 0
      %513 = vmatprep.subr.bf16.mxu0 0
      %514 = vmatpush2.bf16.msra.mxu0 0
      %515 = vmatprep.subr.bf16.mxu0 0
      %516 = vmatpush2.bf16.msra.mxu0 0
      %517 = vmatprep.subr.bf16.mxu0 0
      %518 = vmatpush2.bf16.msra.mxu0 0
      %519 = vmatprep.subr.bf16.mxu0 0
      %520 = vmatpush2.bf16.msra.mxu0 0
      %521 = vmatprep.subr.bf16.mxu0 0
      %522 = vmatpush2.bf16.msra.mxu0 0
      %523 = vmatprep.mubr.bf16.mxu0 0
      %524 = vmatmul.mubr.bf16.gmra.mxu0 %v444
      %v525 = vpop.f32.mrf.mxu0
      %v526 = vadd.f32 %v330, %v525
      %v527 = vpop.f32.mrf.mxu0
      %v528 = vpop.f32.mrf.mxu0
      %v529 = vadd.f32 %v330, %v528
      %v530 = vpop.f32.mrf.mxu0
      %531 = vmatprep.mubr.bf16.mxu0 0
      %532 = vmatmul.mubr.bf16.gmra.mxu0 %v447
      %v533 = vpop.f32.mrf.mxu0
      %v534 = vadd.f32 %v330, %v533
      %v535 = vpop.f32.mrf.mxu0
      %v536 = vpop.f32.mrf.mxu0
      %v537 = vadd.f32 %v330, %v536
      %v538 = vpop.f32.mrf.mxu0
      %539 = vmatprep.mubr.bf16.mxu0 0
      %540 = vmatmul.mubr.bf16.gmra.mxu0 %v450
      %v541 = vpop.f32.mrf.mxu0
      %v542 = vadd.f32 %v330, %v541
      %v543 = vpop.f32.mrf.mxu0
      %v544 = vpop.f32.mrf.mxu0
      %v545 = vadd.f32 %v330, %v544
      %v546 = vpop.f32.mrf.mxu0
      %547 = vmatprep.mubr.bf16.mxu0 0
      %548 = vmatmul.mubr.bf16.gmra.mxu0 %v453
      %v549 = vpop.f32.mrf.mxu0
      %v550 = vadd.f32 %v330, %v549
      %v551 = vpop.f32.mrf.mxu0
      %v552 = vpop.f32.mrf.mxu0
      %v553 = vadd.f32 %v330, %v552
      %v554 = vpop.f32.mrf.mxu0
      %555 = vmatprep.mubr.bf16.mxu0 0
      %556 = vmatmul.mubr.bf16.gmra.mxu0 %v456
      %v557 = vpop.f32.mrf.mxu0
      %v558 = vadd.f32 %v330, %v557
      %v559 = vpop.f32.mrf.mxu0
      %v560 = vpop.f32.mrf.mxu0
      %v561 = vadd.f32 %v330, %v560
      %v562 = vpop.f32.mrf.mxu0
      %563 = vmatprep.mubr.bf16.mxu0 0
      %564 = vmatmul.mubr.bf16.gmra.mxu0 %v459
      %v565 = vpop.f32.mrf.mxu0
      %v566 = vadd.f32 %v330, %v565
      %v567 = vpop.f32.mrf.mxu0
      %v568 = vpop.f32.mrf.mxu0
      %v569 = vadd.f32 %v330, %v568
      %v570 = vpop.f32.mrf.mxu0
      %571 = vmatprep.mubr.bf16.mxu0 0
      %572 = vmatmul.mubr.bf16.gmra.mxu0 %v462
      %v573 = vpop.f32.mrf.mxu0
      %v574 = vadd.f32 %v330, %v573
      %v575 = vpop.f32.mrf.mxu0
      %v576 = vpop.f32.mrf.mxu0
      %v577 = vadd.f32 %v330, %v576
      %v578 = vpop.f32.mrf.mxu0
      %579 = vmatprep.mubr.bf16.mxu0 0
      %580 = vmatmul.mubr.bf16.gmra.mxu0 %v465
      %v581 = vpop.f32.mrf.mxu0
      %v582 = vadd.f32 %v330, %v581
      %v583 = vpop.f32.mrf.mxu0
      %v584 = vpop.f32.mrf.mxu0
      %v585 = vadd.f32 %v330, %v584
      %v586 = vpop.f32.mrf.mxu0
      %587 = vmatprep.mubr.bf16.mxu0 0
      %588 = vmatmul.mubr.bf16.gmra.mxu0 %v468
      %v589 = vpop.f32.mrf.mxu0
      %v590 = vadd.f32 %v330, %v589
      %v591 = vpop.f32.mrf.mxu0
      %v592 = vpop.f32.mrf.mxu0
      %v593 = vadd.f32 %v330, %v592
      %v594 = vpop.f32.mrf.mxu0
      %595 = vmatprep.mubr.bf16.mxu0 0
      %596 = vmatmul.mubr.bf16.gmra.mxu0 %v471
      %v597 = vpop.f32.mrf.mxu0
      %v598 = vadd.f32 %v330, %v597
      %v599 = vpop.f32.mrf.mxu0
      %v600 = vpop.f32.mrf.mxu0
      %v601 = vadd.f32 %v330, %v600
      %v602 = vpop.f32.mrf.mxu0
      %603 = vmatprep.mubr.bf16.mxu0 0
      %604 = vmatmul.mubr.bf16.gmra.mxu0 %v474
      %v605 = vpop.f32.mrf.mxu0
      %v606 = vadd.f32 %v330, %v605
      %v607 = vpop.f32.mrf.mxu0
      %v608 = vpop.f32.mrf.mxu0
      %v609 = vadd.f32 %v330, %v608
      %v610 = vpop.f32.mrf.mxu0
      %611 = vmatprep.mubr.bf16.mxu0 0
      %612 = vmatmul.mubr.bf16.gmra.mxu0 %v477
      %v613 = vpop.f32.mrf.mxu0
      %v614 = vadd.f32 %v330, %v613
      %v615 = vpop.f32.mrf.mxu0
      %v616 = vpop.f32.mrf.mxu0
      %v617 = vadd.f32 %v330, %v616
      %v618 = vpop.f32.mrf.mxu0
      %619 = vmatprep.mubr.bf16.mxu0 0
      %620 = vmatmul.mubr.bf16.gmra.mxu0 %v480
      %v621 = vpop.f32.mrf.mxu0
      %v622 = vadd.f32 %v330, %v621
      %v623 = vpop.f32.mrf.mxu0
      %v624 = vpop.f32.mrf.mxu0
      %v625 = vadd.f32 %v330, %v624
      %v626 = vpop.f32.mrf.mxu0
      %627 = vmatprep.mubr.bf16.mxu0 0
      %628 = vmatmul.mubr.bf16.gmra.mxu0 %v483
      %v629 = vpop.f32.mrf.mxu0
      %v630 = vadd.f32 %v330, %v629
      %v631 = vpop.f32.mrf.mxu0
      %v632 = vpop.f32.mrf.mxu0
      %v633 = vadd.f32 %v330, %v632
      %v634 = vpop.f32.mrf.mxu0
      %635 = vmatprep.mubr.bf16.mxu0 0
      %636 = vmatmul.mubr.bf16.gmra.mxu0 %v486
      %v637 = vpop.f32.mrf.mxu0
      %v638 = vadd.f32 %v330, %v637
      %v639 = vpop.f32.mrf.mxu0
      %v640 = vpop.f32.mrf.mxu0
      %v641 = vadd.f32 %v330, %v640
      %v642 = vpop.f32.mrf.mxu0
      %643 = vmatprep.mubr.bf16.mxu0 0
      %644 = vmatmul.mubr.bf16.gmra.mxu0 %v489
      %v645 = vpop.f32.mrf.mxu0
      %v646 = vadd.f32 %v330, %v645
      %v647 = vpop.f32.mrf.mxu0
      %v648 = vpop.f32.mrf.mxu0
      %v649 = vadd.f32 %v330, %v648
      %v650 = vpop.f32.mrf.mxu0
      %651 = vdwg.mxu0
      %v652 = vmax.f32 %v526, 0.0
      %v653 = vmax.f32 %v529, 0.0
      %v654 = vmax.f32 %v534, 0.0
      %v655 = vmax.f32 %v537, 0.0
      %v656 = vmax.f32 %v542, 0.0
      %v657 = vmax.f32 %v545, 0.0
      %v658 = vmax.f32 %v550, 0.0
      %v659 = vmax.f32 %v553, 0.0
      %v660 = vmax.f32 %v558, 0.0
      %v661 = vmax.f32 %v561, 0.0
      %v662 = vmax.f32 %v566, 0.0
      %v663 = vmax.f32 %v569, 0.0
      %v664 = vmax.f32 %v574, 0.0
      %v665 = vmax.f32 %v577, 0.0
      %v666 = vmax.f32 %v582, 0.0
      %v667 = vmax.f32 %v585, 0.0
      %v668 = vmax.f32 %v590, 0.0
      %v669 = vmax.f32 %v593, 0.0
      %v670 = vmax.f32 %v598, 0.0
      %v671 = vmax.f32 %v601, 0.0
      %v672 = vmax.f32 %v606, 0.0
      %v673 = vmax.f32 %v609, 0.0
      %v674 = vmax.f32 %v614, 0.0
      %v675 = vmax.f32 %v617, 0.0
      %v676 = vmax.f32 %v622, 0.0
      %v677 = vmax.f32 %v625, 0.0
      %v678 = vmax.f32 %v630, 0.0
      %v679 = vmax.f32 %v633, 0.0
      %v680 = vmax.f32 %v638, 0.0
      %v681 = vmax.f32 %v641, 0.0
      %v682 = vmax.f32 %v646, 0.0
      %v683 = vmax.f32 %v649, 0.0
      %v684 = vpack.c.bf16 %v653, %v652
      %v685 = vpack.c.bf16 %v655, %v654
      %v686 = vpack.c.bf16 %v657, %v656
      %v687 = vpack.c.bf16 %v659, %v658
      %v688 = vpack.c.bf16 %v661, %v660
      %v689 = vpack.c.bf16 %v663, %v662
      %v690 = vpack.c.bf16 %v665, %v664
      %v691 = vpack.c.bf16 %v667, %v666
      %v692 = vpack.c.bf16 %v669, %v668
      %v693 = vpack.c.bf16 %v671, %v670
      %v694 = vpack.c.bf16 %v673, %v672
      %v695 = vpack.c.bf16 %v675, %v674
      %v696 = vpack.c.bf16 %v677, %v676
      %v697 = vpack.c.bf16 %v679, %v678
      %v698 = vpack.c.bf16 %v681, %v680
      %v699 = vpack.c.bf16 %v683, %v682
      %v700 = vld [vmem:[%s3] sm:$0xf]
      %v701 = vld [vmem:[%s3 + $0x4] sm:$0xf]
      %v702 = vld [vmem:[%s3 + $0x8] sm:$0xf]
      %v703 = vld [vmem:[%s3 + $0xc] sm:$0xf]
      %v704 = vld [vmem:[%s3 + $0x10] sm:$0xf]
      %v705 = vld [vmem:[%s3 + $0x14] sm:$0xf]
      %v706 = vld [vmem:[%s3 + $0x18] sm:$0xf]
      %v707 = vld [vmem:[%s3 + $0x1c] sm:$0xf]
      %v708 = vld [vmem:[%s4] sm:$0x1]
      %v710 = vlaneseq
      %v711 = vshrl.u32 %v710, 7
      %v712 = vsub.s32 0, %v711
      %v713 = vrot.slane %v708, %v712
      %v723 = vunpack.c.l.b16 %v700
      %v724 = vunpack.c.l.b16 %v701
      %v725 = vunpack.c.l.b16 %v702
      %v726 = vunpack.c.l.b16 %v703
      %v727 = vunpack.c.l.b16 %v704
      %v728 = vunpack.c.l.b16 %v705
      %v729 = vunpack.c.l.b16 %v706
      %v730 = vunpack.c.l.b16 %v707
      %v731 = vpack.c.b16 %v724, %v723
      %v732 = vpack.c.b16 %v726, %v725
      %v733 = vpack.c.b16 %v728, %v727
      %v734 = vpack.c.b16 %v730, %v729
      %vm739 = vcmask 523264
      %v741 = vsel %vm739, %v684, 0
      %v744 = vsel %vm739, %v685, 0
      %v747 = vsel %vm739, %v686, 0
      %v750 = vsel %vm739, %v687, 0
      %v753 = vsel %vm739, %v688, 0
      %v756 = vsel %vm739, %v689, 0
      %v759 = vsel %vm739, %v690, 0
      %v762 = vsel %vm739, %v691, 0
      %v765 = vsel %vm739, %v692, 0
      %v768 = vsel %vm739, %v693, 0
      %v771 = vsel %vm739, %v694, 0
      %v774 = vsel %vm739, %v695, 0
      %v777 = vsel %vm739, %v696, 0
      %v780 = vsel %vm739, %v697, 0
      %v783 = vsel %vm739, %v698, 0
      %v786 = vsel %vm739, %v699, 0
      %788 = vmatprep.subr.bf16.mxu0 0
      %789 = vmatpush1.bf16.msra.mxu0 0
      %790 = vmatprep.subr.bf16.mxu0 0
      %791 = vmatpush1.bf16.msra.mxu0 0
      %792 = vmatprep.subr.bf16.mxu0 0
      %793 = vmatpush1.bf16.msra.mxu0 0
      %794 = vmatprep.subr.bf16.mxu0 0
      %795 = vmatpush1.bf16.msra.mxu0 0
      %796 = vmatprep.subr.bf16.mxu0 0
      %797 = vmatpush1.bf16.msra.mxu0 %v734
      %798 = vmatprep.subr.bf16.mxu0 0
      %799 = vmatpush1.bf16.msra.mxu0 %v733
      %800 = vmatprep.subr.bf16.mxu0 0
      %801 = vmatpush1.bf16.msra.mxu0 %v732
      %802 = vmatprep.subr.bf16.mxu0 0
      %803 = vmatpush1.bf16.msra.mxu0 %v731
      %804 = vmatprep.subr.bf16.mxu0 0
      %805 = vmatpush2.bf16.msra.mxu0 0
      %806 = vmatprep.subr.bf16.mxu0 0
      %807 = vmatpush2.bf16.msra.mxu0 0
      %808 = vmatprep.subr.bf16.mxu0 0
      %809 = vmatpush2.bf16.msra.mxu0 0
      %810 = vmatprep.subr.bf16.mxu0 0
      %811 = vmatpush2.bf16.msra.mxu0 0
      %812 = vmatprep.subr.bf16.mxu0 0
      %813 = vmatpush2.bf16.msra.mxu0 0
      %814 = vmatprep.subr.bf16.mxu0 0
      %815 = vmatpush2.bf16.msra.mxu0 0
      %816 = vmatprep.subr.bf16.mxu0 0
      %817 = vmatpush2.bf16.msra.mxu0 0
      %818 = vmatprep.subr.bf16.mxu0 0
      %819 = vmatpush2.bf16.msra.mxu0 0
      %820 = vmatprep.mubr.bf16.mxu0 0
      %821 = vmatmul.mubr.bf16.gmra.mxu0 %v741
      %v822 = vpop.f32.mrf.mxu0
      %v823 = vadd.f32 %v713, %v822
      %v824 = vpop.f32.mrf.mxu0
      %v825 = vpop.f32.mrf.mxu0
      %v826 = vadd.f32 %v713, %v825
      %v827 = vpop.f32.mrf.mxu0
      %828 = vmatprep.mubr.bf16.mxu0 0
      %829 = vmatmul.mubr.bf16.gmra.mxu0 %v744
      %v830 = vpop.f32.mrf.mxu0
      %v831 = vadd.f32 %v713, %v830
      %v832 = vpop.f32.mrf.mxu0
      %v833 = vpop.f32.mrf.mxu0
      %v834 = vadd.f32 %v713, %v833
      %v835 = vpop.f32.mrf.mxu0
      %836 = vmatprep.mubr.bf16.mxu0 0
      %837 = vmatmul.mubr.bf16.gmra.mxu0 %v747
      %v838 = vpop.f32.mrf.mxu0
      %v839 = vadd.f32 %v713, %v838
      %v840 = vpop.f32.mrf.mxu0
      %v841 = vpop.f32.mrf.mxu0
      %v842 = vadd.f32 %v713, %v841
      %v843 = vpop.f32.mrf.mxu0
      %844 = vmatprep.mubr.bf16.mxu0 0
      %845 = vmatmul.mubr.bf16.gmra.mxu0 %v750
      %v846 = vpop.f32.mrf.mxu0
      %v847 = vadd.f32 %v713, %v846
      %v848 = vpop.f32.mrf.mxu0
      %v849 = vpop.f32.mrf.mxu0
      %v850 = vadd.f32 %v713, %v849
      %v851 = vpop.f32.mrf.mxu0
      %852 = vmatprep.mubr.bf16.mxu0 0
      %853 = vmatmul.mubr.bf16.gmra.mxu0 %v753
      %v854 = vpop.f32.mrf.mxu0
      %v855 = vadd.f32 %v713, %v854
      %v856 = vpop.f32.mrf.mxu0
      %v857 = vpop.f32.mrf.mxu0
      %v858 = vadd.f32 %v713, %v857
      %v859 = vpop.f32.mrf.mxu0
      %860 = vmatprep.mubr.bf16.mxu0 0
      %861 = vmatmul.mubr.bf16.gmra.mxu0 %v756
      %v862 = vpop.f32.mrf.mxu0
      %v863 = vadd.f32 %v713, %v862
      %v864 = vpop.f32.mrf.mxu0
      %v865 = vpop.f32.mrf.mxu0
      %v866 = vadd.f32 %v713, %v865
      %v867 = vpop.f32.mrf.mxu0
      %868 = vmatprep.mubr.bf16.mxu0 0
      %869 = vmatmul.mubr.bf16.gmra.mxu0 %v759
      %v870 = vpop.f32.mrf.mxu0
      %v871 = vadd.f32 %v713, %v870
      %v872 = vpop.f32.mrf.mxu0
      %v873 = vpop.f32.mrf.mxu0
      %v874 = vadd.f32 %v713, %v873
      %v875 = vpop.f32.mrf.mxu0
      %876 = vmatprep.mubr.bf16.mxu0 0
      %877 = vmatmul.mubr.bf16.gmra.mxu0 %v762
      %v878 = vpop.f32.mrf.mxu0
      %v879 = vadd.f32 %v713, %v878
      %v880 = vpop.f32.mrf.mxu0
      %v881 = vpop.f32.mrf.mxu0
      %v882 = vadd.f32 %v713, %v881
      %v883 = vpop.f32.mrf.mxu0
      %884 = vmatprep.mubr.bf16.mxu0 0
      %885 = vmatmul.mubr.bf16.gmra.mxu0 %v765
      %v886 = vpop.f32.mrf.mxu0
      %v887 = vadd.f32 %v713, %v886
      %v888 = vpop.f32.mrf.mxu0
      %v889 = vpop.f32.mrf.mxu0
      %v890 = vadd.f32 %v713, %v889
      %v891 = vpop.f32.mrf.mxu0
      %892 = vmatprep.mubr.bf16.mxu0 0
      %893 = vmatmul.mubr.bf16.gmra.mxu0 %v768
      %v894 = vpop.f32.mrf.mxu0
      %v895 = vadd.f32 %v713, %v894
      %v896 = vpop.f32.mrf.mxu0
      %v897 = vpop.f32.mrf.mxu0
      %v898 = vadd.f32 %v713, %v897
      %v899 = vpop.f32.mrf.mxu0
      %900 = vmatprep.mubr.bf16.mxu0 0
      %901 = vmatmul.mubr.bf16.gmra.mxu0 %v771
      %v902 = vpop.f32.mrf.mxu0
      %v903 = vadd.f32 %v713, %v902
      %v904 = vpop.f32.mrf.mxu0
      %v905 = vpop.f32.mrf.mxu0
      %v906 = vadd.f32 %v713, %v905
      %v907 = vpop.f32.mrf.mxu0
      %908 = vmatprep.mubr.bf16.mxu0 0
      %909 = vmatmul.mubr.bf16.gmra.mxu0 %v774
      %v910 = vpop.f32.mrf.mxu0
      %v911 = vadd.f32 %v713, %v910
      %v912 = vpop.f32.mrf.mxu0
      %v913 = vpop.f32.mrf.mxu0
      %v914 = vadd.f32 %v713, %v913
      %v915 = vpop.f32.mrf.mxu0
      %916 = vmatprep.mubr.bf16.mxu0 0
      %917 = vmatmul.mubr.bf16.gmra.mxu0 %v777
      %v918 = vpop.f32.mrf.mxu0
      %v919 = vadd.f32 %v713, %v918
      %v920 = vpop.f32.mrf.mxu0
      %v921 = vpop.f32.mrf.mxu0
      %v922 = vadd.f32 %v713, %v921
      %v923 = vpop.f32.mrf.mxu0
      %924 = vmatprep.mubr.bf16.mxu0 0
      %925 = vmatmul.mubr.bf16.gmra.mxu0 %v780
      %v926 = vpop.f32.mrf.mxu0
      %v927 = vadd.f32 %v713, %v926
      %v928 = vpop.f32.mrf.mxu0
      %v929 = vpop.f32.mrf.mxu0
      %v930 = vadd.f32 %v713, %v929
      %v931 = vpop.f32.mrf.mxu0
      %932 = vmatprep.mubr.bf16.mxu0 0
      %933 = vmatmul.mubr.bf16.gmra.mxu0 %v783
      %v934 = vpop.f32.mrf.mxu0
      %v935 = vadd.f32 %v713, %v934
      %v936 = vpop.f32.mrf.mxu0
      %v937 = vpop.f32.mrf.mxu0
      %v938 = vadd.f32 %v713, %v937
      %v939 = vpop.f32.mrf.mxu0
      %940 = vmatprep.mubr.bf16.mxu0 0
      %941 = vmatmul.mubr.bf16.gmra.mxu0 %v786
      %v942 = vpop.f32.mrf.mxu0
      %v943 = vadd.f32 %v713, %v942
      %v944 = vpop.f32.mrf.mxu0
      %v945 = vpop.f32.mrf.mxu0
      %v946 = vadd.f32 %v713, %v945
      %v947 = vpop.f32.mrf.mxu0
      %948 = vdwg.mxu0
      %v949 = vmax.f32 %v823, 0.0
      %v950 = vmax.f32 %v826, 0.0
      %v951 = vmax.f32 %v831, 0.0
      %v952 = vmax.f32 %v834, 0.0
      %v953 = vmax.f32 %v839, 0.0
      %v954 = vmax.f32 %v842, 0.0
      %v955 = vmax.f32 %v847, 0.0
      %v956 = vmax.f32 %v850, 0.0
      %v957 = vmax.f32 %v855, 0.0
      %v958 = vmax.f32 %v858, 0.0
      %v959 = vmax.f32 %v863, 0.0
      %v960 = vmax.f32 %v866, 0.0
      %v961 = vmax.f32 %v871, 0.0
      %v962 = vmax.f32 %v874, 0.0
      %v963 = vmax.f32 %v879, 0.0
      %v964 = vmax.f32 %v882, 0.0
      %v965 = vmax.f32 %v887, 0.0
      %v966 = vmax.f32 %v890, 0.0
      %v967 = vmax.f32 %v895, 0.0
      %v968 = vmax.f32 %v898, 0.0
      %v969 = vmax.f32 %v903, 0.0
      %v970 = vmax.f32 %v906, 0.0
      %v971 = vmax.f32 %v911, 0.0
      %v972 = vmax.f32 %v914, 0.0
      %v973 = vmax.f32 %v919, 0.0
      %v974 = vmax.f32 %v922, 0.0
      %v975 = vmax.f32 %v927, 0.0
      %v976 = vmax.f32 %v930, 0.0
      %v977 = vmax.f32 %v935, 0.0
      %v978 = vmax.f32 %v938, 0.0
      %v979 = vmax.f32 %v943, 0.0
      %v980 = vmax.f32 %v946, 0.0
      %v981 = vpack.c.bf16 %v950, %v949
      %v982 = vpack.c.bf16 %v952, %v951
      %v983 = vpack.c.bf16 %v954, %v953
      %v984 = vpack.c.bf16 %v956, %v955
      %v985 = vpack.c.bf16 %v958, %v957
      %v986 = vpack.c.bf16 %v960, %v959
      %v987 = vpack.c.bf16 %v962, %v961
      %v988 = vpack.c.bf16 %v964, %v963
      %v989 = vpack.c.bf16 %v966, %v965
      %v990 = vpack.c.bf16 %v968, %v967
      %v991 = vpack.c.bf16 %v970, %v969
      %v992 = vpack.c.bf16 %v972, %v971
      %v993 = vpack.c.bf16 %v974, %v973
      %v994 = vpack.c.bf16 %v976, %v975
      %v995 = vpack.c.bf16 %v978, %v977
      %v996 = vpack.c.bf16 %v980, %v979
      %v997 = vld [vmem:[%s5] sm:$0xf]
      %v998 = vld [vmem:[%s5 + $0x4] sm:$0xf]
      %v999 = vld [vmem:[%s5 + $0x8] sm:$0xf]
      %v1000 = vld [vmem:[%s5 + $0xc] sm:$0xf]
      %v1001 = vld [vmem:[%s5 + $0x10] sm:$0xf]
      %v1002 = vld [vmem:[%s5 + $0x14] sm:$0xf]
      %v1003 = vld [vmem:[%s5 + $0x18] sm:$0xf]
      %v1004 = vld [vmem:[%s5 + $0x1c] sm:$0xf]
      %v1005 = vld [vmem:[%s6] sm:$0x1]
      %v1007 = vlaneseq
      %v1008 = vshrl.u32 %v1007, 7
      %v1009 = vsub.s32 0, %v1008
      %v1010 = vrot.slane %v1005, %v1009
      %v1020 = vunpack.c.l.b16 %v997
      %v1021 = vunpack.c.l.b16 %v998
      %v1022 = vunpack.c.l.b16 %v999
      %v1023 = vunpack.c.l.b16 %v1000
      %v1024 = vunpack.c.l.b16 %v1001
      %v1025 = vunpack.c.l.b16 %v1002
      %v1026 = vunpack.c.l.b16 %v1003
      %v1027 = vunpack.c.l.b16 %v1004
      %v1028 = vpack.c.b16 %v1021, %v1020
      %v1029 = vpack.c.b16 %v1023, %v1022
      %v1030 = vpack.c.b16 %v1025, %v1024
      %v1031 = vpack.c.b16 %v1027, %v1026
      %v1037 = vsel %vm739, %v981, 0
      %v1040 = vsel %vm739, %v982, 0
      %v1043 = vsel %vm739, %v983, 0
      %v1046 = vsel %vm739, %v984, 0
      %v1049 = vsel %vm739, %v985, 0
      %v1052 = vsel %vm739, %v986, 0
      %v1055 = vsel %vm739, %v987, 0
      %v1058 = vsel %vm739, %v988, 0
      %v1061 = vsel %vm739, %v989, 0
      %v1064 = vsel %vm739, %v990, 0
      %v1067 = vsel %vm739, %v991, 0
      %v1070 = vsel %vm739, %v992, 0
      %v1073 = vsel %vm739, %v993, 0
      %v1076 = vsel %vm739, %v994, 0
      %v1079 = vsel %vm739, %v995, 0
      %v1082 = vsel %vm739, %v996, 0
      %1084 = vmatprep.subr.bf16.mxu0 0
      %1085 = vmatpush1.bf16.msra.mxu0 0
      %1086 = vmatprep.subr.bf16.mxu0 0
      %1087 = vmatpush1.bf16.msra.mxu0 0
      %1088 = vmatprep.subr.bf16.mxu0 0
      %1089 = vmatpush1.bf16.msra.mxu0 0
      %1090 = vmatprep.subr.bf16.mxu0 0
      %1091 = vmatpush1.bf16.msra.mxu0 0
      %1092 = vmatprep.subr.bf16.mxu0 0
      %1093 = vmatpush1.bf16.msra.mxu0 %v1031
      %1094 = vmatprep.subr.bf16.mxu0 0
      %1095 = vmatpush1.bf16.msra.mxu0 %v1030
      %1096 = vmatprep.subr.bf16.mxu0 0
      %1097 = vmatpush1.bf16.msra.mxu0 %v1029
      %1098 = vmatprep.subr.bf16.mxu0 0
      %1099 = vmatpush1.bf16.msra.mxu0 %v1028
      %1100 = vmatprep.subr.bf16.mxu0 0
      %1101 = vmatpush2.bf16.msra.mxu0 0
      %1102 = vmatprep.subr.bf16.mxu0 0
      %1103 = vmatpush2.bf16.msra.mxu0 0
      %1104 = vmatprep.subr.bf16.mxu0 0
      %1105 = vmatpush2.bf16.msra.mxu0 0
      %1106 = vmatprep.subr.bf16.mxu0 0
      %1107 = vmatpush2.bf16.msra.mxu0 0
      %1108 = vmatprep.subr.bf16.mxu0 0
      %1109 = vmatpush2.bf16.msra.mxu0 0
      %1110 = vmatprep.subr.bf16.mxu0 0
      %1111 = vmatpush2.bf16.msra.mxu0 0
      %1112 = vmatprep.subr.bf16.mxu0 0
      %1113 = vmatpush2.bf16.msra.mxu0 0
      %1114 = vmatprep.subr.bf16.mxu0 0
      %1115 = vmatpush2.bf16.msra.mxu0 0
      %1116 = vmatprep.mubr.bf16.mxu0 0
      %1117 = vmatmul.mubr.bf16.gmra.mxu0 %v1037
      %v1118 = vpop.f32.mrf.mxu0
      %v1119 = vadd.f32 %v1010, %v1118
      %v1120 = vpop.f32.mrf.mxu0
      %v1121 = vpop.f32.mrf.mxu0
      %v1122 = vadd.f32 %v1010, %v1121
      %v1123 = vpop.f32.mrf.mxu0
      %1124 = vmatprep.mubr.bf16.mxu0 0
      %1125 = vmatmul.mubr.bf16.gmra.mxu0 %v1040
      %v1126 = vpop.f32.mrf.mxu0
      %v1127 = vadd.f32 %v1010, %v1126
      %v1128 = vpop.f32.mrf.mxu0
      %v1129 = vpop.f32.mrf.mxu0
      %v1130 = vadd.f32 %v1010, %v1129
      %v1131 = vpop.f32.mrf.mxu0
      %1132 = vmatprep.mubr.bf16.mxu0 0
      %1133 = vmatmul.mubr.bf16.gmra.mxu0 %v1043
      %v1134 = vpop.f32.mrf.mxu0
      %v1135 = vadd.f32 %v1010, %v1134
      %v1136 = vpop.f32.mrf.mxu0
      %v1137 = vpop.f32.mrf.mxu0
      %v1138 = vadd.f32 %v1010, %v1137
      %v1139 = vpop.f32.mrf.mxu0
      %1140 = vmatprep.mubr.bf16.mxu0 0
      %1141 = vmatmul.mubr.bf16.gmra.mxu0 %v1046
      %v1142 = vpop.f32.mrf.mxu0
      %v1143 = vadd.f32 %v1010, %v1142
      %v1144 = vpop.f32.mrf.mxu0
      %v1145 = vpop.f32.mrf.mxu0
      %v1146 = vadd.f32 %v1010, %v1145
      %v1147 = vpop.f32.mrf.mxu0
      %1148 = vmatprep.mubr.bf16.mxu0 0
      %1149 = vmatmul.mubr.bf16.gmra.mxu0 %v1049
      %v1150 = vpop.f32.mrf.mxu0
      %v1151 = vadd.f32 %v1010, %v1150
      %v1152 = vpop.f32.mrf.mxu0
      %v1153 = vpop.f32.mrf.mxu0
      %v1154 = vadd.f32 %v1010, %v1153
      %v1155 = vpop.f32.mrf.mxu0
      %1156 = vmatprep.mubr.bf16.mxu0 0
      %1157 = vmatmul.mubr.bf16.gmra.mxu0 %v1052
      %v1158 = vpop.f32.mrf.mxu0
      %v1159 = vadd.f32 %v1010, %v1158
      %v1160 = vpop.f32.mrf.mxu0
      %v1161 = vpop.f32.mrf.mxu0
      %v1162 = vadd.f32 %v1010, %v1161
      %v1163 = vpop.f32.mrf.mxu0
      %1164 = vmatprep.mubr.bf16.mxu0 0
      %1165 = vmatmul.mubr.bf16.gmra.mxu0 %v1055
      %v1166 = vpop.f32.mrf.mxu0
      %v1167 = vadd.f32 %v1010, %v1166
      %v1168 = vpop.f32.mrf.mxu0
      %v1169 = vpop.f32.mrf.mxu0
      %v1170 = vadd.f32 %v1010, %v1169
      %v1171 = vpop.f32.mrf.mxu0
      %1172 = vmatprep.mubr.bf16.mxu0 0
      %1173 = vmatmul.mubr.bf16.gmra.mxu0 %v1058
      %v1174 = vpop.f32.mrf.mxu0
      %v1175 = vadd.f32 %v1010, %v1174
      %v1176 = vpop.f32.mrf.mxu0
      %v1177 = vpop.f32.mrf.mxu0
      %v1178 = vadd.f32 %v1010, %v1177
      %v1179 = vpop.f32.mrf.mxu0
      %1180 = vmatprep.mubr.bf16.mxu0 0
      %1181 = vmatmul.mubr.bf16.gmra.mxu0 %v1061
      %v1182 = vpop.f32.mrf.mxu0
      %v1183 = vadd.f32 %v1010, %v1182
      %v1184 = vpop.f32.mrf.mxu0
      %v1185 = vpop.f32.mrf.mxu0
      %v1186 = vadd.f32 %v1010, %v1185
      %v1187 = vpop.f32.mrf.mxu0
      %1188 = vmatprep.mubr.bf16.mxu0 0
      %1189 = vmatmul.mubr.bf16.gmra.mxu0 %v1064
      %v1190 = vpop.f32.mrf.mxu0
      %v1191 = vadd.f32 %v1010, %v1190
      %v1192 = vpop.f32.mrf.mxu0
      %v1193 = vpop.f32.mrf.mxu0
      %v1194 = vadd.f32 %v1010, %v1193
      %v1195 = vpop.f32.mrf.mxu0
      %1196 = vmatprep.mubr.bf16.mxu0 0
      %1197 = vmatmul.mubr.bf16.gmra.mxu0 %v1067
      %v1198 = vpop.f32.mrf.mxu0
      %v1199 = vadd.f32 %v1010, %v1198
      %v1200 = vpop.f32.mrf.mxu0
      %v1201 = vpop.f32.mrf.mxu0
      %v1202 = vadd.f32 %v1010, %v1201
      %v1203 = vpop.f32.mrf.mxu0
      %1204 = vmatprep.mubr.bf16.mxu0 0
      %1205 = vmatmul.mubr.bf16.gmra.mxu0 %v1070
      %v1206 = vpop.f32.mrf.mxu0
      %v1207 = vadd.f32 %v1010, %v1206
      %v1208 = vpop.f32.mrf.mxu0
      %v1209 = vpop.f32.mrf.mxu0
      %v1210 = vadd.f32 %v1010, %v1209
      %v1211 = vpop.f32.mrf.mxu0
      %1212 = vmatprep.mubr.bf16.mxu0 0
      %1213 = vmatmul.mubr.bf16.gmra.mxu0 %v1073
      %v1214 = vpop.f32.mrf.mxu0
      %v1215 = vadd.f32 %v1010, %v1214
      %v1216 = vpop.f32.mrf.mxu0
      %v1217 = vpop.f32.mrf.mxu0
      %v1218 = vadd.f32 %v1010, %v1217
      %v1219 = vpop.f32.mrf.mxu0
      %1220 = vmatprep.mubr.bf16.mxu0 0
      %1221 = vmatmul.mubr.bf16.gmra.mxu0 %v1076
      %v1222 = vpop.f32.mrf.mxu0
      %v1223 = vadd.f32 %v1010, %v1222
      %v1224 = vpop.f32.mrf.mxu0
      %v1225 = vpop.f32.mrf.mxu0
      %v1226 = vadd.f32 %v1010, %v1225
      %v1227 = vpop.f32.mrf.mxu0
      %1228 = vmatprep.mubr.bf16.mxu0 0
      %1229 = vmatmul.mubr.bf16.gmra.mxu0 %v1079
      %v1230 = vpop.f32.mrf.mxu0
      %v1231 = vadd.f32 %v1010, %v1230
      %v1232 = vpop.f32.mrf.mxu0
      %v1233 = vpop.f32.mrf.mxu0
      %v1234 = vadd.f32 %v1010, %v1233
      %v1235 = vpop.f32.mrf.mxu0
      %1236 = vmatprep.mubr.bf16.mxu0 0
      %1237 = vmatmul.mubr.bf16.gmra.mxu0 %v1082
      %v1238 = vpop.f32.mrf.mxu0
      %v1239 = vadd.f32 %v1010, %v1238
      %v1240 = vpop.f32.mrf.mxu0
      %v1241 = vpop.f32.mrf.mxu0
      %v1242 = vadd.f32 %v1010, %v1241
      %v1243 = vpop.f32.mrf.mxu0
      %1244 = vdwg.mxu0
      %v1245 = vmax.f32 %v1119, 0.0
      %v1246 = vmax.f32 %v1122, 0.0
      %v1247 = vmax.f32 %v1127, 0.0
      %v1248 = vmax.f32 %v1130, 0.0
      %v1249 = vmax.f32 %v1135, 0.0
      %v1250 = vmax.f32 %v1138, 0.0
      %v1251 = vmax.f32 %v1143, 0.0
      %v1252 = vmax.f32 %v1146, 0.0
      %v1253 = vmax.f32 %v1151, 0.0
      %v1254 = vmax.f32 %v1154, 0.0
      %v1255 = vmax.f32 %v1159, 0.0
      %v1256 = vmax.f32 %v1162, 0.0
      %v1257 = vmax.f32 %v1167, 0.0
      %v1258 = vmax.f32 %v1170, 0.0
      %v1259 = vmax.f32 %v1175, 0.0
      %v1260 = vmax.f32 %v1178, 0.0
      %v1261 = vmax.f32 %v1183, 0.0
      %v1262 = vmax.f32 %v1186, 0.0
      %v1263 = vmax.f32 %v1191, 0.0
      %v1264 = vmax.f32 %v1194, 0.0
      %v1265 = vmax.f32 %v1199, 0.0
      %v1266 = vmax.f32 %v1202, 0.0
      %v1267 = vmax.f32 %v1207, 0.0
      %v1268 = vmax.f32 %v1210, 0.0
      %v1269 = vmax.f32 %v1215, 0.0
      %v1270 = vmax.f32 %v1218, 0.0
      %v1271 = vmax.f32 %v1223, 0.0
      %v1272 = vmax.f32 %v1226, 0.0
      %v1273 = vmax.f32 %v1231, 0.0
      %v1274 = vmax.f32 %v1234, 0.0
      %v1275 = vmax.f32 %v1239, 0.0
      %v1276 = vmax.f32 %v1242, 0.0
      %v1277 = vmax.f32 %v1245, %v1246
      %v1278 = vrot.slane %v1277, 4
      %v1279 = vmax.f32 %v1277, %v1278
      %v1280 = vrot.slane %v1279, 2
      %v1281 = vmax.f32 %v1279, %v1280
      %v1282 = vrot.slane %v1281, 1
      %v1283 = vmax.f32 %v1281, %v1282
      %v1284 = vmax.f32 %v1247, %v1248
      %v1285 = vrot.slane %v1284, 4
      %v1286 = vmax.f32 %v1284, %v1285
      %v1287 = vrot.slane %v1286, 2
      %v1288 = vmax.f32 %v1286, %v1287
      %v1289 = vrot.slane %v1288, 1
      %v1290 = vmax.f32 %v1288, %v1289
      %v1291 = vmax.f32 %v1249, %v1250
      %v1292 = vrot.slane %v1291, 4
      %v1293 = vmax.f32 %v1291, %v1292
      %v1294 = vrot.slane %v1293, 2
      %v1295 = vmax.f32 %v1293, %v1294
      %v1296 = vrot.slane %v1295, 1
      %v1297 = vmax.f32 %v1295, %v1296
      %v1298 = vmax.f32 %v1251, %v1252
      %v1299 = vrot.slane %v1298, 4
      %v1300 = vmax.f32 %v1298, %v1299
      %v1301 = vrot.slane %v1300, 2
      %v1302 = vmax.f32 %v1300, %v1301
      %v1303 = vrot.slane %v1302, 1
      %v1304 = vmax.f32 %v1302, %v1303
      %v1305 = vmax.f32 %v1253, %v1254
      %v1306 = vrot.slane %v1305, 4
      %v1307 = vmax.f32 %v1305, %v1306
      %v1308 = vrot.slane %v1307, 2
      %v1309 = vmax.f32 %v1307, %v1308
      %v1310 = vrot.slane %v1309, 1
      %v1311 = vmax.f32 %v1309, %v1310
      %v1312 = vmax.f32 %v1255, %v1256
      %v1313 = vrot.slane %v1312, 4
      %v1314 = vmax.f32 %v1312, %v1313
      %v1315 = vrot.slane %v1314, 2
      %v1316 = vmax.f32 %v1314, %v1315
      %v1317 = vrot.slane %v1316, 1
      %v1318 = vmax.f32 %v1316, %v1317
      %v1319 = vmax.f32 %v1257, %v1258
      %v1320 = vrot.slane %v1319, 4
      %v1321 = vmax.f32 %v1319, %v1320
      %v1322 = vrot.slane %v1321, 2
      %v1323 = vmax.f32 %v1321, %v1322
      %v1324 = vrot.slane %v1323, 1
      %v1325 = vmax.f32 %v1323, %v1324
      %v1326 = vmax.f32 %v1259, %v1260
      %v1327 = vrot.slane %v1326, 4
      %v1328 = vmax.f32 %v1326, %v1327
      %v1329 = vrot.slane %v1328, 2
      %v1330 = vmax.f32 %v1328, %v1329
      %v1331 = vrot.slane %v1330, 1
      %v1332 = vmax.f32 %v1330, %v1331
      %v1333 = vmax.f32 %v1261, %v1262
      %v1334 = vrot.slane %v1333, 4
      %v1335 = vmax.f32 %v1333, %v1334
      %v1336 = vrot.slane %v1335, 2
      %v1337 = vmax.f32 %v1335, %v1336
      %v1338 = vrot.slane %v1337, 1
      %v1339 = vmax.f32 %v1337, %v1338
      %v1340 = vmax.f32 %v1263, %v1264
      %v1341 = vrot.slane %v1340, 4
      %v1342 = vmax.f32 %v1340, %v1341
      %v1343 = vrot.slane %v1342, 2
      %v1344 = vmax.f32 %v1342, %v1343
      %v1345 = vrot.slane %v1344, 1
      %v1346 = vmax.f32 %v1344, %v1345
      %v1347 = vmax.f32 %v1265, %v1266
      %v1348 = vrot.slane %v1347, 4
      %v1349 = vmax.f32 %v1347, %v1348
      %v1350 = vrot.slane %v1349, 2
      %v1351 = vmax.f32 %v1349, %v1350
      %v1352 = vrot.slane %v1351, 1
      %v1353 = vmax.f32 %v1351, %v1352
      %v1354 = vmax.f32 %v1267, %v1268
      %v1355 = vrot.slane %v1354, 4
      %v1356 = vmax.f32 %v1354, %v1355
      %v1357 = vrot.slane %v1356, 2
      %v1358 = vmax.f32 %v1356, %v1357
      %v1359 = vrot.slane %v1358, 1
      %v1360 = vmax.f32 %v1358, %v1359
      %v1361 = vmax.f32 %v1269, %v1270
      %v1362 = vrot.slane %v1361, 4
      %v1363 = vmax.f32 %v1361, %v1362
      %v1364 = vrot.slane %v1363, 2
      %v1365 = vmax.f32 %v1363, %v1364
      %v1366 = vrot.slane %v1365, 1
      %v1367 = vmax.f32 %v1365, %v1366
      %v1368 = vmax.f32 %v1271, %v1272
      %v1369 = vrot.slane %v1368, 4
      %v1370 = vmax.f32 %v1368, %v1369
      %v1371 = vrot.slane %v1370, 2
      %v1372 = vmax.f32 %v1370, %v1371
      %v1373 = vrot.slane %v1372, 1
      %v1374 = vmax.f32 %v1372, %v1373
      %v1375 = vmax.f32 %v1273, %v1274
      %v1376 = vrot.slane %v1375, 4
      %v1377 = vmax.f32 %v1375, %v1376
      %v1378 = vrot.slane %v1377, 2
      %v1379 = vmax.f32 %v1377, %v1378
      %v1380 = vrot.slane %v1379, 1
      %v1381 = vmax.f32 %v1379, %v1380
      %v1382 = vmax.f32 %v1275, %v1276
      %v1383 = vrot.slane %v1382, 4
      %v1384 = vmax.f32 %v1382, %v1383
      %v1385 = vrot.slane %v1384, 2
      %v1386 = vmax.f32 %v1384, %v1385
      %v1387 = vrot.slane %v1386, 1
      %v1388 = vmax.f32 %v1386, %v1387
      %v1389 = vpack.c.bf16 %v1283, %v1283
      %v1390 = vpack.c.bf16 %v1290, %v1290
      %v1391 = vpack.c.bf16 %v1297, %v1297
      %v1392 = vpack.c.bf16 %v1304, %v1304
      %v1393 = vpack.c.bf16 %v1311, %v1311
      %v1394 = vpack.c.bf16 %v1318, %v1318
      %v1395 = vpack.c.bf16 %v1325, %v1325
      %v1396 = vpack.c.bf16 %v1332, %v1332
      %v1397 = vpack.c.bf16 %v1339, %v1339
      %v1398 = vpack.c.bf16 %v1346, %v1346
      %v1399 = vpack.c.bf16 %v1353, %v1353
      %v1400 = vpack.c.bf16 %v1360, %v1360
      %v1401 = vpack.c.bf16 %v1367, %v1367
      %v1402 = vpack.c.bf16 %v1374, %v1374
      %v1403 = vpack.c.bf16 %v1381, %v1381
      %v1404 = vpack.c.bf16 %v1388, %v1388
      %v1421 = vunpack.c.l.b16 %v1389
      %v1422 = vunpack.c.l.b16 %v1390
      %v1423 = vunpack.c.l.b16 %v1391
      %v1424 = vunpack.c.l.b16 %v1392
      %v1425 = vunpack.c.l.b16 %v1393
      %v1426 = vunpack.c.l.b16 %v1394
      %v1427 = vunpack.c.l.b16 %v1395
      %v1428 = vunpack.c.l.b16 %v1396
      %v1429 = vunpack.c.l.b16 %v1397
      %v1430 = vunpack.c.l.b16 %v1398
      %v1431 = vunpack.c.l.b16 %v1399
      %v1432 = vunpack.c.l.b16 %v1400
      %v1433 = vunpack.c.l.b16 %v1401
      %v1434 = vunpack.c.l.b16 %v1402
      %v1435 = vunpack.c.l.b16 %v1403
      %v1436 = vunpack.c.l.b16 %v1404
      %v1437 = vpack.c.b16 %v1421, %v1421
      %v1438 = vpack.c.b16 %v1422, %v1422
      %v1439 = vpack.c.b16 %v1423, %v1423
      %v1440 = vpack.c.b16 %v1424, %v1424
      %v1441 = vpack.c.b16 %v1425, %v1425
      %v1442 = vpack.c.b16 %v1426, %v1426
      %v1443 = vpack.c.b16 %v1427, %v1427
      %v1444 = vpack.c.b16 %v1428, %v1428
      %v1445 = vpack.c.b16 %v1429, %v1429
      %v1446 = vpack.c.b16 %v1430, %v1430
      %v1447 = vpack.c.b16 %v1431, %v1431
      %v1448 = vpack.c.b16 %v1432, %v1432
      %v1449 = vpack.c.b16 %v1433, %v1433
      %v1450 = vpack.c.b16 %v1434, %v1434
      %v1451 = vpack.c.b16 %v1435, %v1435
      %v1452 = vpack.c.b16 %v1436, %v1436
      %v1453 = vunpack.c.l.b16 %v1437
      %v1454 = vunpack.c.l.b16 %v1438
      %v1455 = vunpack.c.l.b16 %v1439
      %v1456 = vunpack.c.l.b16 %v1440
      %v1457 = vunpack.c.l.b16 %v1441
      %v1458 = vunpack.c.l.b16 %v1442
      %v1459 = vunpack.c.l.b16 %v1443
      %v1460 = vunpack.c.l.b16 %v1444
      %v1461 = vunpack.c.l.b16 %v1445
      %v1462 = vunpack.c.l.b16 %v1446
      %v1463 = vunpack.c.l.b16 %v1447
      %v1464 = vunpack.c.l.b16 %v1448
      %v1465 = vunpack.c.l.b16 %v1449
      %v1466 = vunpack.c.l.b16 %v1450
      %v1467 = vunpack.c.l.b16 %v1451
      %v1468 = vunpack.c.l.b16 %v1452
      %vm1469 = vcmask 1041409
      %v1470 = vsel %vm1469, %v1454, %v1453
      %vm1471 = vcmask 1042434
      %v1472 = vsel %vm1471, %v1455, %v1470
      %vm1473 = vcmask 1043459
      %v1474 = vsel %vm1473, %v1456, %v1472
      %vm1475 = vcmask 1044484
      %v1476 = vsel %vm1475, %v1457, %v1474
      %vm1477 = vcmask 1045509
      %v1478 = vsel %vm1477, %v1458, %v1476
      %vm1479 = vcmask 1046534
      %v1480 = vsel %vm1479, %v1459, %v1478
      %vm1481 = vcmask 1047559
      %v1482 = vsel %vm1481, %v1460, %v1480
      %v1483 = vsel %vm1469, %v1462, %v1461
      %v1484 = vsel %vm1471, %v1463, %v1483
      %v1485 = vsel %vm1473, %v1464, %v1484
      %v1486 = vsel %vm1475, %v1465, %v1485
      %v1487 = vsel %vm1477, %v1466, %v1486
      %v1488 = vsel %vm1479, %v1467, %v1487
      %v1489 = vsel %vm1481, %v1468, %v1488
      %v1490 = vpack.c.b16 %v1482, %v1482
      %v1491 = vpack.c.b16 %v1489, %v1489
      %1494 = vst [vmem:[%s280] sm:$0xf] %v1490
      %1495 = vst [vmem:[%s280 + $0x4] sm:$0xf] %v1491
      %s1496 = smul.u32 2, %s18
      %p1497 = scmp.lt.s32.totalorder %s1496, 3
      %s1498 = scalar_select %p1497, %s1496, 3
      %s1499 = smul.addr %s1498, 4
      %s1500 = scalar_lea.vmem %s7, %s1499
      // Predicated region
      $region49: #{pointnet2_forward.9} parent=47 // pred_check
        %p1501 = pneg %p188
      $region50: #{pointnet2_forward.9} parent=47 // pred_check_branch
        %1503 = sbr.rel (%p1501) target = $region52
      $region51: #{pointnet2_forward.9} parent=47 // pred_region
        %s1504 = smul.u32 2, %s18
      $region52: #{pointnet2_forward.9} parent=47 // pred_fallthru
        _
    $region48: #{pointnet2_forward.9} parent=5 // pred_fallthru
      _
    %p1505 = scmp.le.s32.totalorder 2, %s13
    // Predicated region
    $region53: #{pointnet2_forward.9} parent=5 // pred_check
      %p1506 = pneg %p1505
    $region54: #{pointnet2_forward.9} parent=5 // pred_check_branch
      %1508 = sbr.rel (%p1506) target = $region56
    $region55: #{pointnet2_forward.9} parent=5 // pred_region
      %s1509 = ssub.s32 %s13, 2
      // Predicated region
      $region57: #{pointnet2_forward.9} parent=55 // pred_check
        %p1510 = pneg %p194
      $region58: #{pointnet2_forward.9} parent=55 // pred_check_branch
        %1512 = sbr.rel (%p1510) target = $region60
      $region59: #{pointnet2_forward.9} parent=55 // pred_region
        %s1513 = smul.u32 2, %s19
        %p1514 = scmp.lt.s32.totalorder %s1513, 3
        %s1515 = scalar_select %p1514, %s1513, 3
        %s1516 = smul.addr %s1515, 4
        %s1517 = scalar_lea.vmem %s7, %s1516
      $region60: #{pointnet2_forward.9} parent=55 // pred_fallthru
        _
    $region56: #{pointnet2_forward.9} parent=5 // pred_fallthru
      _
  $region6: #{pointnet2_forward.9} parent=0 // loop_footer
    %s17 = sadd.s32 1, %s13
  $region7: #{pointnet2_forward.9} parent=0 // loop_footer_branch
    %12 = sbr.rel target = $region3
  $region8: #{pointnet2_forward.9} parent=0 // loop_exit
    _

// kernel: pointnet2_forward.10
$region0: #{pointnet2_forward.10}
  #allocation0 [shape = 'u32[]', space=smem, size = 0x4, offset = 0x4, fixed_abs, tag = 'smem constant byte address 0x4 - core index']
  #allocation1 [shape = 'u32[144,128]{1,0:T(1,128)}', space=vmem, size = 0x12000, scoped, tag = 'internal scratch']
  %s0 = inlined_call_operand.vmem [shape: bf16[256,144], index: 0, kind: input, shape index: {}]
  %s1 = inlined_call_operand.vmem [shape: bf16[144,128], index: 1, kind: input, shape index: {}]
  %s2 = inlined_call_operand.vmem [shape: f32[1,128], index: 2, kind: input, shape index: {}]
  %s3 = inlined_call_operand.vmem [shape: bf16[128,128], index: 3, kind: input, shape index: {}]
  %s4 = inlined_call_operand.vmem [shape: f32[1,128], index: 4, kind: input, shape index: {}]
  %s5 = inlined_call_operand.vmem [shape: bf16[128,256], index: 5, kind: input, shape index: {}]
  %s6 = inlined_call_operand.vmem [shape: f32[1,256], index: 6, kind: input, shape index: {}]
  %s7 = inlined_call_operand.vmem [shape: bf16[16,256], index: 7, kind: output, shape index: {}]
  %s8 = sld [smem:[#allocation0]]
  $region61: #{pointnet2_forward.10} parent=0
    _
  %s10 = ssub.s32 1, %s8
  %s11 = scalar_select 0, %s10, %s8
  loop: start=0, step=1, limit=4
  $region2: #{pointnet2_forward.10} parent=0 // loop_pre_header
    _
  $region3: #{pointnet2_forward.10} parent=0 // loop_header
    %s13 = sphi 0, %s17
    %p14 = scmp.ge.s32.totalorder %s13, 4
    %s23 = sphi 0, %s25
    %s26 = sphi 0, %s23
    %s27 = sphi 0, %s26
    %s43 = sphi 0, %s27
    %s47 = sphi 0, %s47
    %s49 = sphi 0, %s47
    %s50 = sphi 0, %s49
    %s64 = sphi 0, %s50
    %s68 = sphi 0, %s68
    %s70 = sphi 0, %s68
    %s71 = sphi 0, %s70
    %s85 = sphi 0, %s71
    %s89 = sphi 0, %s89
    %s91 = sphi 0, %s89
    %s92 = sphi 0, %s91
    %s106 = sphi 0, %s92
    %s110 = sphi 0, %s110
    %s112 = sphi 0, %s110
    %s113 = sphi 0, %s112
    %s127 = sphi 0, %s113
    %s131 = sphi 0, %s131
    %s133 = sphi 0, %s131
    %s134 = sphi 0, %s133
    %s148 = sphi 0, %s134
    %s152 = sphi 0, %s152
    %s154 = sphi 0, %s152
    %s155 = sphi 0, %s154
    %s169 = sphi 0, %s155
    %s175 = sphi 0, %s177
    %s178 = sphi 0, %s175
    %s179 = sphi 0, %s178
    %s195 = sphi 0, %s179
  $region4: #{pointnet2_forward.10} parent=0 // loop_header_branch
    %16 = sbr.rel (%p14) target = $region8
  $region5: #{pointnet2_forward.10} parent=0 // loop_body
    %s18 = ssub.s32 %s13, 1
    %s19 = ssub.s32 %s13, 2
    %s20 = sadd.s32 %s13, 1
    %s21 = ssub.s32 %s13, %s20
    %p22 = scmp.eq.s32.totalorder %s21, 0
    %s24 = sadd.s32 %s23, 1
    %s25 = scalar_select %p22, %s23, %s24
    %p28 = pneg %p22
    %p29 = scmp.eq.s32.totalorder %s13, 1
    %p30 = por %p28, %p29
    %p31 = scmp.ne.s32.totalorder %s23, %s26
    %p32 = scmp.eq.s32.totalorder %s13, 0
    %p33 = por %p31, %p32
    %p34 = scmp.ne.s32.totalorder %s23, %s26
    %p35 = scmp.eq.s32.totalorder %s18, 1
    %p36 = por %p34, %p35
    %p37 = scmp.ne.s32.totalorder %s26, %s27
    %p38 = scmp.eq.s32.totalorder %s18, 0
    %p39 = por %p37, %p38
    %p40 = scmp.ne.s32.totalorder %s26, %s27
    %p41 = scmp.eq.s32.totalorder %s19, 1
    %p42 = por %p40, %p41
    %p44 = scmp.ne.s32.totalorder %s27, %s43
    %p45 = scmp.eq.s32.totalorder %s19, 0
    %p46 = por %p44, %p45
    %s48 = sadd.s32 %s47, 1
    %p51 = scmp.eq.s32.totalorder %s13, 1
    %p52 = scmp.ne.s32.totalorder %s47, %s49
    %p53 = scmp.eq.s32.totalorder %s13, 0
    %p54 = por %p52, %p53
    %p55 = scmp.ne.s32.totalorder %s47, %s49
    %p56 = scmp.eq.s32.totalorder %s18, 1
    %p57 = por %p55, %p56
    %p58 = scmp.ne.s32.totalorder %s49, %s50
    %p59 = scmp.eq.s32.totalorder %s18, 0
    %p60 = por %p58, %p59
    %p61 = scmp.ne.s32.totalorder %s49, %s50
    %p62 = scmp.eq.s32.totalorder %s19, 1
    %p63 = por %p61, %p62
    %p65 = scmp.ne.s32.totalorder %s50, %s64
    %p66 = scmp.eq.s32.totalorder %s19, 0
    %p67 = por %p65, %p66
    %s69 = sadd.s32 %s68, 1
    %p72 = scmp.eq.s32.totalorder %s13, 1
    %p73 = scmp.ne.s32.totalorder %s68, %s70
    %p74 = scmp.eq.s32.totalorder %s13, 0
    %p75 = por %p73, %p74
    %p76 = scmp.ne.s32.totalorder %s68, %s70
    %p77 = scmp.eq.s32.totalorder %s18, 1
    %p78 = por %p76, %p77
    %p79 = scmp.ne.s32.totalorder %s70, %s71
    %p80 = scmp.eq.s32.totalorder %s18, 0
    %p81 = por %p79, %p80
    %p82 = scmp.ne.s32.totalorder %s70, %s71
    %p83 = scmp.eq.s32.totalorder %s19, 1
    %p84 = por %p82, %p83
    %p86 = scmp.ne.s32.totalorder %s71, %s85
    %p87 = scmp.eq.s32.totalorder %s19, 0
    %p88 = por %p86, %p87
    %s90 = sadd.s32 %s89, 1
    %p93 = scmp.eq.s32.totalorder %s13, 1
    %p94 = scmp.ne.s32.totalorder %s89, %s91
    %p95 = scmp.eq.s32.totalorder %s13, 0
    %p96 = por %p94, %p95
    %p97 = scmp.ne.s32.totalorder %s89, %s91
    %p98 = scmp.eq.s32.totalorder %s18, 1
    %p99 = por %p97, %p98
    %p100 = scmp.ne.s32.totalorder %s91, %s92
    %p101 = scmp.eq.s32.totalorder %s18, 0
    %p102 = por %p100, %p101
    %p103 = scmp.ne.s32.totalorder %s91, %s92
    %p104 = scmp.eq.s32.totalorder %s19, 1
    %p105 = por %p103, %p104
    %p107 = scmp.ne.s32.totalorder %s92, %s106
    %p108 = scmp.eq.s32.totalorder %s19, 0
    %p109 = por %p107, %p108
    %s111 = sadd.s32 %s110, 1
    %p114 = scmp.eq.s32.totalorder %s13, 1
    %p115 = scmp.ne.s32.totalorder %s110, %s112
    %p116 = scmp.eq.s32.totalorder %s13, 0
    %p117 = por %p115, %p116
    %p118 = scmp.ne.s32.totalorder %s110, %s112
    %p119 = scmp.eq.s32.totalorder %s18, 1
    %p120 = por %p118, %p119
    %p121 = scmp.ne.s32.totalorder %s112, %s113
    %p122 = scmp.eq.s32.totalorder %s18, 0
    %p123 = por %p121, %p122
    %p124 = scmp.ne.s32.totalorder %s112, %s113
    %p125 = scmp.eq.s32.totalorder %s19, 1
    %p126 = por %p124, %p125
    %p128 = scmp.ne.s32.totalorder %s113, %s127
    %p129 = scmp.eq.s32.totalorder %s19, 0
    %p130 = por %p128, %p129
    %s132 = sadd.s32 %s131, 1
    %p135 = scmp.eq.s32.totalorder %s13, 1
    %p136 = scmp.ne.s32.totalorder %s131, %s133
    %p137 = scmp.eq.s32.totalorder %s13, 0
    %p138 = por %p136, %p137
    %p139 = scmp.ne.s32.totalorder %s131, %s133
    %p140 = scmp.eq.s32.totalorder %s18, 1
    %p141 = por %p139, %p140
    %p142 = scmp.ne.s32.totalorder %s133, %s134
    %p143 = scmp.eq.s32.totalorder %s18, 0
    %p144 = por %p142, %p143
    %p145 = scmp.ne.s32.totalorder %s133, %s134
    %p146 = scmp.eq.s32.totalorder %s19, 1
    %p147 = por %p145, %p146
    %p149 = scmp.ne.s32.totalorder %s134, %s148
    %p150 = scmp.eq.s32.totalorder %s19, 0
    %p151 = por %p149, %p150
    %s153 = sadd.s32 %s152, 1
    %p156 = scmp.eq.s32.totalorder %s13, 1
    %p157 = scmp.ne.s32.totalorder %s152, %s154
    %p158 = scmp.eq.s32.totalorder %s13, 0
    %p159 = por %p157, %p158
    %p160 = scmp.ne.s32.totalorder %s152, %s154
    %p161 = scmp.eq.s32.totalorder %s18, 1
    %p162 = por %p160, %p161
    %p163 = scmp.ne.s32.totalorder %s154, %s155
    %p164 = scmp.eq.s32.totalorder %s18, 0
    %p165 = por %p163, %p164
    %p166 = scmp.ne.s32.totalorder %s154, %s155
    %p167 = scmp.eq.s32.totalorder %s19, 1
    %p168 = por %p166, %p167
    %p170 = scmp.ne.s32.totalorder %s155, %s169
    %p171 = scmp.eq.s32.totalorder %s19, 0
    %p172 = por %p170, %p171
    %s173 = ssub.s32 %s13, %s20
    %p174 = scmp.eq.s32.totalorder %s173, 0
    %s176 = sadd.s32 %s175, 1
    %s177 = scalar_select %p174, %s175, %s176
    %p180 = pneg %p174
    %p181 = scmp.eq.s32.totalorder %s13, 1
    %p182 = por %p180, %p181
    %p183 = scmp.ne.s32.totalorder %s175, %s178
    %p184 = scmp.eq.s32.totalorder %s13, 0
    %p185 = por %p183, %p184
    %p186 = scmp.ne.s32.totalorder %s175, %s178
    %p187 = scmp.eq.s32.totalorder %s18, 1
    %p188 = por %p186, %p187
    %p189 = scmp.ne.s32.totalorder %s178, %s179
    %p190 = scmp.eq.s32.totalorder %s18, 0
    %p191 = por %p189, %p190
    %p192 = scmp.ne.s32.totalorder %s178, %s179
    %p193 = scmp.eq.s32.totalorder %s19, 1
    %p194 = por %p192, %p193
    %p196 = scmp.ne.s32.totalorder %s179, %s195
    %p197 = scmp.eq.s32.totalorder %s19, 0
    %p198 = por %p196, %p197
    %p199 = scmp.le.s32.totalorder 1, %s13
    %p200 = scmp.lt.s32.totalorder %s13, 3
    %p201 = pnand %p199, %p200
    %p202 = pneg %p201
    // Predicated region
    $region9: #{pointnet2_forward.10} parent=5 // pred_check
      _
    $region10: #{pointnet2_forward.10} parent=5 // pred_check_branch
      %204 = sbr.rel (%p201) target = $region12
    $region11: #{pointnet2_forward.10} parent=5 // pred_region
      %s205 = ssub.s32 %s13, 1
      // Predicated region
      $region13: #{pointnet2_forward.10} parent=11 // pred_check
        %p206 = pneg %p60
      $region14: #{pointnet2_forward.10} parent=11 // pred_check_branch
        %208 = sbr.rel (%p206) target = $region16
      $region15: #{pointnet2_forward.10} parent=11 // pred_region
        _
      $region16: #{pointnet2_forward.10} parent=11 // pred_fallthru
        _
      // Predicated region
      $region17: #{pointnet2_forward.10} parent=11 // pred_check
        %p209 = pneg %p81
      $region18: #{pointnet2_forward.10} parent=11 // pred_check_branch
        %211 = sbr.rel (%p209) target = $region20
      $region19: #{pointnet2_forward.10} parent=11 // pred_region
        _
      $region20: #{pointnet2_forward.10} parent=11 // pred_fallthru
        _
      // Predicated region
      $region21: #{pointnet2_forward.10} parent=11 // pred_check
        %p212 = pneg %p102
      $region22: #{pointnet2_forward.10} parent=11 // pred_check_branch
        %214 = sbr.rel (%p212) target = $region24
      $region23: #{pointnet2_forward.10} parent=11 // pred_region
        _
      $region24: #{pointnet2_forward.10} parent=11 // pred_fallthru
        _
      // Predicated region
      $region25: #{pointnet2_forward.10} parent=11 // pred_check
        %p215 = pneg %p123
      $region26: #{pointnet2_forward.10} parent=11 // pred_check_branch
        %217 = sbr.rel (%p215) target = $region28
      $region27: #{pointnet2_forward.10} parent=11 // pred_region
        _
      $region28: #{pointnet2_forward.10} parent=11 // pred_fallthru
        _
      // Predicated region
      $region29: #{pointnet2_forward.10} parent=11 // pred_check
        %p218 = pneg %p144
      $region30: #{pointnet2_forward.10} parent=11 // pred_check_branch
        %220 = sbr.rel (%p218) target = $region32
      $region31: #{pointnet2_forward.10} parent=11 // pred_region
        _
      $region32: #{pointnet2_forward.10} parent=11 // pred_fallthru
        _
      // Predicated region
      $region33: #{pointnet2_forward.10} parent=11 // pred_check
        %p221 = pneg %p165
      $region34: #{pointnet2_forward.10} parent=11 // pred_check_branch
        %223 = sbr.rel (%p221) target = $region36
      $region35: #{pointnet2_forward.10} parent=11 // pred_region
        _
      $region36: #{pointnet2_forward.10} parent=11 // pred_fallthru
        _
    $region12: #{pointnet2_forward.10} parent=5 // pred_fallthru
      _
    %p224 = scmp.lt.s32.totalorder %s13, 2
    // Predicated region
    $region37: #{pointnet2_forward.10} parent=5 // pred_check
      %p225 = pneg %p224
    $region38: #{pointnet2_forward.10} parent=5 // pred_check_branch
      %227 = sbr.rel (%p225) target = $region40
    $region39: #{pointnet2_forward.10} parent=5 // pred_region
      // Predicated region
      $region41: #{pointnet2_forward.10} parent=39 // pred_check
        %p228 = pneg %p33
      $region42: #{pointnet2_forward.10} parent=39 // pred_check_branch
        %230 = sbr.rel (%p228) target = $region44
      $region43: #{pointnet2_forward.10} parent=39 // pred_region
        %s231 = smul.u32 16, %s13
        %p232 = scmp.lt.s32.totalorder %s231, 31
        %s233 = scalar_select %p232, %s231, 31
        %s234 = smul.addr %s233, 2
        %s235 = smul.addr %s234, 4
        %s236 = scalar_lea.vmem %s0, %s235
        %s237 = smul.u32 16, %s13
      $region44: #{pointnet2_forward.10} parent=39 // pred_fallthru
        _
    $region40: #{pointnet2_forward.10} parent=5 // pred_fallthru
      _
    %p238 = scmp.le.s32.totalorder 1, %s13
    %p239 = scmp.lt.s32.totalorder %s13, 3
    %p240 = pnand %p238, %p239
    %p241 = pneg %p240
    // Predicated region
    $region45: #{pointnet2_forward.10} parent=5 // pred_check
      _
    $region46: #{pointnet2_forward.10} parent=5 // pred_check_branch
      %243 = sbr.rel (%p240) target = $region48
    $region47: #{pointnet2_forward.10} parent=5 // pred_region
      %s244 = ssub.s32 %s13, 1
      %s245 = smul.u32 16, %s18
      %p246 = scmp.lt.s32.totalorder %s245, 31
      %s247 = scalar_select %p246, %s245, 31
      %s248 = smul.addr %s247, 2
      %s249 = smul.addr %s248, 4
      %s250 = scalar_lea.vmem %s0, %s249
      %p251 = pneg %p39
      %p252 = pneg %p36
      %p253 = pneg %p60
      %p254 = pneg %p57
      %p255 = pneg %p81
      %p256 = pneg %p78
      %p257 = pneg %p102
      %p258 = pneg %p99
      %p259 = pneg %p123
      %p260 = pneg %p120
      %p261 = pneg %p144
      %p262 = pneg %p141
      %p263 = pneg %p165
      %p264 = pneg %p162
      %p265 = pneg %p191
      %p266 = pneg %p188
      %p267 = scmp.lt.s32.totalorder %s18, 1
      %s268 = scalar_select %p267, %s18, 1
      %s269 = smul.addr %s268, 2
      %s270 = smul.addr %s269, 4
      %s271 = scalar_lea.vmem %s7, %s270
      %s272 = smul.u32 16, %s18
      %p273 = scmp.lt.s32.totalorder %s272, 31
      %s274 = scalar_select %p273, %s272, 31
      %s275 = smul.addr %s274, 2
      %s276 = smul.addr %s275, 4
      %s277 = scalar_lea.vmem %s0, %s276
      %s278 = smul.u32 16, %s18
      %p279 = scmp.lt.s32.totalorder %s18, 1
      %s280 = scalar_select %p279, %s18, 1
      %s281 = smul.addr %s280, 2
      %s282 = smul.addr %s281, 4
      %s283 = scalar_lea.vmem %s7, %s282
      %v285 = vld [vmem:[%s277] sm:$0xff]
      %v286 = vld [vmem:[%s277 + $0x8] sm:$0xff]
      %v287 = vld [vmem:[%s277 + $0x10] sm:$0xff]
      %v288 = vld [vmem:[%s277 + $0x18] sm:$0xff]
      %v289 = vld [vmem:[%s277 + $0x20] sm:$0xff]
      %v290 = vld [vmem:[%s277 + $0x28] sm:$0xff]
      %v291 = vld [vmem:[%s277 + $0x30] sm:$0xff]
      %v292 = vld [vmem:[%s277 + $0x38] sm:$0xff]
      %v293 = vld [vmem:[%s277 + $0x40] sm:$0xff]
      %v294 = vld [vmem:[%s277 + $0x48] sm:$0xff]
      %v295 = vld [vmem:[%s277 + $0x50] sm:$0xff]
      %v296 = vld [vmem:[%s277 + $0x58] sm:$0xff]
      %v297 = vld [vmem:[%s277 + $0x60] sm:$0xff]
      %v298 = vld [vmem:[%s277 + $0x68] sm:$0xff]
      %v299 = vld [vmem:[%s277 + $0x70] sm:$0xff]
      %v300 = vld [vmem:[%s277 + $0x78] sm:$0xff]
      %v301 = vld [vmem:[%s1] sm:$0xf]
      %v302 = vld [vmem:[%s1 + $0x4] sm:$0xf]
      %v303 = vld [vmem:[%s1 + $0x8] sm:$0xf]
      %v304 = vld [vmem:[%s1 + $0xc] sm:$0xf]
      %v305 = vld [vmem:[%s1 + $0x10] sm:$0xf]
      %v306 = vld [vmem:[%s1 + $0x14] sm:$0xf]
      %v307 = vld [vmem:[%s1 + $0x18] sm:$0xf]
      %v308 = vld [vmem:[%s1 + $0x1c] sm:$0xf]
      %v309 = vld [vmem:[%s1 + $0x20] sm:$0xf]
      %v310 = vld [vmem:[%s1 + $0x24] sm:$0xf]
      %v311 = vld [vmem:[%s1 + $0x28] sm:$0xf]
      %v312 = vld [vmem:[%s1 + $0x2c] sm:$0xf]
      %v313 = vld [vmem:[%s1 + $0x30] sm:$0xf]
      %v314 = vld [vmem:[%s1 + $0x34] sm:$0xf]
      %v315 = vld [vmem:[%s1 + $0x38] sm:$0xf]
      %v316 = vld [vmem:[%s1 + $0x3c] sm:$0xf]
      %v317 = vld [vmem:[%s1 + $0x40] sm:$0xf]
      %v318 = vld [vmem:[%s1 + $0x44] sm:$0xf]
      %v319 = vld [vmem:[%s2] sm:$0x1]
      %v321 = vlaneseq
      %v322 = vshrl.u32 %v321, 7
      %v323 = vsub.s32 0, %v322
      %v324 = vrot.slane %v319, %v323
      %v342 = vunpack.c.l.b16 %v285
      %v343 = vunpack.c.h.b16 %v285
      %v344 = vunpack.c.l.b16 %v286
      %v345 = vunpack.c.h.b16 %v286
      %v346 = vunpack.c.l.b16 %v287
      %v347 = vunpack.c.h.b16 %v287
      %v348 = vunpack.c.l.b16 %v288
      %v349 = vunpack.c.h.b16 %v288
      %v350 = vunpack.c.l.b16 %v289
      %v351 = vunpack.c.h.b16 %v289
      %v352 = vunpack.c.l.b16 %v290
      %v353 = vunpack.c.h.b16 %v290
      %v354 = vunpack.c.l.b16 %v291
      %v355 = vunpack.c.h.b16 %v291
      %v356 = vunpack.c.l.b16 %v292
      %v357 = vunpack.c.h.b16 %v292
      %v358 = vunpack.c.l.b16 %v293
      %v359 = vunpack.c.h.b16 %v293
      %v360 = vunpack.c.l.b16 %v294
      %v361 = vunpack.c.h.b16 %v294
      %v362 = vunpack.c.l.b16 %v295
      %v363 = vunpack.c.h.b16 %v295
      %v364 = vunpack.c.l.b16 %v296
      %v365 = vunpack.c.h.b16 %v296
      %v366 = vunpack.c.l.b16 %v297
      %v367 = vunpack.c.h.b16 %v297
      %v368 = vunpack.c.l.b16 %v298
      %v369 = vunpack.c.h.b16 %v298
      %v370 = vunpack.c.l.b16 %v299
      %v371 = vunpack.c.h.b16 %v299
      %v372 = vunpack.c.l.b16 %v300
      %v373 = vunpack.c.h.b16 %v300
      %v374 = vpack.c.b16 %v344, %v342
      %v375 = vpack.c.b16 %v345, %v343
      %v376 = vpack.c.b16 %v348, %v346
      %v377 = vpack.c.b16 %v349, %v347
      %v378 = vpack.c.b16 %v352, %v350
      %v379 = vpack.c.b16 %v353, %v351
      %v380 = vpack.c.b16 %v356, %v354
      %v381 = vpack.c.b16 %v357, %v355
      %v382 = vpack.c.b16 %v360, %v358
      %v383 = vpack.c.b16 %v361, %v359
      %v384 = vpack.c.b16 %v364, %v362
      %v385 = vpack.c.b16 %v365, %v363
      %v386 = vpack.c.b16 %v368, %v366
      %v387 = vpack.c.b16 %v369, %v367
      %v388 = vpack.c.b16 %v372, %v370
      %v389 = vpack.c.b16 %v373, %v371
      %v416 = vunpack.c.l.b16 %v301
      %v417 = vunpack.c.l.b16 %v302
      %v418 = vunpack.c.l.b16 %v303
      %v419 = vunpack.c.l.b16 %v304
      %v420 = vunpack.c.l.b16 %v305
      %v421 = vunpack.c.l.b16 %v306
      %v422 = vunpack.c.l.b16 %v307
      %v423 = vunpack.c.l.b16 %v308
      %v424 = vunpack.c.l.b16 %v309
      %v425 = vunpack.c.l.b16 %v310
      %v426 = vunpack.c.l.b16 %v311
      %v427 = vunpack.c.l.b16 %v312
      %v428 = vunpack.c.l.b16 %v313
      %v429 = vunpack.c.l.b16 %v314
      %v430 = vunpack.c.l.b16 %v315
      %v431 = vunpack.c.l.b16 %v316
      %v432 = vunpack.c.l.b16 %v317
      %v433 = vunpack.c.l.b16 %v318
      %v434 = vpack.c.b16 %v417, %v416
      %v435 = vpack.c.b16 %v419, %v418
      %v436 = vpack.c.b16 %v421, %v420
      %v437 = vpack.c.b16 %v423, %v422
      %v438 = vpack.c.b16 %v425, %v424
      %v439 = vpack.c.b16 %v427, %v426
      %v440 = vpack.c.b16 %v429, %v428
      %v441 = vpack.c.b16 %v431, %v430
      %v442 = vpack.c.b16 %v433, %v432
      %vm452 = vcmask 130048
      %v454 = vsel %vm452, %v375, 0
      %v457 = vsel %vm452, %v377, 0
      %v460 = vsel %vm452, %v379, 0
      %v463 = vsel %vm452, %v381, 0
      %v466 = vsel %vm452, %v383, 0
      %v469 = vsel %vm452, %v385, 0
      %v472 = vsel %vm452, %v387, 0
      %v475 = vsel %vm452, %v389, 0
      %477 = vmatprep.subr.bf16.mxu0 0
      %478 = vmatpush1.bf16.msra.mxu0 %v441
      %479 = vmatprep.subr.bf16.mxu0 0
      %480 = vmatpush1.bf16.msra.mxu0 %v440
      %481 = vmatprep.subr.bf16.mxu0 0
      %482 = vmatpush1.bf16.msra.mxu0 %v439
      %483 = vmatprep.subr.bf16.mxu0 0
      %484 = vmatpush1.bf16.msra.mxu0 %v438
      %485 = vmatprep.subr.bf16.mxu0 0
      %486 = vmatpush1.bf16.msra.mxu0 %v437
      %487 = vmatprep.subr.bf16.mxu0 0
      %488 = vmatpush1.bf16.msra.mxu0 %v436
      %489 = vmatprep.subr.bf16.mxu0 0
      %490 = vmatpush1.bf16.msra.mxu0 %v435
      %491 = vmatprep.subr.bf16.mxu0 0
      %492 = vmatpush1.bf16.msra.mxu0 %v434
      %493 = vmatprep.subr.bf16.mxu0 0
      %494 = vmatpush2.bf16.msra.mxu0 0
      %495 = vmatprep.subr.bf16.mxu0 0
      %496 = vmatpush2.bf16.msra.mxu0 0
      %497 = vmatprep.subr.bf16.mxu0 0
      %498 = vmatpush2.bf16.msra.mxu0 0
      %499 = vmatprep.subr.bf16.mxu0 0
      %500 = vmatpush2.bf16.msra.mxu0 0
      %501 = vmatprep.subr.bf16.mxu0 0
      %502 = vmatpush2.bf16.msra.mxu0 0
      %503 = vmatprep.subr.bf16.mxu0 0
      %504 = vmatpush2.bf16.msra.mxu0 0
      %505 = vmatprep.subr.bf16.mxu0 0
      %506 = vmatpush2.bf16.msra.mxu0 0
      %507 = vmatprep.subr.bf16.mxu0 0
      %508 = vmatpush2.bf16.msra.mxu0 %v442
      %509 = vmatprep.mubr.bf16.mxu0 %v454
      %510 = vmatmul.mubr.bf16.gmra.mxu0 %v374
      %v511 = vpop.f32.mrf.mxu0
      %v512 = vadd.f32 %v324, %v511
      %v513 = vpop.f32.mrf.mxu0
      %v514 = vpop.f32.mrf.mxu0
      %v515 = vadd.f32 %v324, %v514
      %v516 = vpop.f32.mrf.mxu0
      %517 = vmatprep.mubr.bf16.mxu0 %v457
      %518 = vmatmul.mubr.bf16.gmra.mxu0 %v376
      %v519 = vpop.f32.mrf.mxu0
      %v520 = vadd.f32 %v324, %v519
      %v521 = vpop.f32.mrf.mxu0
      %v522 = vpop.f32.mrf.mxu0
      %v523 = vadd.f32 %v324, %v522
      %v524 = vpop.f32.mrf.mxu0
      %525 = vmatprep.mubr.bf16.mxu0 %v460
      %526 = vmatmul.mubr.bf16.gmra.mxu0 %v378
      %v527 = vpop.f32.mrf.mxu0
      %v528 = vadd.f32 %v324, %v527
      %v529 = vpop.f32.mrf.mxu0
      %v530 = vpop.f32.mrf.mxu0
      %v531 = vadd.f32 %v324, %v530
      %v532 = vpop.f32.mrf.mxu0
      %533 = vmatprep.mubr.bf16.mxu0 %v463
      %534 = vmatmul.mubr.bf16.gmra.mxu0 %v380
      %v535 = vpop.f32.mrf.mxu0
      %v536 = vadd.f32 %v324, %v535
      %v537 = vpop.f32.mrf.mxu0
      %v538 = vpop.f32.mrf.mxu0
      %v539 = vadd.f32 %v324, %v538
      %v540 = vpop.f32.mrf.mxu0
      %541 = vmatprep.mubr.bf16.mxu0 %v466
      %542 = vmatmul.mubr.bf16.gmra.mxu0 %v382
      %v543 = vpop.f32.mrf.mxu0
      %v544 = vadd.f32 %v324, %v543
      %v545 = vpop.f32.mrf.mxu0
      %v546 = vpop.f32.mrf.mxu0
      %v547 = vadd.f32 %v324, %v546
      %v548 = vpop.f32.mrf.mxu0
      %549 = vmatprep.mubr.bf16.mxu0 %v469
      %550 = vmatmul.mubr.bf16.gmra.mxu0 %v384
      %v551 = vpop.f32.mrf.mxu0
      %v552 = vadd.f32 %v324, %v551
      %v553 = vpop.f32.mrf.mxu0
      %v554 = vpop.f32.mrf.mxu0
      %v555 = vadd.f32 %v324, %v554
      %v556 = vpop.f32.mrf.mxu0
      %557 = vmatprep.mubr.bf16.mxu0 %v472
      %558 = vmatmul.mubr.bf16.gmra.mxu0 %v386
      %v559 = vpop.f32.mrf.mxu0
      %v560 = vadd.f32 %v324, %v559
      %v561 = vpop.f32.mrf.mxu0
      %v562 = vpop.f32.mrf.mxu0
      %v563 = vadd.f32 %v324, %v562
      %v564 = vpop.f32.mrf.mxu0
      %565 = vmatprep.mubr.bf16.mxu0 %v475
      %566 = vmatmul.mubr.bf16.gmra.mxu0 %v388
      %v567 = vpop.f32.mrf.mxu0
      %v568 = vadd.f32 %v324, %v567
      %v569 = vpop.f32.mrf.mxu0
      %v570 = vpop.f32.mrf.mxu0
      %v571 = vadd.f32 %v324, %v570
      %v572 = vpop.f32.mrf.mxu0
      %573 = vdwg.mxu0
      %v574 = vmax.f32 %v512, 0.0
      %v575 = vmax.f32 %v515, 0.0
      %v576 = vmax.f32 %v520, 0.0
      %v577 = vmax.f32 %v523, 0.0
      %v578 = vmax.f32 %v528, 0.0
      %v579 = vmax.f32 %v531, 0.0
      %v580 = vmax.f32 %v536, 0.0
      %v581 = vmax.f32 %v539, 0.0
      %v582 = vmax.f32 %v544, 0.0
      %v583 = vmax.f32 %v547, 0.0
      %v584 = vmax.f32 %v552, 0.0
      %v585 = vmax.f32 %v555, 0.0
      %v586 = vmax.f32 %v560, 0.0
      %v587 = vmax.f32 %v563, 0.0
      %v588 = vmax.f32 %v568, 0.0
      %v589 = vmax.f32 %v571, 0.0
      %v590 = vpack.c.bf16 %v575, %v574
      %v591 = vpack.c.bf16 %v577, %v576
      %v592 = vpack.c.bf16 %v579, %v578
      %v593 = vpack.c.bf16 %v581, %v580
      %v594 = vpack.c.bf16 %v583, %v582
      %v595 = vpack.c.bf16 %v585, %v584
      %v596 = vpack.c.bf16 %v587, %v586
      %v597 = vpack.c.bf16 %v589, %v588
      %v598 = vld [vmem:[%s3] sm:$0xf]
      %v599 = vld [vmem:[%s3 + $0x4] sm:$0xf]
      %v600 = vld [vmem:[%s3 + $0x8] sm:$0xf]
      %v601 = vld [vmem:[%s3 + $0xc] sm:$0xf]
      %v602 = vld [vmem:[%s3 + $0x10] sm:$0xf]
      %v603 = vld [vmem:[%s3 + $0x14] sm:$0xf]
      %v604 = vld [vmem:[%s3 + $0x18] sm:$0xf]
      %v605 = vld [vmem:[%s3 + $0x1c] sm:$0xf]
      %v606 = vld [vmem:[%s3 + $0x20] sm:$0xf]
      %v607 = vld [vmem:[%s3 + $0x24] sm:$0xf]
      %v608 = vld [vmem:[%s3 + $0x28] sm:$0xf]
      %v609 = vld [vmem:[%s3 + $0x2c] sm:$0xf]
      %v610 = vld [vmem:[%s3 + $0x30] sm:$0xf]
      %v611 = vld [vmem:[%s3 + $0x34] sm:$0xf]
      %v612 = vld [vmem:[%s3 + $0x38] sm:$0xf]
      %v613 = vld [vmem:[%s3 + $0x3c] sm:$0xf]
      %v614 = vld [vmem:[%s4] sm:$0x1]
      %v616 = vlaneseq
      %v617 = vshrl.u32 %v616, 7
      %v618 = vsub.s32 0, %v617
      %v619 = vrot.slane %v614, %v618
      %v637 = vunpack.c.l.b16 %v598
      %v638 = vunpack.c.l.b16 %v599
      %v639 = vunpack.c.l.b16 %v600
      %v640 = vunpack.c.l.b16 %v601
      %v641 = vunpack.c.l.b16 %v602
      %v642 = vunpack.c.l.b16 %v603
      %v643 = vunpack.c.l.b16 %v604
      %v644 = vunpack.c.l.b16 %v605
      %v645 = vunpack.c.l.b16 %v606
      %v646 = vunpack.c.l.b16 %v607
      %v647 = vunpack.c.l.b16 %v608
      %v648 = vunpack.c.l.b16 %v609
      %v649 = vunpack.c.l.b16 %v610
      %v650 = vunpack.c.l.b16 %v611
      %v651 = vunpack.c.l.b16 %v612
      %v652 = vunpack.c.l.b16 %v613
      %v653 = vpack.c.b16 %v638, %v637
      %v654 = vpack.c.b16 %v640, %v639
      %v655 = vpack.c.b16 %v642, %v641
      %v656 = vpack.c.b16 %v644, %v643
      %v657 = vpack.c.b16 %v646, %v645
      %v658 = vpack.c.b16 %v648, %v647
      %v659 = vpack.c.b16 %v650, %v649
      %v660 = vpack.c.b16 %v652, %v651
      %669 = vmatprep.subr.bf16.mxu0 0
      %670 = vmatpush1.bf16.msra.mxu0 %v660
      %671 = vmatprep.subr.bf16.mxu0 0
      %672 = vmatpush1.bf16.msra.mxu0 %v659
      %673 = vmatprep.subr.bf16.mxu0 0
      %674 = vmatpush1.bf16.msra.mxu0 %v658
      %675 = vmatprep.subr.bf16.mxu0 0
      %676 = vmatpush1.bf16.msra.mxu0 %v657
      %677 = vmatprep.subr.bf16.mxu0 0
      %678 = vmatpush1.bf16.msra.mxu0 %v656
      %679 = vmatprep.subr.bf16.mxu0 0
      %680 = vmatpush1.bf16.msra.mxu0 %v655
      %681 = vmatprep.subr.bf16.mxu0 0
      %682 = vmatpush1.bf16.msra.mxu0 %v654
      %683 = vmatprep.subr.bf16.mxu0 0
      %684 = vmatpush1.bf16.msra.mxu0 %v653
      %685 = vmatprep.subr.bf16.mxu0 0
      %686 = vmatpush2.bf16.msra.mxu0 0
      %687 = vmatprep.subr.bf16.mxu0 0
      %688 = vmatpush2.bf16.msra.mxu0 0
      %689 = vmatprep.subr.bf16.mxu0 0
      %690 = vmatpush2.bf16.msra.mxu0 0
      %691 = vmatprep.subr.bf16.mxu0 0
      %692 = vmatpush2.bf16.msra.mxu0 0
      %693 = vmatprep.subr.bf16.mxu0 0
      %694 = vmatpush2.bf16.msra.mxu0 0
      %695 = vmatprep.subr.bf16.mxu0 0
      %696 = vmatpush2.bf16.msra.mxu0 0
      %697 = vmatprep.subr.bf16.mxu0 0
      %698 = vmatpush2.bf16.msra.mxu0 0
      %699 = vmatprep.subr.bf16.mxu0 0
      %700 = vmatpush2.bf16.msra.mxu0 0
      %701 = vmatprep.mubr.bf16.mxu0 0
      %702 = vmatmul.mubr.bf16.gmra.mxu0 %v590
      %v703 = vpop.f32.mrf.mxu0
      %v704 = vadd.f32 %v619, %v703
      %v705 = vpop.f32.mrf.mxu0
      %v706 = vpop.f32.mrf.mxu0
      %v707 = vadd.f32 %v619, %v706
      %v708 = vpop.f32.mrf.mxu0
      %709 = vmatprep.mubr.bf16.mxu0 0
      %710 = vmatmul.mubr.bf16.gmra.mxu0 %v591
      %v711 = vpop.f32.mrf.mxu0
      %v712 = vadd.f32 %v619, %v711
      %v713 = vpop.f32.mrf.mxu0
      %v714 = vpop.f32.mrf.mxu0
      %v715 = vadd.f32 %v619, %v714
      %v716 = vpop.f32.mrf.mxu0
      %717 = vmatprep.mubr.bf16.mxu0 0
      %718 = vmatmul.mubr.bf16.gmra.mxu0 %v592
      %v719 = vpop.f32.mrf.mxu0
      %v720 = vadd.f32 %v619, %v719
      %v721 = vpop.f32.mrf.mxu0
      %v722 = vpop.f32.mrf.mxu0
      %v723 = vadd.f32 %v619, %v722
      %v724 = vpop.f32.mrf.mxu0
      %725 = vmatprep.mubr.bf16.mxu0 0
      %726 = vmatmul.mubr.bf16.gmra.mxu0 %v593
      %v727 = vpop.f32.mrf.mxu0
      %v728 = vadd.f32 %v619, %v727
      %v729 = vpop.f32.mrf.mxu0
      %v730 = vpop.f32.mrf.mxu0
      %v731 = vadd.f32 %v619, %v730
      %v732 = vpop.f32.mrf.mxu0
      %733 = vmatprep.mubr.bf16.mxu0 0
      %734 = vmatmul.mubr.bf16.gmra.mxu0 %v594
      %v735 = vpop.f32.mrf.mxu0
      %v736 = vadd.f32 %v619, %v735
      %v737 = vpop.f32.mrf.mxu0
      %v738 = vpop.f32.mrf.mxu0
      %v739 = vadd.f32 %v619, %v738
      %v740 = vpop.f32.mrf.mxu0
      %741 = vmatprep.mubr.bf16.mxu0 0
      %742 = vmatmul.mubr.bf16.gmra.mxu0 %v595
      %v743 = vpop.f32.mrf.mxu0
      %v744 = vadd.f32 %v619, %v743
      %v745 = vpop.f32.mrf.mxu0
      %v746 = vpop.f32.mrf.mxu0
      %v747 = vadd.f32 %v619, %v746
      %v748 = vpop.f32.mrf.mxu0
      %749 = vmatprep.mubr.bf16.mxu0 0
      %750 = vmatmul.mubr.bf16.gmra.mxu0 %v596
      %v751 = vpop.f32.mrf.mxu0
      %v752 = vadd.f32 %v619, %v751
      %v753 = vpop.f32.mrf.mxu0
      %v754 = vpop.f32.mrf.mxu0
      %v755 = vadd.f32 %v619, %v754
      %v756 = vpop.f32.mrf.mxu0
      %757 = vmatprep.mubr.bf16.mxu0 0
      %758 = vmatmul.mubr.bf16.gmra.mxu0 %v597
      %v759 = vpop.f32.mrf.mxu0
      %v760 = vadd.f32 %v619, %v759
      %v761 = vpop.f32.mrf.mxu0
      %v762 = vpop.f32.mrf.mxu0
      %v763 = vadd.f32 %v619, %v762
      %v764 = vpop.f32.mrf.mxu0
      %765 = vdwg.mxu0
      %v766 = vmax.f32 %v704, 0.0
      %v767 = vmax.f32 %v707, 0.0
      %v768 = vmax.f32 %v712, 0.0
      %v769 = vmax.f32 %v715, 0.0
      %v770 = vmax.f32 %v720, 0.0
      %v771 = vmax.f32 %v723, 0.0
      %v772 = vmax.f32 %v728, 0.0
      %v773 = vmax.f32 %v731, 0.0
      %v774 = vmax.f32 %v736, 0.0
      %v775 = vmax.f32 %v739, 0.0
      %v776 = vmax.f32 %v744, 0.0
      %v777 = vmax.f32 %v747, 0.0
      %v778 = vmax.f32 %v752, 0.0
      %v779 = vmax.f32 %v755, 0.0
      %v780 = vmax.f32 %v760, 0.0
      %v781 = vmax.f32 %v763, 0.0
      %v782 = vpack.c.bf16 %v767, %v766
      %v783 = vpack.c.bf16 %v769, %v768
      %v784 = vpack.c.bf16 %v771, %v770
      %v785 = vpack.c.bf16 %v773, %v772
      %v786 = vpack.c.bf16 %v775, %v774
      %v787 = vpack.c.bf16 %v777, %v776
      %v788 = vpack.c.bf16 %v779, %v778
      %v789 = vpack.c.bf16 %v781, %v780
      %v790 = vld [vmem:[%s5] sm:$0xff]
      %v791 = vld [vmem:[%s5 + $0x8] sm:$0xff]
      %v792 = vld [vmem:[%s5 + $0x10] sm:$0xff]
      %v793 = vld [vmem:[%s5 + $0x18] sm:$0xff]
      %v794 = vld [vmem:[%s5 + $0x20] sm:$0xff]
      %v795 = vld [vmem:[%s5 + $0x28] sm:$0xff]
      %v796 = vld [vmem:[%s5 + $0x30] sm:$0xff]
      %v797 = vld [vmem:[%s5 + $0x38] sm:$0xff]
      %v798 = vld [vmem:[%s5 + $0x40] sm:$0xff]
      %v799 = vld [vmem:[%s5 + $0x48] sm:$0xff]
      %v800 = vld [vmem:[%s5 + $0x50] sm:$0xff]
      %v801 = vld [vmem:[%s5 + $0x58] sm:$0xff]
      %v802 = vld [vmem:[%s5 + $0x60] sm:$0xff]
      %v803 = vld [vmem:[%s5 + $0x68] sm:$0xff]
      %v804 = vld [vmem:[%s5 + $0x70] sm:$0xff]
      %v805 = vld [vmem:[%s5 + $0x78] sm:$0xff]
      %v806 = vld [vmem:[%s6] sm:$0x3]
      %v808 = vlaneseq
      %v809 = vshrl.u32 %v808, 7
      %v810 = vsub.s32 0, %v809
      %v811 = vrot.slane %v806, %v810
      %v812 = vlaneseq
      %v813 = vshrl.u32 %v812, 7
      %v814 = vsub.s32 1, %v813
      %v815 = vrot.slane %v806, %v814
      %v834 = vunpack.c.l.b16 %v790
      %v835 = vunpack.c.h.b16 %v790
      %v836 = vunpack.c.l.b16 %v791
      %v837 = vunpack.c.h.b16 %v791
      %v838 = vunpack.c.l.b16 %v792
      %v839 = vunpack.c.h.b16 %v792
      %v840 = vunpack.c.l.b16 %v793
      %v841 = vunpack.c.h.b16 %v793
      %v842 = vunpack.c.l.b16 %v794
      %v843 = vunpack.c.h.b16 %v794
      %v844 = vunpack.c.l.b16 %v795
      %v845 = vunpack.c.h.b16 %v795
      %v846 = vunpack.c.l.b16 %v796
      %v847 = vunpack.c.h.b16 %v796
      %v848 = vunpack.c.l.b16 %v797
      %v849 = vunpack.c.h.b16 %v797
      %v850 = vunpack.c.l.b16 %v798
      %v851 = vunpack.c.h.b16 %v798
      %v852 = vunpack.c.l.b16 %v799
      %v853 = vunpack.c.h.b16 %v799
      %v854 = vunpack.c.l.b16 %v800
      %v855 = vunpack.c.h.b16 %v800
      %v856 = vunpack.c.l.b16 %v801
      %v857 = vunpack.c.h.b16 %v801
      %v858 = vunpack.c.l.b16 %v802
      %v859 = vunpack.c.h.b16 %v802
      %v860 = vunpack.c.l.b16 %v803
      %v861 = vunpack.c.h.b16 %v803
      %v862 = vunpack.c.l.b16 %v804
      %v863 = vunpack.c.h.b16 %v804
      %v864 = vunpack.c.l.b16 %v805
      %v865 = vunpack.c.h.b16 %v805
      %v866 = vpack.c.b16 %v836, %v834
      %v867 = vpack.c.b16 %v837, %v835
      %v868 = vpack.c.b16 %v840, %v838
      %v869 = vpack.c.b16 %v841, %v839
      %v870 = vpack.c.b16 %v844, %v842
      %v871 = vpack.c.b16 %v845, %v843
      %v872 = vpack.c.b16 %v848, %v846
      %v873 = vpack.c.b16 %v849, %v847
      %v874 = vpack.c.b16 %v852, %v850
      %v875 = vpack.c.b16 %v853, %v851
      %v876 = vpack.c.b16 %v856, %v854
      %v877 = vpack.c.b16 %v857, %v855
      %v878 = vpack.c.b16 %v860, %v858
      %v879 = vpack.c.b16 %v861, %v859
      %v880 = vpack.c.b16 %v864, %v862
      %v881 = vpack.c.b16 %v865, %v863
      %898 = vmatprep.subr.bf16.mxu0 %v881
      %899 = vmatpush1.bf16.msra.mxu0 %v880
      %900 = vmatprep.subr.bf16.mxu0 %v879
      %901 = vmatpush1.bf16.msra.mxu0 %v878
      %902 = vmatprep.subr.bf16.mxu0 %v877
      %903 = vmatpush1.bf16.msra.mxu0 %v876
      %904 = vmatprep.subr.bf16.mxu0 %v875
      %905 = vmatpush1.bf16.msra.mxu0 %v874
      %906 = vmatprep.subr.bf16.mxu0 %v873
      %907 = vmatpush1.bf16.msra.mxu0 %v872
      %908 = vmatprep.subr.bf16.mxu0 %v871
      %909 = vmatpush1.bf16.msra.mxu0 %v870
      %910 = vmatprep.subr.bf16.mxu0 %v869
      %911 = vmatpush1.bf16.msra.mxu0 %v868
      %912 = vmatprep.subr.bf16.mxu0 %v867
      %913 = vmatpush1.bf16.msra.mxu0 %v866
      %914 = vmatprep.subr.bf16.mxu0 0
      %915 = vmatpush2.bf16.msra.mxu0 0
      %916 = vmatprep.subr.bf16.mxu0 0
      %917 = vmatpush2.bf16.msra.mxu0 0
      %918 = vmatprep.subr.bf16.mxu0 0
      %919 = vmatpush2.bf16.msra.mxu0 0
      %920 = vmatprep.subr.bf16.mxu0 0
      %921 = vmatpush2.bf16.msra.mxu0 0
      %922 = vmatprep.subr.bf16.mxu0 0
      %923 = vmatpush2.bf16.msra.mxu0 0
      %924 = vmatprep.subr.bf16.mxu0 0
      %925 = vmatpush2.bf16.msra.mxu0 0
      %926 = vmatprep.subr.bf16.mxu0 0
      %927 = vmatpush2.bf16.msra.mxu0 0
      %928 = vmatprep.subr.bf16.mxu0 0
      %929 = vmatpush2.bf16.msra.mxu0 0
      %930 = vmatprep.mubr.bf16.mxu0 0
      %931 = vmatmul.mubr.bf16.gmra.mxu0 %v782
      %v932 = vpop.f32.mrf.mxu0
      %v933 = vadd.f32 %v811, %v932
      %v934 = vpop.f32.mrf.mxu0
      %v935 = vadd.f32 %v815, %v934
      %v936 = vpop.f32.mrf.mxu0
      %v937 = vadd.f32 %v811, %v936
      %v938 = vpop.f32.mrf.mxu0
      %v939 = vadd.f32 %v815, %v938
      %940 = vmatprep.mubr.bf16.mxu0 0
      %941 = vmatmul.mubr.bf16.gmra.mxu0 %v783
      %v942 = vpop.f32.mrf.mxu0
      %v943 = vadd.f32 %v811, %v942
      %v944 = vpop.f32.mrf.mxu0
      %v945 = vadd.f32 %v815, %v944
      %v946 = vpop.f32.mrf.mxu0
      %v947 = vadd.f32 %v811, %v946
      %v948 = vpop.f32.mrf.mxu0
      %v949 = vadd.f32 %v815, %v948
      %950 = vmatprep.mubr.bf16.mxu0 0
      %951 = vmatmul.mubr.bf16.gmra.mxu0 %v784
      %v952 = vpop.f32.mrf.mxu0
      %v953 = vadd.f32 %v811, %v952
      %v954 = vpop.f32.mrf.mxu0
      %v955 = vadd.f32 %v815, %v954
      %v956 = vpop.f32.mrf.mxu0
      %v957 = vadd.f32 %v811, %v956
      %v958 = vpop.f32.mrf.mxu0
      %v959 = vadd.f32 %v815, %v958
      %960 = vmatprep.mubr.bf16.mxu0 0
      %961 = vmatmul.mubr.bf16.gmra.mxu0 %v785
      %v962 = vpop.f32.mrf.mxu0
      %v963 = vadd.f32 %v811, %v962
      %v964 = vpop.f32.mrf.mxu0
      %v965 = vadd.f32 %v815, %v964
      %v966 = vpop.f32.mrf.mxu0
      %v967 = vadd.f32 %v811, %v966
      %v968 = vpop.f32.mrf.mxu0
      %v969 = vadd.f32 %v815, %v968
      %970 = vmatprep.mubr.bf16.mxu0 0
      %971 = vmatmul.mubr.bf16.gmra.mxu0 %v786
      %v972 = vpop.f32.mrf.mxu0
      %v973 = vadd.f32 %v811, %v972
      %v974 = vpop.f32.mrf.mxu0
      %v975 = vadd.f32 %v815, %v974
      %v976 = vpop.f32.mrf.mxu0
      %v977 = vadd.f32 %v811, %v976
      %v978 = vpop.f32.mrf.mxu0
      %v979 = vadd.f32 %v815, %v978
      %980 = vmatprep.mubr.bf16.mxu0 0
      %981 = vmatmul.mubr.bf16.gmra.mxu0 %v787
      %v982 = vpop.f32.mrf.mxu0
      %v983 = vadd.f32 %v811, %v982
      %v984 = vpop.f32.mrf.mxu0
      %v985 = vadd.f32 %v815, %v984
      %v986 = vpop.f32.mrf.mxu0
      %v987 = vadd.f32 %v811, %v986
      %v988 = vpop.f32.mrf.mxu0
      %v989 = vadd.f32 %v815, %v988
      %990 = vmatprep.mubr.bf16.mxu0 0
      %991 = vmatmul.mubr.bf16.gmra.mxu0 %v788
      %v992 = vpop.f32.mrf.mxu0
      %v993 = vadd.f32 %v811, %v992
      %v994 = vpop.f32.mrf.mxu0
      %v995 = vadd.f32 %v815, %v994
      %v996 = vpop.f32.mrf.mxu0
      %v997 = vadd.f32 %v811, %v996
      %v998 = vpop.f32.mrf.mxu0
      %v999 = vadd.f32 %v815, %v998
      %1000 = vmatprep.mubr.bf16.mxu0 0
      %1001 = vmatmul.mubr.bf16.gmra.mxu0 %v789
      %v1002 = vpop.f32.mrf.mxu0
      %v1003 = vadd.f32 %v811, %v1002
      %v1004 = vpop.f32.mrf.mxu0
      %v1005 = vadd.f32 %v815, %v1004
      %v1006 = vpop.f32.mrf.mxu0
      %v1007 = vadd.f32 %v811, %v1006
      %v1008 = vpop.f32.mrf.mxu0
      %v1009 = vadd.f32 %v815, %v1008
      %1010 = vdwg.mxu0
      %v1011 = vmax.f32 %v933, 0.0
      %v1012 = vmax.f32 %v935, 0.0
      %v1013 = vmax.f32 %v937, 0.0
      %v1014 = vmax.f32 %v939, 0.0
      %v1015 = vmax.f32 %v943, 0.0
      %v1016 = vmax.f32 %v945, 0.0
      %v1017 = vmax.f32 %v947, 0.0
      %v1018 = vmax.f32 %v949, 0.0
      %v1019 = vmax.f32 %v953, 0.0
      %v1020 = vmax.f32 %v955, 0.0
      %v1021 = vmax.f32 %v957, 0.0
      %v1022 = vmax.f32 %v959, 0.0
      %v1023 = vmax.f32 %v963, 0.0
      %v1024 = vmax.f32 %v965, 0.0
      %v1025 = vmax.f32 %v967, 0.0
      %v1026 = vmax.f32 %v969, 0.0
      %v1027 = vmax.f32 %v973, 0.0
      %v1028 = vmax.f32 %v975, 0.0
      %v1029 = vmax.f32 %v977, 0.0
      %v1030 = vmax.f32 %v979, 0.0
      %v1031 = vmax.f32 %v983, 0.0
      %v1032 = vmax.f32 %v985, 0.0
      %v1033 = vmax.f32 %v987, 0.0
      %v1034 = vmax.f32 %v989, 0.0
      %v1035 = vmax.f32 %v993, 0.0
      %v1036 = vmax.f32 %v995, 0.0
      %v1037 = vmax.f32 %v997, 0.0
      %v1038 = vmax.f32 %v999, 0.0
      %v1039 = vmax.f32 %v1003, 0.0
      %v1040 = vmax.f32 %v1005, 0.0
      %v1041 = vmax.f32 %v1007, 0.0
      %v1042 = vmax.f32 %v1009, 0.0
      %v1043 = vmax.f32 %v1011, %v1013
      %v1044 = vrot.slane %v1043, 4
      %v1045 = vmax.f32 %v1043, %v1044
      %v1046 = vrot.slane %v1045, 2
      %v1047 = vmax.f32 %v1045, %v1046
      %v1048 = vrot.slane %v1047, 1
      %v1049 = vmax.f32 %v1047, %v1048
      %v1050 = vmax.f32 %v1012, %v1014
      %v1051 = vrot.slane %v1050, 4
      %v1052 = vmax.f32 %v1050, %v1051
      %v1053 = vrot.slane %v1052, 2
      %v1054 = vmax.f32 %v1052, %v1053
      %v1055 = vrot.slane %v1054, 1
      %v1056 = vmax.f32 %v1054, %v1055
      %v1057 = vmax.f32 %v1015, %v1017
      %v1058 = vrot.slane %v1057, 4
      %v1059 = vmax.f32 %v1057, %v1058
      %v1060 = vrot.slane %v1059, 2
      %v1061 = vmax.f32 %v1059, %v1060
      %v1062 = vrot.slane %v1061, 1
      %v1063 = vmax.f32 %v1061, %v1062
      %v1064 = vmax.f32 %v1016, %v1018
      %v1065 = vrot.slane %v1064, 4
      %v1066 = vmax.f32 %v1064, %v1065
      %v1067 = vrot.slane %v1066, 2
      %v1068 = vmax.f32 %v1066, %v1067
      %v1069 = vrot.slane %v1068, 1
      %v1070 = vmax.f32 %v1068, %v1069
      %v1071 = vmax.f32 %v1019, %v1021
      %v1072 = vrot.slane %v1071, 4
      %v1073 = vmax.f32 %v1071, %v1072
      %v1074 = vrot.slane %v1073, 2
      %v1075 = vmax.f32 %v1073, %v1074
      %v1076 = vrot.slane %v1075, 1
      %v1077 = vmax.f32 %v1075, %v1076
      %v1078 = vmax.f32 %v1020, %v1022
      %v1079 = vrot.slane %v1078, 4
      %v1080 = vmax.f32 %v1078, %v1079
      %v1081 = vrot.slane %v1080, 2
      %v1082 = vmax.f32 %v1080, %v1081
      %v1083 = vrot.slane %v1082, 1
      %v1084 = vmax.f32 %v1082, %v1083
      %v1085 = vmax.f32 %v1023, %v1025
      %v1086 = vrot.slane %v1085, 4
      %v1087 = vmax.f32 %v1085, %v1086
      %v1088 = vrot.slane %v1087, 2
      %v1089 = vmax.f32 %v1087, %v1088
      %v1090 = vrot.slane %v1089, 1
      %v1091 = vmax.f32 %v1089, %v1090
      %v1092 = vmax.f32 %v1024, %v1026
      %v1093 = vrot.slane %v1092, 4
      %v1094 = vmax.f32 %v1092, %v1093
      %v1095 = vrot.slane %v1094, 2
      %v1096 = vmax.f32 %v1094, %v1095
      %v1097 = vrot.slane %v1096, 1
      %v1098 = vmax.f32 %v1096, %v1097
      %v1099 = vmax.f32 %v1027, %v1029
      %v1100 = vrot.slane %v1099, 4
      %v1101 = vmax.f32 %v1099, %v1100
      %v1102 = vrot.slane %v1101, 2
      %v1103 = vmax.f32 %v1101, %v1102
      %v1104 = vrot.slane %v1103, 1
      %v1105 = vmax.f32 %v1103, %v1104
      %v1106 = vmax.f32 %v1028, %v1030
      %v1107 = vrot.slane %v1106, 4
      %v1108 = vmax.f32 %v1106, %v1107
      %v1109 = vrot.slane %v1108, 2
      %v1110 = vmax.f32 %v1108, %v1109
      %v1111 = vrot.slane %v1110, 1
      %v1112 = vmax.f32 %v1110, %v1111
      %v1113 = vmax.f32 %v1031, %v1033
      %v1114 = vrot.slane %v1113, 4
      %v1115 = vmax.f32 %v1113, %v1114
      %v1116 = vrot.slane %v1115, 2
      %v1117 = vmax.f32 %v1115, %v1116
      %v1118 = vrot.slane %v1117, 1
      %v1119 = vmax.f32 %v1117, %v1118
      %v1120 = vmax.f32 %v1032, %v1034
      %v1121 = vrot.slane %v1120, 4
      %v1122 = vmax.f32 %v1120, %v1121
      %v1123 = vrot.slane %v1122, 2
      %v1124 = vmax.f32 %v1122, %v1123
      %v1125 = vrot.slane %v1124, 1
      %v1126 = vmax.f32 %v1124, %v1125
      %v1127 = vmax.f32 %v1035, %v1037
      %v1128 = vrot.slane %v1127, 4
      %v1129 = vmax.f32 %v1127, %v1128
      %v1130 = vrot.slane %v1129, 2
      %v1131 = vmax.f32 %v1129, %v1130
      %v1132 = vrot.slane %v1131, 1
      %v1133 = vmax.f32 %v1131, %v1132
      %v1134 = vmax.f32 %v1036, %v1038
      %v1135 = vrot.slane %v1134, 4
      %v1136 = vmax.f32 %v1134, %v1135
      %v1137 = vrot.slane %v1136, 2
      %v1138 = vmax.f32 %v1136, %v1137
      %v1139 = vrot.slane %v1138, 1
      %v1140 = vmax.f32 %v1138, %v1139
      %v1141 = vmax.f32 %v1039, %v1041
      %v1142 = vrot.slane %v1141, 4
      %v1143 = vmax.f32 %v1141, %v1142
      %v1144 = vrot.slane %v1143, 2
      %v1145 = vmax.f32 %v1143, %v1144
      %v1146 = vrot.slane %v1145, 1
      %v1147 = vmax.f32 %v1145, %v1146
      %v1148 = vmax.f32 %v1040, %v1042
      %v1149 = vrot.slane %v1148, 4
      %v1150 = vmax.f32 %v1148, %v1149
      %v1151 = vrot.slane %v1150, 2
      %v1152 = vmax.f32 %v1150, %v1151
      %v1153 = vrot.slane %v1152, 1
      %v1154 = vmax.f32 %v1152, %v1153
      %v1155 = vpack.c.bf16 %v1049, %v1049
      %v1156 = vpack.c.bf16 %v1056, %v1056
      %v1157 = vpack.c.bf16 %v1063, %v1063
      %v1158 = vpack.c.bf16 %v1070, %v1070
      %v1159 = vpack.c.bf16 %v1077, %v1077
      %v1160 = vpack.c.bf16 %v1084, %v1084
      %v1161 = vpack.c.bf16 %v1091, %v1091
      %v1162 = vpack.c.bf16 %v1098, %v1098
      %v1163 = vpack.c.bf16 %v1105, %v1105
      %v1164 = vpack.c.bf16 %v1112, %v1112
      %v1165 = vpack.c.bf16 %v1119, %v1119
      %v1166 = vpack.c.bf16 %v1126, %v1126
      %v1167 = vpack.c.bf16 %v1133, %v1133
      %v1168 = vpack.c.bf16 %v1140, %v1140
      %v1169 = vpack.c.bf16 %v1147, %v1147
      %v1170 = vpack.c.bf16 %v1154, %v1154
      %v1187 = vunpack.c.l.b16 %v1155
      %v1188 = vunpack.c.l.b16 %v1156
      %v1189 = vunpack.c.l.b16 %v1157
      %v1190 = vunpack.c.l.b16 %v1158
      %v1191 = vunpack.c.l.b16 %v1159
      %v1192 = vunpack.c.l.b16 %v1160
      %v1193 = vunpack.c.l.b16 %v1161
      %v1194 = vunpack.c.l.b16 %v1162
      %v1195 = vunpack.c.l.b16 %v1163
      %v1196 = vunpack.c.l.b16 %v1164
      %v1197 = vunpack.c.l.b16 %v1165
      %v1198 = vunpack.c.l.b16 %v1166
      %v1199 = vunpack.c.l.b16 %v1167
      %v1200 = vunpack.c.l.b16 %v1168
      %v1201 = vunpack.c.l.b16 %v1169
      %v1202 = vunpack.c.l.b16 %v1170
      %v1203 = vpack.c.b16 %v1188, %v1187
      %v1204 = vpack.c.b16 %v1190, %v1189
      %v1205 = vpack.c.b16 %v1192, %v1191
      %v1206 = vpack.c.b16 %v1194, %v1193
      %v1207 = vpack.c.b16 %v1196, %v1195
      %v1208 = vpack.c.b16 %v1198, %v1197
      %v1209 = vpack.c.b16 %v1200, %v1199
      %v1210 = vpack.c.b16 %v1202, %v1201
      %v1211 = vunpack.c.l.b16 %v1203
      %v1212 = vunpack.c.h.b16 %v1203
      %v1213 = vunpack.c.l.b16 %v1204
      %v1214 = vunpack.c.h.b16 %v1204
      %v1215 = vunpack.c.l.b16 %v1205
      %v1216 = vunpack.c.h.b16 %v1205
      %v1217 = vunpack.c.l.b16 %v1206
      %v1218 = vunpack.c.h.b16 %v1206
      %v1219 = vunpack.c.l.b16 %v1207
      %v1220 = vunpack.c.h.b16 %v1207
      %v1221 = vunpack.c.l.b16 %v1208
      %v1222 = vunpack.c.h.b16 %v1208
      %v1223 = vunpack.c.l.b16 %v1209
      %v1224 = vunpack.c.h.b16 %v1209
      %v1225 = vunpack.c.l.b16 %v1210
      %v1226 = vunpack.c.h.b16 %v1210
      %vm1227 = vcmask 1041409
      %v1228 = vsel %vm1227, %v1213, %v1211
      %vm1229 = vcmask 1042434
      %v1230 = vsel %vm1229, %v1215, %v1228
      %vm1231 = vcmask 1043459
      %v1232 = vsel %vm1231, %v1217, %v1230
      %vm1233 = vcmask 1044484
      %v1234 = vsel %vm1233, %v1219, %v1232
      %vm1235 = vcmask 1045509
      %v1236 = vsel %vm1235, %v1221, %v1234
      %vm1237 = vcmask 1046534
      %v1238 = vsel %vm1237, %v1223, %v1236
      %vm1239 = vcmask 1047559
      %v1240 = vsel %vm1239, %v1225, %v1238
      %v1241 = vsel %vm1227, %v1214, %v1212
      %v1242 = vsel %vm1229, %v1216, %v1241
      %v1243 = vsel %vm1231, %v1218, %v1242
      %v1244 = vsel %vm1233, %v1220, %v1243
      %v1245 = vsel %vm1235, %v1222, %v1244
      %v1246 = vsel %vm1237, %v1224, %v1245
      %v1247 = vsel %vm1239, %v1226, %v1246
      %v1248 = vpack.c.b16 %v1247, %v1240
      %1250 = vst [vmem:[%s283] sm:$0xff] %v1248
      %p1251 = scmp.lt.s32.totalorder %s18, 1
      %s1252 = scalar_select %p1251, %s18, 1
      %s1253 = smul.addr %s1252, 2
      %s1254 = smul.addr %s1253, 4
      %s1255 = scalar_lea.vmem %s7, %s1254
      // Predicated region
      $region49: #{pointnet2_forward.10} parent=47 // pred_check
        %p1256 = pneg %p188
      $region50: #{pointnet2_forward.10} parent=47 // pred_check_branch
        %1258 = sbr.rel (%p1256) target = $region52
      $region51: #{pointnet2_forward.10} parent=47 // pred_region
        _
      $region52: #{pointnet2_forward.10} parent=47 // pred_fallthru
        _
    $region48: #{pointnet2_forward.10} parent=5 // pred_fallthru
      _
    %p1259 = scmp.le.s32.totalorder 2, %s13
    // Predicated region
    $region53: #{pointnet2_forward.10} parent=5 // pred_check
      %p1260 = pneg %p1259
    $region54: #{pointnet2_forward.10} parent=5 // pred_check_branch
      %1262 = sbr.rel (%p1260) target = $region56
    $region55: #{pointnet2_forward.10} parent=5 // pred_region
      %s1263 = ssub.s32 %s13, 2
      // Predicated region
      $region57: #{pointnet2_forward.10} parent=55 // pred_check
        %p1264 = pneg %p194
      $region58: #{pointnet2_forward.10} parent=55 // pred_check_branch
        %1266 = sbr.rel (%p1264) target = $region60
      $region59: #{pointnet2_forward.10} parent=55 // pred_region
        %p1267 = scmp.lt.s32.totalorder %s19, 1
        %s1268 = scalar_select %p1267, %s19, 1
        %s1269 = smul.addr %s1268, 2
        %s1270 = smul.addr %s1269, 4
        %s1271 = scalar_lea.vmem %s7, %s1270
      $region60: #{pointnet2_forward.10} parent=55 // pred_fallthru
        _
    $region56: #{pointnet2_forward.10} parent=5 // pred_fallthru
      _
  $region6: #{pointnet2_forward.10} parent=0 // loop_footer
    %s17 = sadd.s32 1, %s13
  $region7: #{pointnet2_forward.10} parent=0 // loop_footer_branch
    %12 = sbr.rel target = $region3
  $region8: #{pointnet2_forward.10} parent=0 // loop_exit
    _

// kernel: neg.24
$region0: #{neg.24}
  #allocation0 [shape = 's32[1]{0}', space=sflag, size = 0x4, scoped, tag = 'scoped memory for neg.24']
  %s0 = inlined_call_operand.vmem [shape: f32[2,8,4], index: 0, kind: input, shape index: {}]
  %s1 = inlined_call_operand.vmem [shape: f32[2,8,4], index: 1, kind: output, shape index: {}]
  %v2 = vld [vmem:[%s0] sm:$0xf]
  %3 = xla_tuple %v2
  %4 = xla_tuple %3
  %v5 = vxor.u32 %v2, 2147483648
  %6 = xla_tuple %v5
  %7 = vst [vmem:[%s1] sm:$0xf] %v5
  %s8 = scalar_lea.vmem %s0, 4
  %v9 = vld [vmem:[%s8] sm:$0xf]
  %10 = xla_tuple %v9
  %11 = xla_tuple %10
  %v12 = vxor.u32 %v9, 2147483648
  %13 = xla_tuple %v12
  %s14 = scalar_lea.vmem %s1, 4
  %15 = vst [vmem:[%s14] sm:$0xf] %v12

// kernel: pointnet2_forward.11
$region0: #{pointnet2_forward.11}
  #allocation0 [shape = 'u32[]', space=smem, size = 0x4, offset = 0x4, fixed_abs, tag = 'smem constant byte address 0x4 - core index']
  #allocation1 [shape = 'u32[144,128]{1,0:T(1,128)}', space=vmem, size = 0x12000, scoped, tag = 'internal scratch']
  %s0 = inlined_call_operand.vmem [shape: bf16[128,272], index: 0, kind: input, shape index: {}]
  %s1 = inlined_call_operand.vmem [shape: bf16[272,256], index: 1, kind: input, shape index: {}]
  %s2 = inlined_call_operand.vmem [shape: f32[1,256], index: 2, kind: input, shape index: {}]
  %s3 = inlined_call_operand.vmem [shape: bf16[256,256], index: 3, kind: input, shape index: {}]
  %s4 = inlined_call_operand.vmem [shape: f32[1,256], index: 4, kind: input, shape index: {}]
  %s5 = inlined_call_operand.vmem [shape: bf16[256,512], index: 5, kind: input, shape index: {}]
  %s6 = inlined_call_operand.vmem [shape: f32[1,512], index: 6, kind: input, shape index: {}]
  %s7 = inlined_call_operand.vmem [shape: bf16[8,512], index: 7, kind: output, shape index: {}]
  %s8 = sld [smem:[#allocation0]]
  $region38: #{pointnet2_forward.11} parent=0
    _
  %s10 = ssub.s32 1, %s8
  %s11 = scalar_select 0, %s10, %s8
  // Predicated region
  $region2: #{pointnet2_forward.11} parent=0 // pred_check
    _
  $region3: #{pointnet2_forward.11} parent=0 // pred_check_branch
    %13 = sbr.rel (0) target = $region5
  $region4: #{pointnet2_forward.11} parent=0 // pred_region
    _
  $region5: #{pointnet2_forward.11} parent=0 // pred_fallthru
    _
  // Predicated region
  $region6: #{pointnet2_forward.11} parent=0 // pred_check
    _
  $region7: #{pointnet2_forward.11} parent=0 // pred_check_branch
    %15 = sbr.rel (0) target = $region9
  $region8: #{pointnet2_forward.11} parent=0 // pred_region
    _
  $region9: #{pointnet2_forward.11} parent=0 // pred_fallthru
    _
  // Predicated region
  $region10: #{pointnet2_forward.11} parent=0 // pred_check
    _
  $region11: #{pointnet2_forward.11} parent=0 // pred_check_branch
    %17 = sbr.rel (0) target = $region13
  $region12: #{pointnet2_forward.11} parent=0 // pred_region
    _
  $region13: #{pointnet2_forward.11} parent=0 // pred_fallthru
    _
  // Predicated region
  $region14: #{pointnet2_forward.11} parent=0 // pred_check
    _
  $region15: #{pointnet2_forward.11} parent=0 // pred_check_branch
    %19 = sbr.rel (0) target = $region17
  $region16: #{pointnet2_forward.11} parent=0 // pred_region
    _
  $region17: #{pointnet2_forward.11} parent=0 // pred_fallthru
    _
  // Predicated region
  $region18: #{pointnet2_forward.11} parent=0 // pred_check
    _
  $region19: #{pointnet2_forward.11} parent=0 // pred_check_branch
    %21 = sbr.rel (0) target = $region21
  $region20: #{pointnet2_forward.11} parent=0 // pred_region
    _
  $region21: #{pointnet2_forward.11} parent=0 // pred_fallthru
    _
  // Predicated region
  $region22: #{pointnet2_forward.11} parent=0 // pred_check
    _
  $region23: #{pointnet2_forward.11} parent=0 // pred_check_branch
    %23 = sbr.rel (0) target = $region25
  $region24: #{pointnet2_forward.11} parent=0 // pred_region
    _
  $region25: #{pointnet2_forward.11} parent=0 // pred_fallthru
    _
  // Predicated region
  $region26: #{pointnet2_forward.11} parent=0 // pred_check
    _
  $region27: #{pointnet2_forward.11} parent=0 // pred_check_branch
    %25 = sbr.rel (0) target = $region29
  $region28: #{pointnet2_forward.11} parent=0 // pred_region
    _
  $region29: #{pointnet2_forward.11} parent=0 // pred_fallthru
    _
  %v27 = vld [vmem:[%s0] sm:$0xff]
  %v28 = vld [vmem:[%s0 + $0x8] sm:$0xf]
  %v29 = vld [vmem:[%s0 + $0xc] sm:$0xff]
  %v30 = vld [vmem:[%s0 + $0x14] sm:$0xf]
  %v31 = vld [vmem:[%s0 + $0x18] sm:$0xff]
  %v32 = vld [vmem:[%s0 + $0x20] sm:$0xf]
  %v33 = vld [vmem:[%s0 + $0x24] sm:$0xff]
  %v34 = vld [vmem:[%s0 + $0x2c] sm:$0xf]
  %v35 = vld [vmem:[%s0 + $0x30] sm:$0xff]
  %v36 = vld [vmem:[%s0 + $0x38] sm:$0xf]
  %v37 = vld [vmem:[%s0 + $0x3c] sm:$0xff]
  %v38 = vld [vmem:[%s0 + $0x44] sm:$0xf]
  %v39 = vld [vmem:[%s0 + $0x48] sm:$0xff]
  %v40 = vld [vmem:[%s0 + $0x50] sm:$0xf]
  %v41 = vld [vmem:[%s0 + $0x54] sm:$0xff]
  %v42 = vld [vmem:[%s0 + $0x5c] sm:$0xf]
  %v43 = vld [vmem:[%s0 + $0x60] sm:$0xff]
  %v44 = vld [vmem:[%s0 + $0x68] sm:$0xf]
  %v45 = vld [vmem:[%s0 + $0x6c] sm:$0xff]
  %v46 = vld [vmem:[%s0 + $0x74] sm:$0xf]
  %v47 = vld [vmem:[%s0 + $0x78] sm:$0xff]
  %v48 = vld [vmem:[%s0 + $0x80] sm:$0xf]
  %v49 = vld [vmem:[%s0 + $0x84] sm:$0xff]
  %v50 = vld [vmem:[%s0 + $0x8c] sm:$0xf]
  %v51 = vld [vmem:[%s0 + $0x90] sm:$0xff]
  %v52 = vld [vmem:[%s0 + $0x98] sm:$0xf]
  %v53 = vld [vmem:[%s0 + $0x9c] sm:$0xff]
  %v54 = vld [vmem:[%s0 + $0xa4] sm:$0xf]
  %v55 = vld [vmem:[%s0 + $0xa8] sm:$0xff]
  %v56 = vld [vmem:[%s0 + $0xb0] sm:$0xf]
  %v57 = vld [vmem:[%s0 + $0xb4] sm:$0xff]
  %v58 = vld [vmem:[%s0 + $0xbc] sm:$0xf]
  %v59 = vld [vmem:[%s1] sm:$0xff]
  %v60 = vld [vmem:[%s1 + $0x8] sm:$0xff]
  %v61 = vld [vmem:[%s1 + $0x10] sm:$0xff]
  %v62 = vld [vmem:[%s1 + $0x18] sm:$0xff]
  %v63 = vld [vmem:[%s1 + $0x20] sm:$0xff]
  %v64 = vld [vmem:[%s1 + $0x28] sm:$0xff]
  %v65 = vld [vmem:[%s1 + $0x30] sm:$0xff]
  %v66 = vld [vmem:[%s1 + $0x38] sm:$0xff]
  %v67 = vld [vmem:[%s1 + $0x40] sm:$0xff]
  %v68 = vld [vmem:[%s1 + $0x48] sm:$0xff]
  %v69 = vld [vmem:[%s1 + $0x50] sm:$0xff]
  %v70 = vld [vmem:[%s1 + $0x58] sm:$0xff]
  %v71 = vld [vmem:[%s1 + $0x60] sm:$0xff]
  %v72 = vld [vmem:[%s1 + $0x68] sm:$0xff]
  %v73 = vld [vmem:[%s1 + $0x70] sm:$0xff]
  %v74 = vld [vmem:[%s1 + $0x78] sm:$0xff]
  %v75 = vld [vmem:[%s1 + $0x80] sm:$0xff]
  %v76 = vld [vmem:[%s1 + $0x88] sm:$0xff]
  %v77 = vld [vmem:[%s1 + $0x90] sm:$0xff]
  %v78 = vld [vmem:[%s1 + $0x98] sm:$0xff]
  %v79 = vld [vmem:[%s1 + $0xa0] sm:$0xff]
  %v80 = vld [vmem:[%s1 + $0xa8] sm:$0xff]
  %v81 = vld [vmem:[%s1 + $0xb0] sm:$0xff]
  %v82 = vld [vmem:[%s1 + $0xb8] sm:$0xff]
  %v83 = vld [vmem:[%s1 + $0xc0] sm:$0xff]
  %v84 = vld [vmem:[%s1 + $0xc8] sm:$0xff]
  %v85 = vld [vmem:[%s1 + $0xd0] sm:$0xff]
  %v86 = vld [vmem:[%s1 + $0xd8] sm:$0xff]
  %v87 = vld [vmem:[%s1 + $0xe0] sm:$0xff]
  %v88 = vld [vmem:[%s1 + $0xe8] sm:$0xff]
  %v89 = vld [vmem:[%s1 + $0xf0] sm:$0xff]
  %v90 = vld [vmem:[%s1 + $0xf8] sm:$0xff]
  %v91 = vld [vmem:[%s1 + $0x100] sm:$0xff]
  %v92 = vld [vmem:[%s1 + $0x108] sm:$0xff]
  %v93 = vld [vmem:[%s2] sm:$0x3]
  %v95 = vlaneseq
  %v96 = vshrl.u32 %v95, 7
  %v97 = vsub.s32 0, %v96
  %v98 = vrot.slane %v93, %v97
  %v99 = vlaneseq
  %v100 = vshrl.u32 %v99, 7
  %v101 = vsub.s32 1, %v100
  %v102 = vrot.slane %v93, %v101
  %v137 = vunpack.c.l.b16 %v27
  %v138 = vunpack.c.h.b16 %v27
  %v139 = vunpack.c.l.b16 %v28
  %v140 = vunpack.c.l.b16 %v29
  %v141 = vunpack.c.h.b16 %v29
  %v142 = vunpack.c.l.b16 %v30
  %v143 = vunpack.c.l.b16 %v31
  %v144 = vunpack.c.h.b16 %v31
  %v145 = vunpack.c.l.b16 %v32
  %v146 = vunpack.c.l.b16 %v33
  %v147 = vunpack.c.h.b16 %v33
  %v148 = vunpack.c.l.b16 %v34
  %v149 = vunpack.c.l.b16 %v35
  %v150 = vunpack.c.h.b16 %v35
  %v151 = vunpack.c.l.b16 %v36
  %v152 = vunpack.c.l.b16 %v37
  %v153 = vunpack.c.h.b16 %v37
  %v154 = vunpack.c.l.b16 %v38
  %v155 = vunpack.c.l.b16 %v39
  %v156 = vunpack.c.h.b16 %v39
  %v157 = vunpack.c.l.b16 %v40
  %v158 = vunpack.c.l.b16 %v41
  %v159 = vunpack.c.h.b16 %v41
  %v160 = vunpack.c.l.b16 %v42
  %v161 = vunpack.c.l.b16 %v43
  %v162 = vunpack.c.h.b16 %v43
  %v163 = vunpack.c.l.b16 %v44
  %v164 = vunpack.c.l.b16 %v45
  %v165 = vunpack.c.h.b16 %v45
  %v166 = vunpack.c.l.b16 %v46
  %v167 = vunpack.c.l.b16 %v47
  %v168 = vunpack.c.h.b16 %v47
  %v169 = vunpack.c.l.b16 %v48
  %v170 = vunpack.c.l.b16 %v49
  %v171 = vunpack.c.h.b16 %v49
  %v172 = vunpack.c.l.b16 %v50
  %v173 = vunpack.c.l.b16 %v51
  %v174 = vunpack.c.h.b16 %v51
  %v175 = vunpack.c.l.b16 %v52
  %v176 = vunpack.c.l.b16 %v53
  %v177 = vunpack.c.h.b16 %v53
  %v178 = vunpack.c.l.b16 %v54
  %v179 = vunpack.c.l.b16 %v55
  %v180 = vunpack.c.h.b16 %v55
  %v181 = vunpack.c.l.b16 %v56
  %v182 = vunpack.c.l.b16 %v57
  %v183 = vunpack.c.h.b16 %v57
  %v184 = vunpack.c.l.b16 %v58
  %v185 = vpack.c.b16 %v140, %v137
  %v186 = vpack.c.b16 %v141, %v138
  %v187 = vpack.c.b16 %v142, %v139
  %v188 = vpack.c.b16 %v146, %v143
  %v189 = vpack.c.b16 %v147, %v144
  %v190 = vpack.c.b16 %v148, %v145
  %v191 = vpack.c.b16 %v152, %v149
  %v192 = vpack.c.b16 %v153, %v150
  %v193 = vpack.c.b16 %v154, %v151
  %v194 = vpack.c.b16 %v158, %v155
  %v195 = vpack.c.b16 %v159, %v156
  %v196 = vpack.c.b16 %v160, %v157
  %v197 = vpack.c.b16 %v164, %v161
  %v198 = vpack.c.b16 %v165, %v162
  %v199 = vpack.c.b16 %v166, %v163
  %v200 = vpack.c.b16 %v170, %v167
  %v201 = vpack.c.b16 %v171, %v168
  %v202 = vpack.c.b16 %v172, %v169
  %v203 = vpack.c.b16 %v176, %v173
  %v204 = vpack.c.b16 %v177, %v174
  %v205 = vpack.c.b16 %v178, %v175
  %v206 = vpack.c.b16 %v182, %v179
  %v207 = vpack.c.b16 %v183, %v180
  %v208 = vpack.c.b16 %v184, %v181
  %v259 = vunpack.c.l.b16 %v59
  %v260 = vunpack.c.h.b16 %v59
  %v261 = vunpack.c.l.b16 %v60
  %v262 = vunpack.c.h.b16 %v60
  %v263 = vunpack.c.l.b16 %v61
  %v264 = vunpack.c.h.b16 %v61
  %v265 = vunpack.c.l.b16 %v62
  %v266 = vunpack.c.h.b16 %v62
  %v267 = vunpack.c.l.b16 %v63
  %v268 = vunpack.c.h.b16 %v63
  %v269 = vunpack.c.l.b16 %v64
  %v270 = vunpack.c.h.b16 %v64
  %v271 = vunpack.c.l.b16 %v65
  %v272 = vunpack.c.h.b16 %v65
  %v273 = vunpack.c.l.b16 %v66
  %v274 = vunpack.c.h.b16 %v66
  %v275 = vunpack.c.l.b16 %v67
  %v276 = vunpack.c.h.b16 %v67
  %v277 = vunpack.c.l.b16 %v68
  %v278 = vunpack.c.h.b16 %v68
  %v279 = vunpack.c.l.b16 %v69
  %v280 = vunpack.c.h.b16 %v69
  %v281 = vunpack.c.l.b16 %v70
  %v282 = vunpack.c.h.b16 %v70
  %v283 = vunpack.c.l.b16 %v71
  %v284 = vunpack.c.h.b16 %v71
  %v285 = vunpack.c.l.b16 %v72
  %v286 = vunpack.c.h.b16 %v72
  %v287 = vunpack.c.l.b16 %v73
  %v288 = vunpack.c.h.b16 %v73
  %v289 = vunpack.c.l.b16 %v74
  %v290 = vunpack.c.h.b16 %v74
  %v291 = vunpack.c.l.b16 %v75
  %v292 = vunpack.c.h.b16 %v75
  %v293 = vunpack.c.l.b16 %v76
  %v294 = vunpack.c.h.b16 %v76
  %v295 = vunpack.c.l.b16 %v77
  %v296 = vunpack.c.h.b16 %v77
  %v297 = vunpack.c.l.b16 %v78
  %v298 = vunpack.c.h.b16 %v78
  %v299 = vunpack.c.l.b16 %v79
  %v300 = vunpack.c.h.b16 %v79
  %v301 = vunpack.c.l.b16 %v80
  %v302 = vunpack.c.h.b16 %v80
  %v303 = vunpack.c.l.b16 %v81
  %v304 = vunpack.c.h.b16 %v81
  %v305 = vunpack.c.l.b16 %v82
  %v306 = vunpack.c.h.b16 %v82
  %v307 = vunpack.c.l.b16 %v83
  %v308 = vunpack.c.h.b16 %v83
  %v309 = vunpack.c.l.b16 %v84
  %v310 = vunpack.c.h.b16 %v84
  %v311 = vunpack.c.l.b16 %v85
  %v312 = vunpack.c.h.b16 %v85
  %v313 = vunpack.c.l.b16 %v86
  %v314 = vunpack.c.h.b16 %v86
  %v315 = vunpack.c.l.b16 %v87
  %v316 = vunpack.c.h.b16 %v87
  %v317 = vunpack.c.l.b16 %v88
  %v318 = vunpack.c.h.b16 %v88
  %v319 = vunpack.c.l.b16 %v89
  %v320 = vunpack.c.h.b16 %v89
  %v321 = vunpack.c.l.b16 %v90
  %v322 = vunpack.c.h.b16 %v90
  %v323 = vunpack.c.l.b16 %v91
  %v324 = vunpack.c.h.b16 %v91
  %v325 = vunpack.c.l.b16 %v92
  %v326 = vunpack.c.h.b16 %v92
  %v327 = vpack.c.b16 %v261, %v259
  %v328 = vpack.c.b16 %v262, %v260
  %v329 = vpack.c.b16 %v265, %v263
  %v330 = vpack.c.b16 %v266, %v264
  %v331 = vpack.c.b16 %v269, %v267
  %v332 = vpack.c.b16 %v270, %v268
  %v333 = vpack.c.b16 %v273, %v271
  %v334 = vpack.c.b16 %v274, %v272
  %v335 = vpack.c.b16 %v277, %v275
  %v336 = vpack.c.b16 %v278, %v276
  %v337 = vpack.c.b16 %v281, %v279
  %v338 = vpack.c.b16 %v282, %v280
  %v339 = vpack.c.b16 %v285, %v283
  %v340 = vpack.c.b16 %v286, %v284
  %v341 = vpack.c.b16 %v289, %v287
  %v342 = vpack.c.b16 %v290, %v288
  %v343 = vpack.c.b16 %v293, %v291
  %v344 = vpack.c.b16 %v294, %v292
  %v345 = vpack.c.b16 %v297, %v295
  %v346 = vpack.c.b16 %v298, %v296
  %v347 = vpack.c.b16 %v301, %v299
  %v348 = vpack.c.b16 %v302, %v300
  %v349 = vpack.c.b16 %v305, %v303
  %v350 = vpack.c.b16 %v306, %v304
  %v351 = vpack.c.b16 %v309, %v307
  %v352 = vpack.c.b16 %v310, %v308
  %v353 = vpack.c.b16 %v313, %v311
  %v354 = vpack.c.b16 %v314, %v312
  %v355 = vpack.c.b16 %v317, %v315
  %v356 = vpack.c.b16 %v318, %v316
  %v357 = vpack.c.b16 %v321, %v319
  %v358 = vpack.c.b16 %v322, %v320
  %v359 = vpack.c.b16 %v325, %v323
  %v360 = vpack.c.b16 %v326, %v324
  %vm395 = vcmask 130048
  %v397 = vsel %vm395, %v187, 0
  %v400 = vsel %vm395, %v190, 0
  %v403 = vsel %vm395, %v193, 0
  %v406 = vsel %vm395, %v196, 0
  %v409 = vsel %vm395, %v199, 0
  %v412 = vsel %vm395, %v202, 0
  %v415 = vsel %vm395, %v205, 0
  %v418 = vsel %vm395, %v208, 0
  %420 = vmatprep.subr.bf16.mxu0 %v342
  %421 = vmatpush1.bf16.msra.mxu0 %v341
  %422 = vmatprep.subr.bf16.mxu0 %v340
  %423 = vmatpush1.bf16.msra.mxu0 %v339
  %424 = vmatprep.subr.bf16.mxu0 %v338
  %425 = vmatpush1.bf16.msra.mxu0 %v337
  %426 = vmatprep.subr.bf16.mxu0 %v336
  %427 = vmatpush1.bf16.msra.mxu0 %v335
  %428 = vmatprep.subr.bf16.mxu0 %v334
  %429 = vmatpush1.bf16.msra.mxu0 %v333
  %430 = vmatprep.subr.bf16.mxu0 %v332
  %431 = vmatpush1.bf16.msra.mxu0 %v331
  %432 = vmatprep.subr.bf16.mxu0 %v330
  %433 = vmatpush1.bf16.msra.mxu0 %v329
  %434 = vmatprep.subr.bf16.mxu0 %v328
  %435 = vmatpush1.bf16.msra.mxu0 %v327
  %436 = vmatprep.subr.bf16.mxu0 %v358
  %437 = vmatpush2.bf16.msra.mxu0 %v357
  %438 = vmatprep.subr.bf16.mxu0 %v356
  %439 = vmatpush2.bf16.msra.mxu0 %v355
  %440 = vmatprep.subr.bf16.mxu0 %v354
  %441 = vmatpush2.bf16.msra.mxu0 %v353
  %442 = vmatprep.subr.bf16.mxu0 %v352
  %443 = vmatpush2.bf16.msra.mxu0 %v351
  %444 = vmatprep.subr.bf16.mxu0 %v350
  %445 = vmatpush2.bf16.msra.mxu0 %v349
  %446 = vmatprep.subr.bf16.mxu0 %v348
  %447 = vmatpush2.bf16.msra.mxu0 %v347
  %448 = vmatprep.subr.bf16.mxu0 %v346
  %449 = vmatpush2.bf16.msra.mxu0 %v345
  %450 = vmatprep.subr.bf16.mxu0 %v344
  %451 = vmatpush2.bf16.msra.mxu0 %v343
  %452 = vmatprep.mubr.bf16.mxu0 %v186
  %453 = vmatmul.mubr.bf16.gmra.mxu0 %v185
  %v454 = vpop.f32.mrf.mxu0
  %v455 = vadd.f32 %v98, %v454
  %v456 = vpop.f32.mrf.mxu0
  %v457 = vadd.f32 %v102, %v456
  %v458 = vpop.f32.mrf.mxu0
  %v459 = vadd.f32 %v98, %v458
  %v460 = vpop.f32.mrf.mxu0
  %v461 = vadd.f32 %v102, %v460
  %462 = vmatprep.mubr.bf16.mxu0 %v189
  %463 = vmatmul.mubr.bf16.gmra.mxu0 %v188
  %v464 = vpop.f32.mrf.mxu0
  %v465 = vadd.f32 %v98, %v464
  %v466 = vpop.f32.mrf.mxu0
  %v467 = vadd.f32 %v102, %v466
  %v468 = vpop.f32.mrf.mxu0
  %v469 = vadd.f32 %v98, %v468
  %v470 = vpop.f32.mrf.mxu0
  %v471 = vadd.f32 %v102, %v470
  %472 = vmatprep.mubr.bf16.mxu0 %v192
  %473 = vmatmul.mubr.bf16.gmra.mxu0 %v191
  %v474 = vpop.f32.mrf.mxu0
  %v475 = vadd.f32 %v98, %v474
  %v476 = vpop.f32.mrf.mxu0
  %v477 = vadd.f32 %v102, %v476
  %v478 = vpop.f32.mrf.mxu0
  %v479 = vadd.f32 %v98, %v478
  %v480 = vpop.f32.mrf.mxu0
  %v481 = vadd.f32 %v102, %v480
  %482 = vmatprep.mubr.bf16.mxu0 %v195
  %483 = vmatmul.mubr.bf16.gmra.mxu0 %v194
  %v484 = vpop.f32.mrf.mxu0
  %v485 = vadd.f32 %v98, %v484
  %v486 = vpop.f32.mrf.mxu0
  %v487 = vadd.f32 %v102, %v486
  %v488 = vpop.f32.mrf.mxu0
  %v489 = vadd.f32 %v98, %v488
  %v490 = vpop.f32.mrf.mxu0
  %v491 = vadd.f32 %v102, %v490
  %492 = vmatprep.mubr.bf16.mxu0 %v198
  %493 = vmatmul.mubr.bf16.gmra.mxu0 %v197
  %v494 = vpop.f32.mrf.mxu0
  %v495 = vadd.f32 %v98, %v494
  %v496 = vpop.f32.mrf.mxu0
  %v497 = vadd.f32 %v102, %v496
  %v498 = vpop.f32.mrf.mxu0
  %v499 = vadd.f32 %v98, %v498
  %v500 = vpop.f32.mrf.mxu0
  %v501 = vadd.f32 %v102, %v500
  %502 = vmatprep.mubr.bf16.mxu0 %v201
  %503 = vmatmul.mubr.bf16.gmra.mxu0 %v200
  %v504 = vpop.f32.mrf.mxu0
  %v505 = vadd.f32 %v98, %v504
  %v506 = vpop.f32.mrf.mxu0
  %v507 = vadd.f32 %v102, %v506
  %v508 = vpop.f32.mrf.mxu0
  %v509 = vadd.f32 %v98, %v508
  %v510 = vpop.f32.mrf.mxu0
  %v511 = vadd.f32 %v102, %v510
  %512 = vmatprep.mubr.bf16.mxu0 %v204
  %513 = vmatmul.mubr.bf16.gmra.mxu0 %v203
  %v514 = vpop.f32.mrf.mxu0
  %v515 = vadd.f32 %v98, %v514
  %v516 = vpop.f32.mrf.mxu0
  %v517 = vadd.f32 %v102, %v516
  %v518 = vpop.f32.mrf.mxu0
  %v519 = vadd.f32 %v98, %v518
  %v520 = vpop.f32.mrf.mxu0
  %v521 = vadd.f32 %v102, %v520
  %522 = vmatprep.mubr.bf16.mxu0 %v207
  %523 = vmatmul.mubr.bf16.gmra.mxu0 %v206
  %v524 = vpop.f32.mrf.mxu0
  %v525 = vadd.f32 %v98, %v524
  %v526 = vpop.f32.mrf.mxu0
  %v527 = vadd.f32 %v102, %v526
  %v528 = vpop.f32.mrf.mxu0
  %v529 = vadd.f32 %v98, %v528
  %v530 = vpop.f32.mrf.mxu0
  %v531 = vadd.f32 %v102, %v530
  %532 = vdwg.mxu0
  %533 = vmatprep.subr.bf16.mxu0 0
  %534 = vmatpush1.bf16.msra.mxu0 0
  %535 = vmatprep.subr.bf16.mxu0 0
  %536 = vmatpush1.bf16.msra.mxu0 0
  %537 = vmatprep.subr.bf16.mxu0 0
  %538 = vmatpush1.bf16.msra.mxu0 0
  %539 = vmatprep.subr.bf16.mxu0 0
  %540 = vmatpush1.bf16.msra.mxu0 0
  %541 = vmatprep.subr.bf16.mxu0 0
  %542 = vmatpush1.bf16.msra.mxu0 0
  %543 = vmatprep.subr.bf16.mxu0 0
  %544 = vmatpush1.bf16.msra.mxu0 0
  %545 = vmatprep.subr.bf16.mxu0 0
  %546 = vmatpush1.bf16.msra.mxu0 0
  %547 = vmatprep.subr.bf16.mxu0 %v360
  %548 = vmatpush1.bf16.msra.mxu0 %v359
  %549 = vmatprep.subr.bf16.mxu0 0
  %550 = vmatpush2.bf16.msra.mxu0 0
  %551 = vmatprep.subr.bf16.mxu0 0
  %552 = vmatpush2.bf16.msra.mxu0 0
  %553 = vmatprep.subr.bf16.mxu0 0
  %554 = vmatpush2.bf16.msra.mxu0 0
  %555 = vmatprep.subr.bf16.mxu0 0
  %556 = vmatpush2.bf16.msra.mxu0 0
  %557 = vmatprep.subr.bf16.mxu0 0
  %558 = vmatpush2.bf16.msra.mxu0 0
  %559 = vmatprep.subr.bf16.mxu0 0
  %560 = vmatpush2.bf16.msra.mxu0 0
  %561 = vmatprep.subr.bf16.mxu0 0
  %562 = vmatpush2.bf16.msra.mxu0 0
  %563 = vmatprep.subr.bf16.mxu0 0
  %564 = vmatpush2.bf16.msra.mxu0 0
  %565 = vmatprep.mubr.bf16.mxu0 0
  %566 = vmatmul.mubr.bf16.gmra.mxu0 %v397
  %v567 = vpop.f32.mrf.mxu0
  %v568 = vadd.f32 %v455, %v567
  %v569 = vpop.f32.mrf.mxu0
  %v570 = vadd.f32 %v457, %v569
  %v571 = vpop.f32.mrf.mxu0
  %v572 = vadd.f32 %v459, %v571
  %v573 = vpop.f32.mrf.mxu0
  %v574 = vadd.f32 %v461, %v573
  %575 = vmatprep.mubr.bf16.mxu0 0
  %576 = vmatmul.mubr.bf16.gmra.mxu0 %v400
  %v577 = vpop.f32.mrf.mxu0
  %v578 = vadd.f32 %v465, %v577
  %v579 = vpop.f32.mrf.mxu0
  %v580 = vadd.f32 %v467, %v579
  %v581 = vpop.f32.mrf.mxu0
  %v582 = vadd.f32 %v469, %v581
  %v583 = vpop.f32.mrf.mxu0
  %v584 = vadd.f32 %v471, %v583
  %585 = vmatprep.mubr.bf16.mxu0 0
  %586 = vmatmul.mubr.bf16.gmra.mxu0 %v403
  %v587 = vpop.f32.mrf.mxu0
  %v588 = vadd.f32 %v475, %v587
  %v589 = vpop.f32.mrf.mxu0
  %v590 = vadd.f32 %v477, %v589
  %v591 = vpop.f32.mrf.mxu0
  %v592 = vadd.f32 %v479, %v591
  %v593 = vpop.f32.mrf.mxu0
  %v594 = vadd.f32 %v481, %v593
  %595 = vmatprep.mubr.bf16.mxu0 0
  %596 = vmatmul.mubr.bf16.gmra.mxu0 %v406
  %v597 = vpop.f32.mrf.mxu0
  %v598 = vadd.f32 %v485, %v597
  %v599 = vpop.f32.mrf.mxu0
  %v600 = vadd.f32 %v487, %v599
  %v601 = vpop.f32.mrf.mxu0
  %v602 = vadd.f32 %v489, %v601
  %v603 = vpop.f32.mrf.mxu0
  %v604 = vadd.f32 %v491, %v603
  %605 = vmatprep.mubr.bf16.mxu0 0
  %606 = vmatmul.mubr.bf16.gmra.mxu0 %v409
  %v607 = vpop.f32.mrf.mxu0
  %v608 = vadd.f32 %v495, %v607
  %v609 = vpop.f32.mrf.mxu0
  %v610 = vadd.f32 %v497, %v609
  %v611 = vpop.f32.mrf.mxu0
  %v612 = vadd.f32 %v499, %v611
  %v613 = vpop.f32.mrf.mxu0
  %v614 = vadd.f32 %v501, %v613
  %615 = vmatprep.mubr.bf16.mxu0 0
  %616 = vmatmul.mubr.bf16.gmra.mxu0 %v412
  %v617 = vpop.f32.mrf.mxu0
  %v618 = vadd.f32 %v505, %v617
  %v619 = vpop.f32.mrf.mxu0
  %v620 = vadd.f32 %v507, %v619
  %v621 = vpop.f32.mrf.mxu0
  %v622 = vadd.f32 %v509, %v621
  %v623 = vpop.f32.mrf.mxu0
  %v624 = vadd.f32 %v511, %v623
  %625 = vmatprep.mubr.bf16.mxu0 0
  %626 = vmatmul.mubr.bf16.gmra.mxu0 %v415
  %v627 = vpop.f32.mrf.mxu0
  %v628 = vadd.f32 %v515, %v627
  %v629 = vpop.f32.mrf.mxu0
  %v630 = vadd.f32 %v517, %v629
  %v631 = vpop.f32.mrf.mxu0
  %v632 = vadd.f32 %v519, %v631
  %v633 = vpop.f32.mrf.mxu0
  %v634 = vadd.f32 %v521, %v633
  %635 = vmatprep.mubr.bf16.mxu0 0
  %636 = vmatmul.mubr.bf16.gmra.mxu0 %v418
  %v637 = vpop.f32.mrf.mxu0
  %v638 = vadd.f32 %v525, %v637
  %v639 = vpop.f32.mrf.mxu0
  %v640 = vadd.f32 %v527, %v639
  %v641 = vpop.f32.mrf.mxu0
  %v642 = vadd.f32 %v529, %v641
  %v643 = vpop.f32.mrf.mxu0
  %v644 = vadd.f32 %v531, %v643
  %645 = vdwg.mxu0
  %v646 = vmax.f32 %v568, 0.0
  %v647 = vmax.f32 %v570, 0.0
  %v648 = vmax.f32 %v572, 0.0
  %v649 = vmax.f32 %v574, 0.0
  %v650 = vmax.f32 %v578, 0.0
  %v651 = vmax.f32 %v580, 0.0
  %v652 = vmax.f32 %v582, 0.0
  %v653 = vmax.f32 %v584, 0.0
  %v654 = vmax.f32 %v588, 0.0
  %v655 = vmax.f32 %v590, 0.0
  %v656 = vmax.f32 %v592, 0.0
  %v657 = vmax.f32 %v594, 0.0
  %v658 = vmax.f32 %v598, 0.0
  %v659 = vmax.f32 %v600, 0.0
  %v660 = vmax.f32 %v602, 0.0
  %v661 = vmax.f32 %v604, 0.0
  %v662 = vmax.f32 %v608, 0.0
  %v663 = vmax.f32 %v610, 0.0
  %v664 = vmax.f32 %v612, 0.0
  %v665 = vmax.f32 %v614, 0.0
  %v666 = vmax.f32 %v618, 0.0
  %v667 = vmax.f32 %v620, 0.0
  %v668 = vmax.f32 %v622, 0.0
  %v669 = vmax.f32 %v624, 0.0
  %v670 = vmax.f32 %v628, 0.0
  %v671 = vmax.f32 %v630, 0.0
  %v672 = vmax.f32 %v632, 0.0
  %v673 = vmax.f32 %v634, 0.0
  %v674 = vmax.f32 %v638, 0.0
  %v675 = vmax.f32 %v640, 0.0
  %v676 = vmax.f32 %v642, 0.0
  %v677 = vmax.f32 %v644, 0.0
  %v678 = vpack.c.bf16 %v648, %v646
  %v679 = vpack.c.bf16 %v649, %v647
  %v680 = vpack.c.bf16 %v652, %v650
  %v681 = vpack.c.bf16 %v653, %v651
  %v682 = vpack.c.bf16 %v656, %v654
  %v683 = vpack.c.bf16 %v657, %v655
  %v684 = vpack.c.bf16 %v660, %v658
  %v685 = vpack.c.bf16 %v661, %v659
  %v686 = vpack.c.bf16 %v664, %v662
  %v687 = vpack.c.bf16 %v665, %v663
  %v688 = vpack.c.bf16 %v668, %v666
  %v689 = vpack.c.bf16 %v669, %v667
  %v690 = vpack.c.bf16 %v672, %v670
  %v691 = vpack.c.bf16 %v673, %v671
  %v692 = vpack.c.bf16 %v676, %v674
  %v693 = vpack.c.bf16 %v677, %v675
  %v694 = vld [vmem:[%s3] sm:$0xff]
  %v695 = vld [vmem:[%s3 + $0x8] sm:$0xff]
  %v696 = vld [vmem:[%s3 + $0x10] sm:$0xff]
  %v697 = vld [vmem:[%s3 + $0x18] sm:$0xff]
  %v698 = vld [vmem:[%s3 + $0x20] sm:$0xff]
  %v699 = vld [vmem:[%s3 + $0x28] sm:$0xff]
  %v700 = vld [vmem:[%s3 + $0x30] sm:$0xff]
  %v701 = vld [vmem:[%s3 + $0x38] sm:$0xff]
  %v702 = vld [vmem:[%s3 + $0x40] sm:$0xff]
  %v703 = vld [vmem:[%s3 + $0x48] sm:$0xff]
  %v704 = vld [vmem:[%s3 + $0x50] sm:$0xff]
  %v705 = vld [vmem:[%s3 + $0x58] sm:$0xff]
  %v706 = vld [vmem:[%s3 + $0x60] sm:$0xff]
  %v707 = vld [vmem:[%s3 + $0x68] sm:$0xff]
  %v708 = vld [vmem:[%s3 + $0x70] sm:$0xff]
  %v709 = vld [vmem:[%s3 + $0x78] sm:$0xff]
  %v710 = vld [vmem:[%s3 + $0x80] sm:$0xff]
  %v711 = vld [vmem:[%s3 + $0x88] sm:$0xff]
  %v712 = vld [vmem:[%s3 + $0x90] sm:$0xff]
  %v713 = vld [vmem:[%s3 + $0x98] sm:$0xff]
  %v714 = vld [vmem:[%s3 + $0xa0] sm:$0xff]
  %v715 = vld [vmem:[%s3 + $0xa8] sm:$0xff]
  %v716 = vld [vmem:[%s3 + $0xb0] sm:$0xff]
  %v717 = vld [vmem:[%s3 + $0xb8] sm:$0xff]
  %v718 = vld [vmem:[%s3 + $0xc0] sm:$0xff]
  %v719 = vld [vmem:[%s3 + $0xc8] sm:$0xff]
  %v720 = vld [vmem:[%s3 + $0xd0] sm:$0xff]
  %v721 = vld [vmem:[%s3 + $0xd8] sm:$0xff]
  %v722 = vld [vmem:[%s3 + $0xe0] sm:$0xff]
  %v723 = vld [vmem:[%s3 + $0xe8] sm:$0xff]
  %v724 = vld [vmem:[%s3 + $0xf0] sm:$0xff]
  %v725 = vld [vmem:[%s3 + $0xf8] sm:$0xff]
  %v726 = vld [vmem:[%s4] sm:$0x3]
  %v728 = vlaneseq
  %v729 = vshrl.u32 %v728, 7
  %v730 = vsub.s32 0, %v729
  %v731 = vrot.slane %v726, %v730
  %v732 = vlaneseq
  %v733 = vshrl.u32 %v732, 7
  %v734 = vsub.s32 1, %v733
  %v735 = vrot.slane %v726, %v734
  %v770 = vunpack.c.l.b16 %v694
  %v771 = vunpack.c.h.b16 %v694
  %v772 = vunpack.c.l.b16 %v695
  %v773 = vunpack.c.h.b16 %v695
  %v774 = vunpack.c.l.b16 %v696
  %v775 = vunpack.c.h.b16 %v696
  %v776 = vunpack.c.l.b16 %v697
  %v777 = vunpack.c.h.b16 %v697
  %v778 = vunpack.c.l.b16 %v698
  %v779 = vunpack.c.h.b16 %v698
  %v780 = vunpack.c.l.b16 %v699
  %v781 = vunpack.c.h.b16 %v699
  %v782 = vunpack.c.l.b16 %v700
  %v783 = vunpack.c.h.b16 %v700
  %v784 = vunpack.c.l.b16 %v701
  %v785 = vunpack.c.h.b16 %v701
  %v786 = vunpack.c.l.b16 %v702
  %v787 = vunpack.c.h.b16 %v702
  %v788 = vunpack.c.l.b16 %v703
  %v789 = vunpack.c.h.b16 %v703
  %v790 = vunpack.c.l.b16 %v704
  %v791 = vunpack.c.h.b16 %v704
  %v792 = vunpack.c.l.b16 %v705
  %v793 = vunpack.c.h.b16 %v705
  %v794 = vunpack.c.l.b16 %v706
  %v795 = vunpack.c.h.b16 %v706
  %v796 = vunpack.c.l.b16 %v707
  %v797 = vunpack.c.h.b16 %v707
  %v798 = vunpack.c.l.b16 %v708
  %v799 = vunpack.c.h.b16 %v708
  %v800 = vunpack.c.l.b16 %v709
  %v801 = vunpack.c.h.b16 %v709
  %v802 = vunpack.c.l.b16 %v710
  %v803 = vunpack.c.h.b16 %v710
  %v804 = vunpack.c.l.b16 %v711
  %v805 = vunpack.c.h.b16 %v711
  %v806 = vunpack.c.l.b16 %v712
  %v807 = vunpack.c.h.b16 %v712
  %v808 = vunpack.c.l.b16 %v713
  %v809 = vunpack.c.h.b16 %v713
  %v810 = vunpack.c.l.b16 %v714
  %v811 = vunpack.c.h.b16 %v714
  %v812 = vunpack.c.l.b16 %v715
  %v813 = vunpack.c.h.b16 %v715
  %v814 = vunpack.c.l.b16 %v716
  %v815 = vunpack.c.h.b16 %v716
  %v816 = vunpack.c.l.b16 %v717
  %v817 = vunpack.c.h.b16 %v717
  %v818 = vunpack.c.l.b16 %v718
  %v819 = vunpack.c.h.b16 %v718
  %v820 = vunpack.c.l.b16 %v719
  %v821 = vunpack.c.h.b16 %v719
  %v822 = vunpack.c.l.b16 %v720
  %v823 = vunpack.c.h.b16 %v720
  %v824 = vunpack.c.l.b16 %v721
  %v825 = vunpack.c.h.b16 %v721
  %v826 = vunpack.c.l.b16 %v722
  %v827 = vunpack.c.h.b16 %v722
  %v828 = vunpack.c.l.b16 %v723
  %v829 = vunpack.c.h.b16 %v723
  %v830 = vunpack.c.l.b16 %v724
  %v831 = vunpack.c.h.b16 %v724
  %v832 = vunpack.c.l.b16 %v725
  %v833 = vunpack.c.h.b16 %v725
  %v834 = vpack.c.b16 %v772, %v770
  %v835 = vpack.c.b16 %v773, %v771
  %v836 = vpack.c.b16 %v776, %v774
  %v837 = vpack.c.b16 %v777, %v775
  %v838 = vpack.c.b16 %v780, %v778
  %v839 = vpack.c.b16 %v781, %v779
  %v840 = vpack.c.b16 %v784, %v782
  %v841 = vpack.c.b16 %v785, %v783
  %v842 = vpack.c.b16 %v788, %v786
  %v843 = vpack.c.b16 %v789, %v787
  %v844 = vpack.c.b16 %v792, %v790
  %v845 = vpack.c.b16 %v793, %v791
  %v846 = vpack.c.b16 %v796, %v794
  %v847 = vpack.c.b16 %v797, %v795
  %v848 = vpack.c.b16 %v800, %v798
  %v849 = vpack.c.b16 %v801, %v799
  %v850 = vpack.c.b16 %v804, %v802
  %v851 = vpack.c.b16 %v805, %v803
  %v852 = vpack.c.b16 %v808, %v806
  %v853 = vpack.c.b16 %v809, %v807
  %v854 = vpack.c.b16 %v812, %v810
  %v855 = vpack.c.b16 %v813, %v811
  %v856 = vpack.c.b16 %v816, %v814
  %v857 = vpack.c.b16 %v817, %v815
  %v858 = vpack.c.b16 %v820, %v818
  %v859 = vpack.c.b16 %v821, %v819
  %v860 = vpack.c.b16 %v824, %v822
  %v861 = vpack.c.b16 %v825, %v823
  %v862 = vpack.c.b16 %v828, %v826
  %v863 = vpack.c.b16 %v829, %v827
  %v864 = vpack.c.b16 %v832, %v830
  %v865 = vpack.c.b16 %v833, %v831
  %898 = vmatprep.subr.bf16.mxu0 %v849
  %899 = vmatpush1.bf16.msra.mxu0 %v848
  %900 = vmatprep.subr.bf16.mxu0 %v847
  %901 = vmatpush1.bf16.msra.mxu0 %v846
  %902 = vmatprep.subr.bf16.mxu0 %v845
  %903 = vmatpush1.bf16.msra.mxu0 %v844
  %904 = vmatprep.subr.bf16.mxu0 %v843
  %905 = vmatpush1.bf16.msra.mxu0 %v842
  %906 = vmatprep.subr.bf16.mxu0 %v841
  %907 = vmatpush1.bf16.msra.mxu0 %v840
  %908 = vmatprep.subr.bf16.mxu0 %v839
  %909 = vmatpush1.bf16.msra.mxu0 %v838
  %910 = vmatprep.subr.bf16.mxu0 %v837
  %911 = vmatpush1.bf16.msra.mxu0 %v836
  %912 = vmatprep.subr.bf16.mxu0 %v835
  %913 = vmatpush1.bf16.msra.mxu0 %v834
  %914 = vmatprep.subr.bf16.mxu0 %v865
  %915 = vmatpush2.bf16.msra.mxu0 %v864
  %916 = vmatprep.subr.bf16.mxu0 %v863
  %917 = vmatpush2.bf16.msra.mxu0 %v862
  %918 = vmatprep.subr.bf16.mxu0 %v861
  %919 = vmatpush2.bf16.msra.mxu0 %v860
  %920 = vmatprep.subr.bf16.mxu0 %v859
  %921 = vmatpush2.bf16.msra.mxu0 %v858
  %922 = vmatprep.subr.bf16.mxu0 %v857
  %923 = vmatpush2.bf16.msra.mxu0 %v856
  %924 = vmatprep.subr.bf16.mxu0 %v855
  %925 = vmatpush2.bf16.msra.mxu0 %v854
  %926 = vmatprep.subr.bf16.mxu0 %v853
  %927 = vmatpush2.bf16.msra.mxu0 %v852
  %928 = vmatprep.subr.bf16.mxu0 %v851
  %929 = vmatpush2.bf16.msra.mxu0 %v850
  %930 = vmatprep.mubr.bf16.mxu0 %v679
  %931 = vmatmul.mubr.bf16.gmra.mxu0 %v678
  %v932 = vpop.f32.mrf.mxu0
  %v933 = vadd.f32 %v731, %v932
  %v934 = vpop.f32.mrf.mxu0
  %v935 = vadd.f32 %v735, %v934
  %v936 = vpop.f32.mrf.mxu0
  %v937 = vadd.f32 %v731, %v936
  %v938 = vpop.f32.mrf.mxu0
  %v939 = vadd.f32 %v735, %v938
  %940 = vmatprep.mubr.bf16.mxu0 %v681
  %941 = vmatmul.mubr.bf16.gmra.mxu0 %v680
  %v942 = vpop.f32.mrf.mxu0
  %v943 = vadd.f32 %v731, %v942
  %v944 = vpop.f32.mrf.mxu0
  %v945 = vadd.f32 %v735, %v944
  %v946 = vpop.f32.mrf.mxu0
  %v947 = vadd.f32 %v731, %v946
  %v948 = vpop.f32.mrf.mxu0
  %v949 = vadd.f32 %v735, %v948
  %950 = vmatprep.mubr.bf16.mxu0 %v683
  %951 = vmatmul.mubr.bf16.gmra.mxu0 %v682
  %v952 = vpop.f32.mrf.mxu0
  %v953 = vadd.f32 %v731, %v952
  %v954 = vpop.f32.mrf.mxu0
  %v955 = vadd.f32 %v735, %v954
  %v956 = vpop.f32.mrf.mxu0
  %v957 = vadd.f32 %v731, %v956
  %v958 = vpop.f32.mrf.mxu0
  %v959 = vadd.f32 %v735, %v958
  %960 = vmatprep.mubr.bf16.mxu0 %v685
  %961 = vmatmul.mubr.bf16.gmra.mxu0 %v684
  %v962 = vpop.f32.mrf.mxu0
  %v963 = vadd.f32 %v731, %v962
  %v964 = vpop.f32.mrf.mxu0
  %v965 = vadd.f32 %v735, %v964
  %v966 = vpop.f32.mrf.mxu0
  %v967 = vadd.f32 %v731, %v966
  %v968 = vpop.f32.mrf.mxu0
  %v969 = vadd.f32 %v735, %v968
  %970 = vmatprep.mubr.bf16.mxu0 %v687
  %971 = vmatmul.mubr.bf16.gmra.mxu0 %v686
  %v972 = vpop.f32.mrf.mxu0
  %v973 = vadd.f32 %v731, %v972
  %v974 = vpop.f32.mrf.mxu0
  %v975 = vadd.f32 %v735, %v974
  %v976 = vpop.f32.mrf.mxu0
  %v977 = vadd.f32 %v731, %v976
  %v978 = vpop.f32.mrf.mxu0
  %v979 = vadd.f32 %v735, %v978
  %980 = vmatprep.mubr.bf16.mxu0 %v689
  %981 = vmatmul.mubr.bf16.gmra.mxu0 %v688
  %v982 = vpop.f32.mrf.mxu0
  %v983 = vadd.f32 %v731, %v982
  %v984 = vpop.f32.mrf.mxu0
  %v985 = vadd.f32 %v735, %v984
  %v986 = vpop.f32.mrf.mxu0
  %v987 = vadd.f32 %v731, %v986
  %v988 = vpop.f32.mrf.mxu0
  %v989 = vadd.f32 %v735, %v988
  %990 = vmatprep.mubr.bf16.mxu0 %v691
  %991 = vmatmul.mubr.bf16.gmra.mxu0 %v690
  %v992 = vpop.f32.mrf.mxu0
  %v993 = vadd.f32 %v731, %v992
  %v994 = vpop.f32.mrf.mxu0
  %v995 = vadd.f32 %v735, %v994
  %v996 = vpop.f32.mrf.mxu0
  %v997 = vadd.f32 %v731, %v996
  %v998 = vpop.f32.mrf.mxu0
  %v999 = vadd.f32 %v735, %v998
  %1000 = vmatprep.mubr.bf16.mxu0 %v693
  %1001 = vmatmul.mubr.bf16.gmra.mxu0 %v692
  %v1002 = vpop.f32.mrf.mxu0
  %v1003 = vadd.f32 %v731, %v1002
  %v1004 = vpop.f32.mrf.mxu0
  %v1005 = vadd.f32 %v735, %v1004
  %v1006 = vpop.f32.mrf.mxu0
  %v1007 = vadd.f32 %v731, %v1006
  %v1008 = vpop.f32.mrf.mxu0
  %v1009 = vadd.f32 %v735, %v1008
  %1010 = vdwg.mxu0
  %v1011 = vmax.f32 %v933, 0.0
  %v1012 = vmax.f32 %v935, 0.0
  %v1013 = vmax.f32 %v937, 0.0
  %v1014 = vmax.f32 %v939, 0.0
  %v1015 = vmax.f32 %v943, 0.0
  %v1016 = vmax.f32 %v945, 0.0
  %v1017 = vmax.f32 %v947, 0.0
  %v1018 = vmax.f32 %v949, 0.0
  %v1019 = vmax.f32 %v953, 0.0
  %v1020 = vmax.f32 %v955, 0.0
  %v1021 = vmax.f32 %v957, 0.0
  %v1022 = vmax.f32 %v959, 0.0
  %v1023 = vmax.f32 %v963, 0.0
  %v1024 = vmax.f32 %v965, 0.0
  %v1025 = vmax.f32 %v967, 0.0
  %v1026 = vmax.f32 %v969, 0.0
  %v1027 = vmax.f32 %v973, 0.0
  %v1028 = vmax.f32 %v975, 0.0
  %v1029 = vmax.f32 %v977, 0.0
  %v1030 = vmax.f32 %v979, 0.0
  %v1031 = vmax.f32 %v983, 0.0
  %v1032 = vmax.f32 %v985, 0.0
  %v1033 = vmax.f32 %v987, 0.0
  %v1034 = vmax.f32 %v989, 0.0
  %v1035 = vmax.f32 %v993, 0.0
  %v1036 = vmax.f32 %v995, 0.0
  %v1037 = vmax.f32 %v997, 0.0
  %v1038 = vmax.f32 %v999, 0.0
  %v1039 = vmax.f32 %v1003, 0.0
  %v1040 = vmax.f32 %v1005, 0.0
  %v1041 = vmax.f32 %v1007, 0.0
  %v1042 = vmax.f32 %v1009, 0.0
  %v1043 = vpack.c.bf16 %v1013, %v1011
  %v1044 = vpack.c.bf16 %v1014, %v1012
  %v1045 = vpack.c.bf16 %v1017, %v1015
  %v1046 = vpack.c.bf16 %v1018, %v1016
  %v1047 = vpack.c.bf16 %v1021, %v1019
  %v1048 = vpack.c.bf16 %v1022, %v1020
  %v1049 = vpack.c.bf16 %v1025, %v1023
  %v1050 = vpack.c.bf16 %v1026, %v1024
  %v1051 = vpack.c.bf16 %v1029, %v1027
  %v1052 = vpack.c.bf16 %v1030, %v1028
  %v1053 = vpack.c.bf16 %v1033, %v1031
  %v1054 = vpack.c.bf16 %v1034, %v1032
  %v1055 = vpack.c.bf16 %v1037, %v1035
  %v1056 = vpack.c.bf16 %v1038, %v1036
  %v1057 = vpack.c.bf16 %v1041, %v1039
  %v1058 = vpack.c.bf16 %v1042, %v1040
  %v1059 = vld [vmem:[%s5] sm:$0xff]
  %v1060 = vld [vmem:[%s5 + $0x8] sm:$0xff]
  %v1061 = vld [vmem:[%s5 + $0x10] sm:$0xff]
  %v1062 = vld [vmem:[%s5 + $0x18] sm:$0xff]
  %v1063 = vld [vmem:[%s5 + $0x20] sm:$0xff]
  %v1064 = vld [vmem:[%s5 + $0x28] sm:$0xff]
  %v1065 = vld [vmem:[%s5 + $0x30] sm:$0xff]
  %v1066 = vld [vmem:[%s5 + $0x38] sm:$0xff]
  %v1067 = vld [vmem:[%s5 + $0x40] sm:$0xff]
  %v1068 = vld [vmem:[%s5 + $0x48] sm:$0xff]
  %v1069 = vld [vmem:[%s5 + $0x50] sm:$0xff]
  %v1070 = vld [vmem:[%s5 + $0x58] sm:$0xff]
  %v1071 = vld [vmem:[%s5 + $0x60] sm:$0xff]
  %v1072 = vld [vmem:[%s5 + $0x68] sm:$0xff]
  %v1073 = vld [vmem:[%s5 + $0x70] sm:$0xff]
  %v1074 = vld [vmem:[%s5 + $0x78] sm:$0xff]
  %v1075 = vld [vmem:[%s5 + $0x80] sm:$0xff]
  %v1076 = vld [vmem:[%s5 + $0x88] sm:$0xff]
  %v1077 = vld [vmem:[%s5 + $0x90] sm:$0xff]
  %v1078 = vld [vmem:[%s5 + $0x98] sm:$0xff]
  %v1079 = vld [vmem:[%s5 + $0xa0] sm:$0xff]
  %v1080 = vld [vmem:[%s5 + $0xa8] sm:$0xff]
  %v1081 = vld [vmem:[%s5 + $0xb0] sm:$0xff]
  %v1082 = vld [vmem:[%s5 + $0xb8] sm:$0xff]
  %v1083 = vld [vmem:[%s5 + $0xc0] sm:$0xff]
  %v1084 = vld [vmem:[%s5 + $0xc8] sm:$0xff]
  %v1085 = vld [vmem:[%s5 + $0xd0] sm:$0xff]
  %v1086 = vld [vmem:[%s5 + $0xd8] sm:$0xff]
  %v1087 = vld [vmem:[%s5 + $0xe0] sm:$0xff]
  %v1088 = vld [vmem:[%s5 + $0xe8] sm:$0xff]
  %v1089 = vld [vmem:[%s5 + $0xf0] sm:$0xff]
  %v1090 = vld [vmem:[%s5 + $0xf8] sm:$0xff]
  %v1091 = vld [vmem:[%s5 + $0x100] sm:$0xff]
  %v1092 = vld [vmem:[%s5 + $0x108] sm:$0xff]
  %v1093 = vld [vmem:[%s5 + $0x110] sm:$0xff]
  %v1094 = vld [vmem:[%s5 + $0x118] sm:$0xff]
  %v1095 = vld [vmem:[%s5 + $0x120] sm:$0xff]
  %v1096 = vld [vmem:[%s5 + $0x128] sm:$0xff]
  %v1097 = vld [vmem:[%s5 + $0x130] sm:$0xff]
  %v1098 = vld [vmem:[%s5 + $0x138] sm:$0xff]
  %v1099 = vld [vmem:[%s5 + $0x140] sm:$0xff]
  %v1100 = vld [vmem:[%s5 + $0x148] sm:$0xff]
  %v1101 = vld [vmem:[%s5 + $0x150] sm:$0xff]
  %v1102 = vld [vmem:[%s5 + $0x158] sm:$0xff]
  %v1103 = vld [vmem:[%s5 + $0x160] sm:$0xff]
  %v1104 = vld [vmem:[%s5 + $0x168] sm:$0xff]
  %v1105 = vld [vmem:[%s5 + $0x170] sm:$0xff]
  %v1106 = vld [vmem:[%s5 + $0x178] sm:$0xff]
  %v1107 = vld [vmem:[%s5 + $0x180] sm:$0xff]
  %v1108 = vld [vmem:[%s5 + $0x188] sm:$0xff]
  %v1109 = vld [vmem:[%s5 + $0x190] sm:$0xff]
  %v1110 = vld [vmem:[%s5 + $0x198] sm:$0xff]
  %v1111 = vld [vmem:[%s5 + $0x1a0] sm:$0xff]
  %v1112 = vld [vmem:[%s5 + $0x1a8] sm:$0xff]
  %v1113 = vld [vmem:[%s5 + $0x1b0] sm:$0xff]
  %v1114 = vld [vmem:[%s5 + $0x1b8] sm:$0xff]
  %v1115 = vld [vmem:[%s5 + $0x1c0] sm:$0xff]
  %v1116 = vld [vmem:[%s5 + $0x1c8] sm:$0xff]
  %v1117 = vld [vmem:[%s5 + $0x1d0] sm:$0xff]
  %v1118 = vld [vmem:[%s5 + $0x1d8] sm:$0xff]
  %v1119 = vld [vmem:[%s5 + $0x1e0] sm:$0xff]
  %v1120 = vld [vmem:[%s5 + $0x1e8] sm:$0xff]
  %v1121 = vld [vmem:[%s5 + $0x1f0] sm:$0xff]
  %v1122 = vld [vmem:[%s5 + $0x1f8] sm:$0xff]
  %v1123 = vld [vmem:[%s6] sm:$0xf]
  %v1125 = vlaneseq
  %v1126 = vshrl.u32 %v1125, 7
  %v1127 = vsub.s32 0, %v1126
  %v1128 = vrot.slane %v1123, %v1127
  %v1129 = vlaneseq
  %v1130 = vshrl.u32 %v1129, 7
  %v1131 = vsub.s32 1, %v1130
  %v1132 = vrot.slane %v1123, %v1131
  %v1133 = vlaneseq
  %v1134 = vshrl.u32 %v1133, 7
  %v1135 = vsub.s32 2, %v1134
  %v1136 = vrot.slane %v1123, %v1135
  %v1137 = vlaneseq
  %v1138 = vshrl.u32 %v1137, 7
  %v1139 = vsub.s32 3, %v1138
  %v1140 = vrot.slane %v1123, %v1139
  %v1209 = vunpack.c.l.b16 %v1059
  %v1210 = vunpack.c.h.b16 %v1059
  %v1211 = vunpack.c.l.b16 %v1060
  %v1212 = vunpack.c.h.b16 %v1060
  %v1213 = vunpack.c.l.b16 %v1061
  %v1214 = vunpack.c.h.b16 %v1061
  %v1215 = vunpack.c.l.b16 %v1062
  %v1216 = vunpack.c.h.b16 %v1062
  %v1217 = vunpack.c.l.b16 %v1063
  %v1218 = vunpack.c.h.b16 %v1063
  %v1219 = vunpack.c.l.b16 %v1064
  %v1220 = vunpack.c.h.b16 %v1064
  %v1221 = vunpack.c.l.b16 %v1065
  %v1222 = vunpack.c.h.b16 %v1065
  %v1223 = vunpack.c.l.b16 %v1066
  %v1224 = vunpack.c.h.b16 %v1066
  %v1225 = vunpack.c.l.b16 %v1067
  %v1226 = vunpack.c.h.b16 %v1067
  %v1227 = vunpack.c.l.b16 %v1068
  %v1228 = vunpack.c.h.b16 %v1068
  %v1229 = vunpack.c.l.b16 %v1069
  %v1230 = vunpack.c.h.b16 %v1069
  %v1231 = vunpack.c.l.b16 %v1070
  %v1232 = vunpack.c.h.b16 %v1070
  %v1233 = vunpack.c.l.b16 %v1071
  %v1234 = vunpack.c.h.b16 %v1071
  %v1235 = vunpack.c.l.b16 %v1072
  %v1236 = vunpack.c.h.b16 %v1072
  %v1237 = vunpack.c.l.b16 %v1073
  %v1238 = vunpack.c.h.b16 %v1073
  %v1239 = vunpack.c.l.b16 %v1074
  %v1240 = vunpack.c.h.b16 %v1074
  %v1241 = vunpack.c.l.b16 %v1075
  %v1242 = vunpack.c.h.b16 %v1075
  %v1243 = vunpack.c.l.b16 %v1076
  %v1244 = vunpack.c.h.b16 %v1076
  %v1245 = vunpack.c.l.b16 %v1077
  %v1246 = vunpack.c.h.b16 %v1077
  %v1247 = vunpack.c.l.b16 %v1078
  %v1248 = vunpack.c.h.b16 %v1078
  %v1249 = vunpack.c.l.b16 %v1079
  %v1250 = vunpack.c.h.b16 %v1079
  %v1251 = vunpack.c.l.b16 %v1080
  %v1252 = vunpack.c.h.b16 %v1080
  %v1253 = vunpack.c.l.b16 %v1081
  %v1254 = vunpack.c.h.b16 %v1081
  %v1255 = vunpack.c.l.b16 %v1082
  %v1256 = vunpack.c.h.b16 %v1082
  %v1257 = vunpack.c.l.b16 %v1083
  %v1258 = vunpack.c.h.b16 %v1083
  %v1259 = vunpack.c.l.b16 %v1084
  %v1260 = vunpack.c.h.b16 %v1084
  %v1261 = vunpack.c.l.b16 %v1085
  %v1262 = vunpack.c.h.b16 %v1085
  %v1263 = vunpack.c.l.b16 %v1086
  %v1264 = vunpack.c.h.b16 %v1086
  %v1265 = vunpack.c.l.b16 %v1087
  %v1266 = vunpack.c.h.b16 %v1087
  %v1267 = vunpack.c.l.b16 %v1088
  %v1268 = vunpack.c.h.b16 %v1088
  %v1269 = vunpack.c.l.b16 %v1089
  %v1270 = vunpack.c.h.b16 %v1089
  %v1271 = vunpack.c.l.b16 %v1090
  %v1272 = vunpack.c.h.b16 %v1090
  %v1273 = vunpack.c.l.b16 %v1091
  %v1274 = vunpack.c.h.b16 %v1091
  %v1275 = vunpack.c.l.b16 %v1092
  %v1276 = vunpack.c.h.b16 %v1092
  %v1277 = vunpack.c.l.b16 %v1093
  %v1278 = vunpack.c.h.b16 %v1093
  %v1279 = vunpack.c.l.b16 %v1094
  %v1280 = vunpack.c.h.b16 %v1094
  %v1281 = vunpack.c.l.b16 %v1095
  %v1282 = vunpack.c.h.b16 %v1095
  %v1283 = vunpack.c.l.b16 %v1096
  %v1284 = vunpack.c.h.b16 %v1096
  %v1285 = vunpack.c.l.b16 %v1097
  %v1286 = vunpack.c.h.b16 %v1097
  %v1287 = vunpack.c.l.b16 %v1098
  %v1288 = vunpack.c.h.b16 %v1098
  %v1289 = vunpack.c.l.b16 %v1099
  %v1290 = vunpack.c.h.b16 %v1099
  %v1291 = vunpack.c.l.b16 %v1100
  %v1292 = vunpack.c.h.b16 %v1100
  %v1293 = vunpack.c.l.b16 %v1101
  %v1294 = vunpack.c.h.b16 %v1101
  %v1295 = vunpack.c.l.b16 %v1102
  %v1296 = vunpack.c.h.b16 %v1102
  %v1297 = vunpack.c.l.b16 %v1103
  %v1298 = vunpack.c.h.b16 %v1103
  %v1299 = vunpack.c.l.b16 %v1104
  %v1300 = vunpack.c.h.b16 %v1104
  %v1301 = vunpack.c.l.b16 %v1105
  %v1302 = vunpack.c.h.b16 %v1105
  %v1303 = vunpack.c.l.b16 %v1106
  %v1304 = vunpack.c.h.b16 %v1106
  %v1305 = vunpack.c.l.b16 %v1107
  %v1306 = vunpack.c.h.b16 %v1107
  %v1307 = vunpack.c.l.b16 %v1108
  %v1308 = vunpack.c.h.b16 %v1108
  %v1309 = vunpack.c.l.b16 %v1109
  %v1310 = vunpack.c.h.b16 %v1109
  %v1311 = vunpack.c.l.b16 %v1110
  %v1312 = vunpack.c.h.b16 %v1110
  %v1313 = vunpack.c.l.b16 %v1111
  %v1314 = vunpack.c.h.b16 %v1111
  %v1315 = vunpack.c.l.b16 %v1112
  %v1316 = vunpack.c.h.b16 %v1112
  %v1317 = vunpack.c.l.b16 %v1113
  %v1318 = vunpack.c.h.b16 %v1113
  %v1319 = vunpack.c.l.b16 %v1114
  %v1320 = vunpack.c.h.b16 %v1114
  %v1321 = vunpack.c.l.b16 %v1115
  %v1322 = vunpack.c.h.b16 %v1115
  %v1323 = vunpack.c.l.b16 %v1116
  %v1324 = vunpack.c.h.b16 %v1116
  %v1325 = vunpack.c.l.b16 %v1117
  %v1326 = vunpack.c.h.b16 %v1117
  %v1327 = vunpack.c.l.b16 %v1118
  %v1328 = vunpack.c.h.b16 %v1118
  %v1329 = vunpack.c.l.b16 %v1119
  %v1330 = vunpack.c.h.b16 %v1119
  %v1331 = vunpack.c.l.b16 %v1120
  %v1332 = vunpack.c.h.b16 %v1120
  %v1333 = vunpack.c.l.b16 %v1121
  %v1334 = vunpack.c.h.b16 %v1121
  %v1335 = vunpack.c.l.b16 %v1122
  %v1336 = vunpack.c.h.b16 %v1122
  %v1337 = vpack.c.b16 %v1213, %v1209
  %v1338 = vpack.c.b16 %v1214, %v1210
  %v1339 = vpack.c.b16 %v1215, %v1211
  %v1340 = vpack.c.b16 %v1216, %v1212
  %v1341 = vpack.c.b16 %v1221, %v1217
  %v1342 = vpack.c.b16 %v1222, %v1218
  %v1343 = vpack.c.b16 %v1223, %v1219
  %v1344 = vpack.c.b16 %v1224, %v1220
  %v1345 = vpack.c.b16 %v1229, %v1225
  %v1346 = vpack.c.b16 %v1230, %v1226
  %v1347 = vpack.c.b16 %v1231, %v1227
  %v1348 = vpack.c.b16 %v1232, %v1228
  %v1349 = vpack.c.b16 %v1237, %v1233
  %v1350 = vpack.c.b16 %v1238, %v1234
  %v1351 = vpack.c.b16 %v1239, %v1235
  %v1352 = vpack.c.b16 %v1240, %v1236
  %v1353 = vpack.c.b16 %v1245, %v1241
  %v1354 = vpack.c.b16 %v1246, %v1242
  %v1355 = vpack.c.b16 %v1247, %v1243
  %v1356 = vpack.c.b16 %v1248, %v1244
  %v1357 = vpack.c.b16 %v1253, %v1249
  %v1358 = vpack.c.b16 %v1254, %v1250
  %v1359 = vpack.c.b16 %v1255, %v1251
  %v1360 = vpack.c.b16 %v1256, %v1252
  %v1361 = vpack.c.b16 %v1261, %v1257
  %v1362 = vpack.c.b16 %v1262, %v1258
  %v1363 = vpack.c.b16 %v1263, %v1259
  %v1364 = vpack.c.b16 %v1264, %v1260
  %v1365 = vpack.c.b16 %v1269, %v1265
  %v1366 = vpack.c.b16 %v1270, %v1266
  %v1367 = vpack.c.b16 %v1271, %v1267
  %v1368 = vpack.c.b16 %v1272, %v1268
  %v1369 = vpack.c.b16 %v1277, %v1273
  %v1370 = vpack.c.b16 %v1278, %v1274
  %v1371 = vpack.c.b16 %v1279, %v1275
  %v1372 = vpack.c.b16 %v1280, %v1276
  %v1373 = vpack.c.b16 %v1285, %v1281
  %v1374 = vpack.c.b16 %v1286, %v1282
  %v1375 = vpack.c.b16 %v1287, %v1283
  %v1376 = vpack.c.b16 %v1288, %v1284
  %v1377 = vpack.c.b16 %v1293, %v1289
  %v1378 = vpack.c.b16 %v1294, %v1290
  %v1379 = vpack.c.b16 %v1295, %v1291
  %v1380 = vpack.c.b16 %v1296, %v1292
  %v1381 = vpack.c.b16 %v1301, %v1297
  %v1382 = vpack.c.b16 %v1302, %v1298
  %v1383 = vpack.c.b16 %v1303, %v1299
  %v1384 = vpack.c.b16 %v1304, %v1300
  %v1385 = vpack.c.b16 %v1309, %v1305
  %v1386 = vpack.c.b16 %v1310, %v1306
  %v1387 = vpack.c.b16 %v1311, %v1307
  %v1388 = vpack.c.b16 %v1312, %v1308
  %v1389 = vpack.c.b16 %v1317, %v1313
  %v1390 = vpack.c.b16 %v1318, %v1314
  %v1391 = vpack.c.b16 %v1319, %v1315
  %v1392 = vpack.c.b16 %v1320, %v1316
  %v1393 = vpack.c.b16 %v1325, %v1321
  %v1394 = vpack.c.b16 %v1326, %v1322
  %v1395 = vpack.c.b16 %v1327, %v1323
  %v1396 = vpack.c.b16 %v1328, %v1324
  %v1397 = vpack.c.b16 %v1333, %v1329
  %v1398 = vpack.c.b16 %v1334, %v1330
  %v1399 = vpack.c.b16 %v1335, %v1331
  %v1400 = vpack.c.b16 %v1336, %v1332
  %1465 = vmatprep.subr.bf16.mxu0 %v1366
  %1466 = vmatpush1.bf16.msra.mxu0 %v1365
  %1467 = vmatprep.subr.bf16.mxu0 %v1362
  %1468 = vmatpush1.bf16.msra.mxu0 %v1361
  %1469 = vmatprep.subr.bf16.mxu0 %v1358
  %1470 = vmatpush1.bf16.msra.mxu0 %v1357
  %1471 = vmatprep.subr.bf16.mxu0 %v1354
  %1472 = vmatpush1.bf16.msra.mxu0 %v1353
  %1473 = vmatprep.subr.bf16.mxu0 %v1350
  %1474 = vmatpush1.bf16.msra.mxu0 %v1349
  %1475 = vmatprep.subr.bf16.mxu0 %v1346
  %1476 = vmatpush1.bf16.msra.mxu0 %v1345
  %1477 = vmatprep.subr.bf16.mxu0 %v1342
  %1478 = vmatpush1.bf16.msra.mxu0 %v1341
  %1479 = vmatprep.subr.bf16.mxu0 %v1338
  %1480 = vmatpush1.bf16.msra.mxu0 %v1337
  %1481 = vmatprep.subr.bf16.mxu0 %v1398
  %1482 = vmatpush2.bf16.msra.mxu0 %v1397
  %1483 = vmatprep.subr.bf16.mxu0 %v1394
  %1484 = vmatpush2.bf16.msra.mxu0 %v1393
  %1485 = vmatprep.subr.bf16.mxu0 %v1390
  %1486 = vmatpush2.bf16.msra.mxu0 %v1389
  %1487 = vmatprep.subr.bf16.mxu0 %v1386
  %1488 = vmatpush2.bf16.msra.mxu0 %v1385
  %1489 = vmatprep.subr.bf16.mxu0 %v1382
  %1490 = vmatpush2.bf16.msra.mxu0 %v1381
  %1491 = vmatprep.subr.bf16.mxu0 %v1378
  %1492 = vmatpush2.bf16.msra.mxu0 %v1377
  %1493 = vmatprep.subr.bf16.mxu0 %v1374
  %1494 = vmatpush2.bf16.msra.mxu0 %v1373
  %1495 = vmatprep.subr.bf16.mxu0 %v1370
  %1496 = vmatpush2.bf16.msra.mxu0 %v1369
  %1497 = vmatprep.mubr.bf16.mxu0 %v1044
  %1498 = vmatmul.mubr.bf16.gmra.mxu0 %v1043
  %v1499 = vpop.f32.mrf.mxu0
  %v1500 = vadd.f32 %v1128, %v1499
  %v1501 = vpop.f32.mrf.mxu0
  %v1502 = vadd.f32 %v1132, %v1501
  %v1503 = vpop.f32.mrf.mxu0
  %v1504 = vadd.f32 %v1128, %v1503
  %v1505 = vpop.f32.mrf.mxu0
  %v1506 = vadd.f32 %v1132, %v1505
  %1507 = vmatprep.mubr.bf16.mxu0 %v1046
  %1508 = vmatmul.mubr.bf16.gmra.mxu0 %v1045
  %v1509 = vpop.f32.mrf.mxu0
  %v1510 = vadd.f32 %v1128, %v1509
  %v1511 = vpop.f32.mrf.mxu0
  %v1512 = vadd.f32 %v1132, %v1511
  %v1513 = vpop.f32.mrf.mxu0
  %v1514 = vadd.f32 %v1128, %v1513
  %v1515 = vpop.f32.mrf.mxu0
  %v1516 = vadd.f32 %v1132, %v1515
  %1517 = vmatprep.mubr.bf16.mxu0 %v1048
  %1518 = vmatmul.mubr.bf16.gmra.mxu0 %v1047
  %v1519 = vpop.f32.mrf.mxu0
  %v1520 = vadd.f32 %v1128, %v1519
  %v1521 = vpop.f32.mrf.mxu0
  %v1522 = vadd.f32 %v1132, %v1521
  %v1523 = vpop.f32.mrf.mxu0
  %v1524 = vadd.f32 %v1128, %v1523
  %v1525 = vpop.f32.mrf.mxu0
  %v1526 = vadd.f32 %v1132, %v1525
  %1527 = vmatprep.mubr.bf16.mxu0 %v1050
  %1528 = vmatmul.mubr.bf16.gmra.mxu0 %v1049
  %v1529 = vpop.f32.mrf.mxu0
  %v1530 = vadd.f32 %v1128, %v1529
  %v1531 = vpop.f32.mrf.mxu0
  %v1532 = vadd.f32 %v1132, %v1531
  %v1533 = vpop.f32.mrf.mxu0
  %v1534 = vadd.f32 %v1128, %v1533
  %v1535 = vpop.f32.mrf.mxu0
  %v1536 = vadd.f32 %v1132, %v1535
  %1537 = vmatprep.mubr.bf16.mxu0 %v1052
  %1538 = vmatmul.mubr.bf16.gmra.mxu0 %v1051
  %v1539 = vpop.f32.mrf.mxu0
  %v1540 = vadd.f32 %v1128, %v1539
  %v1541 = vpop.f32.mrf.mxu0
  %v1542 = vadd.f32 %v1132, %v1541
  %v1543 = vpop.f32.mrf.mxu0
  %v1544 = vadd.f32 %v1128, %v1543
  %v1545 = vpop.f32.mrf.mxu0
  %v1546 = vadd.f32 %v1132, %v1545
  %1547 = vmatprep.mubr.bf16.mxu0 %v1054
  %1548 = vmatmul.mubr.bf16.gmra.mxu0 %v1053
  %v1549 = vpop.f32.mrf.mxu0
  %v1550 = vadd.f32 %v1128, %v1549
  %v1551 = vpop.f32.mrf.mxu0
  %v1552 = vadd.f32 %v1132, %v1551
  %v1553 = vpop.f32.mrf.mxu0
  %v1554 = vadd.f32 %v1128, %v1553
  %v1555 = vpop.f32.mrf.mxu0
  %v1556 = vadd.f32 %v1132, %v1555
  %1557 = vmatprep.mubr.bf16.mxu0 %v1056
  %1558 = vmatmul.mubr.bf16.gmra.mxu0 %v1055
  %v1559 = vpop.f32.mrf.mxu0
  %v1560 = vadd.f32 %v1128, %v1559
  %v1561 = vpop.f32.mrf.mxu0
  %v1562 = vadd.f32 %v1132, %v1561
  %v1563 = vpop.f32.mrf.mxu0
  %v1564 = vadd.f32 %v1128, %v1563
  %v1565 = vpop.f32.mrf.mxu0
  %v1566 = vadd.f32 %v1132, %v1565
  %1567 = vmatprep.mubr.bf16.mxu0 %v1058
  %1568 = vmatmul.mubr.bf16.gmra.mxu0 %v1057
  %v1569 = vpop.f32.mrf.mxu0
  %v1570 = vadd.f32 %v1128, %v1569
  %v1571 = vpop.f32.mrf.mxu0
  %v1572 = vadd.f32 %v1132, %v1571
  %v1573 = vpop.f32.mrf.mxu0
  %v1574 = vadd.f32 %v1128, %v1573
  %v1575 = vpop.f32.mrf.mxu0
  %v1576 = vadd.f32 %v1132, %v1575
  %1577 = vdwg.mxu0
  %1578 = vmatprep.subr.bf16.mxu0 %v1368
  %1579 = vmatpush1.bf16.msra.mxu0 %v1367
  %1580 = vmatprep.subr.bf16.mxu0 %v1364
  %1581 = vmatpush1.bf16.msra.mxu0 %v1363
  %1582 = vmatprep.subr.bf16.mxu0 %v1360
  %1583 = vmatpush1.bf16.msra.mxu0 %v1359
  %1584 = vmatprep.subr.bf16.mxu0 %v1356
  %1585 = vmatpush1.bf16.msra.mxu0 %v1355
  %1586 = vmatprep.subr.bf16.mxu0 %v1352
  %1587 = vmatpush1.bf16.msra.mxu0 %v1351
  %1588 = vmatprep.subr.bf16.mxu0 %v1348
  %1589 = vmatpush1.bf16.msra.mxu0 %v1347
  %1590 = vmatprep.subr.bf16.mxu0 %v1344
  %1591 = vmatpush1.bf16.msra.mxu0 %v1343
  %1592 = vmatprep.subr.bf16.mxu0 %v1340
  %1593 = vmatpush1.bf16.msra.mxu0 %v1339
  %1594 = vmatprep.subr.bf16.mxu0 %v1400
  %1595 = vmatpush2.bf16.msra.mxu0 %v1399
  %1596 = vmatprep.subr.bf16.mxu0 %v1396
  %1597 = vmatpush2.bf16.msra.mxu0 %v1395
  %1598 = vmatprep.subr.bf16.mxu0 %v1392
  %1599 = vmatpush2.bf16.msra.mxu0 %v1391
  %1600 = vmatprep.subr.bf16.mxu0 %v1388
  %1601 = vmatpush2.bf16.msra.mxu0 %v1387
  %1602 = vmatprep.subr.bf16.mxu0 %v1384
  %1603 = vmatpush2.bf16.msra.mxu0 %v1383
  %1604 = vmatprep.subr.bf16.mxu0 %v1380
  %1605 = vmatpush2.bf16.msra.mxu0 %v1379
  %1606 = vmatprep.subr.bf16.mxu0 %v1376
  %1607 = vmatpush2.bf16.msra.mxu0 %v1375
  %1608 = vmatprep.subr.bf16.mxu0 %v1372
  %1609 = vmatpush2.bf16.msra.mxu0 %v1371
  %1610 = vmatprep.mubr.bf16.mxu0 %v1044
  %1611 = vmatmul.mubr.bf16.gmra.mxu0 %v1043
  %v1612 = vpop.f32.mrf.mxu0
  %v1613 = vadd.f32 %v1136, %v1612
  %v1614 = vpop.f32.mrf.mxu0
  %v1615 = vadd.f32 %v1140, %v1614
  %v1616 = vpop.f32.mrf.mxu0
  %v1617 = vadd.f32 %v1136, %v1616
  %v1618 = vpop.f32.mrf.mxu0
  %v1619 = vadd.f32 %v1140, %v1618
  %1620 = vmatprep.mubr.bf16.mxu0 %v1046
  %1621 = vmatmul.mubr.bf16.gmra.mxu0 %v1045
  %v1622 = vpop.f32.mrf.mxu0
  %v1623 = vadd.f32 %v1136, %v1622
  %v1624 = vpop.f32.mrf.mxu0
  %v1625 = vadd.f32 %v1140, %v1624
  %v1626 = vpop.f32.mrf.mxu0
  %v1627 = vadd.f32 %v1136, %v1626
  %v1628 = vpop.f32.mrf.mxu0
  %v1629 = vadd.f32 %v1140, %v1628
  %1630 = vmatprep.mubr.bf16.mxu0 %v1048
  %1631 = vmatmul.mubr.bf16.gmra.mxu0 %v1047
  %v1632 = vpop.f32.mrf.mxu0
  %v1633 = vadd.f32 %v1136, %v1632
  %v1634 = vpop.f32.mrf.mxu0
  %v1635 = vadd.f32 %v1140, %v1634
  %v1636 = vpop.f32.mrf.mxu0
  %v1637 = vadd.f32 %v1136, %v1636
  %v1638 = vpop.f32.mrf.mxu0
  %v1639 = vadd.f32 %v1140, %v1638
  %1640 = vmatprep.mubr.bf16.mxu0 %v1050
  %1641 = vmatmul.mubr.bf16.gmra.mxu0 %v1049
  %v1642 = vpop.f32.mrf.mxu0
  %v1643 = vadd.f32 %v1136, %v1642
  %v1644 = vpop.f32.mrf.mxu0
  %v1645 = vadd.f32 %v1140, %v1644
  %v1646 = vpop.f32.mrf.mxu0
  %v1647 = vadd.f32 %v1136, %v1646
  %v1648 = vpop.f32.mrf.mxu0
  %v1649 = vadd.f32 %v1140, %v1648
  %1650 = vmatprep.mubr.bf16.mxu0 %v1052
  %1651 = vmatmul.mubr.bf16.gmra.mxu0 %v1051
  %v1652 = vpop.f32.mrf.mxu0
  %v1653 = vadd.f32 %v1136, %v1652
  %v1654 = vpop.f32.mrf.mxu0
  %v1655 = vadd.f32 %v1140, %v1654
  %v1656 = vpop.f32.mrf.mxu0
  %v1657 = vadd.f32 %v1136, %v1656
  %v1658 = vpop.f32.mrf.mxu0
  %v1659 = vadd.f32 %v1140, %v1658
  %1660 = vmatprep.mubr.bf16.mxu0 %v1054
  %1661 = vmatmul.mubr.bf16.gmra.mxu0 %v1053
  %v1662 = vpop.f32.mrf.mxu0
  %v1663 = vadd.f32 %v1136, %v1662
  %v1664 = vpop.f32.mrf.mxu0
  %v1665 = vadd.f32 %v1140, %v1664
  %v1666 = vpop.f32.mrf.mxu0
  %v1667 = vadd.f32 %v1136, %v1666
  %v1668 = vpop.f32.mrf.mxu0
  %v1669 = vadd.f32 %v1140, %v1668
  %1670 = vmatprep.mubr.bf16.mxu0 %v1056
  %1671 = vmatmul.mubr.bf16.gmra.mxu0 %v1055
  %v1672 = vpop.f32.mrf.mxu0
  %v1673 = vadd.f32 %v1136, %v1672
  %v1674 = vpop.f32.mrf.mxu0
  %v1675 = vadd.f32 %v1140, %v1674
  %v1676 = vpop.f32.mrf.mxu0
  %v1677 = vadd.f32 %v1136, %v1676
  %v1678 = vpop.f32.mrf.mxu0
  %v1679 = vadd.f32 %v1140, %v1678
  %1680 = vmatprep.mubr.bf16.mxu0 %v1058
  %1681 = vmatmul.mubr.bf16.gmra.mxu0 %v1057
  %v1682 = vpop.f32.mrf.mxu0
  %v1683 = vadd.f32 %v1136, %v1682
  %v1684 = vpop.f32.mrf.mxu0
  %v1685 = vadd.f32 %v1140, %v1684
  %v1686 = vpop.f32.mrf.mxu0
  %v1687 = vadd.f32 %v1136, %v1686
  %v1688 = vpop.f32.mrf.mxu0
  %v1689 = vadd.f32 %v1140, %v1688
  %1690 = vdwg.mxu0
  %v1691 = vmax.f32 %v1500, 0.0
  %v1692 = vmax.f32 %v1502, 0.0
  %v1693 = vmax.f32 %v1613, 0.0
  %v1694 = vmax.f32 %v1615, 0.0
  %v1695 = vmax.f32 %v1504, 0.0
  %v1696 = vmax.f32 %v1506, 0.0
  %v1697 = vmax.f32 %v1617, 0.0
  %v1698 = vmax.f32 %v1619, 0.0
  %v1699 = vmax.f32 %v1510, 0.0
  %v1700 = vmax.f32 %v1512, 0.0
  %v1701 = vmax.f32 %v1623, 0.0
  %v1702 = vmax.f32 %v1625, 0.0
  %v1703 = vmax.f32 %v1514, 0.0
  %v1704 = vmax.f32 %v1516, 0.0
  %v1705 = vmax.f32 %v1627, 0.0
  %v1706 = vmax.f32 %v1629, 0.0
  %v1707 = vmax.f32 %v1520, 0.0
  %v1708 = vmax.f32 %v1522, 0.0
  %v1709 = vmax.f32 %v1633, 0.0
  %v1710 = vmax.f32 %v1635, 0.0
  %v1711 = vmax.f32 %v1524, 0.0
  %v1712 = vmax.f32 %v1526, 0.0
  %v1713 = vmax.f32 %v1637, 0.0
  %v1714 = vmax.f32 %v1639, 0.0
  %v1715 = vmax.f32 %v1530, 0.0
  %v1716 = vmax.f32 %v1532, 0.0
  %v1717 = vmax.f32 %v1643, 0.0
  %v1718 = vmax.f32 %v1645, 0.0
  %v1719 = vmax.f32 %v1534, 0.0
  %v1720 = vmax.f32 %v1536, 0.0
  %v1721 = vmax.f32 %v1647, 0.0
  %v1722 = vmax.f32 %v1649, 0.0
  %v1723 = vmax.f32 %v1540, 0.0
  %v1724 = vmax.f32 %v1542, 0.0
  %v1725 = vmax.f32 %v1653, 0.0
  %v1726 = vmax.f32 %v1655, 0.0
  %v1727 = vmax.f32 %v1544, 0.0
  %v1728 = vmax.f32 %v1546, 0.0
  %v1729 = vmax.f32 %v1657, 0.0
  %v1730 = vmax.f32 %v1659, 0.0
  %v1731 = vmax.f32 %v1550, 0.0
  %v1732 = vmax.f32 %v1552, 0.0
  %v1733 = vmax.f32 %v1663, 0.0
  %v1734 = vmax.f32 %v1665, 0.0
  %v1735 = vmax.f32 %v1554, 0.0
  %v1736 = vmax.f32 %v1556, 0.0
  %v1737 = vmax.f32 %v1667, 0.0
  %v1738 = vmax.f32 %v1669, 0.0
  %v1739 = vmax.f32 %v1560, 0.0
  %v1740 = vmax.f32 %v1562, 0.0
  %v1741 = vmax.f32 %v1673, 0.0
  %v1742 = vmax.f32 %v1675, 0.0
  %v1743 = vmax.f32 %v1564, 0.0
  %v1744 = vmax.f32 %v1566, 0.0
  %v1745 = vmax.f32 %v1677, 0.0
  %v1746 = vmax.f32 %v1679, 0.0
  %v1747 = vmax.f32 %v1570, 0.0
  %v1748 = vmax.f32 %v1572, 0.0
  %v1749 = vmax.f32 %v1683, 0.0
  %v1750 = vmax.f32 %v1685, 0.0
  %v1751 = vmax.f32 %v1574, 0.0
  %v1752 = vmax.f32 %v1576, 0.0
  %v1753 = vmax.f32 %v1687, 0.0
  %v1754 = vmax.f32 %v1689, 0.0
  %v1755 = vmax.f32 %v1691, %v1695
  %v1756 = vrot.slane %v1755, 4
  %v1757 = vmax.f32 %v1755, %v1756
  %v1758 = vrot.slane %v1757, 2
  %v1759 = vmax.f32 %v1757, %v1758
  %v1760 = vrot.slane %v1759, 1
  %v1761 = vmax.f32 %v1759, %v1760
  %v1762 = vmax.f32 %v1692, %v1696
  %v1763 = vrot.slane %v1762, 4
  %v1764 = vmax.f32 %v1762, %v1763
  %v1765 = vrot.slane %v1764, 2
  %v1766 = vmax.f32 %v1764, %v1765
  %v1767 = vrot.slane %v1766, 1
  %v1768 = vmax.f32 %v1766, %v1767
  %v1769 = vmax.f32 %v1693, %v1697
  %v1770 = vrot.slane %v1769, 4
  %v1771 = vmax.f32 %v1769, %v1770
  %v1772 = vrot.slane %v1771, 2
  %v1773 = vmax.f32 %v1771, %v1772
  %v1774 = vrot.slane %v1773, 1
  %v1775 = vmax.f32 %v1773, %v1774
  %v1776 = vmax.f32 %v1694, %v1698
  %v1777 = vrot.slane %v1776, 4
  %v1778 = vmax.f32 %v1776, %v1777
  %v1779 = vrot.slane %v1778, 2
  %v1780 = vmax.f32 %v1778, %v1779
  %v1781 = vrot.slane %v1780, 1
  %v1782 = vmax.f32 %v1780, %v1781
  %v1783 = vmax.f32 %v1699, %v1703
  %v1784 = vrot.slane %v1783, 4
  %v1785 = vmax.f32 %v1783, %v1784
  %v1786 = vrot.slane %v1785, 2
  %v1787 = vmax.f32 %v1785, %v1786
  %v1788 = vrot.slane %v1787, 1
  %v1789 = vmax.f32 %v1787, %v1788
  %v1790 = vmax.f32 %v1700, %v1704
  %v1791 = vrot.slane %v1790, 4
  %v1792 = vmax.f32 %v1790, %v1791
  %v1793 = vrot.slane %v1792, 2
  %v1794 = vmax.f32 %v1792, %v1793
  %v1795 = vrot.slane %v1794, 1
  %v1796 = vmax.f32 %v1794, %v1795
  %v1797 = vmax.f32 %v1701, %v1705
  %v1798 = vrot.slane %v1797, 4
  %v1799 = vmax.f32 %v1797, %v1798
  %v1800 = vrot.slane %v1799, 2
  %v1801 = vmax.f32 %v1799, %v1800
  %v1802 = vrot.slane %v1801, 1
  %v1803 = vmax.f32 %v1801, %v1802
  %v1804 = vmax.f32 %v1702, %v1706
  %v1805 = vrot.slane %v1804, 4
  %v1806 = vmax.f32 %v1804, %v1805
  %v1807 = vrot.slane %v1806, 2
  %v1808 = vmax.f32 %v1806, %v1807
  %v1809 = vrot.slane %v1808, 1
  %v1810 = vmax.f32 %v1808, %v1809
  %v1811 = vmax.f32 %v1707, %v1711
  %v1812 = vrot.slane %v1811, 4
  %v1813 = vmax.f32 %v1811, %v1812
  %v1814 = vrot.slane %v1813, 2
  %v1815 = vmax.f32 %v1813, %v1814
  %v1816 = vrot.slane %v1815, 1
  %v1817 = vmax.f32 %v1815, %v1816
  %v1818 = vmax.f32 %v1708, %v1712
  %v1819 = vrot.slane %v1818, 4
  %v1820 = vmax.f32 %v1818, %v1819
  %v1821 = vrot.slane %v1820, 2
  %v1822 = vmax.f32 %v1820, %v1821
  %v1823 = vrot.slane %v1822, 1
  %v1824 = vmax.f32 %v1822, %v1823
  %v1825 = vmax.f32 %v1709, %v1713
  %v1826 = vrot.slane %v1825, 4
  %v1827 = vmax.f32 %v1825, %v1826
  %v1828 = vrot.slane %v1827, 2
  %v1829 = vmax.f32 %v1827, %v1828
  %v1830 = vrot.slane %v1829, 1
  %v1831 = vmax.f32 %v1829, %v1830
  %v1832 = vmax.f32 %v1710, %v1714
  %v1833 = vrot.slane %v1832, 4
  %v1834 = vmax.f32 %v1832, %v1833
  %v1835 = vrot.slane %v1834, 2
  %v1836 = vmax.f32 %v1834, %v1835
  %v1837 = vrot.slane %v1836, 1
  %v1838 = vmax.f32 %v1836, %v1837
  %v1839 = vmax.f32 %v1715, %v1719
  %v1840 = vrot.slane %v1839, 4
  %v1841 = vmax.f32 %v1839, %v1840
  %v1842 = vrot.slane %v1841, 2
  %v1843 = vmax.f32 %v1841, %v1842
  %v1844 = vrot.slane %v1843, 1
  %v1845 = vmax.f32 %v1843, %v1844
  %v1846 = vmax.f32 %v1716, %v1720
  %v1847 = vrot.slane %v1846, 4
  %v1848 = vmax.f32 %v1846, %v1847
  %v1849 = vrot.slane %v1848, 2
  %v1850 = vmax.f32 %v1848, %v1849
  %v1851 = vrot.slane %v1850, 1
  %v1852 = vmax.f32 %v1850, %v1851
  %v1853 = vmax.f32 %v1717, %v1721
  %v1854 = vrot.slane %v1853, 4
  %v1855 = vmax.f32 %v1853, %v1854
  %v1856 = vrot.slane %v1855, 2
  %v1857 = vmax.f32 %v1855, %v1856
  %v1858 = vrot.slane %v1857, 1
  %v1859 = vmax.f32 %v1857, %v1858
  %v1860 = vmax.f32 %v1718, %v1722
  %v1861 = vrot.slane %v1860, 4
  %v1862 = vmax.f32 %v1860, %v1861
  %v1863 = vrot.slane %v1862, 2
  %v1864 = vmax.f32 %v1862, %v1863
  %v1865 = vrot.slane %v1864, 1
  %v1866 = vmax.f32 %v1864, %v1865
  %v1867 = vmax.f32 %v1723, %v1727
  %v1868 = vrot.slane %v1867, 4
  %v1869 = vmax.f32 %v1867, %v1868
  %v1870 = vrot.slane %v1869, 2
  %v1871 = vmax.f32 %v1869, %v1870
  %v1872 = vrot.slane %v1871, 1
  %v1873 = vmax.f32 %v1871, %v1872
  %v1874 = vmax.f32 %v1724, %v1728
  %v1875 = vrot.slane %v1874, 4
  %v1876 = vmax.f32 %v1874, %v1875
  %v1877 = vrot.slane %v1876, 2
  %v1878 = vmax.f32 %v1876, %v1877
  %v1879 = vrot.slane %v1878, 1
  %v1880 = vmax.f32 %v1878, %v1879
  %v1881 = vmax.f32 %v1725, %v1729
  %v1882 = vrot.slane %v1881, 4
  %v1883 = vmax.f32 %v1881, %v1882
  %v1884 = vrot.slane %v1883, 2
  %v1885 = vmax.f32 %v1883, %v1884
  %v1886 = vrot.slane %v1885, 1
  %v1887 = vmax.f32 %v1885, %v1886
  %v1888 = vmax.f32 %v1726, %v1730
  %v1889 = vrot.slane %v1888, 4
  %v1890 = vmax.f32 %v1888, %v1889
  %v1891 = vrot.slane %v1890, 2
  %v1892 = vmax.f32 %v1890, %v1891
  %v1893 = vrot.slane %v1892, 1
  %v1894 = vmax.f32 %v1892, %v1893
  %v1895 = vmax.f32 %v1731, %v1735
  %v1896 = vrot.slane %v1895, 4
  %v1897 = vmax.f32 %v1895, %v1896
  %v1898 = vrot.slane %v1897, 2
  %v1899 = vmax.f32 %v1897, %v1898
  %v1900 = vrot.slane %v1899, 1
  %v1901 = vmax.f32 %v1899, %v1900
  %v1902 = vmax.f32 %v1732, %v1736
  %v1903 = vrot.slane %v1902, 4
  %v1904 = vmax.f32 %v1902, %v1903
  %v1905 = vrot.slane %v1904, 2
  %v1906 = vmax.f32 %v1904, %v1905
  %v1907 = vrot.slane %v1906, 1
  %v1908 = vmax.f32 %v1906, %v1907
  %v1909 = vmax.f32 %v1733, %v1737
  %v1910 = vrot.slane %v1909, 4
  %v1911 = vmax.f32 %v1909, %v1910
  %v1912 = vrot.slane %v1911, 2
  %v1913 = vmax.f32 %v1911, %v1912
  %v1914 = vrot.slane %v1913, 1
  %v1915 = vmax.f32 %v1913, %v1914
  %v1916 = vmax.f32 %v1734, %v1738
  %v1917 = vrot.slane %v1916, 4
  %v1918 = vmax.f32 %v1916, %v1917
  %v1919 = vrot.slane %v1918, 2
  %v1920 = vmax.f32 %v1918, %v1919
  %v1921 = vrot.slane %v1920, 1
  %v1922 = vmax.f32 %v1920, %v1921
  %v1923 = vmax.f32 %v1739, %v1743
  %v1924 = vrot.slane %v1923, 4
  %v1925 = vmax.f32 %v1923, %v1924
  %v1926 = vrot.slane %v1925, 2
  %v1927 = vmax.f32 %v1925, %v1926
  %v1928 = vrot.slane %v1927, 1
  %v1929 = vmax.f32 %v1927, %v1928
  %v1930 = vmax.f32 %v1740, %v1744
  %v1931 = vrot.slane %v1930, 4
  %v1932 = vmax.f32 %v1930, %v1931
  %v1933 = vrot.slane %v1932, 2
  %v1934 = vmax.f32 %v1932, %v1933
  %v1935 = vrot.slane %v1934, 1
  %v1936 = vmax.f32 %v1934, %v1935
  %v1937 = vmax.f32 %v1741, %v1745
  %v1938 = vrot.slane %v1937, 4
  %v1939 = vmax.f32 %v1937, %v1938
  %v1940 = vrot.slane %v1939, 2
  %v1941 = vmax.f32 %v1939, %v1940
  %v1942 = vrot.slane %v1941, 1
  %v1943 = vmax.f32 %v1941, %v1942
  %v1944 = vmax.f32 %v1742, %v1746
  %v1945 = vrot.slane %v1944, 4
  %v1946 = vmax.f32 %v1944, %v1945
  %v1947 = vrot.slane %v1946, 2
  %v1948 = vmax.f32 %v1946, %v1947
  %v1949 = vrot.slane %v1948, 1
  %v1950 = vmax.f32 %v1948, %v1949
  %v1951 = vmax.f32 %v1747, %v1751
  %v1952 = vrot.slane %v1951, 4
  %v1953 = vmax.f32 %v1951, %v1952
  %v1954 = vrot.slane %v1953, 2
  %v1955 = vmax.f32 %v1953, %v1954
  %v1956 = vrot.slane %v1955, 1
  %v1957 = vmax.f32 %v1955, %v1956
  %v1958 = vmax.f32 %v1748, %v1752
  %v1959 = vrot.slane %v1958, 4
  %v1960 = vmax.f32 %v1958, %v1959
  %v1961 = vrot.slane %v1960, 2
  %v1962 = vmax.f32 %v1960, %v1961
  %v1963 = vrot.slane %v1962, 1
  %v1964 = vmax.f32 %v1962, %v1963
  %v1965 = vmax.f32 %v1749, %v1753
  %v1966 = vrot.slane %v1965, 4
  %v1967 = vmax.f32 %v1965, %v1966
  %v1968 = vrot.slane %v1967, 2
  %v1969 = vmax.f32 %v1967, %v1968
  %v1970 = vrot.slane %v1969, 1
  %v1971 = vmax.f32 %v1969, %v1970
  %v1972 = vmax.f32 %v1750, %v1754
  %v1973 = vrot.slane %v1972, 4
  %v1974 = vmax.f32 %v1972, %v1973
  %v1975 = vrot.slane %v1974, 2
  %v1976 = vmax.f32 %v1974, %v1975
  %v1977 = vrot.slane %v1976, 1
  %v1978 = vmax.f32 %v1976, %v1977
  %v1979 = vpack.c.bf16 %v1761, %v1761
  %v1980 = vpack.c.bf16 %v1768, %v1768
  %v1981 = vpack.c.bf16 %v1775, %v1775
  %v1982 = vpack.c.bf16 %v1782, %v1782
  %v1983 = vpack.c.bf16 %v1789, %v1789
  %v1984 = vpack.c.bf16 %v1796, %v1796
  %v1985 = vpack.c.bf16 %v1803, %v1803
  %v1986 = vpack.c.bf16 %v1810, %v1810
  %v1987 = vpack.c.bf16 %v1817, %v1817
  %v1988 = vpack.c.bf16 %v1824, %v1824
  %v1989 = vpack.c.bf16 %v1831, %v1831
  %v1990 = vpack.c.bf16 %v1838, %v1838
  %v1991 = vpack.c.bf16 %v1845, %v1845
  %v1992 = vpack.c.bf16 %v1852, %v1852
  %v1993 = vpack.c.bf16 %v1859, %v1859
  %v1994 = vpack.c.bf16 %v1866, %v1866
  %v1995 = vpack.c.bf16 %v1873, %v1873
  %v1996 = vpack.c.bf16 %v1880, %v1880
  %v1997 = vpack.c.bf16 %v1887, %v1887
  %v1998 = vpack.c.bf16 %v1894, %v1894
  %v1999 = vpack.c.bf16 %v1901, %v1901
  %v2000 = vpack.c.bf16 %v1908, %v1908
  %v2001 = vpack.c.bf16 %v1915, %v1915
  %v2002 = vpack.c.bf16 %v1922, %v1922
  %v2003 = vpack.c.bf16 %v1929, %v1929
  %v2004 = vpack.c.bf16 %v1936, %v1936
  %v2005 = vpack.c.bf16 %v1943, %v1943
  %v2006 = vpack.c.bf16 %v1950, %v1950
  %v2007 = vpack.c.bf16 %v1957, %v1957
  %v2008 = vpack.c.bf16 %v1964, %v1964
  %v2009 = vpack.c.bf16 %v1971, %v1971
  %v2010 = vpack.c.bf16 %v1978, %v1978
  %v2043 = vunpack.c.l.b16 %v1979
  %v2044 = vunpack.c.l.b16 %v1980
  %v2045 = vunpack.c.l.b16 %v1981
  %v2046 = vunpack.c.l.b16 %v1982
  %v2047 = vunpack.c.l.b16 %v1983
  %v2048 = vunpack.c.l.b16 %v1984
  %v2049 = vunpack.c.l.b16 %v1985
  %v2050 = vunpack.c.l.b16 %v1986
  %v2051 = vunpack.c.l.b16 %v1987
  %v2052 = vunpack.c.l.b16 %v1988
  %v2053 = vunpack.c.l.b16 %v1989
  %v2054 = vunpack.c.l.b16 %v1990
  %v2055 = vunpack.c.l.b16 %v1991
  %v2056 = vunpack.c.l.b16 %v1992
  %v2057 = vunpack.c.l.b16 %v1993
  %v2058 = vunpack.c.l.b16 %v1994
  %v2059 = vunpack.c.l.b16 %v1995
  %v2060 = vunpack.c.l.b16 %v1996
  %v2061 = vunpack.c.l.b16 %v1997
  %v2062 = vunpack.c.l.b16 %v1998
  %v2063 = vunpack.c.l.b16 %v1999
  %v2064 = vunpack.c.l.b16 %v2000
  %v2065 = vunpack.c.l.b16 %v2001
  %v2066 = vunpack.c.l.b16 %v2002
  %v2067 = vunpack.c.l.b16 %v2003
  %v2068 = vunpack.c.l.b16 %v2004
  %v2069 = vunpack.c.l.b16 %v2005
  %v2070 = vunpack.c.l.b16 %v2006
  %v2071 = vunpack.c.l.b16 %v2007
  %v2072 = vunpack.c.l.b16 %v2008
  %v2073 = vunpack.c.l.b16 %v2009
  %v2074 = vunpack.c.l.b16 %v2010
  %v2075 = vpack.c.b16 %v2044, %v2043
  %v2076 = vpack.c.b16 %v2046, %v2045
  %v2077 = vpack.c.b16 %v2048, %v2047
  %v2078 = vpack.c.b16 %v2050, %v2049
  %v2079 = vpack.c.b16 %v2052, %v2051
  %v2080 = vpack.c.b16 %v2054, %v2053
  %v2081 = vpack.c.b16 %v2056, %v2055
  %v2082 = vpack.c.b16 %v2058, %v2057
  %v2083 = vpack.c.b16 %v2060, %v2059
  %v2084 = vpack.c.b16 %v2062, %v2061
  %v2085 = vpack.c.b16 %v2064, %v2063
  %v2086 = vpack.c.b16 %v2066, %v2065
  %v2087 = vpack.c.b16 %v2068, %v2067
  %v2088 = vpack.c.b16 %v2070, %v2069
  %v2089 = vpack.c.b16 %v2072, %v2071
  %v2090 = vpack.c.b16 %v2074, %v2073
  %v2091 = vunpack.c.l.b16 %v2075
  %v2092 = vunpack.c.h.b16 %v2075
  %v2093 = vunpack.c.l.b16 %v2076
  %v2094 = vunpack.c.h.b16 %v2076
  %v2095 = vunpack.c.l.b16 %v2077
  %v2096 = vunpack.c.h.b16 %v2077
  %v2097 = vunpack.c.l.b16 %v2078
  %v2098 = vunpack.c.h.b16 %v2078
  %v2099 = vunpack.c.l.b16 %v2079
  %v2100 = vunpack.c.h.b16 %v2079
  %v2101 = vunpack.c.l.b16 %v2080
  %v2102 = vunpack.c.h.b16 %v2080
  %v2103 = vunpack.c.l.b16 %v2081
  %v2104 = vunpack.c.h.b16 %v2081
  %v2105 = vunpack.c.l.b16 %v2082
  %v2106 = vunpack.c.h.b16 %v2082
  %v2107 = vunpack.c.l.b16 %v2083
  %v2108 = vunpack.c.h.b16 %v2083
  %v2109 = vunpack.c.l.b16 %v2084
  %v2110 = vunpack.c.h.b16 %v2084
  %v2111 = vunpack.c.l.b16 %v2085
  %v2112 = vunpack.c.h.b16 %v2085
  %v2113 = vunpack.c.l.b16 %v2086
  %v2114 = vunpack.c.h.b16 %v2086
  %v2115 = vunpack.c.l.b16 %v2087
  %v2116 = vunpack.c.h.b16 %v2087
  %v2117 = vunpack.c.l.b16 %v2088
  %v2118 = vunpack.c.h.b16 %v2088
  %v2119 = vunpack.c.l.b16 %v2089
  %v2120 = vunpack.c.h.b16 %v2089
  %v2121 = vunpack.c.l.b16 %v2090
  %v2122 = vunpack.c.h.b16 %v2090
  %vm2123 = vcmask 1041409
  %v2124 = vsel %vm2123, %v2095, %v2091
  %vm2125 = vcmask 1042434
  %v2126 = vsel %vm2125, %v2099, %v2124
  %vm2127 = vcmask 1043459
  %v2128 = vsel %vm2127, %v2103, %v2126
  %vm2129 = vcmask 1044484
  %v2130 = vsel %vm2129, %v2107, %v2128
  %vm2131 = vcmask 1045509
  %v2132 = vsel %vm2131, %v2111, %v2130
  %vm2133 = vcmask 1046534
  %v2134 = vsel %vm2133, %v2115, %v2132
  %vm2135 = vcmask 1047559
  %v2136 = vsel %vm2135, %v2119, %v2134
  %v2137 = vsel %vm2123, %v2096, %v2092
  %v2138 = vsel %vm2125, %v2100, %v2137
  %v2139 = vsel %vm2127, %v2104, %v2138
  %v2140 = vsel %vm2129, %v2108, %v2139
  %v2141 = vsel %vm2131, %v2112, %v2140
  %v2142 = vsel %vm2133, %v2116, %v2141
  %v2143 = vsel %vm2135, %v2120, %v2142
  %v2144 = vsel %vm2123, %v2097, %v2093
  %v2145 = vsel %vm2125, %v2101, %v2144
  %v2146 = vsel %vm2127, %v2105, %v2145
  %v2147 = vsel %vm2129, %v2109, %v2146
  %v2148 = vsel %vm2131, %v2113, %v2147
  %v2149 = vsel %vm2133, %v2117, %v2148
  %v2150 = vsel %vm2135, %v2121, %v2149
  %v2151 = vsel %vm2123, %v2098, %v2094
  %v2152 = vsel %vm2125, %v2102, %v2151
  %v2153 = vsel %vm2127, %v2106, %v2152
  %v2154 = vsel %vm2129, %v2110, %v2153
  %v2155 = vsel %vm2131, %v2114, %v2154
  %v2156 = vsel %vm2133, %v2118, %v2155
  %v2157 = vsel %vm2135, %v2122, %v2156
  %v2158 = vpack.c.b16 %v2143, %v2136
  %v2159 = vpack.c.b16 %v2157, %v2150
  %2162 = vst [vmem:[%s7] sm:$0xff] %v2158
  %2163 = vst [vmem:[%s7 + $0x8] sm:$0xff] %v2159
  // Predicated region
  $region30: #{pointnet2_forward.11} parent=0 // pred_check
    _
  $region31: #{pointnet2_forward.11} parent=0 // pred_check_branch
    %2165 = sbr.rel (0) target = $region33
  $region32: #{pointnet2_forward.11} parent=0 // pred_region
    _
  $region33: #{pointnet2_forward.11} parent=0 // pred_fallthru
    _
  // Predicated region
  $region34: #{pointnet2_forward.11} parent=0 // pred_check
    _
  $region35: #{pointnet2_forward.11} parent=0 // pred_check_branch
    %2167 = sbr.rel (0) target = $region37
  $region36: #{pointnet2_forward.11} parent=0 // pred_region
    _
  $region37: #{pointnet2_forward.11} parent=0 // pred_fallthru
    _

// kernel: neg.26
$region0: #{neg.26}
  #allocation0 [shape = 's32[1]{0}', space=sflag, size = 0x4, scoped, tag = 'scoped memory for neg.26']
  %s0 = inlined_call_operand.vmem [shape: f32[2,16,8], index: 0, kind: input, shape index: {}]
  %s1 = inlined_call_operand.vmem [shape: f32[2,16,8], index: 1, kind: output, shape index: {}]
  %v2 = vld [vmem:[%s0] sm:$0xff]
  %3 = xla_tuple %v2
  %4 = xla_tuple %3
  %v5 = vxor.u32 %v2, 2147483648
  %6 = xla_tuple %v5
  %7 = vst [vmem:[%s1] sm:$0xff] %v5
  %s8 = scalar_lea.vmem %s0, 8
  %v9 = vld [vmem:[%s8] sm:$0xff]
  %10 = xla_tuple %v9
  %11 = xla_tuple %10
  %v12 = vxor.u32 %v9, 2147483648
  %13 = xla_tuple %v12
  %s14 = scalar_lea.vmem %s1, 8
  %15 = vst [vmem:[%s14] sm:$0xff] %v12

// kernel: pointnet2_forward.12
$region0: #{pointnet2_forward.12}
  #allocation0 [shape = 'u32[]', space=smem, size = 0x4, offset = 0x4, fixed_abs, tag = 'smem constant byte address 0x4 - core index']
  #allocation1 [shape = 'u32[144,128]{1,0:T(1,128)}', space=vmem, size = 0x12000, scoped, tag = 'internal scratch']
  %s0 = inlined_call_operand.vmem [shape: bf16[16,768], index: 0, kind: input, shape index: {}]
  %s1 = inlined_call_operand.vmem [shape: bf16[768,256], index: 1, kind: input, shape index: {}]
  %s2 = inlined_call_operand.vmem [shape: f32[1,256], index: 2, kind: input, shape index: {}]
  %s3 = inlined_call_operand.vmem [shape: bf16[256,256], index: 3, kind: input, shape index: {}]
  %s4 = inlined_call_operand.vmem [shape: f32[1,256], index: 4, kind: input, shape index: {}]
  %s5 = inlined_call_operand.vmem [shape: bf16[16,256], index: 5, kind: output, shape index: {}]
  %s6 = sld [smem:[#allocation0]]
  $region53: #{pointnet2_forward.12} parent=0
    _
  %s8 = ssub.s32 1, %s6
  %s9 = scalar_select 0, %s8, %s6
  loop: start=0, step=1, limit=4
  $region2: #{pointnet2_forward.12} parent=0 // loop_pre_header
    _
  $region3: #{pointnet2_forward.12} parent=0 // loop_header
    %s11 = sphi 0, %s15
    %p12 = scmp.ge.s32.totalorder %s11, 4
    %s21 = sphi 0, %s23
    %s24 = sphi 0, %s21
    %s25 = sphi 0, %s24
    %s41 = sphi 0, %s25
    %s45 = sphi 0, %s45
    %s47 = sphi 0, %s45
    %s48 = sphi 0, %s47
    %s62 = sphi 0, %s48
    %s66 = sphi 0, %s66
    %s68 = sphi 0, %s66
    %s69 = sphi 0, %s68
    %s83 = sphi 0, %s69
    %s87 = sphi 0, %s87
    %s89 = sphi 0, %s87
    %s90 = sphi 0, %s89
    %s104 = sphi 0, %s90
    %s108 = sphi 0, %s108
    %s110 = sphi 0, %s108
    %s111 = sphi 0, %s110
    %s125 = sphi 0, %s111
    %s131 = sphi 0, %s133
    %s134 = sphi 0, %s131
    %s135 = sphi 0, %s134
    %s151 = sphi 0, %s135
  $region4: #{pointnet2_forward.12} parent=0 // loop_header_branch
    %14 = sbr.rel (%p12) target = $region8
  $region5: #{pointnet2_forward.12} parent=0 // loop_body
    %s16 = ssub.s32 %s11, 1
    %s17 = ssub.s32 %s11, 2
    %s18 = sadd.s32 %s11, 1
    %s19 = ssub.s32 %s11, %s18
    %p20 = scmp.eq.s32.totalorder %s19, 0
    %s22 = sadd.s32 %s21, 1
    %s23 = scalar_select %p20, %s21, %s22
    %p26 = pneg %p20
    %p27 = scmp.eq.s32.totalorder %s11, 1
    %p28 = por %p26, %p27
    %p29 = scmp.ne.s32.totalorder %s21, %s24
    %p30 = scmp.eq.s32.totalorder %s11, 0
    %p31 = por %p29, %p30
    %p32 = scmp.ne.s32.totalorder %s21, %s24
    %p33 = scmp.eq.s32.totalorder %s16, 1
    %p34 = por %p32, %p33
    %p35 = scmp.ne.s32.totalorder %s24, %s25
    %p36 = scmp.eq.s32.totalorder %s16, 0
    %p37 = por %p35, %p36
    %p38 = scmp.ne.s32.totalorder %s24, %s25
    %p39 = scmp.eq.s32.totalorder %s17, 1
    %p40 = por %p38, %p39
    %p42 = scmp.ne.s32.totalorder %s25, %s41
    %p43 = scmp.eq.s32.totalorder %s17, 0
    %p44 = por %p42, %p43
    %s46 = sadd.s32 %s45, 1
    %p49 = scmp.eq.s32.totalorder %s11, 1
    %p50 = scmp.ne.s32.totalorder %s45, %s47
    %p51 = scmp.eq.s32.totalorder %s11, 0
    %p52 = por %p50, %p51
    %p53 = scmp.ne.s32.totalorder %s45, %s47
    %p54 = scmp.eq.s32.totalorder %s16, 1
    %p55 = por %p53, %p54
    %p56 = scmp.ne.s32.totalorder %s47, %s48
    %p57 = scmp.eq.s32.totalorder %s16, 0
    %p58 = por %p56, %p57
    %p59 = scmp.ne.s32.totalorder %s47, %s48
    %p60 = scmp.eq.s32.totalorder %s17, 1
    %p61 = por %p59, %p60
    %p63 = scmp.ne.s32.totalorder %s48, %s62
    %p64 = scmp.eq.s32.totalorder %s17, 0
    %p65 = por %p63, %p64
    %s67 = sadd.s32 %s66, 1
    %p70 = scmp.eq.s32.totalorder %s11, 1
    %p71 = scmp.ne.s32.totalorder %s66, %s68
    %p72 = scmp.eq.s32.totalorder %s11, 0
    %p73 = por %p71, %p72
    %p74 = scmp.ne.s32.totalorder %s66, %s68
    %p75 = scmp.eq.s32.totalorder %s16, 1
    %p76 = por %p74, %p75
    %p77 = scmp.ne.s32.totalorder %s68, %s69
    %p78 = scmp.eq.s32.totalorder %s16, 0
    %p79 = por %p77, %p78
    %p80 = scmp.ne.s32.totalorder %s68, %s69
    %p81 = scmp.eq.s32.totalorder %s17, 1
    %p82 = por %p80, %p81
    %p84 = scmp.ne.s32.totalorder %s69, %s83
    %p85 = scmp.eq.s32.totalorder %s17, 0
    %p86 = por %p84, %p85
    %s88 = sadd.s32 %s87, 1
    %p91 = scmp.eq.s32.totalorder %s11, 1
    %p92 = scmp.ne.s32.totalorder %s87, %s89
    %p93 = scmp.eq.s32.totalorder %s11, 0
    %p94 = por %p92, %p93
    %p95 = scmp.ne.s32.totalorder %s87, %s89
    %p96 = scmp.eq.s32.totalorder %s16, 1
    %p97 = por %p95, %p96
    %p98 = scmp.ne.s32.totalorder %s89, %s90
    %p99 = scmp.eq.s32.totalorder %s16, 0
    %p100 = por %p98, %p99
    %p101 = scmp.ne.s32.totalorder %s89, %s90
    %p102 = scmp.eq.s32.totalorder %s17, 1
    %p103 = por %p101, %p102
    %p105 = scmp.ne.s32.totalorder %s90, %s104
    %p106 = scmp.eq.s32.totalorder %s17, 0
    %p107 = por %p105, %p106
    %s109 = sadd.s32 %s108, 1
    %p112 = scmp.eq.s32.totalorder %s11, 1
    %p113 = scmp.ne.s32.totalorder %s108, %s110
    %p114 = scmp.eq.s32.totalorder %s11, 0
    %p115 = por %p113, %p114
    %p116 = scmp.ne.s32.totalorder %s108, %s110
    %p117 = scmp.eq.s32.totalorder %s16, 1
    %p118 = por %p116, %p117
    %p119 = scmp.ne.s32.totalorder %s110, %s111
    %p120 = scmp.eq.s32.totalorder %s16, 0
    %p121 = por %p119, %p120
    %p122 = scmp.ne.s32.totalorder %s110, %s111
    %p123 = scmp.eq.s32.totalorder %s17, 1
    %p124 = por %p122, %p123
    %p126 = scmp.ne.s32.totalorder %s111, %s125
    %p127 = scmp.eq.s32.totalorder %s17, 0
    %p128 = por %p126, %p127
    %s129 = ssub.s32 %s11, %s18
    %p130 = scmp.eq.s32.totalorder %s129, 0
    %s132 = sadd.s32 %s131, 1
    %s133 = scalar_select %p130, %s131, %s132
    %p136 = pneg %p130
    %p137 = scmp.eq.s32.totalorder %s11, 1
    %p138 = por %p136, %p137
    %p139 = scmp.ne.s32.totalorder %s131, %s134
    %p140 = scmp.eq.s32.totalorder %s11, 0
    %p141 = por %p139, %p140
    %p142 = scmp.ne.s32.totalorder %s131, %s134
    %p143 = scmp.eq.s32.totalorder %s16, 1
    %p144 = por %p142, %p143
    %p145 = scmp.ne.s32.totalorder %s134, %s135
    %p146 = scmp.eq.s32.totalorder %s16, 0
    %p147 = por %p145, %p146
    %p148 = scmp.ne.s32.totalorder %s134, %s135
    %p149 = scmp.eq.s32.totalorder %s17, 1
    %p150 = por %p148, %p149
    %p152 = scmp.ne.s32.totalorder %s135, %s151
    %p153 = scmp.eq.s32.totalorder %s17, 0
    %p154 = por %p152, %p153
    %p155 = scmp.le.s32.totalorder 1, %s11
    %p156 = scmp.lt.s32.totalorder %s11, 3
    %p157 = pnand %p155, %p156
    %p158 = pneg %p157
    // Predicated region
    $region9: #{pointnet2_forward.12} parent=5 // pred_check
      _
    $region10: #{pointnet2_forward.12} parent=5 // pred_check_branch
      %160 = sbr.rel (%p157) target = $region12
    $region11: #{pointnet2_forward.12} parent=5 // pred_region
      %s161 = ssub.s32 %s11, 1
      // Predicated region
      $region13: #{pointnet2_forward.12} parent=11 // pred_check
        %p162 = pneg %p58
      $region14: #{pointnet2_forward.12} parent=11 // pred_check_branch
        %164 = sbr.rel (%p162) target = $region16
      $region15: #{pointnet2_forward.12} parent=11 // pred_region
        _
      $region16: #{pointnet2_forward.12} parent=11 // pred_fallthru
        _
      // Predicated region
      $region17: #{pointnet2_forward.12} parent=11 // pred_check
        %p165 = pneg %p79
      $region18: #{pointnet2_forward.12} parent=11 // pred_check_branch
        %167 = sbr.rel (%p165) target = $region20
      $region19: #{pointnet2_forward.12} parent=11 // pred_region
        _
      $region20: #{pointnet2_forward.12} parent=11 // pred_fallthru
        _
      // Predicated region
      $region21: #{pointnet2_forward.12} parent=11 // pred_check
        %p168 = pneg %p100
      $region22: #{pointnet2_forward.12} parent=11 // pred_check_branch
        %170 = sbr.rel (%p168) target = $region24
      $region23: #{pointnet2_forward.12} parent=11 // pred_region
        _
      $region24: #{pointnet2_forward.12} parent=11 // pred_fallthru
        _
      // Predicated region
      $region25: #{pointnet2_forward.12} parent=11 // pred_check
        %p171 = pneg %p121
      $region26: #{pointnet2_forward.12} parent=11 // pred_check_branch
        %173 = sbr.rel (%p171) target = $region28
      $region27: #{pointnet2_forward.12} parent=11 // pred_region
        _
      $region28: #{pointnet2_forward.12} parent=11 // pred_fallthru
        _
    $region12: #{pointnet2_forward.12} parent=5 // pred_fallthru
      _
    %p174 = scmp.lt.s32.totalorder %s11, 2
    // Predicated region
    $region29: #{pointnet2_forward.12} parent=5 // pred_check
      %p175 = pneg %p174
    $region30: #{pointnet2_forward.12} parent=5 // pred_check_branch
      %177 = sbr.rel (%p175) target = $region32
    $region31: #{pointnet2_forward.12} parent=5 // pred_region
      // Predicated region
      $region33: #{pointnet2_forward.12} parent=31 // pred_check
        %p178 = pneg %p31
      $region34: #{pointnet2_forward.12} parent=31 // pred_check_branch
        %180 = sbr.rel (%p178) target = $region36
      $region35: #{pointnet2_forward.12} parent=31 // pred_region
        %p181 = scmp.lt.s32.totalorder %s11, 1
        %s182 = scalar_select %p181, %s11, 1
        %s183 = smul.addr %s182, 6
        %s184 = smul.addr %s183, 4
        %s185 = scalar_lea.vmem %s0, %s184
      $region36: #{pointnet2_forward.12} parent=31 // pred_fallthru
        _
    $region32: #{pointnet2_forward.12} parent=5 // pred_fallthru
      _
    %p186 = scmp.le.s32.totalorder 1, %s11
    %p187 = scmp.lt.s32.totalorder %s11, 3
    %p188 = pnand %p186, %p187
    %p189 = pneg %p188
    // Predicated region
    $region37: #{pointnet2_forward.12} parent=5 // pred_check
      _
    $region38: #{pointnet2_forward.12} parent=5 // pred_check_branch
      %191 = sbr.rel (%p188) target = $region40
    $region39: #{pointnet2_forward.12} parent=5 // pred_region
      %s192 = ssub.s32 %s11, 1
      %p193 = scmp.lt.s32.totalorder %s16, 1
      %s194 = scalar_select %p193, %s16, 1
      %s195 = smul.addr %s194, 6
      %s196 = smul.addr %s195, 4
      %s197 = scalar_lea.vmem %s0, %s196
      %p198 = pneg %p37
      %p199 = pneg %p34
      %p200 = pneg %p58
      %p201 = pneg %p55
      %p202 = pneg %p79
      %p203 = pneg %p76
      %p204 = pneg %p100
      %p205 = pneg %p97
      %p206 = pneg %p121
      %p207 = pneg %p118
      %p208 = pneg %p147
      %p209 = pneg %p144
      %p210 = scmp.lt.s32.totalorder %s16, 1
      %s211 = scalar_select %p210, %s16, 1
      %s212 = smul.addr %s211, 2
      %s213 = smul.addr %s212, 4
      %s214 = scalar_lea.vmem %s5, %s213
      %p215 = scmp.lt.s32.totalorder %s16, 1
      %s216 = scalar_select %p215, %s16, 1
      %s217 = smul.addr %s216, 6
      %s218 = smul.addr %s217, 4
      %s219 = scalar_lea.vmem %s0, %s218
      %p220 = scmp.lt.s32.totalorder %s16, 1
      %s221 = scalar_select %p220, %s16, 1
      %s222 = smul.addr %s221, 2
      %s223 = smul.addr %s222, 4
      %s224 = scalar_lea.vmem %s5, %s223
      %v225 = vld [vmem:[%s219] sm:$0xff]
      %v226 = vld [vmem:[%s219 + $0x8] sm:$0xff]
      %v227 = vld [vmem:[%s219 + $0x10] sm:$0xff]
      %v228 = vld [vmem:[%s1] sm:$0xff]
      %v229 = vld [vmem:[%s1 + $0x8] sm:$0xff]
      %v230 = vld [vmem:[%s1 + $0x10] sm:$0xff]
      %v231 = vld [vmem:[%s1 + $0x18] sm:$0xff]
      %v232 = vld [vmem:[%s1 + $0x20] sm:$0xff]
      %v233 = vld [vmem:[%s1 + $0x28] sm:$0xff]
      %v234 = vld [vmem:[%s1 + $0x30] sm:$0xff]
      %v235 = vld [vmem:[%s1 + $0x38] sm:$0xff]
      %v236 = vld [vmem:[%s1 + $0x40] sm:$0xff]
      %v237 = vld [vmem:[%s1 + $0x48] sm:$0xff]
      %v238 = vld [vmem:[%s1 + $0x50] sm:$0xff]
      %v239 = vld [vmem:[%s1 + $0x58] sm:$0xff]
      %v240 = vld [vmem:[%s1 + $0x60] sm:$0xff]
      %v241 = vld [vmem:[%s1 + $0x68] sm:$0xff]
      %v242 = vld [vmem:[%s1 + $0x70] sm:$0xff]
      %v243 = vld [vmem:[%s1 + $0x78] sm:$0xff]
      %v244 = vld [vmem:[%s1 + $0x80] sm:$0xff]
      %v245 = vld [vmem:[%s1 + $0x88] sm:$0xff]
      %v246 = vld [vmem:[%s1 + $0x90] sm:$0xff]
      %v247 = vld [vmem:[%s1 + $0x98] sm:$0xff]
      %v248 = vld [vmem:[%s1 + $0xa0] sm:$0xff]
      %v249 = vld [vmem:[%s1 + $0xa8] sm:$0xff]
      %v250 = vld [vmem:[%s1 + $0xb0] sm:$0xff]
      %v251 = vld [vmem:[%s1 + $0xb8] sm:$0xff]
      %v252 = vld [vmem:[%s1 + $0xc0] sm:$0xff]
      %v253 = vld [vmem:[%s1 + $0xc8] sm:$0xff]
      %v254 = vld [vmem:[%s1 + $0xd0] sm:$0xff]
      %v255 = vld [vmem:[%s1 + $0xd8] sm:$0xff]
      %v256 = vld [vmem:[%s1 + $0xe0] sm:$0xff]
      %v257 = vld [vmem:[%s1 + $0xe8] sm:$0xff]
      %v258 = vld [vmem:[%s1 + $0xf0] sm:$0xff]
      %v259 = vld [vmem:[%s1 + $0xf8] sm:$0xff]
      %v260 = vld [vmem:[%s1 + $0x100] sm:$0xff]
      %v261 = vld [vmem:[%s1 + $0x108] sm:$0xff]
      %v262 = vld [vmem:[%s1 + $0x110] sm:$0xff]
      %v263 = vld [vmem:[%s1 + $0x118] sm:$0xff]
      %v264 = vld [vmem:[%s1 + $0x120] sm:$0xff]
      %v265 = vld [vmem:[%s1 + $0x128] sm:$0xff]
      %v266 = vld [vmem:[%s1 + $0x130] sm:$0xff]
      %v267 = vld [vmem:[%s1 + $0x138] sm:$0xff]
      %v268 = vld [vmem:[%s1 + $0x140] sm:$0xff]
      %v269 = vld [vmem:[%s1 + $0x148] sm:$0xff]
      %v270 = vld [vmem:[%s1 + $0x150] sm:$0xff]
      %v271 = vld [vmem:[%s1 + $0x158] sm:$0xff]
      %v272 = vld [vmem:[%s1 + $0x160] sm:$0xff]
      %v273 = vld [vmem:[%s1 + $0x168] sm:$0xff]
      %v274 = vld [vmem:[%s1 + $0x170] sm:$0xff]
      %v275 = vld [vmem:[%s1 + $0x178] sm:$0xff]
      %v276 = vld [vmem:[%s1 + $0x180] sm:$0xff]
      %v277 = vld [vmem:[%s1 + $0x188] sm:$0xff]
      %v278 = vld [vmem:[%s1 + $0x190] sm:$0xff]
      %v279 = vld [vmem:[%s1 + $0x198] sm:$0xff]
      %v280 = vld [vmem:[%s1 + $0x1a0] sm:$0xff]
      %v281 = vld [vmem:[%s1 + $0x1a8] sm:$0xff]
      %v282 = vld [vmem:[%s1 + $0x1b0] sm:$0xff]
      %v283 = vld [vmem:[%s1 + $0x1b8] sm:$0xff]
      %v284 = vld [vmem:[%s1 + $0x1c0] sm:$0xff]
      %v285 = vld [vmem:[%s1 + $0x1c8] sm:$0xff]
      %v286 = vld [vmem:[%s1 + $0x1d0] sm:$0xff]
      %v287 = vld [vmem:[%s1 + $0x1d8] sm:$0xff]
      %v288 = vld [vmem:[%s1 + $0x1e0] sm:$0xff]
      %v289 = vld [vmem:[%s1 + $0x1e8] sm:$0xff]
      %v290 = vld [vmem:[%s1 + $0x1f0] sm:$0xff]
      %v291 = vld [vmem:[%s1 + $0x1f8] sm:$0xff]
      %v292 = vld [vmem:[%s1 + $0x200] sm:$0xff]
      %v293 = vld [vmem:[%s1 + $0x208] sm:$0xff]
      %v294 = vld [vmem:[%s1 + $0x210] sm:$0xff]
      %v295 = vld [vmem:[%s1 + $0x218] sm:$0xff]
      %v296 = vld [vmem:[%s1 + $0x220] sm:$0xff]
      %v297 = vld [vmem:[%s1 + $0x228] sm:$0xff]
      %v298 = vld [vmem:[%s1 + $0x230] sm:$0xff]
      %v299 = vld [vmem:[%s1 + $0x238] sm:$0xff]
      %v300 = vld [vmem:[%s1 + $0x240] sm:$0xff]
      %v301 = vld [vmem:[%s1 + $0x248] sm:$0xff]
      %v302 = vld [vmem:[%s1 + $0x250] sm:$0xff]
      %v303 = vld [vmem:[%s1 + $0x258] sm:$0xff]
      %v304 = vld [vmem:[%s1 + $0x260] sm:$0xff]
      %v305 = vld [vmem:[%s1 + $0x268] sm:$0xff]
      %v306 = vld [vmem:[%s1 + $0x270] sm:$0xff]
      %v307 = vld [vmem:[%s1 + $0x278] sm:$0xff]
      %v308 = vld [vmem:[%s1 + $0x280] sm:$0xff]
      %v309 = vld [vmem:[%s1 + $0x288] sm:$0xff]
      %v310 = vld [vmem:[%s1 + $0x290] sm:$0xff]
      %v311 = vld [vmem:[%s1 + $0x298] sm:$0xff]
      %v312 = vld [vmem:[%s1 + $0x2a0] sm:$0xff]
      %v313 = vld [vmem:[%s1 + $0x2a8] sm:$0xff]
      %v314 = vld [vmem:[%s1 + $0x2b0] sm:$0xff]
      %v315 = vld [vmem:[%s1 + $0x2b8] sm:$0xff]
      %v316 = vld [vmem:[%s1 + $0x2c0] sm:$0xff]
      %v317 = vld [vmem:[%s1 + $0x2c8] sm:$0xff]
      %v318 = vld [vmem:[%s1 + $0x2d0] sm:$0xff]
      %v319 = vld [vmem:[%s1 + $0x2d8] sm:$0xff]
      %v320 = vld [vmem:[%s1 + $0x2e0] sm:$0xff]
      %v321 = vld [vmem:[%s1 + $0x2e8] sm:$0xff]
      %v322 = vld [vmem:[%s1 + $0x2f0] sm:$0xff]
      %v323 = vld [vmem:[%s1 + $0x2f8] sm:$0xff]
      %v324 = vld [vmem:[%s2] sm:$0x3]
      %v326 = vlaneseq
      %v327 = vshrl.u32 %v326, 7
      %v328 = vsub.s32 0, %v327
      %v329 = vrot.slane %v324, %v328
      %v330 = vlaneseq
      %v331 = vshrl.u32 %v330, 7
      %v332 = vsub.s32 1, %v331
      %v333 = vrot.slane %v324, %v332
      %v339 = vunpack.c.l.b16 %v225
      %v340 = vunpack.c.h.b16 %v225
      %v341 = vunpack.c.l.b16 %v226
      %v342 = vunpack.c.h.b16 %v226
      %v343 = vunpack.c.l.b16 %v227
      %v344 = vunpack.c.h.b16 %v227
      %v345 = vpack.c.b16 %v339, %v339
      %v346 = vpack.c.b16 %v340, %v340
      %v347 = vpack.c.b16 %v341, %v341
      %v348 = vpack.c.b16 %v342, %v342
      %v349 = vpack.c.b16 %v343, %v343
      %v350 = vpack.c.b16 %v344, %v344
      %v453 = vunpack.c.l.b16 %v228
      %v454 = vunpack.c.h.b16 %v228
      %v455 = vunpack.c.l.b16 %v229
      %v456 = vunpack.c.h.b16 %v229
      %v457 = vunpack.c.l.b16 %v230
      %v458 = vunpack.c.h.b16 %v230
      %v459 = vunpack.c.l.b16 %v231
      %v460 = vunpack.c.h.b16 %v231
      %v461 = vunpack.c.l.b16 %v232
      %v462 = vunpack.c.h.b16 %v232
      %v463 = vunpack.c.l.b16 %v233
      %v464 = vunpack.c.h.b16 %v233
      %v465 = vunpack.c.l.b16 %v234
      %v466 = vunpack.c.h.b16 %v234
      %v467 = vunpack.c.l.b16 %v235
      %v468 = vunpack.c.h.b16 %v235
      %v469 = vunpack.c.l.b16 %v236
      %v470 = vunpack.c.h.b16 %v236
      %v471 = vunpack.c.l.b16 %v237
      %v472 = vunpack.c.h.b16 %v237
      %v473 = vunpack.c.l.b16 %v238
      %v474 = vunpack.c.h.b16 %v238
      %v475 = vunpack.c.l.b16 %v239
      %v476 = vunpack.c.h.b16 %v239
      %v477 = vunpack.c.l.b16 %v240
      %v478 = vunpack.c.h.b16 %v240
      %v479 = vunpack.c.l.b16 %v241
      %v480 = vunpack.c.h.b16 %v241
      %v481 = vunpack.c.l.b16 %v242
      %v482 = vunpack.c.h.b16 %v242
      %v483 = vunpack.c.l.b16 %v243
      %v484 = vunpack.c.h.b16 %v243
      %v485 = vunpack.c.l.b16 %v244
      %v486 = vunpack.c.h.b16 %v244
      %v487 = vunpack.c.l.b16 %v245
      %v488 = vunpack.c.h.b16 %v245
      %v489 = vunpack.c.l.b16 %v246
      %v490 = vunpack.c.h.b16 %v246
      %v491 = vunpack.c.l.b16 %v247
      %v492 = vunpack.c.h.b16 %v247
      %v493 = vunpack.c.l.b16 %v248
      %v494 = vunpack.c.h.b16 %v248
      %v495 = vunpack.c.l.b16 %v249
      %v496 = vunpack.c.h.b16 %v249
      %v497 = vunpack.c.l.b16 %v250
      %v498 = vunpack.c.h.b16 %v250
      %v499 = vunpack.c.l.b16 %v251
      %v500 = vunpack.c.h.b16 %v251
      %v501 = vunpack.c.l.b16 %v252
      %v502 = vunpack.c.h.b16 %v252
      %v503 = vunpack.c.l.b16 %v253
      %v504 = vunpack.c.h.b16 %v253
      %v505 = vunpack.c.l.b16 %v254
      %v506 = vunpack.c.h.b16 %v254
      %v507 = vunpack.c.l.b16 %v255
      %v508 = vunpack.c.h.b16 %v255
      %v509 = vunpack.c.l.b16 %v256
      %v510 = vunpack.c.h.b16 %v256
      %v511 = vunpack.c.l.b16 %v257
      %v512 = vunpack.c.h.b16 %v257
      %v513 = vunpack.c.l.b16 %v258
      %v514 = vunpack.c.h.b16 %v258
      %v515 = vunpack.c.l.b16 %v259
      %v516 = vunpack.c.h.b16 %v259
      %v517 = vunpack.c.l.b16 %v260
      %v518 = vunpack.c.h.b16 %v260
      %v519 = vunpack.c.l.b16 %v261
      %v520 = vunpack.c.h.b16 %v261
      %v521 = vunpack.c.l.b16 %v262
      %v522 = vunpack.c.h.b16 %v262
      %v523 = vunpack.c.l.b16 %v263
      %v524 = vunpack.c.h.b16 %v263
      %v525 = vunpack.c.l.b16 %v264
      %v526 = vunpack.c.h.b16 %v264
      %v527 = vunpack.c.l.b16 %v265
      %v528 = vunpack.c.h.b16 %v265
      %v529 = vunpack.c.l.b16 %v266
      %v530 = vunpack.c.h.b16 %v266
      %v531 = vunpack.c.l.b16 %v267
      %v532 = vunpack.c.h.b16 %v267
      %v533 = vunpack.c.l.b16 %v268
      %v534 = vunpack.c.h.b16 %v268
      %v535 = vunpack.c.l.b16 %v269
      %v536 = vunpack.c.h.b16 %v269
      %v537 = vunpack.c.l.b16 %v270
      %v538 = vunpack.c.h.b16 %v270
      %v539 = vunpack.c.l.b16 %v271
      %v540 = vunpack.c.h.b16 %v271
      %v541 = vunpack.c.l.b16 %v272
      %v542 = vunpack.c.h.b16 %v272
      %v543 = vunpack.c.l.b16 %v273
      %v544 = vunpack.c.h.b16 %v273
      %v545 = vunpack.c.l.b16 %v274
      %v546 = vunpack.c.h.b16 %v274
      %v547 = vunpack.c.l.b16 %v275
      %v548 = vunpack.c.h.b16 %v275
      %v549 = vunpack.c.l.b16 %v276
      %v550 = vunpack.c.h.b16 %v276
      %v551 = vunpack.c.l.b16 %v277
      %v552 = vunpack.c.h.b16 %v277
      %v553 = vunpack.c.l.b16 %v278
      %v554 = vunpack.c.h.b16 %v278
      %v555 = vunpack.c.l.b16 %v279
      %v556 = vunpack.c.h.b16 %v279
      %v557 = vunpack.c.l.b16 %v280
      %v558 = vunpack.c.h.b16 %v280
      %v559 = vunpack.c.l.b16 %v281
      %v560 = vunpack.c.h.b16 %v281
      %v561 = vunpack.c.l.b16 %v282
      %v562 = vunpack.c.h.b16 %v282
      %v563 = vunpack.c.l.b16 %v283
      %v564 = vunpack.c.h.b16 %v283
      %v565 = vunpack.c.l.b16 %v284
      %v566 = vunpack.c.h.b16 %v284
      %v567 = vunpack.c.l.b16 %v285
      %v568 = vunpack.c.h.b16 %v285
      %v569 = vunpack.c.l.b16 %v286
      %v570 = vunpack.c.h.b16 %v286
      %v571 = vunpack.c.l.b16 %v287
      %v572 = vunpack.c.h.b16 %v287
      %v573 = vunpack.c.l.b16 %v288
      %v574 = vunpack.c.h.b16 %v288
      %v575 = vunpack.c.l.b16 %v289
      %v576 = vunpack.c.h.b16 %v289
      %v577 = vunpack.c.l.b16 %v290
      %v578 = vunpack.c.h.b16 %v290
      %v579 = vunpack.c.l.b16 %v291
      %v580 = vunpack.c.h.b16 %v291
      %v581 = vunpack.c.l.b16 %v292
      %v582 = vunpack.c.h.b16 %v292
      %v583 = vunpack.c.l.b16 %v293
      %v584 = vunpack.c.h.b16 %v293
      %v585 = vunpack.c.l.b16 %v294
      %v586 = vunpack.c.h.b16 %v294
      %v587 = vunpack.c.l.b16 %v295
      %v588 = vunpack.c.h.b16 %v295
      %v589 = vunpack.c.l.b16 %v296
      %v590 = vunpack.c.h.b16 %v296
      %v591 = vunpack.c.l.b16 %v297
      %v592 = vunpack.c.h.b16 %v297
      %v593 = vunpack.c.l.b16 %v298
      %v594 = vunpack.c.h.b16 %v298
      %v595 = vunpack.c.l.b16 %v299
      %v596 = vunpack.c.h.b16 %v299
      %v597 = vunpack.c.l.b16 %v300
      %v598 = vunpack.c.h.b16 %v300
      %v599 = vunpack.c.l.b16 %v301
      %v600 = vunpack.c.h.b16 %v301
      %v601 = vunpack.c.l.b16 %v302
      %v602 = vunpack.c.h.b16 %v302
      %v603 = vunpack.c.l.b16 %v303
      %v604 = vunpack.c.h.b16 %v303
      %v605 = vunpack.c.l.b16 %v304
      %v606 = vunpack.c.h.b16 %v304
      %v607 = vunpack.c.l.b16 %v305
      %v608 = vunpack.c.h.b16 %v305
      %v609 = vunpack.c.l.b16 %v306
      %v610 = vunpack.c.h.b16 %v306
      %v611 = vunpack.c.l.b16 %v307
      %v612 = vunpack.c.h.b16 %v307
      %v613 = vunpack.c.l.b16 %v308
      %v614 = vunpack.c.h.b16 %v308
      %v615 = vunpack.c.l.b16 %v309
      %v616 = vunpack.c.h.b16 %v309
      %v617 = vunpack.c.l.b16 %v310
      %v618 = vunpack.c.h.b16 %v310
      %v619 = vunpack.c.l.b16 %v311
      %v620 = vunpack.c.h.b16 %v311
      %v621 = vunpack.c.l.b16 %v312
      %v622 = vunpack.c.h.b16 %v312
      %v623 = vunpack.c.l.b16 %v313
      %v624 = vunpack.c.h.b16 %v313
      %v625 = vunpack.c.l.b16 %v314
      %v626 = vunpack.c.h.b16 %v314
      %v627 = vunpack.c.l.b16 %v315
      %v628 = vunpack.c.h.b16 %v315
      %v629 = vunpack.c.l.b16 %v316
      %v630 = vunpack.c.h.b16 %v316
      %v631 = vunpack.c.l.b16 %v317
      %v632 = vunpack.c.h.b16 %v317
      %v633 = vunpack.c.l.b16 %v318
      %v634 = vunpack.c.h.b16 %v318
      %v635 = vunpack.c.l.b16 %v319
      %v636 = vunpack.c.h.b16 %v319
      %v637 = vunpack.c.l.b16 %v320
      %v638 = vunpack.c.h.b16 %v320
      %v639 = vunpack.c.l.b16 %v321
      %v640 = vunpack.c.h.b16 %v321
      %v641 = vunpack.c.l.b16 %v322
      %v642 = vunpack.c.h.b16 %v322
      %v643 = vunpack.c.l.b16 %v323
      %v644 = vunpack.c.h.b16 %v323
      %v645 = vpack.c.b16 %v455, %v453
      %v646 = vpack.c.b16 %v456, %v454
      %v647 = vpack.c.b16 %v459, %v457
      %v648 = vpack.c.b16 %v460, %v458
      %v649 = vpack.c.b16 %v463, %v461
      %v650 = vpack.c.b16 %v464, %v462
      %v651 = vpack.c.b16 %v467, %v465
      %v652 = vpack.c.b16 %v468, %v466
      %v653 = vpack.c.b16 %v471, %v469
      %v654 = vpack.c.b16 %v472, %v470
      %v655 = vpack.c.b16 %v475, %v473
      %v656 = vpack.c.b16 %v476, %v474
      %v657 = vpack.c.b16 %v479, %v477
      %v658 = vpack.c.b16 %v480, %v478
      %v659 = vpack.c.b16 %v483, %v481
      %v660 = vpack.c.b16 %v484, %v482
      %v661 = vpack.c.b16 %v487, %v485
      %v662 = vpack.c.b16 %v488, %v486
      %v663 = vpack.c.b16 %v491, %v489
      %v664 = vpack.c.b16 %v492, %v490
      %v665 = vpack.c.b16 %v495, %v493
      %v666 = vpack.c.b16 %v496, %v494
      %v667 = vpack.c.b16 %v499, %v497
      %v668 = vpack.c.b16 %v500, %v498
      %v669 = vpack.c.b16 %v503, %v501
      %v670 = vpack.c.b16 %v504, %v502
      %v671 = vpack.c.b16 %v507, %v505
      %v672 = vpack.c.b16 %v508, %v506
      %v673 = vpack.c.b16 %v511, %v509
      %v674 = vpack.c.b16 %v512, %v510
      %v675 = vpack.c.b16 %v515, %v513
      %v676 = vpack.c.b16 %v516, %v514
      %v677 = vpack.c.b16 %v519, %v517
      %v678 = vpack.c.b16 %v520, %v518
      %v679 = vpack.c.b16 %v523, %v521
      %v680 = vpack.c.b16 %v524, %v522
      %v681 = vpack.c.b16 %v527, %v525
      %v682 = vpack.c.b16 %v528, %v526
      %v683 = vpack.c.b16 %v531, %v529
      %v684 = vpack.c.b16 %v532, %v530
      %v685 = vpack.c.b16 %v535, %v533
      %v686 = vpack.c.b16 %v536, %v534
      %v687 = vpack.c.b16 %v539, %v537
      %v688 = vpack.c.b16 %v540, %v538
      %v689 = vpack.c.b16 %v543, %v541
      %v690 = vpack.c.b16 %v544, %v542
      %v691 = vpack.c.b16 %v547, %v545
      %v692 = vpack.c.b16 %v548, %v546
      %v693 = vpack.c.b16 %v551, %v549
      %v694 = vpack.c.b16 %v552, %v550
      %v695 = vpack.c.b16 %v555, %v553
      %v696 = vpack.c.b16 %v556, %v554
      %v697 = vpack.c.b16 %v559, %v557
      %v698 = vpack.c.b16 %v560, %v558
      %v699 = vpack.c.b16 %v563, %v561
      %v700 = vpack.c.b16 %v564, %v562
      %v701 = vpack.c.b16 %v567, %v565
      %v702 = vpack.c.b16 %v568, %v566
      %v703 = vpack.c.b16 %v571, %v569
      %v704 = vpack.c.b16 %v572, %v570
      %v705 = vpack.c.b16 %v575, %v573
      %v706 = vpack.c.b16 %v576, %v574
      %v707 = vpack.c.b16 %v579, %v577
      %v708 = vpack.c.b16 %v580, %v578
      %v709 = vpack.c.b16 %v583, %v581
      %v710 = vpack.c.b16 %v584, %v582
      %v711 = vpack.c.b16 %v587, %v585
      %v712 = vpack.c.b16 %v588, %v586
      %v713 = vpack.c.b16 %v591, %v589
      %v714 = vpack.c.b16 %v592, %v590
      %v715 = vpack.c.b16 %v595, %v593
      %v716 = vpack.c.b16 %v596, %v594
      %v717 = vpack.c.b16 %v599, %v597
      %v718 = vpack.c.b16 %v600, %v598
      %v719 = vpack.c.b16 %v603, %v601
      %v720 = vpack.c.b16 %v604, %v602
      %v721 = vpack.c.b16 %v607, %v605
      %v722 = vpack.c.b16 %v608, %v606
      %v723 = vpack.c.b16 %v611, %v609
      %v724 = vpack.c.b16 %v612, %v610
      %v725 = vpack.c.b16 %v615, %v613
      %v726 = vpack.c.b16 %v616, %v614
      %v727 = vpack.c.b16 %v619, %v617
      %v728 = vpack.c.b16 %v620, %v618
      %v729 = vpack.c.b16 %v623, %v621
      %v730 = vpack.c.b16 %v624, %v622
      %v731 = vpack.c.b16 %v627, %v625
      %v732 = vpack.c.b16 %v628, %v626
      %v733 = vpack.c.b16 %v631, %v629
      %v734 = vpack.c.b16 %v632, %v630
      %v735 = vpack.c.b16 %v635, %v633
      %v736 = vpack.c.b16 %v636, %v634
      %v737 = vpack.c.b16 %v639, %v637
      %v738 = vpack.c.b16 %v640, %v638
      %v739 = vpack.c.b16 %v643, %v641
      %v740 = vpack.c.b16 %v644, %v642
      %837 = vmatprep.subr.bf16.mxu0 %v660
      %838 = vmatpush1.bf16.msra.mxu0 %v659
      %839 = vmatprep.subr.bf16.mxu0 %v658
      %840 = vmatpush1.bf16.msra.mxu0 %v657
      %841 = vmatprep.subr.bf16.mxu0 %v656
      %842 = vmatpush1.bf16.msra.mxu0 %v655
      %843 = vmatprep.subr.bf16.mxu0 %v654
      %844 = vmatpush1.bf16.msra.mxu0 %v653
      %845 = vmatprep.subr.bf16.mxu0 %v652
      %846 = vmatpush1.bf16.msra.mxu0 %v651
      %847 = vmatprep.subr.bf16.mxu0 %v650
      %848 = vmatpush1.bf16.msra.mxu0 %v649
      %849 = vmatprep.subr.bf16.mxu0 %v648
      %850 = vmatpush1.bf16.msra.mxu0 %v647
      %851 = vmatprep.subr.bf16.mxu0 %v646
      %852 = vmatpush1.bf16.msra.mxu0 %v645
      %853 = vmatprep.subr.bf16.mxu0 %v676
      %854 = vmatpush2.bf16.msra.mxu0 %v675
      %855 = vmatprep.subr.bf16.mxu0 %v674
      %856 = vmatpush2.bf16.msra.mxu0 %v673
      %857 = vmatprep.subr.bf16.mxu0 %v672
      %858 = vmatpush2.bf16.msra.mxu0 %v671
      %859 = vmatprep.subr.bf16.mxu0 %v670
      %860 = vmatpush2.bf16.msra.mxu0 %v669
      %861 = vmatprep.subr.bf16.mxu0 %v668
      %862 = vmatpush2.bf16.msra.mxu0 %v667
      %863 = vmatprep.subr.bf16.mxu0 %v666
      %864 = vmatpush2.bf16.msra.mxu0 %v665
      %865 = vmatprep.subr.bf16.mxu0 %v664
      %866 = vmatpush2.bf16.msra.mxu0 %v663
      %867 = vmatprep.subr.bf16.mxu0 %v662
      %868 = vmatpush2.bf16.msra.mxu0 %v661
      %869 = vmatprep.mubr.bf16.mxu0 %v346
      %870 = vmatmul.mubr.bf16.gmra.mxu0 %v345
      %v871 = vpop.f32.mrf.mxu0
      %v872 = vadd.f32 %v329, %v871
      %v873 = vpop.f32.mrf.mxu0
      %v874 = vadd.f32 %v333, %v873
      %v875 = vpop.f32.mrf.mxu0
      %v876 = vpop.f32.mrf.mxu0
      %877 = vdwg.mxu0
      %878 = vmatprep.subr.bf16.mxu0 %v692
      %879 = vmatpush1.bf16.msra.mxu0 %v691
      %880 = vmatprep.subr.bf16.mxu0 %v690
      %881 = vmatpush1.bf16.msra.mxu0 %v689
      %882 = vmatprep.subr.bf16.mxu0 %v688
      %883 = vmatpush1.bf16.msra.mxu0 %v687
      %884 = vmatprep.subr.bf16.mxu0 %v686
      %885 = vmatpush1.bf16.msra.mxu0 %v685
      %886 = vmatprep.subr.bf16.mxu0 %v684
      %887 = vmatpush1.bf16.msra.mxu0 %v683
      %888 = vmatprep.subr.bf16.mxu0 %v682
      %889 = vmatpush1.bf16.msra.mxu0 %v681
      %890 = vmatprep.subr.bf16.mxu0 %v680
      %891 = vmatpush1.bf16.msra.mxu0 %v679
      %892 = vmatprep.subr.bf16.mxu0 %v678
      %893 = vmatpush1.bf16.msra.mxu0 %v677
      %894 = vmatprep.subr.bf16.mxu0 %v708
      %895 = vmatpush2.bf16.msra.mxu0 %v707
      %896 = vmatprep.subr.bf16.mxu0 %v706
      %897 = vmatpush2.bf16.msra.mxu0 %v705
      %898 = vmatprep.subr.bf16.mxu0 %v704
      %899 = vmatpush2.bf16.msra.mxu0 %v703
      %900 = vmatprep.subr.bf16.mxu0 %v702
      %901 = vmatpush2.bf16.msra.mxu0 %v701
      %902 = vmatprep.subr.bf16.mxu0 %v700
      %903 = vmatpush2.bf16.msra.mxu0 %v699
      %904 = vmatprep.subr.bf16.mxu0 %v698
      %905 = vmatpush2.bf16.msra.mxu0 %v697
      %906 = vmatprep.subr.bf16.mxu0 %v696
      %907 = vmatpush2.bf16.msra.mxu0 %v695
      %908 = vmatprep.subr.bf16.mxu0 %v694
      %909 = vmatpush2.bf16.msra.mxu0 %v693
      %910 = vmatprep.mubr.bf16.mxu0 %v348
      %911 = vmatmul.mubr.bf16.gmra.mxu0 %v347
      %v912 = vpop.f32.mrf.mxu0
      %v913 = vadd.f32 %v872, %v912
      %v914 = vpop.f32.mrf.mxu0
      %v915 = vadd.f32 %v874, %v914
      %v916 = vpop.f32.mrf.mxu0
      %v917 = vpop.f32.mrf.mxu0
      %918 = vdwg.mxu0
      %919 = vmatprep.subr.bf16.mxu0 %v724
      %920 = vmatpush1.bf16.msra.mxu0 %v723
      %921 = vmatprep.subr.bf16.mxu0 %v722
      %922 = vmatpush1.bf16.msra.mxu0 %v721
      %923 = vmatprep.subr.bf16.mxu0 %v720
      %924 = vmatpush1.bf16.msra.mxu0 %v719
      %925 = vmatprep.subr.bf16.mxu0 %v718
      %926 = vmatpush1.bf16.msra.mxu0 %v717
      %927 = vmatprep.subr.bf16.mxu0 %v716
      %928 = vmatpush1.bf16.msra.mxu0 %v715
      %929 = vmatprep.subr.bf16.mxu0 %v714
      %930 = vmatpush1.bf16.msra.mxu0 %v713
      %931 = vmatprep.subr.bf16.mxu0 %v712
      %932 = vmatpush1.bf16.msra.mxu0 %v711
      %933 = vmatprep.subr.bf16.mxu0 %v710
      %934 = vmatpush1.bf16.msra.mxu0 %v709
      %935 = vmatprep.subr.bf16.mxu0 %v740
      %936 = vmatpush2.bf16.msra.mxu0 %v739
      %937 = vmatprep.subr.bf16.mxu0 %v738
      %938 = vmatpush2.bf16.msra.mxu0 %v737
      %939 = vmatprep.subr.bf16.mxu0 %v736
      %940 = vmatpush2.bf16.msra.mxu0 %v735
      %941 = vmatprep.subr.bf16.mxu0 %v734
      %942 = vmatpush2.bf16.msra.mxu0 %v733
      %943 = vmatprep.subr.bf16.mxu0 %v732
      %944 = vmatpush2.bf16.msra.mxu0 %v731
      %945 = vmatprep.subr.bf16.mxu0 %v730
      %946 = vmatpush2.bf16.msra.mxu0 %v729
      %947 = vmatprep.subr.bf16.mxu0 %v728
      %948 = vmatpush2.bf16.msra.mxu0 %v727
      %949 = vmatprep.subr.bf16.mxu0 %v726
      %950 = vmatpush2.bf16.msra.mxu0 %v725
      %951 = vmatprep.mubr.bf16.mxu0 %v350
      %952 = vmatmul.mubr.bf16.gmra.mxu0 %v349
      %v953 = vpop.f32.mrf.mxu0
      %v954 = vadd.f32 %v913, %v953
      %v955 = vpop.f32.mrf.mxu0
      %v956 = vadd.f32 %v915, %v955
      %v957 = vpop.f32.mrf.mxu0
      %v958 = vpop.f32.mrf.mxu0
      %959 = vdwg.mxu0
      %v960 = vmax.f32 %v954, 0.0
      %v961 = vmax.f32 %v956, 0.0
      %v962 = vpack.c.bf16 %v960, %v960
      %v963 = vpack.c.bf16 %v961, %v961
      %v964 = vld [vmem:[%s3] sm:$0xff]
      %v965 = vld [vmem:[%s3 + $0x8] sm:$0xff]
      %v966 = vld [vmem:[%s3 + $0x10] sm:$0xff]
      %v967 = vld [vmem:[%s3 + $0x18] sm:$0xff]
      %v968 = vld [vmem:[%s3 + $0x20] sm:$0xff]
      %v969 = vld [vmem:[%s3 + $0x28] sm:$0xff]
      %v970 = vld [vmem:[%s3 + $0x30] sm:$0xff]
      %v971 = vld [vmem:[%s3 + $0x38] sm:$0xff]
      %v972 = vld [vmem:[%s3 + $0x40] sm:$0xff]
      %v973 = vld [vmem:[%s3 + $0x48] sm:$0xff]
      %v974 = vld [vmem:[%s3 + $0x50] sm:$0xff]
      %v975 = vld [vmem:[%s3 + $0x58] sm:$0xff]
      %v976 = vld [vmem:[%s3 + $0x60] sm:$0xff]
      %v977 = vld [vmem:[%s3 + $0x68] sm:$0xff]
      %v978 = vld [vmem:[%s3 + $0x70] sm:$0xff]
      %v979 = vld [vmem:[%s3 + $0x78] sm:$0xff]
      %v980 = vld [vmem:[%s3 + $0x80] sm:$0xff]
      %v981 = vld [vmem:[%s3 + $0x88] sm:$0xff]
      %v982 = vld [vmem:[%s3 + $0x90] sm:$0xff]
      %v983 = vld [vmem:[%s3 + $0x98] sm:$0xff]
      %v984 = vld [vmem:[%s3 + $0xa0] sm:$0xff]
      %v985 = vld [vmem:[%s3 + $0xa8] sm:$0xff]
      %v986 = vld [vmem:[%s3 + $0xb0] sm:$0xff]
      %v987 = vld [vmem:[%s3 + $0xb8] sm:$0xff]
      %v988 = vld [vmem:[%s3 + $0xc0] sm:$0xff]
      %v989 = vld [vmem:[%s3 + $0xc8] sm:$0xff]
      %v990 = vld [vmem:[%s3 + $0xd0] sm:$0xff]
      %v991 = vld [vmem:[%s3 + $0xd8] sm:$0xff]
      %v992 = vld [vmem:[%s3 + $0xe0] sm:$0xff]
      %v993 = vld [vmem:[%s3 + $0xe8] sm:$0xff]
      %v994 = vld [vmem:[%s3 + $0xf0] sm:$0xff]
      %v995 = vld [vmem:[%s3 + $0xf8] sm:$0xff]
      %v996 = vld [vmem:[%s4] sm:$0x3]
      %v998 = vlaneseq
      %v999 = vshrl.u32 %v998, 7
      %v1000 = vsub.s32 0, %v999
      %v1001 = vrot.slane %v996, %v1000
      %v1002 = vlaneseq
      %v1003 = vshrl.u32 %v1002, 7
      %v1004 = vsub.s32 1, %v1003
      %v1005 = vrot.slane %v996, %v1004
      %v1040 = vunpack.c.l.b16 %v964
      %v1041 = vunpack.c.h.b16 %v964
      %v1042 = vunpack.c.l.b16 %v965
      %v1043 = vunpack.c.h.b16 %v965
      %v1044 = vunpack.c.l.b16 %v966
      %v1045 = vunpack.c.h.b16 %v966
      %v1046 = vunpack.c.l.b16 %v967
      %v1047 = vunpack.c.h.b16 %v967
      %v1048 = vunpack.c.l.b16 %v968
      %v1049 = vunpack.c.h.b16 %v968
      %v1050 = vunpack.c.l.b16 %v969
      %v1051 = vunpack.c.h.b16 %v969
      %v1052 = vunpack.c.l.b16 %v970
      %v1053 = vunpack.c.h.b16 %v970
      %v1054 = vunpack.c.l.b16 %v971
      %v1055 = vunpack.c.h.b16 %v971
      %v1056 = vunpack.c.l.b16 %v972
      %v1057 = vunpack.c.h.b16 %v972
      %v1058 = vunpack.c.l.b16 %v973
      %v1059 = vunpack.c.h.b16 %v973
      %v1060 = vunpack.c.l.b16 %v974
      %v1061 = vunpack.c.h.b16 %v974
      %v1062 = vunpack.c.l.b16 %v975
      %v1063 = vunpack.c.h.b16 %v975
      %v1064 = vunpack.c.l.b16 %v976
      %v1065 = vunpack.c.h.b16 %v976
      %v1066 = vunpack.c.l.b16 %v977
      %v1067 = vunpack.c.h.b16 %v977
      %v1068 = vunpack.c.l.b16 %v978
      %v1069 = vunpack.c.h.b16 %v978
      %v1070 = vunpack.c.l.b16 %v979
      %v1071 = vunpack.c.h.b16 %v979
      %v1072 = vunpack.c.l.b16 %v980
      %v1073 = vunpack.c.h.b16 %v980
      %v1074 = vunpack.c.l.b16 %v981
      %v1075 = vunpack.c.h.b16 %v981
      %v1076 = vunpack.c.l.b16 %v982
      %v1077 = vunpack.c.h.b16 %v982
      %v1078 = vunpack.c.l.b16 %v983
      %v1079 = vunpack.c.h.b16 %v983
      %v1080 = vunpack.c.l.b16 %v984
      %v1081 = vunpack.c.h.b16 %v984
      %v1082 = vunpack.c.l.b16 %v985
      %v1083 = vunpack.c.h.b16 %v985
      %v1084 = vunpack.c.l.b16 %v986
      %v1085 = vunpack.c.h.b16 %v986
      %v1086 = vunpack.c.l.b16 %v987
      %v1087 = vunpack.c.h.b16 %v987
      %v1088 = vunpack.c.l.b16 %v988
      %v1089 = vunpack.c.h.b16 %v988
      %v1090 = vunpack.c.l.b16 %v989
      %v1091 = vunpack.c.h.b16 %v989
      %v1092 = vunpack.c.l.b16 %v990
      %v1093 = vunpack.c.h.b16 %v990
      %v1094 = vunpack.c.l.b16 %v991
      %v1095 = vunpack.c.h.b16 %v991
      %v1096 = vunpack.c.l.b16 %v992
      %v1097 = vunpack.c.h.b16 %v992
      %v1098 = vunpack.c.l.b16 %v993
      %v1099 = vunpack.c.h.b16 %v993
      %v1100 = vunpack.c.l.b16 %v994
      %v1101 = vunpack.c.h.b16 %v994
      %v1102 = vunpack.c.l.b16 %v995
      %v1103 = vunpack.c.h.b16 %v995
      %v1104 = vpack.c.b16 %v1042, %v1040
      %v1105 = vpack.c.b16 %v1043, %v1041
      %v1106 = vpack.c.b16 %v1046, %v1044
      %v1107 = vpack.c.b16 %v1047, %v1045
      %v1108 = vpack.c.b16 %v1050, %v1048
      %v1109 = vpack.c.b16 %v1051, %v1049
      %v1110 = vpack.c.b16 %v1054, %v1052
      %v1111 = vpack.c.b16 %v1055, %v1053
      %v1112 = vpack.c.b16 %v1058, %v1056
      %v1113 = vpack.c.b16 %v1059, %v1057
      %v1114 = vpack.c.b16 %v1062, %v1060
      %v1115 = vpack.c.b16 %v1063, %v1061
      %v1116 = vpack.c.b16 %v1066, %v1064
      %v1117 = vpack.c.b16 %v1067, %v1065
      %v1118 = vpack.c.b16 %v1070, %v1068
      %v1119 = vpack.c.b16 %v1071, %v1069
      %v1120 = vpack.c.b16 %v1074, %v1072
      %v1121 = vpack.c.b16 %v1075, %v1073
      %v1122 = vpack.c.b16 %v1078, %v1076
      %v1123 = vpack.c.b16 %v1079, %v1077
      %v1124 = vpack.c.b16 %v1082, %v1080
      %v1125 = vpack.c.b16 %v1083, %v1081
      %v1126 = vpack.c.b16 %v1086, %v1084
      %v1127 = vpack.c.b16 %v1087, %v1085
      %v1128 = vpack.c.b16 %v1090, %v1088
      %v1129 = vpack.c.b16 %v1091, %v1089
      %v1130 = vpack.c.b16 %v1094, %v1092
      %v1131 = vpack.c.b16 %v1095, %v1093
      %v1132 = vpack.c.b16 %v1098, %v1096
      %v1133 = vpack.c.b16 %v1099, %v1097
      %v1134 = vpack.c.b16 %v1102, %v1100
      %v1135 = vpack.c.b16 %v1103, %v1101
      %1168 = vmatprep.subr.bf16.mxu0 %v1119
      %1169 = vmatpush1.bf16.msra.mxu0 %v1118
      %1170 = vmatprep.subr.bf16.mxu0 %v1117
      %1171 = vmatpush1.bf16.msra.mxu0 %v1116
      %1172 = vmatprep.subr.bf16.mxu0 %v1115
      %1173 = vmatpush1.bf16.msra.mxu0 %v1114
      %1174 = vmatprep.subr.bf16.mxu0 %v1113
      %1175 = vmatpush1.bf16.msra.mxu0 %v1112
      %1176 = vmatprep.subr.bf16.mxu0 %v1111
      %1177 = vmatpush1.bf16.msra.mxu0 %v1110
      %1178 = vmatprep.subr.bf16.mxu0 %v1109
      %1179 = vmatpush1.bf16.msra.mxu0 %v1108
      %1180 = vmatprep.subr.bf16.mxu0 %v1107
      %1181 = vmatpush1.bf16.msra.mxu0 %v1106
      %1182 = vmatprep.subr.bf16.mxu0 %v1105
      %1183 = vmatpush1.bf16.msra.mxu0 %v1104
      %1184 = vmatprep.subr.bf16.mxu0 %v1135
      %1185 = vmatpush2.bf16.msra.mxu0 %v1134
      %1186 = vmatprep.subr.bf16.mxu0 %v1133
      %1187 = vmatpush2.bf16.msra.mxu0 %v1132
      %1188 = vmatprep.subr.bf16.mxu0 %v1131
      %1189 = vmatpush2.bf16.msra.mxu0 %v1130
      %1190 = vmatprep.subr.bf16.mxu0 %v1129
      %1191 = vmatpush2.bf16.msra.mxu0 %v1128
      %1192 = vmatprep.subr.bf16.mxu0 %v1127
      %1193 = vmatpush2.bf16.msra.mxu0 %v1126
      %1194 = vmatprep.subr.bf16.mxu0 %v1125
      %1195 = vmatpush2.bf16.msra.mxu0 %v1124
      %1196 = vmatprep.subr.bf16.mxu0 %v1123
      %1197 = vmatpush2.bf16.msra.mxu0 %v1122
      %1198 = vmatprep.subr.bf16.mxu0 %v1121
      %1199 = vmatpush2.bf16.msra.mxu0 %v1120
      %1200 = vmatprep.mubr.bf16.mxu0 %v963
      %1201 = vmatmul.mubr.bf16.gmra.mxu0 %v962
      %v1202 = vpop.f32.mrf.mxu0
      %v1203 = vadd.f32 %v1001, %v1202
      %v1204 = vpop.f32.mrf.mxu0
      %v1205 = vadd.f32 %v1005, %v1204
      %v1206 = vpop.f32.mrf.mxu0
      %v1207 = vpop.f32.mrf.mxu0
      %1208 = vdwg.mxu0
      %v1209 = vmax.f32 %v1203, 0.0
      %v1210 = vmax.f32 %v1205, 0.0
      %v1211 = vpack.c.bf16 %v1209, %v1209
      %v1212 = vpack.c.bf16 %v1210, %v1210
      %v1215 = vunpack.c.l.b16 %v1211
      %v1216 = vunpack.c.l.b16 %v1212
      %v1217 = vpack.c.b16 %v1216, %v1215
      %1219 = vst [vmem:[%s224] sm:$0xff] %v1217
      %p1220 = scmp.lt.s32.totalorder %s16, 1
      %s1221 = scalar_select %p1220, %s16, 1
      %s1222 = smul.addr %s1221, 2
      %s1223 = smul.addr %s1222, 4
      %s1224 = scalar_lea.vmem %s5, %s1223
      // Predicated region
      $region41: #{pointnet2_forward.12} parent=39 // pred_check
        %p1225 = pneg %p144
      $region42: #{pointnet2_forward.12} parent=39 // pred_check_branch
        %1227 = sbr.rel (%p1225) target = $region44
      $region43: #{pointnet2_forward.12} parent=39 // pred_region
        _
      $region44: #{pointnet2_forward.12} parent=39 // pred_fallthru
        _
    $region40: #{pointnet2_forward.12} parent=5 // pred_fallthru
      _
    %p1228 = scmp.le.s32.totalorder 2, %s11
    // Predicated region
    $region45: #{pointnet2_forward.12} parent=5 // pred_check
      %p1229 = pneg %p1228
    $region46: #{pointnet2_forward.12} parent=5 // pred_check_branch
      %1231 = sbr.rel (%p1229) target = $region48
    $region47: #{pointnet2_forward.12} parent=5 // pred_region
      %s1232 = ssub.s32 %s11, 2
      // Predicated region
      $region49: #{pointnet2_forward.12} parent=47 // pred_check
        %p1233 = pneg %p150
      $region50: #{pointnet2_forward.12} parent=47 // pred_check_branch
        %1235 = sbr.rel (%p1233) target = $region52
      $region51: #{pointnet2_forward.12} parent=47 // pred_region
        %p1236 = scmp.lt.s32.totalorder %s17, 1
        %s1237 = scalar_select %p1236, %s17, 1
        %s1238 = smul.addr %s1237, 2
        %s1239 = smul.addr %s1238, 4
        %s1240 = scalar_lea.vmem %s5, %s1239
      $region52: #{pointnet2_forward.12} parent=47 // pred_fallthru
        _
    $region48: #{pointnet2_forward.12} parent=5 // pred_fallthru
      _
  $region6: #{pointnet2_forward.12} parent=0 // loop_footer
    %s15 = sadd.s32 1, %s11
  $region7: #{pointnet2_forward.12} parent=0 // loop_footer_branch
    %10 = sbr.rel target = $region3
  $region8: #{pointnet2_forward.12} parent=0 // loop_exit
    _

// kernel: neg.28
$region0: #{neg.28}
  #allocation0 [shape = 's32[1]{0}', space=sflag, size = 0x4, scoped, tag = 'scoped memory for neg.28']
  %s0 = inlined_call_operand.vmem [shape: f32[2,32,16], index: 0, kind: input, shape index: {}]
  %s1 = inlined_call_operand.vmem [shape: f32[2,32,16], index: 1, kind: output, shape index: {}]
  %v2 = vld [vmem:[%s0] sm:$0xff]
  %3 = xla_tuple %v2
  %4 = xla_tuple %3
  %v5 = vxor.u32 %v2, 2147483648
  %6 = xla_tuple %v5
  %7 = vst [vmem:[%s1] sm:$0xff] %v5
  %s8 = scalar_lea.vmem %s0, 16
  %v9 = vld [vmem:[%s8] sm:$0xff]
  %10 = xla_tuple %v9
  %11 = xla_tuple %10
  %v12 = vxor.u32 %v9, 2147483648
  %13 = xla_tuple %v12
  %s14 = scalar_lea.vmem %s1, 16
  %15 = vst [vmem:[%s14] sm:$0xff] %v12
  %s16 = scalar_lea.vmem %s0, 8
  %v17 = vld [vmem:[%s16] sm:$0xff]
  %18 = xla_tuple %v17
  %19 = xla_tuple %18
  %v20 = vxor.u32 %v17, 2147483648
  %21 = xla_tuple %v20
  %s22 = scalar_lea.vmem %s1, 8
  %23 = vst [vmem:[%s22] sm:$0xff] %v20
  %s24 = scalar_lea.vmem %s0, 24
  %v25 = vld [vmem:[%s24] sm:$0xff]
  %26 = xla_tuple %v25
  %27 = xla_tuple %26
  %v28 = vxor.u32 %v25, 2147483648
  %29 = xla_tuple %v28
  %s30 = scalar_lea.vmem %s1, 24
  %31 = vst [vmem:[%s30] sm:$0xff] %v28

// kernel: pointnet2_forward.13
$region0: #{pointnet2_forward.13}
  #allocation0 [shape = 'u32[]', space=smem, size = 0x4, offset = 0x4, fixed_abs, tag = 'smem constant byte address 0x4 - core index']
  #allocation1 [shape = 'u32[144,128]{1,0:T(1,128)}', space=vmem, size = 0x12000, scoped, tag = 'internal scratch']
  %s0 = inlined_call_operand.vmem [shape: bf16[32,384], index: 0, kind: input, shape index: {}]
  %s1 = inlined_call_operand.vmem [shape: bf16[384,256], index: 1, kind: input, shape index: {}]
  %s2 = inlined_call_operand.vmem [shape: f32[1,256], index: 2, kind: input, shape index: {}]
  %s3 = inlined_call_operand.vmem [shape: bf16[256,256], index: 3, kind: input, shape index: {}]
  %s4 = inlined_call_operand.vmem [shape: f32[1,256], index: 4, kind: input, shape index: {}]
  %s5 = inlined_call_operand.vmem [shape: bf16[32,256], index: 5, kind: output, shape index: {}]
  %s6 = sld [smem:[#allocation0]]
  $region53: #{pointnet2_forward.13} parent=0
    _
  %s8 = ssub.s32 1, %s6
  %s9 = scalar_select 0, %s8, %s6
  loop: start=0, step=1, limit=4
  $region2: #{pointnet2_forward.13} parent=0 // loop_pre_header
    _
  $region3: #{pointnet2_forward.13} parent=0 // loop_header
    %s11 = sphi 0, %s15
    %p12 = scmp.ge.s32.totalorder %s11, 4
    %s21 = sphi 0, %s23
    %s24 = sphi 0, %s21
    %s25 = sphi 0, %s24
    %s41 = sphi 0, %s25
    %s45 = sphi 0, %s45
    %s47 = sphi 0, %s45
    %s48 = sphi 0, %s47
    %s62 = sphi 0, %s48
    %s66 = sphi 0, %s66
    %s68 = sphi 0, %s66
    %s69 = sphi 0, %s68
    %s83 = sphi 0, %s69
    %s87 = sphi 0, %s87
    %s89 = sphi 0, %s87
    %s90 = sphi 0, %s89
    %s104 = sphi 0, %s90
    %s108 = sphi 0, %s108
    %s110 = sphi 0, %s108
    %s111 = sphi 0, %s110
    %s125 = sphi 0, %s111
    %s131 = sphi 0, %s133
    %s134 = sphi 0, %s131
    %s135 = sphi 0, %s134
    %s151 = sphi 0, %s135
  $region4: #{pointnet2_forward.13} parent=0 // loop_header_branch
    %14 = sbr.rel (%p12) target = $region8
  $region5: #{pointnet2_forward.13} parent=0 // loop_body
    %s16 = ssub.s32 %s11, 1
    %s17 = ssub.s32 %s11, 2
    %s18 = sadd.s32 %s11, 1
    %s19 = ssub.s32 %s11, %s18
    %p20 = scmp.eq.s32.totalorder %s19, 0
    %s22 = sadd.s32 %s21, 1
    %s23 = scalar_select %p20, %s21, %s22
    %p26 = pneg %p20
    %p27 = scmp.eq.s32.totalorder %s11, 1
    %p28 = por %p26, %p27
    %p29 = scmp.ne.s32.totalorder %s21, %s24
    %p30 = scmp.eq.s32.totalorder %s11, 0
    %p31 = por %p29, %p30
    %p32 = scmp.ne.s32.totalorder %s21, %s24
    %p33 = scmp.eq.s32.totalorder %s16, 1
    %p34 = por %p32, %p33
    %p35 = scmp.ne.s32.totalorder %s24, %s25
    %p36 = scmp.eq.s32.totalorder %s16, 0
    %p37 = por %p35, %p36
    %p38 = scmp.ne.s32.totalorder %s24, %s25
    %p39 = scmp.eq.s32.totalorder %s17, 1
    %p40 = por %p38, %p39
    %p42 = scmp.ne.s32.totalorder %s25, %s41
    %p43 = scmp.eq.s32.totalorder %s17, 0
    %p44 = por %p42, %p43
    %s46 = sadd.s32 %s45, 1
    %p49 = scmp.eq.s32.totalorder %s11, 1
    %p50 = scmp.ne.s32.totalorder %s45, %s47
    %p51 = scmp.eq.s32.totalorder %s11, 0
    %p52 = por %p50, %p51
    %p53 = scmp.ne.s32.totalorder %s45, %s47
    %p54 = scmp.eq.s32.totalorder %s16, 1
    %p55 = por %p53, %p54
    %p56 = scmp.ne.s32.totalorder %s47, %s48
    %p57 = scmp.eq.s32.totalorder %s16, 0
    %p58 = por %p56, %p57
    %p59 = scmp.ne.s32.totalorder %s47, %s48
    %p60 = scmp.eq.s32.totalorder %s17, 1
    %p61 = por %p59, %p60
    %p63 = scmp.ne.s32.totalorder %s48, %s62
    %p64 = scmp.eq.s32.totalorder %s17, 0
    %p65 = por %p63, %p64
    %s67 = sadd.s32 %s66, 1
    %p70 = scmp.eq.s32.totalorder %s11, 1
    %p71 = scmp.ne.s32.totalorder %s66, %s68
    %p72 = scmp.eq.s32.totalorder %s11, 0
    %p73 = por %p71, %p72
    %p74 = scmp.ne.s32.totalorder %s66, %s68
    %p75 = scmp.eq.s32.totalorder %s16, 1
    %p76 = por %p74, %p75
    %p77 = scmp.ne.s32.totalorder %s68, %s69
    %p78 = scmp.eq.s32.totalorder %s16, 0
    %p79 = por %p77, %p78
    %p80 = scmp.ne.s32.totalorder %s68, %s69
    %p81 = scmp.eq.s32.totalorder %s17, 1
    %p82 = por %p80, %p81
    %p84 = scmp.ne.s32.totalorder %s69, %s83
    %p85 = scmp.eq.s32.totalorder %s17, 0
    %p86 = por %p84, %p85
    %s88 = sadd.s32 %s87, 1
    %p91 = scmp.eq.s32.totalorder %s11, 1
    %p92 = scmp.ne.s32.totalorder %s87, %s89
    %p93 = scmp.eq.s32.totalorder %s11, 0
    %p94 = por %p92, %p93
    %p95 = scmp.ne.s32.totalorder %s87, %s89
    %p96 = scmp.eq.s32.totalorder %s16, 1
    %p97 = por %p95, %p96
    %p98 = scmp.ne.s32.totalorder %s89, %s90
    %p99 = scmp.eq.s32.totalorder %s16, 0
    %p100 = por %p98, %p99
    %p101 = scmp.ne.s32.totalorder %s89, %s90
    %p102 = scmp.eq.s32.totalorder %s17, 1
    %p103 = por %p101, %p102
    %p105 = scmp.ne.s32.totalorder %s90, %s104
    %p106 = scmp.eq.s32.totalorder %s17, 0
    %p107 = por %p105, %p106
    %s109 = sadd.s32 %s108, 1
    %p112 = scmp.eq.s32.totalorder %s11, 1
    %p113 = scmp.ne.s32.totalorder %s108, %s110
    %p114 = scmp.eq.s32.totalorder %s11, 0
    %p115 = por %p113, %p114
    %p116 = scmp.ne.s32.totalorder %s108, %s110
    %p117 = scmp.eq.s32.totalorder %s16, 1
    %p118 = por %p116, %p117
    %p119 = scmp.ne.s32.totalorder %s110, %s111
    %p120 = scmp.eq.s32.totalorder %s16, 0
    %p121 = por %p119, %p120
    %p122 = scmp.ne.s32.totalorder %s110, %s111
    %p123 = scmp.eq.s32.totalorder %s17, 1
    %p124 = por %p122, %p123
    %p126 = scmp.ne.s32.totalorder %s111, %s125
    %p127 = scmp.eq.s32.totalorder %s17, 0
    %p128 = por %p126, %p127
    %s129 = ssub.s32 %s11, %s18
    %p130 = scmp.eq.s32.totalorder %s129, 0
    %s132 = sadd.s32 %s131, 1
    %s133 = scalar_select %p130, %s131, %s132
    %p136 = pneg %p130
    %p137 = scmp.eq.s32.totalorder %s11, 1
    %p138 = por %p136, %p137
    %p139 = scmp.ne.s32.totalorder %s131, %s134
    %p140 = scmp.eq.s32.totalorder %s11, 0
    %p141 = por %p139, %p140
    %p142 = scmp.ne.s32.totalorder %s131, %s134
    %p143 = scmp.eq.s32.totalorder %s16, 1
    %p144 = por %p142, %p143
    %p145 = scmp.ne.s32.totalorder %s134, %s135
    %p146 = scmp.eq.s32.totalorder %s16, 0
    %p147 = por %p145, %p146
    %p148 = scmp.ne.s32.totalorder %s134, %s135
    %p149 = scmp.eq.s32.totalorder %s17, 1
    %p150 = por %p148, %p149
    %p152 = scmp.ne.s32.totalorder %s135, %s151
    %p153 = scmp.eq.s32.totalorder %s17, 0
    %p154 = por %p152, %p153
    %p155 = scmp.le.s32.totalorder 1, %s11
    %p156 = scmp.lt.s32.totalorder %s11, 3
    %p157 = pnand %p155, %p156
    %p158 = pneg %p157
    // Predicated region
    $region9: #{pointnet2_forward.13} parent=5 // pred_check
      _
    $region10: #{pointnet2_forward.13} parent=5 // pred_check_branch
      %160 = sbr.rel (%p157) target = $region12
    $region11: #{pointnet2_forward.13} parent=5 // pred_region
      %s161 = ssub.s32 %s11, 1
      // Predicated region
      $region13: #{pointnet2_forward.13} parent=11 // pred_check
        %p162 = pneg %p58
      $region14: #{pointnet2_forward.13} parent=11 // pred_check_branch
        %164 = sbr.rel (%p162) target = $region16
      $region15: #{pointnet2_forward.13} parent=11 // pred_region
        _
      $region16: #{pointnet2_forward.13} parent=11 // pred_fallthru
        _
      // Predicated region
      $region17: #{pointnet2_forward.13} parent=11 // pred_check
        %p165 = pneg %p79
      $region18: #{pointnet2_forward.13} parent=11 // pred_check_branch
        %167 = sbr.rel (%p165) target = $region20
      $region19: #{pointnet2_forward.13} parent=11 // pred_region
        _
      $region20: #{pointnet2_forward.13} parent=11 // pred_fallthru
        _
      // Predicated region
      $region21: #{pointnet2_forward.13} parent=11 // pred_check
        %p168 = pneg %p100
      $region22: #{pointnet2_forward.13} parent=11 // pred_check_branch
        %170 = sbr.rel (%p168) target = $region24
      $region23: #{pointnet2_forward.13} parent=11 // pred_region
        _
      $region24: #{pointnet2_forward.13} parent=11 // pred_fallthru
        _
      // Predicated region
      $region25: #{pointnet2_forward.13} parent=11 // pred_check
        %p171 = pneg %p121
      $region26: #{pointnet2_forward.13} parent=11 // pred_check_branch
        %173 = sbr.rel (%p171) target = $region28
      $region27: #{pointnet2_forward.13} parent=11 // pred_region
        _
      $region28: #{pointnet2_forward.13} parent=11 // pred_fallthru
        _
    $region12: #{pointnet2_forward.13} parent=5 // pred_fallthru
      _
    %p174 = scmp.lt.s32.totalorder %s11, 2
    // Predicated region
    $region29: #{pointnet2_forward.13} parent=5 // pred_check
      %p175 = pneg %p174
    $region30: #{pointnet2_forward.13} parent=5 // pred_check_branch
      %177 = sbr.rel (%p175) target = $region32
    $region31: #{pointnet2_forward.13} parent=5 // pred_region
      // Predicated region
      $region33: #{pointnet2_forward.13} parent=31 // pred_check
        %p178 = pneg %p31
      $region34: #{pointnet2_forward.13} parent=31 // pred_check_branch
        %180 = sbr.rel (%p178) target = $region36
      $region35: #{pointnet2_forward.13} parent=31 // pred_region
        %s181 = smul.u32 2, %s11
        %p182 = scmp.lt.s32.totalorder %s181, 3
        %s183 = scalar_select %p182, %s181, 3
        %s184 = smul.addr %s183, 3
        %s185 = smul.addr %s184, 4
        %s186 = scalar_lea.vmem %s0, %s185
        %s187 = smul.u32 2, %s11
      $region36: #{pointnet2_forward.13} parent=31 // pred_fallthru
        _
    $region32: #{pointnet2_forward.13} parent=5 // pred_fallthru
      _
    %p188 = scmp.le.s32.totalorder 1, %s11
    %p189 = scmp.lt.s32.totalorder %s11, 3
    %p190 = pnand %p188, %p189
    %p191 = pneg %p190
    // Predicated region
    $region37: #{pointnet2_forward.13} parent=5 // pred_check
      _
    $region38: #{pointnet2_forward.13} parent=5 // pred_check_branch
      %193 = sbr.rel (%p190) target = $region40
    $region39: #{pointnet2_forward.13} parent=5 // pred_region
      %s194 = ssub.s32 %s11, 1
      %s195 = smul.u32 2, %s16
      %p196 = scmp.lt.s32.totalorder %s195, 3
      %s197 = scalar_select %p196, %s195, 3
      %s198 = smul.addr %s197, 3
      %s199 = smul.addr %s198, 4
      %s200 = scalar_lea.vmem %s0, %s199
      %p201 = pneg %p37
      %p202 = pneg %p34
      %p203 = pneg %p58
      %p204 = pneg %p55
      %p205 = pneg %p79
      %p206 = pneg %p76
      %p207 = pneg %p100
      %p208 = pneg %p97
      %p209 = pneg %p121
      %p210 = pneg %p118
      %p211 = pneg %p147
      %p212 = pneg %p144
      %s213 = smul.u32 2, %s16
      %p214 = scmp.lt.s32.totalorder %s213, 3
      %s215 = scalar_select %p214, %s213, 3
      %s216 = smul.addr %s215, 2
      %s217 = smul.addr %s216, 4
      %s218 = scalar_lea.vmem %s5, %s217
      %s219 = smul.u32 2, %s16
      %p220 = scmp.lt.s32.totalorder %s219, 3
      %s221 = scalar_select %p220, %s219, 3
      %s222 = smul.addr %s221, 3
      %s223 = smul.addr %s222, 4
      %s224 = scalar_lea.vmem %s0, %s223
      %s225 = smul.u32 2, %s16
      %s226 = smul.u32 2, %s16
      %p227 = scmp.lt.s32.totalorder %s226, 3
      %s228 = scalar_select %p227, %s226, 3
      %s229 = smul.addr %s228, 2
      %s230 = smul.addr %s229, 4
      %s231 = scalar_lea.vmem %s5, %s230
      %s232 = smul.u32 2, %s16
      %v234 = vld [vmem:[%s224] sm:$0xff]
      %v235 = vld [vmem:[%s224 + $0x8] sm:$0xf]
      %v236 = vld [vmem:[%s224 + $0xc] sm:$0xff]
      %v237 = vld [vmem:[%s224 + $0x14] sm:$0xf]
      %v238 = vld [vmem:[%s1] sm:$0xff]
      %v239 = vld [vmem:[%s1 + $0x8] sm:$0xff]
      %v240 = vld [vmem:[%s1 + $0x10] sm:$0xff]
      %v241 = vld [vmem:[%s1 + $0x18] sm:$0xff]
      %v242 = vld [vmem:[%s1 + $0x20] sm:$0xff]
      %v243 = vld [vmem:[%s1 + $0x28] sm:$0xff]
      %v244 = vld [vmem:[%s1 + $0x30] sm:$0xff]
      %v245 = vld [vmem:[%s1 + $0x38] sm:$0xff]
      %v246 = vld [vmem:[%s1 + $0x40] sm:$0xff]
      %v247 = vld [vmem:[%s1 + $0x48] sm:$0xff]
      %v248 = vld [vmem:[%s1 + $0x50] sm:$0xff]
      %v249 = vld [vmem:[%s1 + $0x58] sm:$0xff]
      %v250 = vld [vmem:[%s1 + $0x60] sm:$0xff]
      %v251 = vld [vmem:[%s1 + $0x68] sm:$0xff]
      %v252 = vld [vmem:[%s1 + $0x70] sm:$0xff]
      %v253 = vld [vmem:[%s1 + $0x78] sm:$0xff]
      %v254 = vld [vmem:[%s1 + $0x80] sm:$0xff]
      %v255 = vld [vmem:[%s1 + $0x88] sm:$0xff]
      %v256 = vld [vmem:[%s1 + $0x90] sm:$0xff]
      %v257 = vld [vmem:[%s1 + $0x98] sm:$0xff]
      %v258 = vld [vmem:[%s1 + $0xa0] sm:$0xff]
      %v259 = vld [vmem:[%s1 + $0xa8] sm:$0xff]
      %v260 = vld [vmem:[%s1 + $0xb0] sm:$0xff]
      %v261 = vld [vmem:[%s1 + $0xb8] sm:$0xff]
      %v262 = vld [vmem:[%s1 + $0xc0] sm:$0xff]
      %v263 = vld [vmem:[%s1 + $0xc8] sm:$0xff]
      %v264 = vld [vmem:[%s1 + $0xd0] sm:$0xff]
      %v265 = vld [vmem:[%s1 + $0xd8] sm:$0xff]
      %v266 = vld [vmem:[%s1 + $0xe0] sm:$0xff]
      %v267 = vld [vmem:[%s1 + $0xe8] sm:$0xff]
      %v268 = vld [vmem:[%s1 + $0xf0] sm:$0xff]
      %v269 = vld [vmem:[%s1 + $0xf8] sm:$0xff]
      %v270 = vld [vmem:[%s1 + $0x100] sm:$0xff]
      %v271 = vld [vmem:[%s1 + $0x108] sm:$0xff]
      %v272 = vld [vmem:[%s1 + $0x110] sm:$0xff]
      %v273 = vld [vmem:[%s1 + $0x118] sm:$0xff]
      %v274 = vld [vmem:[%s1 + $0x120] sm:$0xff]
      %v275 = vld [vmem:[%s1 + $0x128] sm:$0xff]
      %v276 = vld [vmem:[%s1 + $0x130] sm:$0xff]
      %v277 = vld [vmem:[%s1 + $0x138] sm:$0xff]
      %v278 = vld [vmem:[%s1 + $0x140] sm:$0xff]
      %v279 = vld [vmem:[%s1 + $0x148] sm:$0xff]
      %v280 = vld [vmem:[%s1 + $0x150] sm:$0xff]
      %v281 = vld [vmem:[%s1 + $0x158] sm:$0xff]
      %v282 = vld [vmem:[%s1 + $0x160] sm:$0xff]
      %v283 = vld [vmem:[%s1 + $0x168] sm:$0xff]
      %v284 = vld [vmem:[%s1 + $0x170] sm:$0xff]
      %v285 = vld [vmem:[%s1 + $0x178] sm:$0xff]
      %v286 = vld [vmem:[%s2] sm:$0x3]
      %v288 = vlaneseq
      %v289 = vshrl.u32 %v288, 7
      %v290 = vsub.s32 0, %v289
      %v291 = vrot.slane %v286, %v290
      %v292 = vlaneseq
      %v293 = vshrl.u32 %v292, 7
      %v294 = vsub.s32 1, %v293
      %v295 = vrot.slane %v286, %v294
      %v302 = vunpack.c.l.b16 %v234
      %v303 = vunpack.c.h.b16 %v234
      %v304 = vunpack.c.l.b16 %v235
      %v305 = vunpack.c.l.b16 %v236
      %v306 = vunpack.c.h.b16 %v236
      %v307 = vunpack.c.l.b16 %v237
      %v308 = vpack.c.b16 %v305, %v302
      %v309 = vpack.c.b16 %v306, %v303
      %v310 = vpack.c.b16 %v307, %v304
      %v362 = vunpack.c.l.b16 %v238
      %v363 = vunpack.c.h.b16 %v238
      %v364 = vunpack.c.l.b16 %v239
      %v365 = vunpack.c.h.b16 %v239
      %v366 = vunpack.c.l.b16 %v240
      %v367 = vunpack.c.h.b16 %v240
      %v368 = vunpack.c.l.b16 %v241
      %v369 = vunpack.c.h.b16 %v241
      %v370 = vunpack.c.l.b16 %v242
      %v371 = vunpack.c.h.b16 %v242
      %v372 = vunpack.c.l.b16 %v243
      %v373 = vunpack.c.h.b16 %v243
      %v374 = vunpack.c.l.b16 %v244
      %v375 = vunpack.c.h.b16 %v244
      %v376 = vunpack.c.l.b16 %v245
      %v377 = vunpack.c.h.b16 %v245
      %v378 = vunpack.c.l.b16 %v246
      %v379 = vunpack.c.h.b16 %v246
      %v380 = vunpack.c.l.b16 %v247
      %v381 = vunpack.c.h.b16 %v247
      %v382 = vunpack.c.l.b16 %v248
      %v383 = vunpack.c.h.b16 %v248
      %v384 = vunpack.c.l.b16 %v249
      %v385 = vunpack.c.h.b16 %v249
      %v386 = vunpack.c.l.b16 %v250
      %v387 = vunpack.c.h.b16 %v250
      %v388 = vunpack.c.l.b16 %v251
      %v389 = vunpack.c.h.b16 %v251
      %v390 = vunpack.c.l.b16 %v252
      %v391 = vunpack.c.h.b16 %v252
      %v392 = vunpack.c.l.b16 %v253
      %v393 = vunpack.c.h.b16 %v253
      %v394 = vunpack.c.l.b16 %v254
      %v395 = vunpack.c.h.b16 %v254
      %v396 = vunpack.c.l.b16 %v255
      %v397 = vunpack.c.h.b16 %v255
      %v398 = vunpack.c.l.b16 %v256
      %v399 = vunpack.c.h.b16 %v256
      %v400 = vunpack.c.l.b16 %v257
      %v401 = vunpack.c.h.b16 %v257
      %v402 = vunpack.c.l.b16 %v258
      %v403 = vunpack.c.h.b16 %v258
      %v404 = vunpack.c.l.b16 %v259
      %v405 = vunpack.c.h.b16 %v259
      %v406 = vunpack.c.l.b16 %v260
      %v407 = vunpack.c.h.b16 %v260
      %v408 = vunpack.c.l.b16 %v261
      %v409 = vunpack.c.h.b16 %v261
      %v410 = vunpack.c.l.b16 %v262
      %v411 = vunpack.c.h.b16 %v262
      %v412 = vunpack.c.l.b16 %v263
      %v413 = vunpack.c.h.b16 %v263
      %v414 = vunpack.c.l.b16 %v264
      %v415 = vunpack.c.h.b16 %v264
      %v416 = vunpack.c.l.b16 %v265
      %v417 = vunpack.c.h.b16 %v265
      %v418 = vunpack.c.l.b16 %v266
      %v419 = vunpack.c.h.b16 %v266
      %v420 = vunpack.c.l.b16 %v267
      %v421 = vunpack.c.h.b16 %v267
      %v422 = vunpack.c.l.b16 %v268
      %v423 = vunpack.c.h.b16 %v268
      %v424 = vunpack.c.l.b16 %v269
      %v425 = vunpack.c.h.b16 %v269
      %v426 = vunpack.c.l.b16 %v270
      %v427 = vunpack.c.h.b16 %v270
      %v428 = vunpack.c.l.b16 %v271
      %v429 = vunpack.c.h.b16 %v271
      %v430 = vunpack.c.l.b16 %v272
      %v431 = vunpack.c.h.b16 %v272
      %v432 = vunpack.c.l.b16 %v273
      %v433 = vunpack.c.h.b16 %v273
      %v434 = vunpack.c.l.b16 %v274
      %v435 = vunpack.c.h.b16 %v274
      %v436 = vunpack.c.l.b16 %v275
      %v437 = vunpack.c.h.b16 %v275
      %v438 = vunpack.c.l.b16 %v276
      %v439 = vunpack.c.h.b16 %v276
      %v440 = vunpack.c.l.b16 %v277
      %v441 = vunpack.c.h.b16 %v277
      %v442 = vunpack.c.l.b16 %v278
      %v443 = vunpack.c.h.b16 %v278
      %v444 = vunpack.c.l.b16 %v279
      %v445 = vunpack.c.h.b16 %v279
      %v446 = vunpack.c.l.b16 %v280
      %v447 = vunpack.c.h.b16 %v280
      %v448 = vunpack.c.l.b16 %v281
      %v449 = vunpack.c.h.b16 %v281
      %v450 = vunpack.c.l.b16 %v282
      %v451 = vunpack.c.h.b16 %v282
      %v452 = vunpack.c.l.b16 %v283
      %v453 = vunpack.c.h.b16 %v283
      %v454 = vunpack.c.l.b16 %v284
      %v455 = vunpack.c.h.b16 %v284
      %v456 = vunpack.c.l.b16 %v285
      %v457 = vunpack.c.h.b16 %v285
      %v458 = vpack.c.b16 %v364, %v362
      %v459 = vpack.c.b16 %v365, %v363
      %v460 = vpack.c.b16 %v368, %v366
      %v461 = vpack.c.b16 %v369, %v367
      %v462 = vpack.c.b16 %v372, %v370
      %v463 = vpack.c.b16 %v373, %v371
      %v464 = vpack.c.b16 %v376, %v374
      %v465 = vpack.c.b16 %v377, %v375
      %v466 = vpack.c.b16 %v380, %v378
      %v467 = vpack.c.b16 %v381, %v379
      %v468 = vpack.c.b16 %v384, %v382
      %v469 = vpack.c.b16 %v385, %v383
      %v470 = vpack.c.b16 %v388, %v386
      %v471 = vpack.c.b16 %v389, %v387
      %v472 = vpack.c.b16 %v392, %v390
      %v473 = vpack.c.b16 %v393, %v391
      %v474 = vpack.c.b16 %v396, %v394
      %v475 = vpack.c.b16 %v397, %v395
      %v476 = vpack.c.b16 %v400, %v398
      %v477 = vpack.c.b16 %v401, %v399
      %v478 = vpack.c.b16 %v404, %v402
      %v479 = vpack.c.b16 %v405, %v403
      %v480 = vpack.c.b16 %v408, %v406
      %v481 = vpack.c.b16 %v409, %v407
      %v482 = vpack.c.b16 %v412, %v410
      %v483 = vpack.c.b16 %v413, %v411
      %v484 = vpack.c.b16 %v416, %v414
      %v485 = vpack.c.b16 %v417, %v415
      %v486 = vpack.c.b16 %v420, %v418
      %v487 = vpack.c.b16 %v421, %v419
      %v488 = vpack.c.b16 %v424, %v422
      %v489 = vpack.c.b16 %v425, %v423
      %v490 = vpack.c.b16 %v428, %v426
      %v491 = vpack.c.b16 %v429, %v427
      %v492 = vpack.c.b16 %v432, %v430
      %v493 = vpack.c.b16 %v433, %v431
      %v494 = vpack.c.b16 %v436, %v434
      %v495 = vpack.c.b16 %v437, %v435
      %v496 = vpack.c.b16 %v440, %v438
      %v497 = vpack.c.b16 %v441, %v439
      %v498 = vpack.c.b16 %v444, %v442
      %v499 = vpack.c.b16 %v445, %v443
      %v500 = vpack.c.b16 %v448, %v446
      %v501 = vpack.c.b16 %v449, %v447
      %v502 = vpack.c.b16 %v452, %v450
      %v503 = vpack.c.b16 %v453, %v451
      %v504 = vpack.c.b16 %v456, %v454
      %v505 = vpack.c.b16 %v457, %v455
      %554 = vmatprep.subr.bf16.mxu0 %v473
      %555 = vmatpush1.bf16.msra.mxu0 %v472
      %556 = vmatprep.subr.bf16.mxu0 %v471
      %557 = vmatpush1.bf16.msra.mxu0 %v470
      %558 = vmatprep.subr.bf16.mxu0 %v469
      %559 = vmatpush1.bf16.msra.mxu0 %v468
      %560 = vmatprep.subr.bf16.mxu0 %v467
      %561 = vmatpush1.bf16.msra.mxu0 %v466
      %562 = vmatprep.subr.bf16.mxu0 %v465
      %563 = vmatpush1.bf16.msra.mxu0 %v464
      %564 = vmatprep.subr.bf16.mxu0 %v463
      %565 = vmatpush1.bf16.msra.mxu0 %v462
      %566 = vmatprep.subr.bf16.mxu0 %v461
      %567 = vmatpush1.bf16.msra.mxu0 %v460
      %568 = vmatprep.subr.bf16.mxu0 %v459
      %569 = vmatpush1.bf16.msra.mxu0 %v458
      %570 = vmatprep.subr.bf16.mxu0 %v489
      %571 = vmatpush2.bf16.msra.mxu0 %v488
      %572 = vmatprep.subr.bf16.mxu0 %v487
      %573 = vmatpush2.bf16.msra.mxu0 %v486
      %574 = vmatprep.subr.bf16.mxu0 %v485
      %575 = vmatpush2.bf16.msra.mxu0 %v484
      %576 = vmatprep.subr.bf16.mxu0 %v483
      %577 = vmatpush2.bf16.msra.mxu0 %v482
      %578 = vmatprep.subr.bf16.mxu0 %v481
      %579 = vmatpush2.bf16.msra.mxu0 %v480
      %580 = vmatprep.subr.bf16.mxu0 %v479
      %581 = vmatpush2.bf16.msra.mxu0 %v478
      %582 = vmatprep.subr.bf16.mxu0 %v477
      %583 = vmatpush2.bf16.msra.mxu0 %v476
      %584 = vmatprep.subr.bf16.mxu0 %v475
      %585 = vmatpush2.bf16.msra.mxu0 %v474
      %586 = vmatprep.mubr.bf16.mxu0 %v309
      %587 = vmatmul.mubr.bf16.gmra.mxu0 %v308
      %v588 = vpop.f32.mrf.mxu0
      %v589 = vadd.f32 %v291, %v588
      %v590 = vpop.f32.mrf.mxu0
      %v591 = vadd.f32 %v295, %v590
      %v592 = vpop.f32.mrf.mxu0
      %v593 = vadd.f32 %v291, %v592
      %v594 = vpop.f32.mrf.mxu0
      %v595 = vadd.f32 %v295, %v594
      %596 = vdwg.mxu0
      %597 = vmatprep.subr.bf16.mxu0 %v505
      %598 = vmatpush1.bf16.msra.mxu0 %v504
      %599 = vmatprep.subr.bf16.mxu0 %v503
      %600 = vmatpush1.bf16.msra.mxu0 %v502
      %601 = vmatprep.subr.bf16.mxu0 %v501
      %602 = vmatpush1.bf16.msra.mxu0 %v500
      %603 = vmatprep.subr.bf16.mxu0 %v499
      %604 = vmatpush1.bf16.msra.mxu0 %v498
      %605 = vmatprep.subr.bf16.mxu0 %v497
      %606 = vmatpush1.bf16.msra.mxu0 %v496
      %607 = vmatprep.subr.bf16.mxu0 %v495
      %608 = vmatpush1.bf16.msra.mxu0 %v494
      %609 = vmatprep.subr.bf16.mxu0 %v493
      %610 = vmatpush1.bf16.msra.mxu0 %v492
      %611 = vmatprep.subr.bf16.mxu0 %v491
      %612 = vmatpush1.bf16.msra.mxu0 %v490
      %613 = vmatprep.subr.bf16.mxu0 0
      %614 = vmatpush2.bf16.msra.mxu0 0
      %615 = vmatprep.subr.bf16.mxu0 0
      %616 = vmatpush2.bf16.msra.mxu0 0
      %617 = vmatprep.subr.bf16.mxu0 0
      %618 = vmatpush2.bf16.msra.mxu0 0
      %619 = vmatprep.subr.bf16.mxu0 0
      %620 = vmatpush2.bf16.msra.mxu0 0
      %621 = vmatprep.subr.bf16.mxu0 0
      %622 = vmatpush2.bf16.msra.mxu0 0
      %623 = vmatprep.subr.bf16.mxu0 0
      %624 = vmatpush2.bf16.msra.mxu0 0
      %625 = vmatprep.subr.bf16.mxu0 0
      %626 = vmatpush2.bf16.msra.mxu0 0
      %627 = vmatprep.subr.bf16.mxu0 0
      %628 = vmatpush2.bf16.msra.mxu0 0
      %629 = vmatprep.mubr.bf16.mxu0 0
      %630 = vmatmul.mubr.bf16.gmra.mxu0 %v310
      %v631 = vpop.f32.mrf.mxu0
      %v632 = vadd.f32 %v589, %v631
      %v633 = vpop.f32.mrf.mxu0
      %v634 = vadd.f32 %v591, %v633
      %v635 = vpop.f32.mrf.mxu0
      %v636 = vadd.f32 %v593, %v635
      %v637 = vpop.f32.mrf.mxu0
      %v638 = vadd.f32 %v595, %v637
      %639 = vdwg.mxu0
      %v640 = vmax.f32 %v632, 0.0
      %v641 = vmax.f32 %v634, 0.0
      %v642 = vmax.f32 %v636, 0.0
      %v643 = vmax.f32 %v638, 0.0
      %v644 = vpack.c.bf16 %v642, %v640
      %v645 = vpack.c.bf16 %v643, %v641
      %v646 = vld [vmem:[%s3] sm:$0xff]
      %v647 = vld [vmem:[%s3 + $0x8] sm:$0xff]
      %v648 = vld [vmem:[%s3 + $0x10] sm:$0xff]
      %v649 = vld [vmem:[%s3 + $0x18] sm:$0xff]
      %v650 = vld [vmem:[%s3 + $0x20] sm:$0xff]
      %v651 = vld [vmem:[%s3 + $0x28] sm:$0xff]
      %v652 = vld [vmem:[%s3 + $0x30] sm:$0xff]
      %v653 = vld [vmem:[%s3 + $0x38] sm:$0xff]
      %v654 = vld [vmem:[%s3 + $0x40] sm:$0xff]
      %v655 = vld [vmem:[%s3 + $0x48] sm:$0xff]
      %v656 = vld [vmem:[%s3 + $0x50] sm:$0xff]
      %v657 = vld [vmem:[%s3 + $0x58] sm:$0xff]
      %v658 = vld [vmem:[%s3 + $0x60] sm:$0xff]
      %v659 = vld [vmem:[%s3 + $0x68] sm:$0xff]
      %v660 = vld [vmem:[%s3 + $0x70] sm:$0xff]
      %v661 = vld [vmem:[%s3 + $0x78] sm:$0xff]
      %v662 = vld [vmem:[%s3 + $0x80] sm:$0xff]
      %v663 = vld [vmem:[%s3 + $0x88] sm:$0xff]
      %v664 = vld [vmem:[%s3 + $0x90] sm:$0xff]
      %v665 = vld [vmem:[%s3 + $0x98] sm:$0xff]
      %v666 = vld [vmem:[%s3 + $0xa0] sm:$0xff]
      %v667 = vld [vmem:[%s3 + $0xa8] sm:$0xff]
      %v668 = vld [vmem:[%s3 + $0xb0] sm:$0xff]
      %v669 = vld [vmem:[%s3 + $0xb8] sm:$0xff]
      %v670 = vld [vmem:[%s3 + $0xc0] sm:$0xff]
      %v671 = vld [vmem:[%s3 + $0xc8] sm:$0xff]
      %v672 = vld [vmem:[%s3 + $0xd0] sm:$0xff]
      %v673 = vld [vmem:[%s3 + $0xd8] sm:$0xff]
      %v674 = vld [vmem:[%s3 + $0xe0] sm:$0xff]
      %v675 = vld [vmem:[%s3 + $0xe8] sm:$0xff]
      %v676 = vld [vmem:[%s3 + $0xf0] sm:$0xff]
      %v677 = vld [vmem:[%s3 + $0xf8] sm:$0xff]
      %v678 = vld [vmem:[%s4] sm:$0x3]
      %v680 = vlaneseq
      %v681 = vshrl.u32 %v680, 7
      %v682 = vsub.s32 0, %v681
      %v683 = vrot.slane %v678, %v682
      %v684 = vlaneseq
      %v685 = vshrl.u32 %v684, 7
      %v686 = vsub.s32 1, %v685
      %v687 = vrot.slane %v678, %v686
      %v722 = vunpack.c.l.b16 %v646
      %v723 = vunpack.c.h.b16 %v646
      %v724 = vunpack.c.l.b16 %v647
      %v725 = vunpack.c.h.b16 %v647
      %v726 = vunpack.c.l.b16 %v648
      %v727 = vunpack.c.h.b16 %v648
      %v728 = vunpack.c.l.b16 %v649
      %v729 = vunpack.c.h.b16 %v649
      %v730 = vunpack.c.l.b16 %v650
      %v731 = vunpack.c.h.b16 %v650
      %v732 = vunpack.c.l.b16 %v651
      %v733 = vunpack.c.h.b16 %v651
      %v734 = vunpack.c.l.b16 %v652
      %v735 = vunpack.c.h.b16 %v652
      %v736 = vunpack.c.l.b16 %v653
      %v737 = vunpack.c.h.b16 %v653
      %v738 = vunpack.c.l.b16 %v654
      %v739 = vunpack.c.h.b16 %v654
      %v740 = vunpack.c.l.b16 %v655
      %v741 = vunpack.c.h.b16 %v655
      %v742 = vunpack.c.l.b16 %v656
      %v743 = vunpack.c.h.b16 %v656
      %v744 = vunpack.c.l.b16 %v657
      %v745 = vunpack.c.h.b16 %v657
      %v746 = vunpack.c.l.b16 %v658
      %v747 = vunpack.c.h.b16 %v658
      %v748 = vunpack.c.l.b16 %v659
      %v749 = vunpack.c.h.b16 %v659
      %v750 = vunpack.c.l.b16 %v660
      %v751 = vunpack.c.h.b16 %v660
      %v752 = vunpack.c.l.b16 %v661
      %v753 = vunpack.c.h.b16 %v661
      %v754 = vunpack.c.l.b16 %v662
      %v755 = vunpack.c.h.b16 %v662
      %v756 = vunpack.c.l.b16 %v663
      %v757 = vunpack.c.h.b16 %v663
      %v758 = vunpack.c.l.b16 %v664
      %v759 = vunpack.c.h.b16 %v664
      %v760 = vunpack.c.l.b16 %v665
      %v761 = vunpack.c.h.b16 %v665
      %v762 = vunpack.c.l.b16 %v666
      %v763 = vunpack.c.h.b16 %v666
      %v764 = vunpack.c.l.b16 %v667
      %v765 = vunpack.c.h.b16 %v667
      %v766 = vunpack.c.l.b16 %v668
      %v767 = vunpack.c.h.b16 %v668
      %v768 = vunpack.c.l.b16 %v669
      %v769 = vunpack.c.h.b16 %v669
      %v770 = vunpack.c.l.b16 %v670
      %v771 = vunpack.c.h.b16 %v670
      %v772 = vunpack.c.l.b16 %v671
      %v773 = vunpack.c.h.b16 %v671
      %v774 = vunpack.c.l.b16 %v672
      %v775 = vunpack.c.h.b16 %v672
      %v776 = vunpack.c.l.b16 %v673
      %v777 = vunpack.c.h.b16 %v673
      %v778 = vunpack.c.l.b16 %v674
      %v779 = vunpack.c.h.b16 %v674
      %v780 = vunpack.c.l.b16 %v675
      %v781 = vunpack.c.h.b16 %v675
      %v782 = vunpack.c.l.b16 %v676
      %v783 = vunpack.c.h.b16 %v676
      %v784 = vunpack.c.l.b16 %v677
      %v785 = vunpack.c.h.b16 %v677
      %v786 = vpack.c.b16 %v724, %v722
      %v787 = vpack.c.b16 %v725, %v723
      %v788 = vpack.c.b16 %v728, %v726
      %v789 = vpack.c.b16 %v729, %v727
      %v790 = vpack.c.b16 %v732, %v730
      %v791 = vpack.c.b16 %v733, %v731
      %v792 = vpack.c.b16 %v736, %v734
      %v793 = vpack.c.b16 %v737, %v735
      %v794 = vpack.c.b16 %v740, %v738
      %v795 = vpack.c.b16 %v741, %v739
      %v796 = vpack.c.b16 %v744, %v742
      %v797 = vpack.c.b16 %v745, %v743
      %v798 = vpack.c.b16 %v748, %v746
      %v799 = vpack.c.b16 %v749, %v747
      %v800 = vpack.c.b16 %v752, %v750
      %v801 = vpack.c.b16 %v753, %v751
      %v802 = vpack.c.b16 %v756, %v754
      %v803 = vpack.c.b16 %v757, %v755
      %v804 = vpack.c.b16 %v760, %v758
      %v805 = vpack.c.b16 %v761, %v759
      %v806 = vpack.c.b16 %v764, %v762
      %v807 = vpack.c.b16 %v765, %v763
      %v808 = vpack.c.b16 %v768, %v766
      %v809 = vpack.c.b16 %v769, %v767
      %v810 = vpack.c.b16 %v772, %v770
      %v811 = vpack.c.b16 %v773, %v771
      %v812 = vpack.c.b16 %v776, %v774
      %v813 = vpack.c.b16 %v777, %v775
      %v814 = vpack.c.b16 %v780, %v778
      %v815 = vpack.c.b16 %v781, %v779
      %v816 = vpack.c.b16 %v784, %v782
      %v817 = vpack.c.b16 %v785, %v783
      %850 = vmatprep.subr.bf16.mxu0 %v801
      %851 = vmatpush1.bf16.msra.mxu0 %v800
      %852 = vmatprep.subr.bf16.mxu0 %v799
      %853 = vmatpush1.bf16.msra.mxu0 %v798
      %854 = vmatprep.subr.bf16.mxu0 %v797
      %855 = vmatpush1.bf16.msra.mxu0 %v796
      %856 = vmatprep.subr.bf16.mxu0 %v795
      %857 = vmatpush1.bf16.msra.mxu0 %v794
      %858 = vmatprep.subr.bf16.mxu0 %v793
      %859 = vmatpush1.bf16.msra.mxu0 %v792
      %860 = vmatprep.subr.bf16.mxu0 %v791
      %861 = vmatpush1.bf16.msra.mxu0 %v790
      %862 = vmatprep.subr.bf16.mxu0 %v789
      %863 = vmatpush1.bf16.msra.mxu0 %v788
      %864 = vmatprep.subr.bf16.mxu0 %v787
      %865 = vmatpush1.bf16.msra.mxu0 %v786
      %866 = vmatprep.subr.bf16.mxu0 %v817
      %867 = vmatpush2.bf16.msra.mxu0 %v816
      %868 = vmatprep.subr.bf16.mxu0 %v815
      %869 = vmatpush2.bf16.msra.mxu0 %v814
      %870 = vmatprep.subr.bf16.mxu0 %v813
      %871 = vmatpush2.bf16.msra.mxu0 %v812
      %872 = vmatprep.subr.bf16.mxu0 %v811
      %873 = vmatpush2.bf16.msra.mxu0 %v810
      %874 = vmatprep.subr.bf16.mxu0 %v809
      %875 = vmatpush2.bf16.msra.mxu0 %v808
      %876 = vmatprep.subr.bf16.mxu0 %v807
      %877 = vmatpush2.bf16.msra.mxu0 %v806
      %878 = vmatprep.subr.bf16.mxu0 %v805
      %879 = vmatpush2.bf16.msra.mxu0 %v804
      %880 = vmatprep.subr.bf16.mxu0 %v803
      %881 = vmatpush2.bf16.msra.mxu0 %v802
      %882 = vmatprep.mubr.bf16.mxu0 %v645
      %883 = vmatmul.mubr.bf16.gmra.mxu0 %v644
      %v884 = vpop.f32.mrf.mxu0
      %v885 = vadd.f32 %v683, %v884
      %v886 = vpop.f32.mrf.mxu0
      %v887 = vadd.f32 %v687, %v886
      %v888 = vpop.f32.mrf.mxu0
      %v889 = vadd.f32 %v683, %v888
      %v890 = vpop.f32.mrf.mxu0
      %v891 = vadd.f32 %v687, %v890
      %892 = vdwg.mxu0
      %v893 = vmax.f32 %v885, 0.0
      %v894 = vmax.f32 %v887, 0.0
      %v895 = vmax.f32 %v889, 0.0
      %v896 = vmax.f32 %v891, 0.0
      %v897 = vpack.c.bf16 %v895, %v893
      %v898 = vpack.c.bf16 %v896, %v894
      %v901 = vunpack.c.l.b16 %v897
      %v902 = vunpack.c.l.b16 %v898
      %v903 = vunpack.c.h.b16 %v897
      %v904 = vunpack.c.h.b16 %v898
      %v905 = vpack.c.b16 %v902, %v901
      %v906 = vpack.c.b16 %v904, %v903
      %909 = vst [vmem:[%s231] sm:$0xff] %v905
      %910 = vst [vmem:[%s231 + $0x8] sm:$0xff] %v906
      %s911 = smul.u32 2, %s16
      %p912 = scmp.lt.s32.totalorder %s911, 3
      %s913 = scalar_select %p912, %s911, 3
      %s914 = smul.addr %s913, 2
      %s915 = smul.addr %s914, 4
      %s916 = scalar_lea.vmem %s5, %s915
      // Predicated region
      $region41: #{pointnet2_forward.13} parent=39 // pred_check
        %p917 = pneg %p144
      $region42: #{pointnet2_forward.13} parent=39 // pred_check_branch
        %919 = sbr.rel (%p917) target = $region44
      $region43: #{pointnet2_forward.13} parent=39 // pred_region
        %s920 = smul.u32 2, %s16
      $region44: #{pointnet2_forward.13} parent=39 // pred_fallthru
        _
    $region40: #{pointnet2_forward.13} parent=5 // pred_fallthru
      _
    %p921 = scmp.le.s32.totalorder 2, %s11
    // Predicated region
    $region45: #{pointnet2_forward.13} parent=5 // pred_check
      %p922 = pneg %p921
    $region46: #{pointnet2_forward.13} parent=5 // pred_check_branch
      %924 = sbr.rel (%p922) target = $region48
    $region47: #{pointnet2_forward.13} parent=5 // pred_region
      %s925 = ssub.s32 %s11, 2
      // Predicated region
      $region49: #{pointnet2_forward.13} parent=47 // pred_check
        %p926 = pneg %p150
      $region50: #{pointnet2_forward.13} parent=47 // pred_check_branch
        %928 = sbr.rel (%p926) target = $region52
      $region51: #{pointnet2_forward.13} parent=47 // pred_region
        %s929 = smul.u32 2, %s17
        %p930 = scmp.lt.s32.totalorder %s929, 3
        %s931 = scalar_select %p930, %s929, 3
        %s932 = smul.addr %s931, 2
        %s933 = smul.addr %s932, 4
        %s934 = scalar_lea.vmem %s5, %s933
      $region52: #{pointnet2_forward.13} parent=47 // pred_fallthru
        _
    $region48: #{pointnet2_forward.13} parent=5 // pred_fallthru
      _
  $region6: #{pointnet2_forward.13} parent=0 // loop_footer
    %s15 = sadd.s32 1, %s11
  $region7: #{pointnet2_forward.13} parent=0 // loop_footer_branch
    %10 = sbr.rel target = $region3
  $region8: #{pointnet2_forward.13} parent=0 // loop_exit
    _

// kernel: pointnet2_forward.14
$region0: #{pointnet2_forward.14}
  #allocation0 [shape = 'u32[]', space=smem, size = 0x4, offset = 0x4, fixed_abs, tag = 'smem constant byte address 0x4 - core index']
  #allocation1 [shape = 'u32[144,128]{1,0:T(1,128)}', space=vmem, size = 0x12000, scoped, tag = 'internal scratch']
  %s0 = inlined_call_operand.vmem [shape: bf16[64,320], index: 0, kind: input, shape index: {}]
  %s1 = inlined_call_operand.vmem [shape: bf16[320,256], index: 1, kind: input, shape index: {}]
  %s2 = inlined_call_operand.vmem [shape: f32[1,256], index: 2, kind: input, shape index: {}]
  %s3 = inlined_call_operand.vmem [shape: bf16[256,128], index: 3, kind: input, shape index: {}]
  %s4 = inlined_call_operand.vmem [shape: f32[1,128], index: 4, kind: input, shape index: {}]
  %s5 = inlined_call_operand.vmem [shape: bf16[64,128], index: 5, kind: output, shape index: {}]
  %s6 = sld [smem:[#allocation0]]
  $region53: #{pointnet2_forward.14} parent=0
    _
  %s8 = ssub.s32 1, %s6
  %s9 = scalar_select 0, %s8, %s6
  loop: start=0, step=1, limit=4
  $region2: #{pointnet2_forward.14} parent=0 // loop_pre_header
    _
  $region3: #{pointnet2_forward.14} parent=0 // loop_header
    %s11 = sphi 0, %s15
    %p12 = scmp.ge.s32.totalorder %s11, 4
    %s21 = sphi 0, %s23
    %s24 = sphi 0, %s21
    %s25 = sphi 0, %s24
    %s41 = sphi 0, %s25
    %s45 = sphi 0, %s45
    %s47 = sphi 0, %s45
    %s48 = sphi 0, %s47
    %s62 = sphi 0, %s48
    %s66 = sphi 0, %s66
    %s68 = sphi 0, %s66
    %s69 = sphi 0, %s68
    %s83 = sphi 0, %s69
    %s87 = sphi 0, %s87
    %s89 = sphi 0, %s87
    %s90 = sphi 0, %s89
    %s104 = sphi 0, %s90
    %s108 = sphi 0, %s108
    %s110 = sphi 0, %s108
    %s111 = sphi 0, %s110
    %s125 = sphi 0, %s111
    %s131 = sphi 0, %s133
    %s134 = sphi 0, %s131
    %s135 = sphi 0, %s134
    %s151 = sphi 0, %s135
  $region4: #{pointnet2_forward.14} parent=0 // loop_header_branch
    %14 = sbr.rel (%p12) target = $region8
  $region5: #{pointnet2_forward.14} parent=0 // loop_body
    %s16 = ssub.s32 %s11, 1
    %s17 = ssub.s32 %s11, 2
    %s18 = sadd.s32 %s11, 1
    %s19 = ssub.s32 %s11, %s18
    %p20 = scmp.eq.s32.totalorder %s19, 0
    %s22 = sadd.s32 %s21, 1
    %s23 = scalar_select %p20, %s21, %s22
    %p26 = pneg %p20
    %p27 = scmp.eq.s32.totalorder %s11, 1
    %p28 = por %p26, %p27
    %p29 = scmp.ne.s32.totalorder %s21, %s24
    %p30 = scmp.eq.s32.totalorder %s11, 0
    %p31 = por %p29, %p30
    %p32 = scmp.ne.s32.totalorder %s21, %s24
    %p33 = scmp.eq.s32.totalorder %s16, 1
    %p34 = por %p32, %p33
    %p35 = scmp.ne.s32.totalorder %s24, %s25
    %p36 = scmp.eq.s32.totalorder %s16, 0
    %p37 = por %p35, %p36
    %p38 = scmp.ne.s32.totalorder %s24, %s25
    %p39 = scmp.eq.s32.totalorder %s17, 1
    %p40 = por %p38, %p39
    %p42 = scmp.ne.s32.totalorder %s25, %s41
    %p43 = scmp.eq.s32.totalorder %s17, 0
    %p44 = por %p42, %p43
    %s46 = sadd.s32 %s45, 1
    %p49 = scmp.eq.s32.totalorder %s11, 1
    %p50 = scmp.ne.s32.totalorder %s45, %s47
    %p51 = scmp.eq.s32.totalorder %s11, 0
    %p52 = por %p50, %p51
    %p53 = scmp.ne.s32.totalorder %s45, %s47
    %p54 = scmp.eq.s32.totalorder %s16, 1
    %p55 = por %p53, %p54
    %p56 = scmp.ne.s32.totalorder %s47, %s48
    %p57 = scmp.eq.s32.totalorder %s16, 0
    %p58 = por %p56, %p57
    %p59 = scmp.ne.s32.totalorder %s47, %s48
    %p60 = scmp.eq.s32.totalorder %s17, 1
    %p61 = por %p59, %p60
    %p63 = scmp.ne.s32.totalorder %s48, %s62
    %p64 = scmp.eq.s32.totalorder %s17, 0
    %p65 = por %p63, %p64
    %s67 = sadd.s32 %s66, 1
    %p70 = scmp.eq.s32.totalorder %s11, 1
    %p71 = scmp.ne.s32.totalorder %s66, %s68
    %p72 = scmp.eq.s32.totalorder %s11, 0
    %p73 = por %p71, %p72
    %p74 = scmp.ne.s32.totalorder %s66, %s68
    %p75 = scmp.eq.s32.totalorder %s16, 1
    %p76 = por %p74, %p75
    %p77 = scmp.ne.s32.totalorder %s68, %s69
    %p78 = scmp.eq.s32.totalorder %s16, 0
    %p79 = por %p77, %p78
    %p80 = scmp.ne.s32.totalorder %s68, %s69
    %p81 = scmp.eq.s32.totalorder %s17, 1
    %p82 = por %p80, %p81
    %p84 = scmp.ne.s32.totalorder %s69, %s83
    %p85 = scmp.eq.s32.totalorder %s17, 0
    %p86 = por %p84, %p85
    %s88 = sadd.s32 %s87, 1
    %p91 = scmp.eq.s32.totalorder %s11, 1
    %p92 = scmp.ne.s32.totalorder %s87, %s89
    %p93 = scmp.eq.s32.totalorder %s11, 0
    %p94 = por %p92, %p93
    %p95 = scmp.ne.s32.totalorder %s87, %s89
    %p96 = scmp.eq.s32.totalorder %s16, 1
    %p97 = por %p95, %p96
    %p98 = scmp.ne.s32.totalorder %s89, %s90
    %p99 = scmp.eq.s32.totalorder %s16, 0
    %p100 = por %p98, %p99
    %p101 = scmp.ne.s32.totalorder %s89, %s90
    %p102 = scmp.eq.s32.totalorder %s17, 1
    %p103 = por %p101, %p102
    %p105 = scmp.ne.s32.totalorder %s90, %s104
    %p106 = scmp.eq.s32.totalorder %s17, 0
    %p107 = por %p105, %p106
    %s109 = sadd.s32 %s108, 1
    %p112 = scmp.eq.s32.totalorder %s11, 1
    %p113 = scmp.ne.s32.totalorder %s108, %s110
    %p114 = scmp.eq.s32.totalorder %s11, 0
    %p115 = por %p113, %p114
    %p116 = scmp.ne.s32.totalorder %s108, %s110
    %p117 = scmp.eq.s32.totalorder %s16, 1
    %p118 = por %p116, %p117
    %p119 = scmp.ne.s32.totalorder %s110, %s111
    %p120 = scmp.eq.s32.totalorder %s16, 0
    %p121 = por %p119, %p120
    %p122 = scmp.ne.s32.totalorder %s110, %s111
    %p123 = scmp.eq.s32.totalorder %s17, 1
    %p124 = por %p122, %p123
    %p126 = scmp.ne.s32.totalorder %s111, %s125
    %p127 = scmp.eq.s32.totalorder %s17, 0
    %p128 = por %p126, %p127
    %s129 = ssub.s32 %s11, %s18
    %p130 = scmp.eq.s32.totalorder %s129, 0
    %s132 = sadd.s32 %s131, 1
    %s133 = scalar_select %p130, %s131, %s132
    %p136 = pneg %p130
    %p137 = scmp.eq.s32.totalorder %s11, 1
    %p138 = por %p136, %p137
    %p139 = scmp.ne.s32.totalorder %s131, %s134
    %p140 = scmp.eq.s32.totalorder %s11, 0
    %p141 = por %p139, %p140
    %p142 = scmp.ne.s32.totalorder %s131, %s134
    %p143 = scmp.eq.s32.totalorder %s16, 1
    %p144 = por %p142, %p143
    %p145 = scmp.ne.s32.totalorder %s134, %s135
    %p146 = scmp.eq.s32.totalorder %s16, 0
    %p147 = por %p145, %p146
    %p148 = scmp.ne.s32.totalorder %s134, %s135
    %p149 = scmp.eq.s32.totalorder %s17, 1
    %p150 = por %p148, %p149
    %p152 = scmp.ne.s32.totalorder %s135, %s151
    %p153 = scmp.eq.s32.totalorder %s17, 0
    %p154 = por %p152, %p153
    %p155 = scmp.le.s32.totalorder 1, %s11
    %p156 = scmp.lt.s32.totalorder %s11, 3
    %p157 = pnand %p155, %p156
    %p158 = pneg %p157
    // Predicated region
    $region9: #{pointnet2_forward.14} parent=5 // pred_check
      _
    $region10: #{pointnet2_forward.14} parent=5 // pred_check_branch
      %160 = sbr.rel (%p157) target = $region12
    $region11: #{pointnet2_forward.14} parent=5 // pred_region
      %s161 = ssub.s32 %s11, 1
      // Predicated region
      $region13: #{pointnet2_forward.14} parent=11 // pred_check
        %p162 = pneg %p58
      $region14: #{pointnet2_forward.14} parent=11 // pred_check_branch
        %164 = sbr.rel (%p162) target = $region16
      $region15: #{pointnet2_forward.14} parent=11 // pred_region
        _
      $region16: #{pointnet2_forward.14} parent=11 // pred_fallthru
        _
      // Predicated region
      $region17: #{pointnet2_forward.14} parent=11 // pred_check
        %p165 = pneg %p79
      $region18: #{pointnet2_forward.14} parent=11 // pred_check_branch
        %167 = sbr.rel (%p165) target = $region20
      $region19: #{pointnet2_forward.14} parent=11 // pred_region
        _
      $region20: #{pointnet2_forward.14} parent=11 // pred_fallthru
        _
      // Predicated region
      $region21: #{pointnet2_forward.14} parent=11 // pred_check
        %p168 = pneg %p100
      $region22: #{pointnet2_forward.14} parent=11 // pred_check_branch
        %170 = sbr.rel (%p168) target = $region24
      $region23: #{pointnet2_forward.14} parent=11 // pred_region
        _
      $region24: #{pointnet2_forward.14} parent=11 // pred_fallthru
        _
      // Predicated region
      $region25: #{pointnet2_forward.14} parent=11 // pred_check
        %p171 = pneg %p121
      $region26: #{pointnet2_forward.14} parent=11 // pred_check_branch
        %173 = sbr.rel (%p171) target = $region28
      $region27: #{pointnet2_forward.14} parent=11 // pred_region
        _
      $region28: #{pointnet2_forward.14} parent=11 // pred_fallthru
        _
    $region12: #{pointnet2_forward.14} parent=5 // pred_fallthru
      _
    %p174 = scmp.lt.s32.totalorder %s11, 2
    // Predicated region
    $region29: #{pointnet2_forward.14} parent=5 // pred_check
      %p175 = pneg %p174
    $region30: #{pointnet2_forward.14} parent=5 // pred_check_branch
      %177 = sbr.rel (%p175) target = $region32
    $region31: #{pointnet2_forward.14} parent=5 // pred_region
      // Predicated region
      $region33: #{pointnet2_forward.14} parent=31 // pred_check
        %p178 = pneg %p31
      $region34: #{pointnet2_forward.14} parent=31 // pred_check_branch
        %180 = sbr.rel (%p178) target = $region36
      $region35: #{pointnet2_forward.14} parent=31 // pred_region
        %s181 = smul.u32 4, %s11
        %p182 = scmp.lt.s32.totalorder %s181, 7
        %s183 = scalar_select %p182, %s181, 7
        %s184 = smul.addr %s183, 3
        %s185 = smul.addr %s184, 4
        %s186 = scalar_lea.vmem %s0, %s185
        %s187 = smul.u32 4, %s11
      $region36: #{pointnet2_forward.14} parent=31 // pred_fallthru
        _
    $region32: #{pointnet2_forward.14} parent=5 // pred_fallthru
      _
    %p188 = scmp.le.s32.totalorder 1, %s11
    %p189 = scmp.lt.s32.totalorder %s11, 3
    %p190 = pnand %p188, %p189
    %p191 = pneg %p190
    // Predicated region
    $region37: #{pointnet2_forward.14} parent=5 // pred_check
      _
    $region38: #{pointnet2_forward.14} parent=5 // pred_check_branch
      %193 = sbr.rel (%p190) target = $region40
    $region39: #{pointnet2_forward.14} parent=5 // pred_region
      %s194 = ssub.s32 %s11, 1
      %s195 = smul.u32 4, %s16
      %p196 = scmp.lt.s32.totalorder %s195, 7
      %s197 = scalar_select %p196, %s195, 7
      %s198 = smul.addr %s197, 3
      %s199 = smul.addr %s198, 4
      %s200 = scalar_lea.vmem %s0, %s199
      %p201 = pneg %p37
      %p202 = pneg %p34
      %p203 = pneg %p58
      %p204 = pneg %p55
      %p205 = pneg %p79
      %p206 = pneg %p76
      %p207 = pneg %p100
      %p208 = pneg %p97
      %p209 = pneg %p121
      %p210 = pneg %p118
      %p211 = pneg %p147
      %p212 = pneg %p144
      %s213 = smul.u32 4, %s16
      %p214 = scmp.lt.s32.totalorder %s213, 7
      %s215 = scalar_select %p214, %s213, 7
      %s216 = smul.addr %s215, 4
      %s217 = scalar_lea.vmem %s5, %s216
      %s218 = smul.u32 4, %s16
      %p219 = scmp.lt.s32.totalorder %s218, 7
      %s220 = scalar_select %p219, %s218, 7
      %s221 = smul.addr %s220, 3
      %s222 = smul.addr %s221, 4
      %s223 = scalar_lea.vmem %s0, %s222
      %s224 = smul.u32 4, %s16
      %s225 = smul.u32 4, %s16
      %p226 = scmp.lt.s32.totalorder %s225, 7
      %s227 = scalar_select %p226, %s225, 7
      %s228 = smul.addr %s227, 4
      %s229 = scalar_lea.vmem %s5, %s228
      %s230 = smul.u32 4, %s16
      %v232 = vld [vmem:[%s223] sm:$0xff]
      %v233 = vld [vmem:[%s223 + $0x8] sm:$0xf]
      %v234 = vld [vmem:[%s223 + $0xc] sm:$0xff]
      %v235 = vld [vmem:[%s223 + $0x14] sm:$0xf]
      %v236 = vld [vmem:[%s223 + $0x18] sm:$0xff]
      %v237 = vld [vmem:[%s223 + $0x20] sm:$0xf]
      %v238 = vld [vmem:[%s223 + $0x24] sm:$0xff]
      %v239 = vld [vmem:[%s223 + $0x2c] sm:$0xf]
      %v240 = vld [vmem:[%s1] sm:$0xff]
      %v241 = vld [vmem:[%s1 + $0x8] sm:$0xff]
      %v242 = vld [vmem:[%s1 + $0x10] sm:$0xff]
      %v243 = vld [vmem:[%s1 + $0x18] sm:$0xff]
      %v244 = vld [vmem:[%s1 + $0x20] sm:$0xff]
      %v245 = vld [vmem:[%s1 + $0x28] sm:$0xff]
      %v246 = vld [vmem:[%s1 + $0x30] sm:$0xff]
      %v247 = vld [vmem:[%s1 + $0x38] sm:$0xff]
      %v248 = vld [vmem:[%s1 + $0x40] sm:$0xff]
      %v249 = vld [vmem:[%s1 + $0x48] sm:$0xff]
      %v250 = vld [vmem:[%s1 + $0x50] sm:$0xff]
      %v251 = vld [vmem:[%s1 + $0x58] sm:$0xff]
      %v252 = vld [vmem:[%s1 + $0x60] sm:$0xff]
      %v253 = vld [vmem:[%s1 + $0x68] sm:$0xff]
      %v254 = vld [vmem:[%s1 + $0x70] sm:$0xff]
      %v255 = vld [vmem:[%s1 + $0x78] sm:$0xff]
      %v256 = vld [vmem:[%s1 + $0x80] sm:$0xff]
      %v257 = vld [vmem:[%s1 + $0x88] sm:$0xff]
      %v258 = vld [vmem:[%s1 + $0x90] sm:$0xff]
      %v259 = vld [vmem:[%s1 + $0x98] sm:$0xff]
      %v260 = vld [vmem:[%s1 + $0xa0] sm:$0xff]
      %v261 = vld [vmem:[%s1 + $0xa8] sm:$0xff]
      %v262 = vld [vmem:[%s1 + $0xb0] sm:$0xff]
      %v263 = vld [vmem:[%s1 + $0xb8] sm:$0xff]
      %v264 = vld [vmem:[%s1 + $0xc0] sm:$0xff]
      %v265 = vld [vmem:[%s1 + $0xc8] sm:$0xff]
      %v266 = vld [vmem:[%s1 + $0xd0] sm:$0xff]
      %v267 = vld [vmem:[%s1 + $0xd8] sm:$0xff]
      %v268 = vld [vmem:[%s1 + $0xe0] sm:$0xff]
      %v269 = vld [vmem:[%s1 + $0xe8] sm:$0xff]
      %v270 = vld [vmem:[%s1 + $0xf0] sm:$0xff]
      %v271 = vld [vmem:[%s1 + $0xf8] sm:$0xff]
      %v272 = vld [vmem:[%s1 + $0x100] sm:$0xff]
      %v273 = vld [vmem:[%s1 + $0x108] sm:$0xff]
      %v274 = vld [vmem:[%s1 + $0x110] sm:$0xff]
      %v275 = vld [vmem:[%s1 + $0x118] sm:$0xff]
      %v276 = vld [vmem:[%s1 + $0x120] sm:$0xff]
      %v277 = vld [vmem:[%s1 + $0x128] sm:$0xff]
      %v278 = vld [vmem:[%s1 + $0x130] sm:$0xff]
      %v279 = vld [vmem:[%s1 + $0x138] sm:$0xff]
      %v280 = vld [vmem:[%s2] sm:$0x3]
      %v282 = vlaneseq
      %v283 = vshrl.u32 %v282, 7
      %v284 = vsub.s32 0, %v283
      %v285 = vrot.slane %v280, %v284
      %v286 = vlaneseq
      %v287 = vshrl.u32 %v286, 7
      %v288 = vsub.s32 1, %v287
      %v289 = vrot.slane %v280, %v288
      %v300 = vunpack.c.l.b16 %v232
      %v301 = vunpack.c.h.b16 %v232
      %v302 = vunpack.c.l.b16 %v233
      %v303 = vunpack.c.l.b16 %v234
      %v304 = vunpack.c.h.b16 %v234
      %v305 = vunpack.c.l.b16 %v235
      %v306 = vunpack.c.l.b16 %v236
      %v307 = vunpack.c.h.b16 %v236
      %v308 = vunpack.c.l.b16 %v237
      %v309 = vunpack.c.l.b16 %v238
      %v310 = vunpack.c.h.b16 %v238
      %v311 = vunpack.c.l.b16 %v239
      %v312 = vpack.c.b16 %v303, %v300
      %v313 = vpack.c.b16 %v304, %v301
      %v314 = vpack.c.b16 %v305, %v302
      %v315 = vpack.c.b16 %v309, %v306
      %v316 = vpack.c.b16 %v310, %v307
      %v317 = vpack.c.b16 %v311, %v308
      %v362 = vunpack.c.l.b16 %v240
      %v363 = vunpack.c.h.b16 %v240
      %v364 = vunpack.c.l.b16 %v241
      %v365 = vunpack.c.h.b16 %v241
      %v366 = vunpack.c.l.b16 %v242
      %v367 = vunpack.c.h.b16 %v242
      %v368 = vunpack.c.l.b16 %v243
      %v369 = vunpack.c.h.b16 %v243
      %v370 = vunpack.c.l.b16 %v244
      %v371 = vunpack.c.h.b16 %v244
      %v372 = vunpack.c.l.b16 %v245
      %v373 = vunpack.c.h.b16 %v245
      %v374 = vunpack.c.l.b16 %v246
      %v375 = vunpack.c.h.b16 %v246
      %v376 = vunpack.c.l.b16 %v247
      %v377 = vunpack.c.h.b16 %v247
      %v378 = vunpack.c.l.b16 %v248
      %v379 = vunpack.c.h.b16 %v248
      %v380 = vunpack.c.l.b16 %v249
      %v381 = vunpack.c.h.b16 %v249
      %v382 = vunpack.c.l.b16 %v250
      %v383 = vunpack.c.h.b16 %v250
      %v384 = vunpack.c.l.b16 %v251
      %v385 = vunpack.c.h.b16 %v251
      %v386 = vunpack.c.l.b16 %v252
      %v387 = vunpack.c.h.b16 %v252
      %v388 = vunpack.c.l.b16 %v253
      %v389 = vunpack.c.h.b16 %v253
      %v390 = vunpack.c.l.b16 %v254
      %v391 = vunpack.c.h.b16 %v254
      %v392 = vunpack.c.l.b16 %v255
      %v393 = vunpack.c.h.b16 %v255
      %v394 = vunpack.c.l.b16 %v256
      %v395 = vunpack.c.h.b16 %v256
      %v396 = vunpack.c.l.b16 %v257
      %v397 = vunpack.c.h.b16 %v257
      %v398 = vunpack.c.l.b16 %v258
      %v399 = vunpack.c.h.b16 %v258
      %v400 = vunpack.c.l.b16 %v259
      %v401 = vunpack.c.h.b16 %v259
      %v402 = vunpack.c.l.b16 %v260
      %v403 = vunpack.c.h.b16 %v260
      %v404 = vunpack.c.l.b16 %v261
      %v405 = vunpack.c.h.b16 %v261
      %v406 = vunpack.c.l.b16 %v262
      %v407 = vunpack.c.h.b16 %v262
      %v408 = vunpack.c.l.b16 %v263
      %v409 = vunpack.c.h.b16 %v263
      %v410 = vunpack.c.l.b16 %v264
      %v411 = vunpack.c.h.b16 %v264
      %v412 = vunpack.c.l.b16 %v265
      %v413 = vunpack.c.h.b16 %v265
      %v414 = vunpack.c.l.b16 %v266
      %v415 = vunpack.c.h.b16 %v266
      %v416 = vunpack.c.l.b16 %v267
      %v417 = vunpack.c.h.b16 %v267
      %v418 = vunpack.c.l.b16 %v268
      %v419 = vunpack.c.h.b16 %v268
      %v420 = vunpack.c.l.b16 %v269
      %v421 = vunpack.c.h.b16 %v269
      %v422 = vunpack.c.l.b16 %v270
      %v423 = vunpack.c.h.b16 %v270
      %v424 = vunpack.c.l.b16 %v271
      %v425 = vunpack.c.h.b16 %v271
      %v426 = vunpack.c.l.b16 %v272
      %v427 = vunpack.c.h.b16 %v272
      %v428 = vunpack.c.l.b16 %v273
      %v429 = vunpack.c.h.b16 %v273
      %v430 = vunpack.c.l.b16 %v274
      %v431 = vunpack.c.h.b16 %v274
      %v432 = vunpack.c.l.b16 %v275
      %v433 = vunpack.c.h.b16 %v275
      %v434 = vunpack.c.l.b16 %v276
      %v435 = vunpack.c.h.b16 %v276
      %v436 = vunpack.c.l.b16 %v277
      %v437 = vunpack.c.h.b16 %v277
      %v438 = vunpack.c.l.b16 %v278
      %v439 = vunpack.c.h.b16 %v278
      %v440 = vunpack.c.l.b16 %v279
      %v441 = vunpack.c.h.b16 %v279
      %v442 = vpack.c.b16 %v364, %v362
      %v443 = vpack.c.b16 %v365, %v363
      %v444 = vpack.c.b16 %v368, %v366
      %v445 = vpack.c.b16 %v369, %v367
      %v446 = vpack.c.b16 %v372, %v370
      %v447 = vpack.c.b16 %v373, %v371
      %v448 = vpack.c.b16 %v376, %v374
      %v449 = vpack.c.b16 %v377, %v375
      %v450 = vpack.c.b16 %v380, %v378
      %v451 = vpack.c.b16 %v381, %v379
      %v452 = vpack.c.b16 %v384, %v382
      %v453 = vpack.c.b16 %v385, %v383
      %v454 = vpack.c.b16 %v388, %v386
      %v455 = vpack.c.b16 %v389, %v387
      %v456 = vpack.c.b16 %v392, %v390
      %v457 = vpack.c.b16 %v393, %v391
      %v458 = vpack.c.b16 %v396, %v394
      %v459 = vpack.c.b16 %v397, %v395
      %v460 = vpack.c.b16 %v400, %v398
      %v461 = vpack.c.b16 %v401, %v399
      %v462 = vpack.c.b16 %v404, %v402
      %v463 = vpack.c.b16 %v405, %v403
      %v464 = vpack.c.b16 %v408, %v406
      %v465 = vpack.c.b16 %v409, %v407
      %v466 = vpack.c.b16 %v412, %v410
      %v467 = vpack.c.b16 %v413, %v411
      %v468 = vpack.c.b16 %v416, %v414
      %v469 = vpack.c.b16 %v417, %v415
      %v470 = vpack.c.b16 %v420, %v418
      %v471 = vpack.c.b16 %v421, %v419
      %v472 = vpack.c.b16 %v424, %v422
      %v473 = vpack.c.b16 %v425, %v423
      %v474 = vpack.c.b16 %v428, %v426
      %v475 = vpack.c.b16 %v429, %v427
      %v476 = vpack.c.b16 %v432, %v430
      %v477 = vpack.c.b16 %v433, %v431
      %v478 = vpack.c.b16 %v436, %v434
      %v479 = vpack.c.b16 %v437, %v435
      %v480 = vpack.c.b16 %v440, %v438
      %v481 = vpack.c.b16 %v441, %v439
      %vm522 = vcmask 523264
      %v524 = vsel %vm522, %v314, 0
      %v527 = vsel %vm522, %v317, 0
      %529 = vmatprep.subr.bf16.mxu0 %v457
      %530 = vmatpush1.bf16.msra.mxu0 %v456
      %531 = vmatprep.subr.bf16.mxu0 %v455
      %532 = vmatpush1.bf16.msra.mxu0 %v454
      %533 = vmatprep.subr.bf16.mxu0 %v453
      %534 = vmatpush1.bf16.msra.mxu0 %v452
      %535 = vmatprep.subr.bf16.mxu0 %v451
      %536 = vmatpush1.bf16.msra.mxu0 %v450
      %537 = vmatprep.subr.bf16.mxu0 %v449
      %538 = vmatpush1.bf16.msra.mxu0 %v448
      %539 = vmatprep.subr.bf16.mxu0 %v447
      %540 = vmatpush1.bf16.msra.mxu0 %v446
      %541 = vmatprep.subr.bf16.mxu0 %v445
      %542 = vmatpush1.bf16.msra.mxu0 %v444
      %543 = vmatprep.subr.bf16.mxu0 %v443
      %544 = vmatpush1.bf16.msra.mxu0 %v442
      %545 = vmatprep.subr.bf16.mxu0 %v473
      %546 = vmatpush2.bf16.msra.mxu0 %v472
      %547 = vmatprep.subr.bf16.mxu0 %v471
      %548 = vmatpush2.bf16.msra.mxu0 %v470
      %549 = vmatprep.subr.bf16.mxu0 %v469
      %550 = vmatpush2.bf16.msra.mxu0 %v468
      %551 = vmatprep.subr.bf16.mxu0 %v467
      %552 = vmatpush2.bf16.msra.mxu0 %v466
      %553 = vmatprep.subr.bf16.mxu0 %v465
      %554 = vmatpush2.bf16.msra.mxu0 %v464
      %555 = vmatprep.subr.bf16.mxu0 %v463
      %556 = vmatpush2.bf16.msra.mxu0 %v462
      %557 = vmatprep.subr.bf16.mxu0 %v461
      %558 = vmatpush2.bf16.msra.mxu0 %v460
      %559 = vmatprep.subr.bf16.mxu0 %v459
      %560 = vmatpush2.bf16.msra.mxu0 %v458
      %561 = vmatprep.mubr.bf16.mxu0 %v313
      %562 = vmatmul.mubr.bf16.gmra.mxu0 %v312
      %v563 = vpop.f32.mrf.mxu0
      %v564 = vadd.f32 %v285, %v563
      %v565 = vpop.f32.mrf.mxu0
      %v566 = vadd.f32 %v289, %v565
      %v567 = vpop.f32.mrf.mxu0
      %v568 = vadd.f32 %v285, %v567
      %v569 = vpop.f32.mrf.mxu0
      %v570 = vadd.f32 %v289, %v569
      %571 = vmatprep.mubr.bf16.mxu0 %v316
      %572 = vmatmul.mubr.bf16.gmra.mxu0 %v315
      %v573 = vpop.f32.mrf.mxu0
      %v574 = vadd.f32 %v285, %v573
      %v575 = vpop.f32.mrf.mxu0
      %v576 = vadd.f32 %v289, %v575
      %v577 = vpop.f32.mrf.mxu0
      %v578 = vadd.f32 %v285, %v577
      %v579 = vpop.f32.mrf.mxu0
      %v580 = vadd.f32 %v289, %v579
      %581 = vdwg.mxu0
      %582 = vmatprep.subr.bf16.mxu0 0
      %583 = vmatpush1.bf16.msra.mxu0 0
      %584 = vmatprep.subr.bf16.mxu0 0
      %585 = vmatpush1.bf16.msra.mxu0 0
      %586 = vmatprep.subr.bf16.mxu0 0
      %587 = vmatpush1.bf16.msra.mxu0 0
      %588 = vmatprep.subr.bf16.mxu0 0
      %589 = vmatpush1.bf16.msra.mxu0 0
      %590 = vmatprep.subr.bf16.mxu0 %v481
      %591 = vmatpush1.bf16.msra.mxu0 %v480
      %592 = vmatprep.subr.bf16.mxu0 %v479
      %593 = vmatpush1.bf16.msra.mxu0 %v478
      %594 = vmatprep.subr.bf16.mxu0 %v477
      %595 = vmatpush1.bf16.msra.mxu0 %v476
      %596 = vmatprep.subr.bf16.mxu0 %v475
      %597 = vmatpush1.bf16.msra.mxu0 %v474
      %598 = vmatprep.subr.bf16.mxu0 0
      %599 = vmatpush2.bf16.msra.mxu0 0
      %600 = vmatprep.subr.bf16.mxu0 0
      %601 = vmatpush2.bf16.msra.mxu0 0
      %602 = vmatprep.subr.bf16.mxu0 0
      %603 = vmatpush2.bf16.msra.mxu0 0
      %604 = vmatprep.subr.bf16.mxu0 0
      %605 = vmatpush2.bf16.msra.mxu0 0
      %606 = vmatprep.subr.bf16.mxu0 0
      %607 = vmatpush2.bf16.msra.mxu0 0
      %608 = vmatprep.subr.bf16.mxu0 0
      %609 = vmatpush2.bf16.msra.mxu0 0
      %610 = vmatprep.subr.bf16.mxu0 0
      %611 = vmatpush2.bf16.msra.mxu0 0
      %612 = vmatprep.subr.bf16.mxu0 0
      %613 = vmatpush2.bf16.msra.mxu0 0
      %614 = vmatprep.mubr.bf16.mxu0 0
      %615 = vmatmul.mubr.bf16.gmra.mxu0 %v524
      %v616 = vpop.f32.mrf.mxu0
      %v617 = vadd.f32 %v564, %v616
      %v618 = vpop.f32.mrf.mxu0
      %v619 = vadd.f32 %v566, %v618
      %v620 = vpop.f32.mrf.mxu0
      %v621 = vadd.f32 %v568, %v620
      %v622 = vpop.f32.mrf.mxu0
      %v623 = vadd.f32 %v570, %v622
      %624 = vmatprep.mubr.bf16.mxu0 0
      %625 = vmatmul.mubr.bf16.gmra.mxu0 %v527
      %v626 = vpop.f32.mrf.mxu0
      %v627 = vadd.f32 %v574, %v626
      %v628 = vpop.f32.mrf.mxu0
      %v629 = vadd.f32 %v576, %v628
      %v630 = vpop.f32.mrf.mxu0
      %v631 = vadd.f32 %v578, %v630
      %v632 = vpop.f32.mrf.mxu0
      %v633 = vadd.f32 %v580, %v632
      %634 = vdwg.mxu0
      %v635 = vmax.f32 %v617, 0.0
      %v636 = vmax.f32 %v619, 0.0
      %v637 = vmax.f32 %v621, 0.0
      %v638 = vmax.f32 %v623, 0.0
      %v639 = vmax.f32 %v627, 0.0
      %v640 = vmax.f32 %v629, 0.0
      %v641 = vmax.f32 %v631, 0.0
      %v642 = vmax.f32 %v633, 0.0
      %v643 = vpack.c.bf16 %v637, %v635
      %v644 = vpack.c.bf16 %v638, %v636
      %v645 = vpack.c.bf16 %v641, %v639
      %v646 = vpack.c.bf16 %v642, %v640
      %v647 = vld [vmem:[%s3] sm:$0xf]
      %v648 = vld [vmem:[%s3 + $0x4] sm:$0xf]
      %v649 = vld [vmem:[%s3 + $0x8] sm:$0xf]
      %v650 = vld [vmem:[%s3 + $0xc] sm:$0xf]
      %v651 = vld [vmem:[%s3 + $0x10] sm:$0xf]
      %v652 = vld [vmem:[%s3 + $0x14] sm:$0xf]
      %v653 = vld [vmem:[%s3 + $0x18] sm:$0xf]
      %v654 = vld [vmem:[%s3 + $0x1c] sm:$0xf]
      %v655 = vld [vmem:[%s3 + $0x20] sm:$0xf]
      %v656 = vld [vmem:[%s3 + $0x24] sm:$0xf]
      %v657 = vld [vmem:[%s3 + $0x28] sm:$0xf]
      %v658 = vld [vmem:[%s3 + $0x2c] sm:$0xf]
      %v659 = vld [vmem:[%s3 + $0x30] sm:$0xf]
      %v660 = vld [vmem:[%s3 + $0x34] sm:$0xf]
      %v661 = vld [vmem:[%s3 + $0x38] sm:$0xf]
      %v662 = vld [vmem:[%s3 + $0x3c] sm:$0xf]
      %v663 = vld [vmem:[%s3 + $0x40] sm:$0xf]
      %v664 = vld [vmem:[%s3 + $0x44] sm:$0xf]
      %v665 = vld [vmem:[%s3 + $0x48] sm:$0xf]
      %v666 = vld [vmem:[%s3 + $0x4c] sm:$0xf]
      %v667 = vld [vmem:[%s3 + $0x50] sm:$0xf]
      %v668 = vld [vmem:[%s3 + $0x54] sm:$0xf]
      %v669 = vld [vmem:[%s3 + $0x58] sm:$0xf]
      %v670 = vld [vmem:[%s3 + $0x5c] sm:$0xf]
      %v671 = vld [vmem:[%s3 + $0x60] sm:$0xf]
      %v672 = vld [vmem:[%s3 + $0x64] sm:$0xf]
      %v673 = vld [vmem:[%s3 + $0x68] sm:$0xf]
      %v674 = vld [vmem:[%s3 + $0x6c] sm:$0xf]
      %v675 = vld [vmem:[%s3 + $0x70] sm:$0xf]
      %v676 = vld [vmem:[%s3 + $0x74] sm:$0xf]
      %v677 = vld [vmem:[%s3 + $0x78] sm:$0xf]
      %v678 = vld [vmem:[%s3 + $0x7c] sm:$0xf]
      %v679 = vld [vmem:[%s4] sm:$0x1]
      %v681 = vlaneseq
      %v682 = vshrl.u32 %v681, 7
      %v683 = vsub.s32 0, %v682
      %v684 = vrot.slane %v679, %v683
      %v718 = vunpack.c.l.b16 %v647
      %v719 = vunpack.c.l.b16 %v648
      %v720 = vunpack.c.l.b16 %v649
      %v721 = vunpack.c.l.b16 %v650
      %v722 = vunpack.c.l.b16 %v651
      %v723 = vunpack.c.l.b16 %v652
      %v724 = vunpack.c.l.b16 %v653
      %v725 = vunpack.c.l.b16 %v654
      %v726 = vunpack.c.l.b16 %v655
      %v727 = vunpack.c.l.b16 %v656
      %v728 = vunpack.c.l.b16 %v657
      %v729 = vunpack.c.l.b16 %v658
      %v730 = vunpack.c.l.b16 %v659
      %v731 = vunpack.c.l.b16 %v660
      %v732 = vunpack.c.l.b16 %v661
      %v733 = vunpack.c.l.b16 %v662
      %v734 = vunpack.c.l.b16 %v663
      %v735 = vunpack.c.l.b16 %v664
      %v736 = vunpack.c.l.b16 %v665
      %v737 = vunpack.c.l.b16 %v666
      %v738 = vunpack.c.l.b16 %v667
      %v739 = vunpack.c.l.b16 %v668
      %v740 = vunpack.c.l.b16 %v669
      %v741 = vunpack.c.l.b16 %v670
      %v742 = vunpack.c.l.b16 %v671
      %v743 = vunpack.c.l.b16 %v672
      %v744 = vunpack.c.l.b16 %v673
      %v745 = vunpack.c.l.b16 %v674
      %v746 = vunpack.c.l.b16 %v675
      %v747 = vunpack.c.l.b16 %v676
      %v748 = vunpack.c.l.b16 %v677
      %v749 = vunpack.c.l.b16 %v678
      %v750 = vpack.c.b16 %v719, %v718
      %v751 = vpack.c.b16 %v721, %v720
      %v752 = vpack.c.b16 %v723, %v722
      %v753 = vpack.c.b16 %v725, %v724
      %v754 = vpack.c.b16 %v727, %v726
      %v755 = vpack.c.b16 %v729, %v728
      %v756 = vpack.c.b16 %v731, %v730
      %v757 = vpack.c.b16 %v733, %v732
      %v758 = vpack.c.b16 %v735, %v734
      %v759 = vpack.c.b16 %v737, %v736
      %v760 = vpack.c.b16 %v739, %v738
      %v761 = vpack.c.b16 %v741, %v740
      %v762 = vpack.c.b16 %v743, %v742
      %v763 = vpack.c.b16 %v745, %v744
      %v764 = vpack.c.b16 %v747, %v746
      %v765 = vpack.c.b16 %v749, %v748
      %782 = vmatprep.subr.bf16.mxu0 0
      %783 = vmatpush1.bf16.msra.mxu0 %v757
      %784 = vmatprep.subr.bf16.mxu0 0
      %785 = vmatpush1.bf16.msra.mxu0 %v756
      %786 = vmatprep.subr.bf16.mxu0 0
      %787 = vmatpush1.bf16.msra.mxu0 %v755
      %788 = vmatprep.subr.bf16.mxu0 0
      %789 = vmatpush1.bf16.msra.mxu0 %v754
      %790 = vmatprep.subr.bf16.mxu0 0
      %791 = vmatpush1.bf16.msra.mxu0 %v753
      %792 = vmatprep.subr.bf16.mxu0 0
      %793 = vmatpush1.bf16.msra.mxu0 %v752
      %794 = vmatprep.subr.bf16.mxu0 0
      %795 = vmatpush1.bf16.msra.mxu0 %v751
      %796 = vmatprep.subr.bf16.mxu0 0
      %797 = vmatpush1.bf16.msra.mxu0 %v750
      %798 = vmatprep.subr.bf16.mxu0 0
      %799 = vmatpush2.bf16.msra.mxu0 %v765
      %800 = vmatprep.subr.bf16.mxu0 0
      %801 = vmatpush2.bf16.msra.mxu0 %v764
      %802 = vmatprep.subr.bf16.mxu0 0
      %803 = vmatpush2.bf16.msra.mxu0 %v763
      %804 = vmatprep.subr.bf16.mxu0 0
      %805 = vmatpush2.bf16.msra.mxu0 %v762
      %806 = vmatprep.subr.bf16.mxu0 0
      %807 = vmatpush2.bf16.msra.mxu0 %v761
      %808 = vmatprep.subr.bf16.mxu0 0
      %809 = vmatpush2.bf16.msra.mxu0 %v760
      %810 = vmatprep.subr.bf16.mxu0 0
      %811 = vmatpush2.bf16.msra.mxu0 %v759
      %812 = vmatprep.subr.bf16.mxu0 0
      %813 = vmatpush2.bf16.msra.mxu0 %v758
      %814 = vmatprep.mubr.bf16.mxu0 %v644
      %815 = vmatmul.mubr.bf16.gmra.mxu0 %v643
      %v816 = vpop.f32.mrf.mxu0
      %v817 = vadd.f32 %v684, %v816
      %v818 = vpop.f32.mrf.mxu0
      %v819 = vpop.f32.mrf.mxu0
      %v820 = vadd.f32 %v684, %v819
      %v821 = vpop.f32.mrf.mxu0
      %822 = vmatprep.mubr.bf16.mxu0 %v646
      %823 = vmatmul.mubr.bf16.gmra.mxu0 %v645
      %v824 = vpop.f32.mrf.mxu0
      %v825 = vadd.f32 %v684, %v824
      %v826 = vpop.f32.mrf.mxu0
      %v827 = vpop.f32.mrf.mxu0
      %v828 = vadd.f32 %v684, %v827
      %v829 = vpop.f32.mrf.mxu0
      %830 = vdwg.mxu0
      %v831 = vmax.f32 %v817, 0.0
      %v832 = vmax.f32 %v820, 0.0
      %v833 = vmax.f32 %v825, 0.0
      %v834 = vmax.f32 %v828, 0.0
      %v835 = vpack.c.bf16 %v832, %v831
      %v836 = vpack.c.bf16 %v834, %v833
      %v839 = vunpack.c.l.b16 %v835
      %v840 = vunpack.c.h.b16 %v835
      %v841 = vunpack.c.l.b16 %v836
      %v842 = vunpack.c.h.b16 %v836
      %v843 = vpack.c.b16 %v839, %v839
      %v844 = vpack.c.b16 %v840, %v840
      %v845 = vpack.c.b16 %v841, %v841
      %v846 = vpack.c.b16 %v842, %v842
      %851 = vst [vmem:[%s229] sm:$0xf] %v843
      %852 = vst [vmem:[%s229 + $0x4] sm:$0xf] %v844
      %853 = vst [vmem:[%s229 + $0x8] sm:$0xf] %v845
      %854 = vst [vmem:[%s229 + $0xc] sm:$0xf] %v846
      %s855 = smul.u32 4, %s16
      %p856 = scmp.lt.s32.totalorder %s855, 7
      %s857 = scalar_select %p856, %s855, 7
      %s858 = smul.addr %s857, 4
      %s859 = scalar_lea.vmem %s5, %s858
      // Predicated region
      $region41: #{pointnet2_forward.14} parent=39 // pred_check
        %p860 = pneg %p144
      $region42: #{pointnet2_forward.14} parent=39 // pred_check_branch
        %862 = sbr.rel (%p860) target = $region44
      $region43: #{pointnet2_forward.14} parent=39 // pred_region
        %s863 = smul.u32 4, %s16
      $region44: #{pointnet2_forward.14} parent=39 // pred_fallthru
        _
    $region40: #{pointnet2_forward.14} parent=5 // pred_fallthru
      _
    %p864 = scmp.le.s32.totalorder 2, %s11
    // Predicated region
    $region45: #{pointnet2_forward.14} parent=5 // pred_check
      %p865 = pneg %p864
    $region46: #{pointnet2_forward.14} parent=5 // pred_check_branch
      %867 = sbr.rel (%p865) target = $region48
    $region47: #{pointnet2_forward.14} parent=5 // pred_region
      %s868 = ssub.s32 %s11, 2
      // Predicated region
      $region49: #{pointnet2_forward.14} parent=47 // pred_check
        %p869 = pneg %p150
      $region50: #{pointnet2_forward.14} parent=47 // pred_check_branch
        %871 = sbr.rel (%p869) target = $region52
      $region51: #{pointnet2_forward.14} parent=47 // pred_region
        %s872 = smul.u32 4, %s17
        %p873 = scmp.lt.s32.totalorder %s872, 7
        %s874 = scalar_select %p873, %s872, 7
        %s875 = smul.addr %s874, 4
        %s876 = scalar_lea.vmem %s5, %s875
      $region52: #{pointnet2_forward.14} parent=47 // pred_fallthru
        _
    $region48: #{pointnet2_forward.14} parent=5 // pred_fallthru
      _
  $region6: #{pointnet2_forward.14} parent=0 // loop_footer
    %s15 = sadd.s32 1, %s11
  $region7: #{pointnet2_forward.14} parent=0 // loop_footer_branch
    %10 = sbr.rel target = $region3
  $region8: #{pointnet2_forward.14} parent=0 // loop_exit
    _

// kernel: neg.30
$region0: #{neg.30}
  #allocation0 [shape = 's32[1]{0}', space=sflag, size = 0x4, scoped, tag = 'scoped memory for neg.30']
  %s0 = inlined_call_operand.vmem [shape: f32[2,64,32], index: 0, kind: input, shape index: {}]
  %s1 = inlined_call_operand.vmem [shape: f32[2,64,32], index: 1, kind: output, shape index: {}]
  %v2 = vld [vmem:[%s0] sm:$0xff]
  %3 = xla_tuple %v2
  %4 = xla_tuple %3
  %v5 = vxor.u32 %v2, 2147483648
  %6 = xla_tuple %v5
  %7 = vst [vmem:[%s1] sm:$0xff] %v5
  %s8 = scalar_lea.vmem %s0, 32
  %v9 = vld [vmem:[%s8] sm:$0xff]
  %10 = xla_tuple %v9
  %11 = xla_tuple %10
  %v12 = vxor.u32 %v9, 2147483648
  %13 = xla_tuple %v12
  %s14 = scalar_lea.vmem %s1, 32
  %15 = vst [vmem:[%s14] sm:$0xff] %v12
  %s16 = scalar_lea.vmem %s0, 8
  %v17 = vld [vmem:[%s16] sm:$0xff]
  %18 = xla_tuple %v17
  %19 = xla_tuple %18
  %v20 = vxor.u32 %v17, 2147483648
  %21 = xla_tuple %v20
  %s22 = scalar_lea.vmem %s1, 8
  %23 = vst [vmem:[%s22] sm:$0xff] %v20
  %s24 = scalar_lea.vmem %s0, 40
  %v25 = vld [vmem:[%s24] sm:$0xff]
  %26 = xla_tuple %v25
  %27 = xla_tuple %26
  %v28 = vxor.u32 %v25, 2147483648
  %29 = xla_tuple %v28
  %s30 = scalar_lea.vmem %s1, 40
  %31 = vst [vmem:[%s30] sm:$0xff] %v28
  %s32 = scalar_lea.vmem %s0, 16
  %v33 = vld [vmem:[%s32] sm:$0xff]
  %34 = xla_tuple %v33
  %35 = xla_tuple %34
  %v36 = vxor.u32 %v33, 2147483648
  %37 = xla_tuple %v36
  %s38 = scalar_lea.vmem %s1, 16
  %39 = vst [vmem:[%s38] sm:$0xff] %v36
  %s40 = scalar_lea.vmem %s0, 48
  %v41 = vld [vmem:[%s40] sm:$0xff]
  %42 = xla_tuple %v41
  %43 = xla_tuple %42
  %v44 = vxor.u32 %v41, 2147483648
  %45 = xla_tuple %v44
  %s46 = scalar_lea.vmem %s1, 48
  %47 = vst [vmem:[%s46] sm:$0xff] %v44
  %s48 = scalar_lea.vmem %s0, 24
  %v49 = vld [vmem:[%s48] sm:$0xff]
  %50 = xla_tuple %v49
  %51 = xla_tuple %50
  %v52 = vxor.u32 %v49, 2147483648
  %53 = xla_tuple %v52
  %s54 = scalar_lea.vmem %s1, 24
  %55 = vst [vmem:[%s54] sm:$0xff] %v52
  %s56 = scalar_lea.vmem %s0, 56
  %v57 = vld [vmem:[%s56] sm:$0xff]
  %58 = xla_tuple %v57
  %59 = xla_tuple %58
  %v60 = vxor.u32 %v57, 2147483648
  %61 = xla_tuple %v60
  %s62 = scalar_lea.vmem %s1, 56
  %63 = vst [vmem:[%s62] sm:$0xff] %v60

// kernel: pointnet2_forward.15
$region0: #{pointnet2_forward.15}
  #allocation0 [shape = 'u32[]', space=smem, size = 0x4, offset = 0x4, fixed_abs, tag = 'smem constant byte address 0x4 - core index']
  #allocation1 [shape = 'u32[144,128]{1,0:T(1,128)}', space=vmem, size = 0x12000, scoped, tag = 'internal scratch']
  %s0 = inlined_call_operand.vmem [shape: bf16[128,144], index: 0, kind: input, shape index: {}]
  %s1 = inlined_call_operand.vmem [shape: bf16[144,128], index: 1, kind: input, shape index: {}]
  %s2 = inlined_call_operand.vmem [shape: f32[1,128], index: 2, kind: input, shape index: {}]
  %s3 = inlined_call_operand.vmem [shape: bf16[128,128], index: 3, kind: input, shape index: {}]
  %s4 = inlined_call_operand.vmem [shape: f32[1,128], index: 4, kind: input, shape index: {}]
  %s5 = inlined_call_operand.vmem [shape: bf16[128,128], index: 5, kind: input, shape index: {}]
  %s6 = inlined_call_operand.vmem [shape: f32[1,128], index: 6, kind: input, shape index: {}]
  %s7 = inlined_call_operand.hbm [shape: f32[128,128], index: 7, kind: output, shape index: {}]
  %s8 = sld [smem:[#allocation0]]
  $region61: #{pointnet2_forward.15} parent=0
    _
  %s10 = ssub.s32 1, %s8
  %s11 = scalar_select 0, %s10, %s8
  $region1: #{pointnet2_forward.15} parent=0
    #allocation2 [shape = 'u8[65536]{0}', space=vmem, size = 0x10000, scoped, tag = 'output window, operand 0']
    #allocation3 [shape = 's32[2]{0}', space=sflag, size = 0x8, scoped, tag = 'scoped memory for pointnet2_forward.15']
    %12 = vsyncpa [#allocation3], 0
    %s13 = scalar_lea.sflag [#allocation3], 1
    %14 = vsyncpa %s13, 0
    loop: start=0, step=1, limit=4
    $region2: #{pointnet2_forward.15} parent=1 // loop_pre_header
      _
    $region3: #{pointnet2_forward.15} parent=1 // loop_header
      %s16 = sphi 0, %s20
      %p17 = scmp.ge.s32.totalorder %s16, 4
      %s26 = sphi 0, %s28
      %s29 = sphi 0, %s26
      %s30 = sphi 0, %s29
      %s46 = sphi 0, %s30
      %s50 = sphi 0, %s50
      %s52 = sphi 0, %s50
      %s53 = sphi 0, %s52
      %s67 = sphi 0, %s53
      %s71 = sphi 0, %s71
      %s73 = sphi 0, %s71
      %s74 = sphi 0, %s73
      %s88 = sphi 0, %s74
      %s92 = sphi 0, %s92
      %s94 = sphi 0, %s92
      %s95 = sphi 0, %s94
      %s109 = sphi 0, %s95
      %s113 = sphi 0, %s113
      %s115 = sphi 0, %s113
      %s116 = sphi 0, %s115
      %s130 = sphi 0, %s116
      %s134 = sphi 0, %s134
      %s136 = sphi 0, %s134
      %s137 = sphi 0, %s136
      %s151 = sphi 0, %s137
      %s155 = sphi 0, %s155
      %s157 = sphi 0, %s155
      %s158 = sphi 0, %s157
      %s172 = sphi 0, %s158
      %s178 = sphi 0, %s180
      %s181 = sphi 0, %s178
      %s182 = sphi 0, %s181
      %s198 = sphi 0, %s182
    $region4: #{pointnet2_forward.15} parent=1 // loop_header_branch
      %19 = sbr.rel (%p17) target = $region8
    $region5: #{pointnet2_forward.15} parent=1 // loop_body
      %s21 = ssub.s32 %s16, 1
      %s22 = ssub.s32 %s16, 2
      %s23 = sadd.s32 %s16, 1
      %s24 = ssub.s32 %s16, %s23
      %p25 = scmp.eq.s32.totalorder %s24, 0
      %s27 = sadd.s32 %s26, 1
      %s28 = scalar_select %p25, %s26, %s27
      %p31 = pneg %p25
      %p32 = scmp.eq.s32.totalorder %s16, 1
      %p33 = por %p31, %p32
      %p34 = scmp.ne.s32.totalorder %s26, %s29
      %p35 = scmp.eq.s32.totalorder %s16, 0
      %p36 = por %p34, %p35
      %p37 = scmp.ne.s32.totalorder %s26, %s29
      %p38 = scmp.eq.s32.totalorder %s21, 1
      %p39 = por %p37, %p38
      %p40 = scmp.ne.s32.totalorder %s29, %s30
      %p41 = scmp.eq.s32.totalorder %s21, 0
      %p42 = por %p40, %p41
      %p43 = scmp.ne.s32.totalorder %s29, %s30
      %p44 = scmp.eq.s32.totalorder %s22, 1
      %p45 = por %p43, %p44
      %p47 = scmp.ne.s32.totalorder %s30, %s46
      %p48 = scmp.eq.s32.totalorder %s22, 0
      %p49 = por %p47, %p48
      %s51 = sadd.s32 %s50, 1
      %p54 = scmp.eq.s32.totalorder %s16, 1
      %p55 = scmp.ne.s32.totalorder %s50, %s52
      %p56 = scmp.eq.s32.totalorder %s16, 0
      %p57 = por %p55, %p56
      %p58 = scmp.ne.s32.totalorder %s50, %s52
      %p59 = scmp.eq.s32.totalorder %s21, 1
      %p60 = por %p58, %p59
      %p61 = scmp.ne.s32.totalorder %s52, %s53
      %p62 = scmp.eq.s32.totalorder %s21, 0
      %p63 = por %p61, %p62
      %p64 = scmp.ne.s32.totalorder %s52, %s53
      %p65 = scmp.eq.s32.totalorder %s22, 1
      %p66 = por %p64, %p65
      %p68 = scmp.ne.s32.totalorder %s53, %s67
      %p69 = scmp.eq.s32.totalorder %s22, 0
      %p70 = por %p68, %p69
      %s72 = sadd.s32 %s71, 1
      %p75 = scmp.eq.s32.totalorder %s16, 1
      %p76 = scmp.ne.s32.totalorder %s71, %s73
      %p77 = scmp.eq.s32.totalorder %s16, 0
      %p78 = por %p76, %p77
      %p79 = scmp.ne.s32.totalorder %s71, %s73
      %p80 = scmp.eq.s32.totalorder %s21, 1
      %p81 = por %p79, %p80
      %p82 = scmp.ne.s32.totalorder %s73, %s74
      %p83 = scmp.eq.s32.totalorder %s21, 0
      %p84 = por %p82, %p83
      %p85 = scmp.ne.s32.totalorder %s73, %s74
      %p86 = scmp.eq.s32.totalorder %s22, 1
      %p87 = por %p85, %p86
      %p89 = scmp.ne.s32.totalorder %s74, %s88
      %p90 = scmp.eq.s32.totalorder %s22, 0
      %p91 = por %p89, %p90
      %s93 = sadd.s32 %s92, 1
      %p96 = scmp.eq.s32.totalorder %s16, 1
      %p97 = scmp.ne.s32.totalorder %s92, %s94
      %p98 = scmp.eq.s32.totalorder %s16, 0
      %p99 = por %p97, %p98
      %p100 = scmp.ne.s32.totalorder %s92, %s94
      %p101 = scmp.eq.s32.totalorder %s21, 1
      %p102 = por %p100, %p101
      %p103 = scmp.ne.s32.totalorder %s94, %s95
      %p104 = scmp.eq.s32.totalorder %s21, 0
      %p105 = por %p103, %p104
      %p106 = scmp.ne.s32.totalorder %s94, %s95
      %p107 = scmp.eq.s32.totalorder %s22, 1
      %p108 = por %p106, %p107
      %p110 = scmp.ne.s32.totalorder %s95, %s109
      %p111 = scmp.eq.s32.totalorder %s22, 0
      %p112 = por %p110, %p111
      %s114 = sadd.s32 %s113, 1
      %p117 = scmp.eq.s32.totalorder %s16, 1
      %p118 = scmp.ne.s32.totalorder %s113, %s115
      %p119 = scmp.eq.s32.totalorder %s16, 0
      %p120 = por %p118, %p119
      %p121 = scmp.ne.s32.totalorder %s113, %s115
      %p122 = scmp.eq.s32.totalorder %s21, 1
      %p123 = por %p121, %p122
      %p124 = scmp.ne.s32.totalorder %s115, %s116
      %p125 = scmp.eq.s32.totalorder %s21, 0
      %p126 = por %p124, %p125
      %p127 = scmp.ne.s32.totalorder %s115, %s116
      %p128 = scmp.eq.s32.totalorder %s22, 1
      %p129 = por %p127, %p128
      %p131 = scmp.ne.s32.totalorder %s116, %s130
      %p132 = scmp.eq.s32.totalorder %s22, 0
      %p133 = por %p131, %p132
      %s135 = sadd.s32 %s134, 1
      %p138 = scmp.eq.s32.totalorder %s16, 1
      %p139 = scmp.ne.s32.totalorder %s134, %s136
      %p140 = scmp.eq.s32.totalorder %s16, 0
      %p141 = por %p139, %p140
      %p142 = scmp.ne.s32.totalorder %s134, %s136
      %p143 = scmp.eq.s32.totalorder %s21, 1
      %p144 = por %p142, %p143
      %p145 = scmp.ne.s32.totalorder %s136, %s137
      %p146 = scmp.eq.s32.totalorder %s21, 0
      %p147 = por %p145, %p146
      %p148 = scmp.ne.s32.totalorder %s136, %s137
      %p149 = scmp.eq.s32.totalorder %s22, 1
      %p150 = por %p148, %p149
      %p152 = scmp.ne.s32.totalorder %s137, %s151
      %p153 = scmp.eq.s32.totalorder %s22, 0
      %p154 = por %p152, %p153
      %s156 = sadd.s32 %s155, 1
      %p159 = scmp.eq.s32.totalorder %s16, 1
      %p160 = scmp.ne.s32.totalorder %s155, %s157
      %p161 = scmp.eq.s32.totalorder %s16, 0
      %p162 = por %p160, %p161
      %p163 = scmp.ne.s32.totalorder %s155, %s157
      %p164 = scmp.eq.s32.totalorder %s21, 1
      %p165 = por %p163, %p164
      %p166 = scmp.ne.s32.totalorder %s157, %s158
      %p167 = scmp.eq.s32.totalorder %s21, 0
      %p168 = por %p166, %p167
      %p169 = scmp.ne.s32.totalorder %s157, %s158
      %p170 = scmp.eq.s32.totalorder %s22, 1
      %p171 = por %p169, %p170
      %p173 = scmp.ne.s32.totalorder %s158, %s172
      %p174 = scmp.eq.s32.totalorder %s22, 0
      %p175 = por %p173, %p174
      %s176 = ssub.s32 %s16, %s23
      %p177 = scmp.eq.s32.totalorder %s176, 0
      %s179 = sadd.s32 %s178, 1
      %s180 = scalar_select %p177, %s178, %s179
      %p183 = pneg %p177
      %p184 = scmp.eq.s32.totalorder %s16, 1
      %p185 = por %p183, %p184
      %p186 = scmp.ne.s32.totalorder %s178, %s181
      %p187 = scmp.eq.s32.totalorder %s16, 0
      %p188 = por %p186, %p187
      %p189 = scmp.ne.s32.totalorder %s178, %s181
      %p190 = scmp.eq.s32.totalorder %s21, 1
      %p191 = por %p189, %p190
      %p192 = scmp.ne.s32.totalorder %s181, %s182
      %p193 = scmp.eq.s32.totalorder %s21, 0
      %p194 = por %p192, %p193
      %p195 = scmp.ne.s32.totalorder %s181, %s182
      %p196 = scmp.eq.s32.totalorder %s22, 1
      %p197 = por %p195, %p196
      %p199 = scmp.ne.s32.totalorder %s182, %s198
      %p200 = scmp.eq.s32.totalorder %s22, 0
      %p201 = por %p199, %p200
      %p202 = scmp.le.s32.totalorder 1, %s16
      %p203 = scmp.lt.s32.totalorder %s16, 3
      %p204 = pnand %p202, %p203
      %p205 = pneg %p204
      // Predicated region
      $region9: #{pointnet2_forward.15} parent=5 // pred_check
        _
      $region10: #{pointnet2_forward.15} parent=5 // pred_check_branch
        %207 = sbr.rel (%p204) target = $region12
      $region11: #{pointnet2_forward.15} parent=5 // pred_region
        %s208 = ssub.s32 %s16, 1
        // Predicated region
        $region13: #{pointnet2_forward.15} parent=11 // pred_check
          %p209 = pneg %p63
        $region14: #{pointnet2_forward.15} parent=11 // pred_check_branch
          %211 = sbr.rel (%p209) target = $region16
        $region15: #{pointnet2_forward.15} parent=11 // pred_region
          _
        $region16: #{pointnet2_forward.15} parent=11 // pred_fallthru
          _
        // Predicated region
        $region17: #{pointnet2_forward.15} parent=11 // pred_check
          %p212 = pneg %p84
        $region18: #{pointnet2_forward.15} parent=11 // pred_check_branch
          %214 = sbr.rel (%p212) target = $region20
        $region19: #{pointnet2_forward.15} parent=11 // pred_region
          _
        $region20: #{pointnet2_forward.15} parent=11 // pred_fallthru
          _
        // Predicated region
        $region21: #{pointnet2_forward.15} parent=11 // pred_check
          %p215 = pneg %p105
        $region22: #{pointnet2_forward.15} parent=11 // pred_check_branch
          %217 = sbr.rel (%p215) target = $region24
        $region23: #{pointnet2_forward.15} parent=11 // pred_region
          _
        $region24: #{pointnet2_forward.15} parent=11 // pred_fallthru
          _
        // Predicated region
        $region25: #{pointnet2_forward.15} parent=11 // pred_check
          %p218 = pneg %p126
        $region26: #{pointnet2_forward.15} parent=11 // pred_check_branch
          %220 = sbr.rel (%p218) target = $region28
        $region27: #{pointnet2_forward.15} parent=11 // pred_region
          _
        $region28: #{pointnet2_forward.15} parent=11 // pred_fallthru
          _
        // Predicated region
        $region29: #{pointnet2_forward.15} parent=11 // pred_check
          %p221 = pneg %p147
        $region30: #{pointnet2_forward.15} parent=11 // pred_check_branch
          %223 = sbr.rel (%p221) target = $region32
        $region31: #{pointnet2_forward.15} parent=11 // pred_region
          _
        $region32: #{pointnet2_forward.15} parent=11 // pred_fallthru
          _
        // Predicated region
        $region33: #{pointnet2_forward.15} parent=11 // pred_check
          %p224 = pneg %p168
        $region34: #{pointnet2_forward.15} parent=11 // pred_check_branch
          %226 = sbr.rel (%p224) target = $region36
        $region35: #{pointnet2_forward.15} parent=11 // pred_region
          _
        $region36: #{pointnet2_forward.15} parent=11 // pred_fallthru
          _
      $region12: #{pointnet2_forward.15} parent=5 // pred_fallthru
        _
      %p227 = scmp.lt.s32.totalorder %s16, 2
      // Predicated region
      $region37: #{pointnet2_forward.15} parent=5 // pred_check
        %p228 = pneg %p227
      $region38: #{pointnet2_forward.15} parent=5 // pred_check_branch
        %230 = sbr.rel (%p228) target = $region40
      $region39: #{pointnet2_forward.15} parent=5 // pred_region
        // Predicated region
        $region41: #{pointnet2_forward.15} parent=39 // pred_check
          %p231 = pneg %p36
        $region42: #{pointnet2_forward.15} parent=39 // pred_check_branch
          %233 = sbr.rel (%p231) target = $region44
        $region43: #{pointnet2_forward.15} parent=39 // pred_region
          %s234 = smul.u32 8, %s16
          %p235 = scmp.lt.s32.totalorder %s234, 15
          %s236 = scalar_select %p235, %s234, 15
          %s237 = smul.addr %s236, 2
          %s238 = smul.addr %s237, 4
          %s239 = scalar_lea.vmem %s0, %s238
          %s240 = smul.u32 8, %s16
        $region44: #{pointnet2_forward.15} parent=39 // pred_fallthru
          _
      $region40: #{pointnet2_forward.15} parent=5 // pred_fallthru
        _
      %p241 = scmp.le.s32.totalorder 1, %s16
      %p242 = scmp.lt.s32.totalorder %s16, 3
      %p243 = pnand %p241, %p242
      %p244 = pneg %p243
      // Predicated region
      $region45: #{pointnet2_forward.15} parent=5 // pred_check
        _
      $region46: #{pointnet2_forward.15} parent=5 // pred_check_branch
        %246 = sbr.rel (%p243) target = $region48
      $region47: #{pointnet2_forward.15} parent=5 // pred_region
        %s247 = ssub.s32 %s16, 1
        %s248 = smul.u32 8, %s21
        %p249 = scmp.lt.s32.totalorder %s248, 15
        %s250 = scalar_select %p249, %s248, 15
        %s251 = smul.addr %s250, 2
        %s252 = smul.addr %s251, 4
        %s253 = scalar_lea.vmem %s0, %s252
        %p254 = pneg %p42
        %p255 = pneg %p39
        %p256 = pneg %p63
        %p257 = pneg %p60
        %p258 = pneg %p84
        %p259 = pneg %p81
        %p260 = pneg %p105
        %p261 = pneg %p102
        %p262 = pneg %p126
        %p263 = pneg %p123
        %p264 = pneg %p147
        %p265 = pneg %p144
        %p266 = pneg %p168
        %p267 = pneg %p165
        %p268 = pneg %p194
        %p269 = pneg %p191
        %s270 = sand.u32 %s181, 1
        %s271 = scalar_lea.sflag [#allocation3], %s270
        %s272 = sand.u32 %s181, 1
        %s273 = smul.addr %s272, 64
        %s274 = scalar_lea.vmem [#allocation2], %s273
        %s275 = smul.u32 8, %s21
        %p276 = scmp.lt.s32.totalorder %s275, 15
        %s277 = scalar_select %p276, %s275, 15
        %s278 = smul.addr %s277, 2
        %s279 = smul.addr %s278, 4
        %s280 = scalar_lea.vmem %s0, %s279
        %s281 = smul.u32 8, %s21
        %s282 = smul.u32 8, %s21
        %v284 = vld [vmem:[%s280] sm:$0xff]
        %v285 = vld [vmem:[%s280 + $0x8] sm:$0xff]
        %v286 = vld [vmem:[%s280 + $0x10] sm:$0xff]
        %v287 = vld [vmem:[%s280 + $0x18] sm:$0xff]
        %v288 = vld [vmem:[%s280 + $0x20] sm:$0xff]
        %v289 = vld [vmem:[%s280 + $0x28] sm:$0xff]
        %v290 = vld [vmem:[%s280 + $0x30] sm:$0xff]
        %v291 = vld [vmem:[%s280 + $0x38] sm:$0xff]
        %v292 = vld [vmem:[%s1] sm:$0xf]
        %v293 = vld [vmem:[%s1 + $0x4] sm:$0xf]
        %v294 = vld [vmem:[%s1 + $0x8] sm:$0xf]
        %v295 = vld [vmem:[%s1 + $0xc] sm:$0xf]
        %v296 = vld [vmem:[%s1 + $0x10] sm:$0xf]
        %v297 = vld [vmem:[%s1 + $0x14] sm:$0xf]
        %v298 = vld [vmem:[%s1 + $0x18] sm:$0xf]
        %v299 = vld [vmem:[%s1 + $0x1c] sm:$0xf]
        %v300 = vld [vmem:[%s1 + $0x20] sm:$0xf]
        %v301 = vld [vmem:[%s1 + $0x24] sm:$0xf]
        %v302 = vld [vmem:[%s1 + $0x28] sm:$0xf]
        %v303 = vld [vmem:[%s1 + $0x2c] sm:$0xf]
        %v304 = vld [vmem:[%s1 + $0x30] sm:$0xf]
        %v305 = vld [vmem:[%s1 + $0x34] sm:$0xf]
        %v306 = vld [vmem:[%s1 + $0x38] sm:$0xf]
        %v307 = vld [vmem:[%s1 + $0x3c] sm:$0xf]
        %v308 = vld [vmem:[%s1 + $0x40] sm:$0xf]
        %v309 = vld [vmem:[%s1 + $0x44] sm:$0xf]
        %v310 = vld [vmem:[%s2] sm:$0x1]
        %v312 = vlaneseq
        %v313 = vshrl.u32 %v312, 7
        %v314 = vsub.s32 0, %v313
        %v315 = vrot.slane %v310, %v314
        %v325 = vunpack.c.l.b16 %v284
        %v326 = vunpack.c.h.b16 %v284
        %v327 = vunpack.c.l.b16 %v285
        %v328 = vunpack.c.h.b16 %v285
        %v329 = vunpack.c.l.b16 %v286
        %v330 = vunpack.c.h.b16 %v286
        %v331 = vunpack.c.l.b16 %v287
        %v332 = vunpack.c.h.b16 %v287
        %v333 = vunpack.c.l.b16 %v288
        %v334 = vunpack.c.h.b16 %v288
        %v335 = vunpack.c.l.b16 %v289
        %v336 = vunpack.c.h.b16 %v289
        %v337 = vunpack.c.l.b16 %v290
        %v338 = vunpack.c.h.b16 %v290
        %v339 = vunpack.c.l.b16 %v291
        %v340 = vunpack.c.h.b16 %v291
        %v341 = vpack.c.b16 %v327, %v325
        %v342 = vpack.c.b16 %v328, %v326
        %v343 = vpack.c.b16 %v331, %v329
        %v344 = vpack.c.b16 %v332, %v330
        %v345 = vpack.c.b16 %v335, %v333
        %v346 = vpack.c.b16 %v336, %v334
        %v347 = vpack.c.b16 %v339, %v337
        %v348 = vpack.c.b16 %v340, %v338
        %v371 = vunpack.c.l.b16 %v292
        %v372 = vunpack.c.l.b16 %v293
        %v373 = vunpack.c.l.b16 %v294
        %v374 = vunpack.c.l.b16 %v295
        %v375 = vunpack.c.l.b16 %v296
        %v376 = vunpack.c.l.b16 %v297
        %v377 = vunpack.c.l.b16 %v298
        %v378 = vunpack.c.l.b16 %v299
        %v379 = vunpack.c.l.b16 %v300
        %v380 = vunpack.c.l.b16 %v301
        %v381 = vunpack.c.l.b16 %v302
        %v382 = vunpack.c.l.b16 %v303
        %v383 = vunpack.c.l.b16 %v304
        %v384 = vunpack.c.l.b16 %v305
        %v385 = vunpack.c.l.b16 %v306
        %v386 = vunpack.c.l.b16 %v307
        %v387 = vunpack.c.l.b16 %v308
        %v388 = vunpack.c.l.b16 %v309
        %v389 = vpack.c.b16 %v372, %v371
        %v390 = vpack.c.b16 %v374, %v373
        %v391 = vpack.c.b16 %v376, %v375
        %v392 = vpack.c.b16 %v378, %v377
        %v393 = vpack.c.b16 %v380, %v379
        %v394 = vpack.c.b16 %v382, %v381
        %v395 = vpack.c.b16 %v384, %v383
        %v396 = vpack.c.b16 %v386, %v385
        %v397 = vpack.c.b16 %v388, %v387
        %vm407 = vcmask 130048
        %v409 = vsel %vm407, %v342, 0
        %v412 = vsel %vm407, %v344, 0
        %v415 = vsel %vm407, %v346, 0
        %v418 = vsel %vm407, %v348, 0
        %420 = vmatprep.subr.bf16.mxu0 0
        %421 = vmatpush1.bf16.msra.mxu0 %v396
        %422 = vmatprep.subr.bf16.mxu0 0
        %423 = vmatpush1.bf16.msra.mxu0 %v395
        %424 = vmatprep.subr.bf16.mxu0 0
        %425 = vmatpush1.bf16.msra.mxu0 %v394
        %426 = vmatprep.subr.bf16.mxu0 0
        %427 = vmatpush1.bf16.msra.mxu0 %v393
        %428 = vmatprep.subr.bf16.mxu0 0
        %429 = vmatpush1.bf16.msra.mxu0 %v392
        %430 = vmatprep.subr.bf16.mxu0 0
        %431 = vmatpush1.bf16.msra.mxu0 %v391
        %432 = vmatprep.subr.bf16.mxu0 0
        %433 = vmatpush1.bf16.msra.mxu0 %v390
        %434 = vmatprep.subr.bf16.mxu0 0
        %435 = vmatpush1.bf16.msra.mxu0 %v389
        %436 = vmatprep.subr.bf16.mxu0 0
        %437 = vmatpush2.bf16.msra.mxu0 0
        %438 = vmatprep.subr.bf16.mxu0 0
        %439 = vmatpush2.bf16.msra.mxu0 0
        %440 = vmatprep.subr.bf16.mxu0 0
        %441 = vmatpush2.bf16.msra.mxu0 0
        %442 = vmatprep.subr.bf16.mxu0 0
        %443 = vmatpush2.bf16.msra.mxu0 0
        %444 = vmatprep.subr.bf16.mxu0 0
        %445 = vmatpush2.bf16.msra.mxu0 0
        %446 = vmatprep.subr.bf16.mxu0 0
        %447 = vmatpush2.bf16.msra.mxu0 0
        %448 = vmatprep.subr.bf16.mxu0 0
        %449 = vmatpush2.bf16.msra.mxu0 0
        %450 = vmatprep.subr.bf16.mxu0 0
        %451 = vmatpush2.bf16.msra.mxu0 %v397
        %452 = vmatprep.mubr.bf16.mxu0 %v409
        %453 = vmatmul.mubr.bf16.gmra.mxu0 %v341
        %v454 = vpop.f32.mrf.mxu0
        %v455 = vadd.f32 %v315, %v454
        %v456 = vpop.f32.mrf.mxu0
        %v457 = vpop.f32.mrf.mxu0
        %v458 = vadd.f32 %v315, %v457
        %v459 = vpop.f32.mrf.mxu0
        %460 = vmatprep.mubr.bf16.mxu0 %v412
        %461 = vmatmul.mubr.bf16.gmra.mxu0 %v343
        %v462 = vpop.f32.mrf.mxu0
        %v463 = vadd.f32 %v315, %v462
        %v464 = vpop.f32.mrf.mxu0
        %v465 = vpop.f32.mrf.mxu0
        %v466 = vadd.f32 %v315, %v465
        %v467 = vpop.f32.mrf.mxu0
        %468 = vmatprep.mubr.bf16.mxu0 %v415
        %469 = vmatmul.mubr.bf16.gmra.mxu0 %v345
        %v470 = vpop.f32.mrf.mxu0
        %v471 = vadd.f32 %v315, %v470
        %v472 = vpop.f32.mrf.mxu0
        %v473 = vpop.f32.mrf.mxu0
        %v474 = vadd.f32 %v315, %v473
        %v475 = vpop.f32.mrf.mxu0
        %476 = vmatprep.mubr.bf16.mxu0 %v418
        %477 = vmatmul.mubr.bf16.gmra.mxu0 %v347
        %v478 = vpop.f32.mrf.mxu0
        %v479 = vadd.f32 %v315, %v478
        %v480 = vpop.f32.mrf.mxu0
        %v481 = vpop.f32.mrf.mxu0
        %v482 = vadd.f32 %v315, %v481
        %v483 = vpop.f32.mrf.mxu0
        %484 = vdwg.mxu0
        %v485 = vmax.f32 %v455, 0.0
        %v486 = vmax.f32 %v458, 0.0
        %v487 = vmax.f32 %v463, 0.0
        %v488 = vmax.f32 %v466, 0.0
        %v489 = vmax.f32 %v471, 0.0
        %v490 = vmax.f32 %v474, 0.0
        %v491 = vmax.f32 %v479, 0.0
        %v492 = vmax.f32 %v482, 0.0
        %v493 = vpack.c.bf16 %v486, %v485
        %v494 = vpack.c.bf16 %v488, %v487
        %v495 = vpack.c.bf16 %v490, %v489
        %v496 = vpack.c.bf16 %v492, %v491
        %v497 = vld [vmem:[%s3] sm:$0xf]
        %v498 = vld [vmem:[%s3 + $0x4] sm:$0xf]
        %v499 = vld [vmem:[%s3 + $0x8] sm:$0xf]
        %v500 = vld [vmem:[%s3 + $0xc] sm:$0xf]
        %v501 = vld [vmem:[%s3 + $0x10] sm:$0xf]
        %v502 = vld [vmem:[%s3 + $0x14] sm:$0xf]
        %v503 = vld [vmem:[%s3 + $0x18] sm:$0xf]
        %v504 = vld [vmem:[%s3 + $0x1c] sm:$0xf]
        %v505 = vld [vmem:[%s3 + $0x20] sm:$0xf]
        %v506 = vld [vmem:[%s3 + $0x24] sm:$0xf]
        %v507 = vld [vmem:[%s3 + $0x28] sm:$0xf]
        %v508 = vld [vmem:[%s3 + $0x2c] sm:$0xf]
        %v509 = vld [vmem:[%s3 + $0x30] sm:$0xf]
        %v510 = vld [vmem:[%s3 + $0x34] sm:$0xf]
        %v511 = vld [vmem:[%s3 + $0x38] sm:$0xf]
        %v512 = vld [vmem:[%s3 + $0x3c] sm:$0xf]
        %v513 = vld [vmem:[%s4] sm:$0x1]
        %v515 = vlaneseq
        %v516 = vshrl.u32 %v515, 7
        %v517 = vsub.s32 0, %v516
        %v518 = vrot.slane %v513, %v517
        %v536 = vunpack.c.l.b16 %v497
        %v537 = vunpack.c.l.b16 %v498
        %v538 = vunpack.c.l.b16 %v499
        %v539 = vunpack.c.l.b16 %v500
        %v540 = vunpack.c.l.b16 %v501
        %v541 = vunpack.c.l.b16 %v502
        %v542 = vunpack.c.l.b16 %v503
        %v543 = vunpack.c.l.b16 %v504
        %v544 = vunpack.c.l.b16 %v505
        %v545 = vunpack.c.l.b16 %v506
        %v546 = vunpack.c.l.b16 %v507
        %v547 = vunpack.c.l.b16 %v508
        %v548 = vunpack.c.l.b16 %v509
        %v549 = vunpack.c.l.b16 %v510
        %v550 = vunpack.c.l.b16 %v511
        %v551 = vunpack.c.l.b16 %v512
        %v552 = vpack.c.b16 %v537, %v536
        %v553 = vpack.c.b16 %v539, %v538
        %v554 = vpack.c.b16 %v541, %v540
        %v555 = vpack.c.b16 %v543, %v542
        %v556 = vpack.c.b16 %v545, %v544
        %v557 = vpack.c.b16 %v547, %v546
        %v558 = vpack.c.b16 %v549, %v548
        %v559 = vpack.c.b16 %v551, %v550
        %568 = vmatprep.subr.bf16.mxu0 0
        %569 = vmatpush1.bf16.msra.mxu0 %v559
        %570 = vmatprep.subr.bf16.mxu0 0
        %571 = vmatpush1.bf16.msra.mxu0 %v558
        %572 = vmatprep.subr.bf16.mxu0 0
        %573 = vmatpush1.bf16.msra.mxu0 %v557
        %574 = vmatprep.subr.bf16.mxu0 0
        %575 = vmatpush1.bf16.msra.mxu0 %v556
        %576 = vmatprep.subr.bf16.mxu0 0
        %577 = vmatpush1.bf16.msra.mxu0 %v555
        %578 = vmatprep.subr.bf16.mxu0 0
        %579 = vmatpush1.bf16.msra.mxu0 %v554
        %580 = vmatprep.subr.bf16.mxu0 0
        %581 = vmatpush1.bf16.msra.mxu0 %v553
        %582 = vmatprep.subr.bf16.mxu0 0
        %583 = vmatpush1.bf16.msra.mxu0 %v552
        %584 = vmatprep.subr.bf16.mxu0 0
        %585 = vmatpush2.bf16.msra.mxu0 0
        %586 = vmatprep.subr.bf16.mxu0 0
        %587 = vmatpush2.bf16.msra.mxu0 0
        %588 = vmatprep.subr.bf16.mxu0 0
        %589 = vmatpush2.bf16.msra.mxu0 0
        %590 = vmatprep.subr.bf16.mxu0 0
        %591 = vmatpush2.bf16.msra.mxu0 0
        %592 = vmatprep.subr.bf16.mxu0 0
        %593 = vmatpush2.bf16.msra.mxu0 0
        %594 = vmatprep.subr.bf16.mxu0 0
        %595 = vmatpush2.bf16.msra.mxu0 0
        %596 = vmatprep.subr.bf16.mxu0 0
        %597 = vmatpush2.bf16.msra.mxu0 0
        %598 = vmatprep.subr.bf16.mxu0 0
        %599 = vmatpush2.bf16.msra.mxu0 0
        %600 = vmatprep.mubr.bf16.mxu0 0
        %601 = vmatmul.mubr.bf16.gmra.mxu0 %v493
        %v602 = vpop.f32.mrf.mxu0
        %v603 = vadd.f32 %v518, %v602
        %v604 = vpop.f32.mrf.mxu0
        %v605 = vpop.f32.mrf.mxu0
        %v606 = vadd.f32 %v518, %v605
        %v607 = vpop.f32.mrf.mxu0
        %608 = vmatprep.mubr.bf16.mxu0 0
        %609 = vmatmul.mubr.bf16.gmra.mxu0 %v494
        %v610 = vpop.f32.mrf.mxu0
        %v611 = vadd.f32 %v518, %v610
        %v612 = vpop.f32.mrf.mxu0
        %v613 = vpop.f32.mrf.mxu0
        %v614 = vadd.f32 %v518, %v613
        %v615 = vpop.f32.mrf.mxu0
        %616 = vmatprep.mubr.bf16.mxu0 0
        %617 = vmatmul.mubr.bf16.gmra.mxu0 %v495
        %v618 = vpop.f32.mrf.mxu0
        %v619 = vadd.f32 %v518, %v618
        %v620 = vpop.f32.mrf.mxu0
        %v621 = vpop.f32.mrf.mxu0
        %v622 = vadd.f32 %v518, %v621
        %v623 = vpop.f32.mrf.mxu0
        %624 = vmatprep.mubr.bf16.mxu0 0
        %625 = vmatmul.mubr.bf16.gmra.mxu0 %v496
        %v626 = vpop.f32.mrf.mxu0
        %v627 = vadd.f32 %v518, %v626
        %v628 = vpop.f32.mrf.mxu0
        %v629 = vpop.f32.mrf.mxu0
        %v630 = vadd.f32 %v518, %v629
        %v631 = vpop.f32.mrf.mxu0
        %632 = vdwg.mxu0
        %v633 = vmax.f32 %v603, 0.0
        %v634 = vmax.f32 %v606, 0.0
        %v635 = vmax.f32 %v611, 0.0
        %v636 = vmax.f32 %v614, 0.0
        %v637 = vmax.f32 %v619, 0.0
        %v638 = vmax.f32 %v622, 0.0
        %v639 = vmax.f32 %v627, 0.0
        %v640 = vmax.f32 %v630, 0.0
        %v641 = vpack.c.bf16 %v634, %v633
        %v642 = vpack.c.bf16 %v636, %v635
        %v643 = vpack.c.bf16 %v638, %v637
        %v644 = vpack.c.bf16 %v640, %v639
        %v645 = vld [vmem:[%s5] sm:$0xf]
        %v646 = vld [vmem:[%s5 + $0x4] sm:$0xf]
        %v647 = vld [vmem:[%s5 + $0x8] sm:$0xf]
        %v648 = vld [vmem:[%s5 + $0xc] sm:$0xf]
        %v649 = vld [vmem:[%s5 + $0x10] sm:$0xf]
        %v650 = vld [vmem:[%s5 + $0x14] sm:$0xf]
        %v651 = vld [vmem:[%s5 + $0x18] sm:$0xf]
        %v652 = vld [vmem:[%s5 + $0x1c] sm:$0xf]
        %v653 = vld [vmem:[%s5 + $0x20] sm:$0xf]
        %v654 = vld [vmem:[%s5 + $0x24] sm:$0xf]
        %v655 = vld [vmem:[%s5 + $0x28] sm:$0xf]
        %v656 = vld [vmem:[%s5 + $0x2c] sm:$0xf]
        %v657 = vld [vmem:[%s5 + $0x30] sm:$0xf]
        %v658 = vld [vmem:[%s5 + $0x34] sm:$0xf]
        %v659 = vld [vmem:[%s5 + $0x38] sm:$0xf]
        %v660 = vld [vmem:[%s5 + $0x3c] sm:$0xf]
        %v661 = vld [vmem:[%s6] sm:$0x1]
        %v663 = vlaneseq
        %v664 = vshrl.u32 %v663, 7
        %v665 = vsub.s32 0, %v664
        %v666 = vrot.slane %v661, %v665
        %v684 = vunpack.c.l.b16 %v645
        %v685 = vunpack.c.l.b16 %v646
        %v686 = vunpack.c.l.b16 %v647
        %v687 = vunpack.c.l.b16 %v648
        %v688 = vunpack.c.l.b16 %v649
        %v689 = vunpack.c.l.b16 %v650
        %v690 = vunpack.c.l.b16 %v651
        %v691 = vunpack.c.l.b16 %v652
        %v692 = vunpack.c.l.b16 %v653
        %v693 = vunpack.c.l.b16 %v654
        %v694 = vunpack.c.l.b16 %v655
        %v695 = vunpack.c.l.b16 %v656
        %v696 = vunpack.c.l.b16 %v657
        %v697 = vunpack.c.l.b16 %v658
        %v698 = vunpack.c.l.b16 %v659
        %v699 = vunpack.c.l.b16 %v660
        %v700 = vpack.c.b16 %v685, %v684
        %v701 = vpack.c.b16 %v687, %v686
        %v702 = vpack.c.b16 %v689, %v688
        %v703 = vpack.c.b16 %v691, %v690
        %v704 = vpack.c.b16 %v693, %v692
        %v705 = vpack.c.b16 %v695, %v694
        %v706 = vpack.c.b16 %v697, %v696
        %v707 = vpack.c.b16 %v699, %v698
        %716 = vmatprep.subr.bf16.mxu0 0
        %717 = vmatpush1.bf16.msra.mxu0 %v707
        %718 = vmatprep.subr.bf16.mxu0 0
        %719 = vmatpush1.bf16.msra.mxu0 %v706
        %720 = vmatprep.subr.bf16.mxu0 0
        %721 = vmatpush1.bf16.msra.mxu0 %v705
        %722 = vmatprep.subr.bf16.mxu0 0
        %723 = vmatpush1.bf16.msra.mxu0 %v704
        %724 = vmatprep.subr.bf16.mxu0 0
        %725 = vmatpush1.bf16.msra.mxu0 %v703
        %726 = vmatprep.subr.bf16.mxu0 0
        %727 = vmatpush1.bf16.msra.mxu0 %v702
        %728 = vmatprep.subr.bf16.mxu0 0
        %729 = vmatpush1.bf16.msra.mxu0 %v701
        %730 = vmatprep.subr.bf16.mxu0 0
        %731 = vmatpush1.bf16.msra.mxu0 %v700
        %732 = vmatprep.subr.bf16.mxu0 0
        %733 = vmatpush2.bf16.msra.mxu0 0
        %734 = vmatprep.subr.bf16.mxu0 0
        %735 = vmatpush2.bf16.msra.mxu0 0
        %736 = vmatprep.subr.bf16.mxu0 0
        %737 = vmatpush2.bf16.msra.mxu0 0
        %738 = vmatprep.subr.bf16.mxu0 0
        %739 = vmatpush2.bf16.msra.mxu0 0
        %740 = vmatprep.subr.bf16.mxu0 0
        %741 = vmatpush2.bf16.msra.mxu0 0
        %742 = vmatprep.subr.bf16.mxu0 0
        %743 = vmatpush2.bf16.msra.mxu0 0
        %744 = vmatprep.subr.bf16.mxu0 0
        %745 = vmatpush2.bf16.msra.mxu0 0
        %746 = vmatprep.subr.bf16.mxu0 0
        %747 = vmatpush2.bf16.msra.mxu0 0
        %748 = vmatprep.mubr.bf16.mxu0 0
        %749 = vmatmul.mubr.bf16.gmra.mxu0 %v641
        %v750 = vpop.f32.mrf.mxu0
        %v751 = vadd.f32 %v666, %v750
        %v752 = vpop.f32.mrf.mxu0
        %v753 = vpop.f32.mrf.mxu0
        %v754 = vadd.f32 %v666, %v753
        %v755 = vpop.f32.mrf.mxu0
        %756 = vmatprep.mubr.bf16.mxu0 0
        %757 = vmatmul.mubr.bf16.gmra.mxu0 %v642
        %v758 = vpop.f32.mrf.mxu0
        %v759 = vadd.f32 %v666, %v758
        %v760 = vpop.f32.mrf.mxu0
        %v761 = vpop.f32.mrf.mxu0
        %v762 = vadd.f32 %v666, %v761
        %v763 = vpop.f32.mrf.mxu0
        %764 = vmatprep.mubr.bf16.mxu0 0
        %765 = vmatmul.mubr.bf16.gmra.mxu0 %v643
        %v766 = vpop.f32.mrf.mxu0
        %v767 = vadd.f32 %v666, %v766
        %v768 = vpop.f32.mrf.mxu0
        %v769 = vpop.f32.mrf.mxu0
        %v770 = vadd.f32 %v666, %v769
        %v771 = vpop.f32.mrf.mxu0
        %772 = vmatprep.mubr.bf16.mxu0 0
        %773 = vmatmul.mubr.bf16.gmra.mxu0 %v644
        %v774 = vpop.f32.mrf.mxu0
        %v775 = vadd.f32 %v666, %v774
        %v776 = vpop.f32.mrf.mxu0
        %v777 = vpop.f32.mrf.mxu0
        %v778 = vadd.f32 %v666, %v777
        %v779 = vpop.f32.mrf.mxu0
        %780 = vdwg.mxu0
        %v781 = vmax.f32 %v751, 0.0
        %v782 = vmax.f32 %v754, 0.0
        %v783 = vmax.f32 %v759, 0.0
        %v784 = vmax.f32 %v762, 0.0
        %v785 = vmax.f32 %v767, 0.0
        %v786 = vmax.f32 %v770, 0.0
        %v787 = vmax.f32 %v775, 0.0
        %v788 = vmax.f32 %v778, 0.0
        %789 = vst [vmem:[%s274] sm:$0xff] %v781
        %790 = vst [vmem:[%s274 + $0x8] sm:$0xff] %v782
        %791 = vst [vmem:[%s274 + $0x10] sm:$0xff] %v783
        %792 = vst [vmem:[%s274 + $0x18] sm:$0xff] %v784
        %793 = vst [vmem:[%s274 + $0x20] sm:$0xff] %v785
        %794 = vst [vmem:[%s274 + $0x28] sm:$0xff] %v786
        %795 = vst [vmem:[%s274 + $0x30] sm:$0xff] %v787
        %796 = vst [vmem:[%s274 + $0x38] sm:$0xff] %v788
        %s797 = sand.u32 %s181, 1
        %s798 = scalar_lea.sflag [#allocation3], %s797
        %s799 = sand.u32 %s181, 1
        %s800 = smul.addr %s799, 64
        %s801 = scalar_lea.vmem [#allocation2], %s800
        // Predicated region
        $region49: #{pointnet2_forward.15} parent=47 // pred_check
          %p802 = pneg %p191
        $region50: #{pointnet2_forward.15} parent=47 // pred_check_branch
          %804 = sbr.rel (%p802) target = $region52
        $region51: #{pointnet2_forward.15} parent=47 // pred_region
          %s805 = smul.u32 8, %s21
          %s807 = ssub.s32 1024, 1024
          %808 = vsyncadd %s798, %s807
          %s809 = smul.addr %s805, 128
          %s810 = scalar_lea.hbm %s7, %s809
          %s811 = sshll.u32 %s801, 4
          %s812 = int_to_ptr.vmem [resolvable:$true] %s811
          %817 = dma.vmem_to_hbm [thread:$0]  %s812, 1024, %s810, %s798, 128, 128, 8
        $region52: #{pointnet2_forward.15} parent=47 // pred_fallthru
          _
      $region48: #{pointnet2_forward.15} parent=5 // pred_fallthru
        _
      %p818 = scmp.le.s32.totalorder 2, %s16
      // Predicated region
      $region53: #{pointnet2_forward.15} parent=5 // pred_check
        %p819 = pneg %p818
      $region54: #{pointnet2_forward.15} parent=5 // pred_check_branch
        %821 = sbr.rel (%p819) target = $region56
      $region55: #{pointnet2_forward.15} parent=5 // pred_region
        %s822 = ssub.s32 %s16, 2
        // Predicated region
        $region57: #{pointnet2_forward.15} parent=55 // pred_check
          %p823 = pneg %p197
        $region58: #{pointnet2_forward.15} parent=55 // pred_check_branch
          %825 = sbr.rel (%p823) target = $region60
        $region59: #{pointnet2_forward.15} parent=55 // pred_region
          %s826 = sand.u32 %s182, 1
          %s827 = scalar_lea.sflag [#allocation3], %s826
          %s828 = sand.u32 %s182, 1
          %s829 = smul.addr %s828, 64
          %s830 = scalar_lea.vmem [#allocation2], %s829
          %831 = dma.done %s827, 1024
        $region60: #{pointnet2_forward.15} parent=55 // pred_fallthru
          _
      $region56: #{pointnet2_forward.15} parent=5 // pred_fallthru
        _
    $region6: #{pointnet2_forward.15} parent=1 // loop_footer
      %s20 = sadd.s32 1, %s16
    $region7: #{pointnet2_forward.15} parent=1 // loop_footer_branch
      %15 = sbr.rel target = $region3
    $region8: #{pointnet2_forward.15} parent=1 // loop_exit
      _
    %832 = vsyncpa [#allocation3], 1
    %s833 = scalar_lea.sflag [#allocation3], 1
    %834 = vsyncpa %s833, 1

</llo_original>
